<compile_context>
chip_gen: v5e
topology: v5e:2x2
jax: 0.10.0
libtpu: 0.0.40
codegen_flags: <defaults>
</compile_context>

<pallas_src>
import functools

import jax
import jax.numpy as jnp
import numpy as np
from jax import lax
from jax.experimental import pallas as pl
from jax.experimental.pallas import tpu as pltpu


# ----------------------------------------------------------------------------
# Fused Pallas kernel: whole DnCNN stack for one batch element per grid step.
# ----------------------------------------------------------------------------
def _dncnn_fused_kernel(x_ref, w_init_ref, b_init_ref, w_main_ref, b_main_ref,
                        w_final_ref, b_final_ref, o_ref,
                        pad_x, pad_a, pad_b,
                        *, H, W, C, L, residual):
    # x_ref:       (1, H, W, 1)      input image (NHWC, single channel)
    # w_init_ref:  (9, C)            init-layer taps, row = dy*3 + dx
    # b_init_ref:  (1, C)
    # w_main_ref:  (9*L, C, C)       row = l*9 + dy*3 + dx
    # b_main_ref:  (L, C)
    # w_final_ref: (9, C, 1)
    # b_final_ref: (1, 1, 1)
    # o_ref:       (1, H, W, 1)
    # pad_x:       VMEM (H+2, W+2, 1) padded input scratch
    # pad_a/pad_b: VMEM (H+2, W+2, C) ping-pong padded activation scratch

    # In-kernel zero padding: zero the padded scratch, then only ever write the
    # interior.  (Re-zeroed every grid step -> safe under "parallel" batch.)
    pad_x[...] = jnp.zeros_like(pad_x)
    pad_a[...] = jnp.zeros_like(pad_a)
    pad_b[...] = jnp.zeros_like(pad_b)

    x = x_ref[0]                                    # (H, W, 1)
    pad_x[1:1 + H, 1:1 + W, :] = x

    # ---- init layer: 1 -> C, bias + ReLU (VPU broadcast-MAC; Cin == 1) ----
    acc = jnp.zeros((H, W, C), jnp.float32)
    for dy in range(3):
        for dx in range(3):
            k = dy * 3 + dx
            xs = pad_x[dy:dy + H, dx:dx + W, :]     # (H, W, 1)
            acc = acc + xs * w_init_ref[k][None, None, :]
    acc = jnp.maximum(acc + b_init_ref[0][None, None, :], 0.0)
    pad_a[1:1 + H, 1:1 + W, :] = acc

    # ---- main layers: C -> C, bias + ReLU (MXU, f32 accumulation) ----
    bufs = (pad_a, pad_b)
    cur = 0
    for l in range(L):
        src = bufs[cur]
        dst = bufs[1 - cur]
        acc = jnp.zeros((H, W, C), jnp.float32)
        for dy in range(3):
            for dx in range(3):
                k = l * 9 + dy * 3 + dx
                xs = src[dy:dy + H, dx:dx + W, :]   # (H, W, C)
                acc = acc + lax.dot_general(
                    xs, w_main_ref[k],
                    dimension_numbers=(((2,), (0,)), ((), ())),
                    preferred_element_type=jnp.float32)
        acc = jnp.maximum(acc + b_main_ref[l][None, None, :], 0.0)
        dst[1:1 + H, 1:1 + W, :] = acc
        cur = 1 - cur

    # ---- final layer: C -> 1, bias, no ReLU (+ fused residual) ----
    src = bufs[cur]
    res = jnp.zeros((H, W, 1), jnp.float32)
    for dy in range(3):
        for dx in range(3):
            k = dy * 3 + dx
            xs = src[dy:dy + H, dx:dx + W, :]       # (H, W, C)
            res = res + lax.dot_general(
                xs, w_final_ref[k],
                dimension_numbers=(((2,), (0,)), ((), ())),
                preferred_element_type=jnp.float32)
    res = res + b_final_ref[...]                    # (1,1,1) broadcast
    if residual:
        res = x - res                               # fused x - f(x)
    o_ref[0] = res.astype(o_ref.dtype)


# ----------------------------------------------------------------------------
# Wrapper: packs weights, builds the single pallas_call.
# ----------------------------------------------------------------------------
def dncnn_forward(params, x_nchw, est_type="direct"):
    if est_type not in ("direct", "residual"):
        raise ValueError(est_type)

    B, cin, H, W = x_nchw.shape
    assert cin == 1, "DnCNN input has a single channel"

    # NCHW -> NHWC is a pure (free) reshape because the channel dim is 1.
    x = x_nchw.reshape(B, H, W, 1).astype(jnp.float32)

    w_init, b_init = params["init"]                 # (3,3,1,C), (C,)
    C = int(w_init.shape[-1])
    L = len(params["main"])
    assert L >= 1, "kernel expects at least one middle layer"

    w_init_p = w_init.reshape(9, C)
    b_init_p = b_init.reshape(1, C)
    w_main_p = jnp.stack([w for (w, _) in params["main"]], 0).reshape(9 * L, C, C)
    b_main_p = jnp.stack([b for (_, b) in params["main"]], 0)          # (L, C)
    w_final, b_final = params["final"]              # (3,3,C,1), (1,)
    w_final_p = w_final.reshape(9, C, 1)
    b_final_p = b_final.reshape(1, 1, 1)

    kernel = functools.partial(_dncnn_fused_kernel, H=H, W=W, C=C, L=L,
                               residual=(est_type == "residual"))

    flops = 2 * 9 * H * W * (C + L * C * C + C) * B
    param_elems = (9 * C + C) + L * (9 * C * C + C) + (9 * C + 1)
    bytes_accessed = 4 * (2 * B * H * W + param_elems)

    out = pl.pallas_call(
        kernel,
        out_shape=jax.ShapeDtypeStruct((B, H, W, 1), jnp.float32),
        grid=(B,),
        in_specs=[
            pl.BlockSpec((1, H, W, 1), lambda b: (b, 0, 0, 0)),   # x
            pl.BlockSpec((9, C), lambda b: (0, 0)),               # w_init
            pl.BlockSpec((1, C), lambda b: (0, 0)),               # b_init
            pl.BlockSpec((9 * L, C, C), lambda b: (0, 0, 0)),     # w_main
            pl.BlockSpec((L, C), lambda b: (0, 0)),               # b_main
            pl.BlockSpec((9, C, 1), lambda b: (0, 0, 0)),         # w_final
            pl.BlockSpec((1, 1, 1), lambda b: (0, 0, 0)),         # b_final
        ],
        out_specs=pl.BlockSpec((1, H, W, 1), lambda b: (b, 0, 0, 0)),
        scratch_shapes=[
            pltpu.VMEM((H + 2, W + 2, 1), jnp.float32),   # padded input
            pltpu.VMEM((H + 2, W + 2, C), jnp.float32),   # ping
            pltpu.VMEM((H + 2, W + 2, C), jnp.float32),   # pong
        ],
        compiler_params=pltpu.CompilerParams(
            dimension_semantics=("parallel",)),
        cost_estimate=pl.CostEstimate(
            flops=flops, transcendentals=0, bytes_accessed=bytes_accessed),
    )(x, w_init_p, b_init_p, w_main_p, b_main_p, w_final_p, b_final_p)

    # NHWC -> NCHW is again a pure reshape (channel dim is 1).  Residual is
    # already fused in-kernel.
    return out.reshape(B, 1, H, W)


# ----------------------------------------------------------------------------
# Parameter init (matches PyTorch Conv2d shapes, stored HWIO).
# ----------------------------------------------------------------------------
def init_dncnn_params(key, num_layers, num_channels, filter_size=3):
    assert filter_size == 3, "kernel written for filterSize=3 / padding=1"
    params = {}
    n_convs = num_layers + 2
    keys = jax.random.split(key, n_convs)

    def conv_init(k, cin, cout):
        fan_in = cin * filter_size * filter_size
        bound = 1.0 / np.sqrt(fan_in)
        kw, kb = jax.random.split(k)
        w = jax.random.uniform(kw, (filter_size, filter_size, cin, cout),
                               jnp.float32, -bound, bound)
        b = jax.random.uniform(kb, (cout,), jnp.float32, -bound, bound)
        return w, b

    params["init"] = conv_init(keys[0], 1, num_channels)
    params["main"] = [conv_init(keys[1 + i], num_channels, num_channels)
                      for i in range(num_layers)]
    params["final"] = conv_init(keys[-1], num_channels, 1)
    return params


# ----------------------------------------------------------------------------
# Pure-JAX reference (lax.conv) for correctness check.
# ----------------------------------------------------------------------------
def _ref_conv(x_nhwc, w_hwio, bias, apply_relu):
    y = lax.conv_general_dilated(
        x_nhwc, w_hwio, window_strides=(1, 1), padding="SAME",
        dimension_numbers=("NHWC", "HWIO", "NHWC"))
    y = y + bias[None, None, None, :]
    return jnp.maximum(y, 0.0) if apply_relu else y


def dncnn_reference(params, x_nchw, est_type="direct"):
    x = jnp.transpose(x_nchw, (0, 2, 3, 1)).astype(jnp.float32)
    w, b = params["init"]
    h = _ref_conv(x, w, b, True)
    for (w, b) in params["main"]:
        h = _ref_conv(h, w, b, True)
    w, b = params["final"]
    out = _ref_conv(h, w, b, False)
    out_nchw = jnp.transpose(out, (0, 3, 1, 2))
    return out_nchw if est_type == "direct" else x_nchw - out_nchw


if __name__ == "__main__":
    key = jax.random.PRNGKey(0)
    k_param, k_x = jax.random.split(key)

    num_layers = 3
    num_channels = 8
    filter_size = 3

    params = init_dncnn_params(k_param, num_layers, num_channels, filter_size)

    # x: [bs, num_ch=1, spatial_dim, spatial_dim]
    x = jax.random.normal(k_x, (2, 1, 16, 16), jnp.float32)

    for est_type in ("residual", "direct"):
        fwd = jax.jit(functools.partial(dncnn_forward, est_type=est_type))
        out = jax.block_until_ready(fwd(params, x))
        ref = jax.block_until_ready(
            dncnn_reference(params, x, est_type=est_type))
        assert out.shape == (2, 1, 16, 16), out.shape
        np.testing.assert_allclose(np.asarray(out), np.asarray(ref),
                                   rtol=1e-4, atol=1e-4)

    print("KERNEL_OK")
</pallas_src>

<mosaic_0001>
module attributes {stable_mosaic.version = 11 : i64} {
  func.func @_dncnn_fused_kernel(%arg0: i32, %arg1: memref<1x16x16x1xf32, #tpu.memory_space<vmem>>, %arg2: memref<9x8xf32, #tpu.memory_space<vmem>>, %arg3: memref<1x8xf32, #tpu.memory_space<vmem>>, %arg4: memref<27x8x8xf32, #tpu.memory_space<vmem>>, %arg5: memref<3x8xf32, #tpu.memory_space<vmem>>, %arg6: memref<9x8x1xf32, #tpu.memory_space<vmem>>, %arg7: memref<1x1x1xf32, #tpu.memory_space<vmem>>, %arg8: memref<1x16x16x1xf32, #tpu.memory_space<vmem>>, %arg9: memref<18x18x1xf32, #tpu.memory_space<vmem>>, %arg10: memref<18x18x8xf32, #tpu.memory_space<vmem>>, %arg11: memref<18x18x8xf32, #tpu.memory_space<vmem>>) attributes {dimension_semantics = [#tpu.dimension_semantics<parallel>], iteration_bounds = array<i64: 2>, scalar_prefetch = 0 : i64, scratch_operands = 3 : i64, tpu.core_type = #tpu.core_type<tc>, window_params = [{transform_indices = @transform_0, window_bounds = array<i64: 1, 16, 16, 1>}, {pipeline_mode = #tpu.pipeline_mode<synchronous>, transform_indices = @transform_1, window_bounds = array<i64: 9, 8>}, {pipeline_mode = #tpu.pipeline_mode<synchronous>, transform_indices = @transform_2, window_bounds = array<i64: 1, 8>}, {pipeline_mode = #tpu.pipeline_mode<synchronous>, transform_indices = @transform_3, window_bounds = array<i64: 27, 8, 8>}, {pipeline_mode = #tpu.pipeline_mode<synchronous>, transform_indices = @transform_4, window_bounds = array<i64: 3, 8>}, {pipeline_mode = #tpu.pipeline_mode<synchronous>, transform_indices = @transform_5, window_bounds = array<i64: 9, 8, 1>}, {pipeline_mode = #tpu.pipeline_mode<synchronous>, transform_indices = @transform_6, window_bounds = array<i64: 1, 1, 1>}, {transform_indices = @transform_7, window_bounds = array<i64: 1, 16, 16, 1>}]} {
    %cst = arith.constant 0.000000e+00 : f32
    %0 = vector.broadcast %cst : f32 to vector<18x18x1xf32>
    %c0 = arith.constant 0 : index
    %c0_0 = arith.constant 0 : index
    %c0_1 = arith.constant 0 : index
    %1 = vector.load %arg9[%c0, %c0_0, %c0_1] : memref<18x18x1xf32, #tpu.memory_space<vmem>>, vector<18x18x1xf32>
    tpu.vector_store %arg9[%c0, %c0_0, %c0_1], %0 {strides = array<i32>} : memref<18x18x1xf32, #tpu.memory_space<vmem>>, vector<18x18x1xf32>,
    %cst_2 = arith.constant 0.000000e+00 : f32
    %2 = vector.broadcast %cst_2 : f32 to vector<18x18x8xf32>
    %c0_3 = arith.constant 0 : index
    %c0_4 = arith.constant 0 : index
    %c0_5 = arith.constant 0 : index
    %3 = vector.load %arg10[%c0_3, %c0_4, %c0_5] : memref<18x18x8xf32, #tpu.memory_space<vmem>>, vector<18x18x8xf32>
    tpu.vector_store %arg10[%c0_3, %c0_4, %c0_5], %2 {strides = array<i32>} : memref<18x18x8xf32, #tpu.memory_space<vmem>>, vector<18x18x8xf32>,
    %cst_6 = arith.constant 0.000000e+00 : f32
    %4 = vector.broadcast %cst_6 : f32 to vector<18x18x8xf32>
    %c0_7 = arith.constant 0 : index
    %c0_8 = arith.constant 0 : index
    %c0_9 = arith.constant 0 : index
    %5 = vector.load %arg11[%c0_7, %c0_8, %c0_9] : memref<18x18x8xf32, #tpu.memory_space<vmem>>, vector<18x18x8xf32>
    tpu.vector_store %arg11[%c0_7, %c0_8, %c0_9], %4 {strides = array<i32>} : memref<18x18x8xf32, #tpu.memory_space<vmem>>, vector<18x18x8xf32>,
    %c0_10 = arith.constant 0 : index
    %c0_11 = arith.constant 0 : index
    %c0_12 = arith.constant 0 : index
    %c0_13 = arith.constant 0 : index
    %6 = vector.load %arg1[%c0_10, %c0_11, %c0_12, %c0_13] : memref<1x16x16x1xf32, #tpu.memory_space<vmem>>, vector<1x16x16x1xf32>
    %7 = vector.shape_cast %6 : vector<1x16x16x1xf32> to vector<16x16x1xf32>
    %c1 = arith.constant 1 : index
    %c1_14 = arith.constant 1 : index
    %c0_15 = arith.constant 0 : index
    %8 = vector.load %arg9[%c1, %c1_14, %c0_15] : memref<18x18x1xf32, #tpu.memory_space<vmem>>, vector<16x16x1xf32>
    tpu.vector_store %arg9[%c1, %c1_14, %c0_15], %7 {strides = array<i32>} : memref<18x18x1xf32, #tpu.memory_space<vmem>>, vector<16x16x1xf32>,
    %cst_16 = arith.constant 0.000000e+00 : f32
    %9 = vector.broadcast %cst_16 : f32 to vector<16x16x8xf32>
    %c0_17 = arith.constant 0 : index
    %c0_18 = arith.constant 0 : index
    %c0_19 = arith.constant 0 : index
    %10 = vector.load %arg9[%c0_17, %c0_18, %c0_19] : memref<18x18x1xf32, #tpu.memory_space<vmem>>, vector<16x16x1xf32>
    %c0_20 = arith.constant 0 : index
    %c0_21 = arith.constant 0 : index
    %11 = vector.load %arg2[%c0_20, %c0_21] : memref<9x8xf32, #tpu.memory_space<vmem>>, vector<1x8xf32>
    %12 = vector.shape_cast %11 : vector<1x8xf32> to vector<8xf32>
    %13 = vector.shape_cast %12 : vector<8xf32> to vector<1x1x8xf32>
    %14 = vector.broadcast %10 : vector<16x16x1xf32> to vector<16x16x8xf32>
    %15 = vector.broadcast %13 : vector<1x1x8xf32> to vector<16x16x8xf32>
    %16 = arith.mulf %14, %15 : vector<16x16x8xf32>
    %17 = arith.addf %9, %16 : vector<16x16x8xf32>
    %c0_22 = arith.constant 0 : index
    %c1_23 = arith.constant 1 : index
    %c0_24 = arith.constant 0 : index
    %18 = vector.load %arg9[%c0_22, %c1_23, %c0_24] : memref<18x18x1xf32, #tpu.memory_space<vmem>>, vector<16x16x1xf32>
    %c1_25 = arith.constant 1 : index
    %c0_26 = arith.constant 0 : index
    %19 = vector.load %arg2[%c1_25, %c0_26] : memref<9x8xf32, #tpu.memory_space<vmem>>, vector<1x8xf32>
    %20 = vector.shape_cast %19 : vector<1x8xf32> to vector<8xf32>
    %21 = vector.shape_cast %20 : vector<8xf32> to vector<1x1x8xf32>
    %22 = vector.broadcast %18 : vector<16x16x1xf32> to vector<16x16x8xf32>
    %23 = vector.broadcast %21 : vector<1x1x8xf32> to vector<16x16x8xf32>
    %24 = arith.mulf %22, %23 : vector<16x16x8xf32>
    %25 = arith.addf %17, %24 : vector<16x16x8xf32>
    %c0_27 = arith.constant 0 : index
    %c2 = arith.constant 2 : index
    %c0_28 = arith.constant 0 : index
    %26 = vector.load %arg9[%c0_27, %c2, %c0_28] : memref<18x18x1xf32, #tpu.memory_space<vmem>>, vector<16x16x1xf32>
    %c2_29 = arith.constant 2 : index
    %c0_30 = arith.constant 0 : index
    %27 = vector.load %arg2[%c2_29, %c0_30] : memref<9x8xf32, #tpu.memory_space<vmem>>, vector<1x8xf32>
    %28 = vector.shape_cast %27 : vector<1x8xf32> to vector<8xf32>
    %29 = vector.shape_cast %28 : vector<8xf32> to vector<1x1x8xf32>
    %30 = vector.broadcast %26 : vector<16x16x1xf32> to vector<16x16x8xf32>
    %31 = vector.broadcast %29 : vector<1x1x8xf32> to vector<16x16x8xf32>
    %32 = arith.mulf %30, %31 : vector<16x16x8xf32>
    %33 = arith.addf %25, %32 : vector<16x16x8xf32>
    %c1_31 = arith.constant 1 : index
    %c0_32 = arith.constant 0 : index
    %c0_33 = arith.constant 0 : index
    %34 = vector.load %arg9[%c1_31, %c0_32, %c0_33] : memref<18x18x1xf32, #tpu.memory_space<vmem>>, vector<16x16x1xf32>
    %c3 = arith.constant 3 : index
    %c0_34 = arith.constant 0 : index
    %35 = vector.load %arg2[%c3, %c0_34] : memref<9x8xf32, #tpu.memory_space<vmem>>, vector<1x8xf32>
    %36 = vector.shape_cast %35 : vector<1x8xf32> to vector<8xf32>
    %37 = vector.shape_cast %36 : vector<8xf32> to vector<1x1x8xf32>
    %38 = vector.broadcast %34 : vector<16x16x1xf32> to vector<16x16x8xf32>
    %39 = vector.broadcast %37 : vector<1x1x8xf32> to vector<16x16x8xf32>
    %40 = arith.mulf %38, %39 : vector<16x16x8xf32>
    %41 = arith.addf %33, %40 : vector<16x16x8xf32>
    %c1_35 = arith.constant 1 : index
    %c1_36 = arith.constant 1 : index
    %c0_37 = arith.constant 0 : index
    %42 = vector.load %arg9[%c1_35, %c1_36, %c0_37] : memref<18x18x1xf32, #tpu.memory_space<vmem>>, vector<16x16x1xf32>
    %c4 = arith.constant 4 : index
    %c0_38 = arith.constant 0 : index
    %43 = vector.load %arg2[%c4, %c0_38] : memref<9x8xf32, #tpu.memory_space<vmem>>, vector<1x8xf32>
    %44 = vector.shape_cast %43 : vector<1x8xf32> to vector<8xf32>
    %45 = vector.shape_cast %44 : vector<8xf32> to vector<1x1x8xf32>
    %46 = vector.broadcast %42 : vector<16x16x1xf32> to vector<16x16x8xf32>
    %47 = vector.broadcast %45 : vector<1x1x8xf32> to vector<16x16x8xf32>
    %48 = arith.mulf %46, %47 : vector<16x16x8xf32>
    %49 = arith.addf %41, %48 : vector<16x16x8xf32>
    %c1_39 = arith.constant 1 : index
    %c2_40 = arith.constant 2 : index
    %c0_41 = arith.constant 0 : index
    %50 = vector.load %arg9[%c1_39, %c2_40, %c0_41] : memref<18x18x1xf32, #tpu.memory_space<vmem>>, vector<16x16x1xf32>
    %c5 = arith.constant 5 : index
    %c0_42 = arith.constant 0 : index
    %51 = vector.load %arg2[%c5, %c0_42] : memref<9x8xf32, #tpu.memory_space<vmem>>, vector<1x8xf32>
    %52 = vector.shape_cast %51 : vector<1x8xf32> to vector<8xf32>
    %53 = vector.shape_cast %52 : vector<8xf32> to vector<1x1x8xf32>
    %54 = vector.broadcast %50 : vector<16x16x1xf32> to vector<16x16x8xf32>
    %55 = vector.broadcast %53 : vector<1x1x8xf32> to vector<16x16x8xf32>
    %56 = arith.mulf %54, %55 : vector<16x16x8xf32>
    %57 = arith.addf %49, %56 : vector<16x16x8xf32>
    %c2_43 = arith.constant 2 : index
    %c0_44 = arith.constant 0 : index
    %c0_45 = arith.constant 0 : index
    %58 = vector.load %arg9[%c2_43, %c0_44, %c0_45] : memref<18x18x1xf32, #tpu.memory_space<vmem>>, vector<16x16x1xf32>
    %c6 = arith.constant 6 : index
    %c0_46 = arith.constant 0 : index
    %59 = vector.load %arg2[%c6, %c0_46] : memref<9x8xf32, #tpu.memory_space<vmem>>, vector<1x8xf32>
    %60 = vector.shape_cast %59 : vector<1x8xf32> to vector<8xf32>
    %61 = vector.shape_cast %60 : vector<8xf32> to vector<1x1x8xf32>
    %62 = vector.broadcast %58 : vector<16x16x1xf32> to vector<16x16x8xf32>
    %63 = vector.broadcast %61 : vector<1x1x8xf32> to vector<16x16x8xf32>
    %64 = arith.mulf %62, %63 : vector<16x16x8xf32>
    %65 = arith.addf %57, %64 : vector<16x16x8xf32>
    %c2_47 = arith.constant 2 : index
    %c1_48 = arith.constant 1 : index
    %c0_49 = arith.constant 0 : index
    %66 = vector.load %arg9[%c2_47, %c1_48, %c0_49] : memref<18x18x1xf32, #tpu.memory_space<vmem>>, vector<16x16x1xf32>
    %c7 = arith.constant 7 : index
    %c0_50 = arith.constant 0 : index
    %67 = vector.load %arg2[%c7, %c0_50] : memref<9x8xf32, #tpu.memory_space<vmem>>, vector<1x8xf32>
    %68 = vector.shape_cast %67 : vector<1x8xf32> to vector<8xf32>
    %69 = vector.shape_cast %68 : vector<8xf32> to vector<1x1x8xf32>
    %70 = vector.broadcast %66 : vector<16x16x1xf32> to vector<16x16x8xf32>
    %71 = vector.broadcast %69 : vector<1x1x8xf32> to vector<16x16x8xf32>
    %72 = arith.mulf %70, %71 : vector<16x16x8xf32>
    %73 = arith.addf %65, %72 : vector<16x16x8xf32>
    %c2_51 = arith.constant 2 : index
    %c2_52 = arith.constant 2 : index
    %c0_53 = arith.constant 0 : index
    %74 = vector.load %arg9[%c2_51, %c2_52, %c0_53] : memref<18x18x1xf32, #tpu.memory_space<vmem>>, vector<16x16x1xf32>
    %c8 = arith.constant 8 : index
    %c0_54 = arith.constant 0 : index
    %75 = vector.load %arg2[%c8, %c0_54] : memref<9x8xf32, #tpu.memory_space<vmem>>, vector<1x8xf32>
    %76 = vector.shape_cast %75 : vector<1x8xf32> to vector<8xf32>
    %77 = vector.shape_cast %76 : vector<8xf32> to vector<1x1x8xf32>
    %78 = vector.broadcast %74 : vector<16x16x1xf32> to vector<16x16x8xf32>
    %79 = vector.broadcast %77 : vector<1x1x8xf32> to vector<16x16x8xf32>
    %80 = arith.mulf %78, %79 : vector<16x16x8xf32>
    %81 = arith.addf %73, %80 : vector<16x16x8xf32>
    %c0_55 = arith.constant 0 : index
    %c0_56 = arith.constant 0 : index
    %82 = vector.load %arg3[%c0_55, %c0_56] : memref<1x8xf32, #tpu.memory_space<vmem>>, vector<1x8xf32>
    %83 = vector.shape_cast %82 : vector<1x8xf32> to vector<8xf32>
    %84 = vector.shape_cast %83 : vector<8xf32> to vector<1x1x8xf32>
    %85 = vector.broadcast %84 : vector<1x1x8xf32> to vector<16x16x8xf32>
    %86 = arith.addf %81, %85 : vector<16x16x8xf32>
    %cst_57 = arith.constant 0.000000e+00 : f32
    %87 = vector.broadcast %cst_57 : f32 to vector<16x16x8xf32>
    %88 = arith.maximumf %86, %87 : vector<16x16x8xf32>
    %c1_58 = arith.constant 1 : index
    %c1_59 = arith.constant 1 : index
    %c0_60 = arith.constant 0 : index
    %89 = vector.load %arg10[%c1_58, %c1_59, %c0_60] : memref<18x18x8xf32, #tpu.memory_space<vmem>>, vector<16x16x8xf32>
    tpu.vector_store %arg10[%c1_58, %c1_59, %c0_60], %88 {strides = array<i32>} : memref<18x18x8xf32, #tpu.memory_space<vmem>>, vector<16x16x8xf32>,
    %cst_61 = arith.constant 0.000000e+00 : f32
    %90 = vector.broadcast %cst_61 : f32 to vector<16x16x8xf32>
    %c0_62 = arith.constant 0 : index
    %c0_63 = arith.constant 0 : index
    %c0_64 = arith.constant 0 : index
    %91 = vector.load %arg10[%c0_62, %c0_63, %c0_64] : memref<18x18x8xf32, #tpu.memory_space<vmem>>, vector<16x16x8xf32>
    %c0_65 = arith.constant 0 : index
    %c0_66 = arith.constant 0 : index
    %c0_67 = arith.constant 0 : index
    %92 = vector.load %arg4[%c0_65, %c0_66, %c0_67] : memref<27x8x8xf32, #tpu.memory_space<vmem>>, vector<1x8x8xf32>
    %93 = vector.shape_cast %92 : vector<1x8x8xf32> to vector<8x8xf32>
    %cst_68 = arith.constant dense<0.000000e+00> : vector<16x16x8xf32>
    %94 = tpu.matmul %91, %93, %cst_68 {dimension_numbers = #tpu.dot_dimension_numbers<[2], [0], [0, 1], [1], [0, 0, 0, 1, 1, 1], [], []>} : vector<16x16x8xf32>, vector<8x8xf32>, vector<16x16x8xf32> -> vector<16x16x8xf32>
    %95 = arith.addf %90, %94 : vector<16x16x8xf32>
    %c0_69 = arith.constant 0 : index
    %c1_70 = arith.constant 1 : index
    %c0_71 = arith.constant 0 : index
    %96 = vector.load %arg10[%c0_69, %c1_70, %c0_71] : memref<18x18x8xf32, #tpu.memory_space<vmem>>, vector<16x16x8xf32>
    %c1_72 = arith.constant 1 : index
    %c0_73 = arith.constant 0 : index
    %c0_74 = arith.constant 0 : index
    %97 = vector.load %arg4[%c1_72, %c0_73, %c0_74] : memref<27x8x8xf32, #tpu.memory_space<vmem>>, vector<1x8x8xf32>
    %98 = vector.shape_cast %97 : vector<1x8x8xf32> to vector<8x8xf32>
    %cst_75 = arith.constant dense<0.000000e+00> : vector<16x16x8xf32>
    %99 = tpu.matmul %96, %98, %cst_75 {dimension_numbers = #tpu.dot_dimension_numbers<[2], [0], [0, 1], [1], [0, 0, 0, 1, 1, 1], [], []>} : vector<16x16x8xf32>, vector<8x8xf32>, vector<16x16x8xf32> -> vector<16x16x8xf32>
    %100 = arith.addf %95, %99 : vector<16x16x8xf32>
    %c0_76 = arith.constant 0 : index
    %c2_77 = arith.constant 2 : index
    %c0_78 = arith.constant 0 : index
    %101 = vector.load %arg10[%c0_76, %c2_77, %c0_78] : memref<18x18x8xf32, #tpu.memory_space<vmem>>, vector<16x16x8xf32>
    %c2_79 = arith.constant 2 : index
    %c0_80 = arith.constant 0 : index
    %c0_81 = arith.constant 0 : index
    %102 = vector.load %arg4[%c2_79, %c0_80, %c0_81] : memref<27x8x8xf32, #tpu.memory_space<vmem>>, vector<1x8x8xf32>
    %103 = vector.shape_cast %102 : vector<1x8x8xf32> to vector<8x8xf32>
    %cst_82 = arith.constant dense<0.000000e+00> : vector<16x16x8xf32>
    %104 = tpu.matmul %101, %103, %cst_82 {dimension_numbers = #tpu.dot_dimension_numbers<[2], [0], [0, 1], [1], [0, 0, 0, 1, 1, 1], [], []>} : vector<16x16x8xf32>, vector<8x8xf32>, vector<16x16x8xf32> -> vector<16x16x8xf32>
    %105 = arith.addf %100, %104 : vector<16x16x8xf32>
    %c1_83 = arith.constant 1 : index
    %c0_84 = arith.constant 0 : index
    %c0_85 = arith.constant 0 : index
    %106 = vector.load %arg10[%c1_83, %c0_84, %c0_85] : memref<18x18x8xf32, #tpu.memory_space<vmem>>, vector<16x16x8xf32>
    %c3_86 = arith.constant 3 : index
    %c0_87 = arith.constant 0 : index
    %c0_88 = arith.constant 0 : index
    %107 = vector.load %arg4[%c3_86, %c0_87, %c0_88] : memref<27x8x8xf32, #tpu.memory_space<vmem>>, vector<1x8x8xf32>
    %108 = vector.shape_cast %107 : vector<1x8x8xf32> to vector<8x8xf32>
    %cst_89 = arith.constant dense<0.000000e+00> : vector<16x16x8xf32>
    %109 = tpu.matmul %106, %108, %cst_89 {dimension_numbers = #tpu.dot_dimension_numbers<[2], [0], [0, 1], [1], [0, 0, 0, 1, 1, 1], [], []>} : vector<16x16x8xf32>, vector<8x8xf32>, vector<16x16x8xf32> -> vector<16x16x8xf32>
    %110 = arith.addf %105, %109 : vector<16x16x8xf32>
    %c1_90 = arith.constant 1 : index
    %c1_91 = arith.constant 1 : index
    %c0_92 = arith.constant 0 : index
    %111 = vector.load %arg10[%c1_90, %c1_91, %c0_92] : memref<18x18x8xf32, #tpu.memory_space<vmem>>, vector<16x16x8xf32>
    %c4_93 = arith.constant 4 : index
    %c0_94 = arith.constant 0 : index
    %c0_95 = arith.constant 0 : index
    %112 = vector.load %arg4[%c4_93, %c0_94, %c0_95] : memref<27x8x8xf32, #tpu.memory_space<vmem>>, vector<1x8x8xf32>
    %113 = vector.shape_cast %112 : vector<1x8x8xf32> to vector<8x8xf32>
    %cst_96 = arith.constant dense<0.000000e+00> : vector<16x16x8xf32>
    %114 = tpu.matmul %111, %113, %cst_96 {dimension_numbers = #tpu.dot_dimension_numbers<[2], [0], [0, 1], [1], [0, 0, 0, 1, 1, 1], [], []>} : vector<16x16x8xf32>, vector<8x8xf32>, vector<16x16x8xf32> -> vector<16x16x8xf32>
    %115 = arith.addf %110, %114 : vector<16x16x8xf32>
    %c1_97 = arith.constant 1 : index
    %c2_98 = arith.constant 2 : index
    %c0_99 = arith.constant 0 : index
    %116 = vector.load %arg10[%c1_97, %c2_98, %c0_99] : memref<18x18x8xf32, #tpu.memory_space<vmem>>, vector<16x16x8xf32>
    %c5_100 = arith.constant 5 : index
    %c0_101 = arith.constant 0 : index
    %c0_102 = arith.constant 0 : index
    %117 = vector.load %arg4[%c5_100, %c0_101, %c0_102] : memref<27x8x8xf32, #tpu.memory_space<vmem>>, vector<1x8x8xf32>
    %118 = vector.shape_cast %117 : vector<1x8x8xf32> to vector<8x8xf32>
    %cst_103 = arith.constant dense<0.000000e+00> : vector<16x16x8xf32>
    %119 = tpu.matmul %116, %118, %cst_103 {dimension_numbers = #tpu.dot_dimension_numbers<[2], [0], [0, 1], [1], [0, 0, 0, 1, 1, 1], [], []>} : vector<16x16x8xf32>, vector<8x8xf32>, vector<16x16x8xf32> -> vector<16x16x8xf32>
    %120 = arith.addf %115, %119 : vector<16x16x8xf32>
    %c2_104 = arith.constant 2 : index
    %c0_105 = arith.constant 0 : index
    %c0_106 = arith.constant 0 : index
    %121 = vector.load %arg10[%c2_104, %c0_105, %c0_106] : memref<18x18x8xf32, #tpu.memory_space<vmem>>, vector<16x16x8xf32>
    %c6_107 = arith.constant 6 : index
    %c0_108 = arith.constant 0 : index
    %c0_109 = arith.constant 0 : index
    %122 = vector.load %arg4[%c6_107, %c0_108, %c0_109] : memref<27x8x8xf32, #tpu.memory_space<vmem>>, vector<1x8x8xf32>
    %123 = vector.shape_cast %122 : vector<1x8x8xf32> to vector<8x8xf32>
    %cst_110 = arith.constant dense<0.000000e+00> : vector<16x16x8xf32>
    %124 = tpu.matmul %121, %123, %cst_110 {dimension_numbers = #tpu.dot_dimension_numbers<[2], [0], [0, 1], [1], [0, 0, 0, 1, 1, 1], [], []>} : vector<16x16x8xf32>, vector<8x8xf32>, vector<16x16x8xf32> -> vector<16x16x8xf32>
    %125 = arith.addf %120, %124 : vector<16x16x8xf32>
    %c2_111 = arith.constant 2 : index
    %c1_112 = arith.constant 1 : index
    %c0_113 = arith.constant 0 : index
    %126 = vector.load %arg10[%c2_111, %c1_112, %c0_113] : memref<18x18x8xf32, #tpu.memory_space<vmem>>, vector<16x16x8xf32>
    %c7_114 = arith.constant 7 : index
    %c0_115 = arith.constant 0 : index
    %c0_116 = arith.constant 0 : index
    %127 = vector.load %arg4[%c7_114, %c0_115, %c0_116] : memref<27x8x8xf32, #tpu.memory_space<vmem>>, vector<1x8x8xf32>
    %128 = vector.shape_cast %127 : vector<1x8x8xf32> to vector<8x8xf32>
    %cst_117 = arith.constant dense<0.000000e+00> : vector<16x16x8xf32>
    %129 = tpu.matmul %126, %128, %cst_117 {dimension_numbers = #tpu.dot_dimension_numbers<[2], [0], [0, 1], [1], [0, 0, 0, 1, 1, 1], [], []>} : vector<16x16x8xf32>, vector<8x8xf32>, vector<16x16x8xf32> -> vector<16x16x8xf32>
    %130 = arith.addf %125, %129 : vector<16x16x8xf32>
    %c2_118 = arith.constant 2 : index
    %c2_119 = arith.constant 2 : index
    %c0_120 = arith.constant 0 : index
    %131 = vector.load %arg10[%c2_118, %c2_119, %c0_120] : memref<18x18x8xf32, #tpu.memory_space<vmem>>, vector<16x16x8xf32>
    %c8_121 = arith.constant 8 : index
    %c0_122 = arith.constant 0 : index
    %c0_123 = arith.constant 0 : index
    %132 = vector.load %arg4[%c8_121, %c0_122, %c0_123] : memref<27x8x8xf32, #tpu.memory_space<vmem>>, vector<1x8x8xf32>
    %133 = vector.shape_cast %132 : vector<1x8x8xf32> to vector<8x8xf32>
    %cst_124 = arith.constant dense<0.000000e+00> : vector<16x16x8xf32>
    %134 = tpu.matmul %131, %133, %cst_124 {dimension_numbers = #tpu.dot_dimension_numbers<[2], [0], [0, 1], [1], [0, 0, 0, 1, 1, 1], [], []>} : vector<16x16x8xf32>, vector<8x8xf32>, vector<16x16x8xf32> -> vector<16x16x8xf32>
    %135 = arith.addf %130, %134 : vector<16x16x8xf32>
    %c0_125 = arith.constant 0 : index
    %c0_126 = arith.constant 0 : index
    %136 = vector.load %arg5[%c0_125, %c0_126] : memref<3x8xf32, #tpu.memory_space<vmem>>, vector<1x8xf32>
    %137 = vector.shape_cast %136 : vector<1x8xf32> to vector<8xf32>
    %138 = vector.shape_cast %137 : vector<8xf32> to vector<1x1x8xf32>
    %139 = vector.broadcast %138 : vector<1x1x8xf32> to vector<16x16x8xf32>
    %140 = arith.addf %135, %139 : vector<16x16x8xf32>
    %cst_127 = arith.constant 0.000000e+00 : f32
    %141 = vector.broadcast %cst_127 : f32 to vector<16x16x8xf32>
    %142 = arith.maximumf %140, %141 : vector<16x16x8xf32>
    %c1_128 = arith.constant 1 : index
    %c1_129 = arith.constant 1 : index
    %c0_130 = arith.constant 0 : index
    %143 = vector.load %arg11[%c1_128, %c1_129, %c0_130] : memref<18x18x8xf32, #tpu.memory_space<vmem>>, vector<16x16x8xf32>
    tpu.vector_store %arg11[%c1_128, %c1_129, %c0_130], %142 {strides = array<i32>} : memref<18x18x8xf32, #tpu.memory_space<vmem>>, vector<16x16x8xf32>,
    %cst_131 = arith.constant 0.000000e+00 : f32
    %144 = vector.broadcast %cst_131 : f32 to vector<16x16x8xf32>
    %c0_132 = arith.constant 0 : index
    %c0_133 = arith.constant 0 : index
    %c0_134 = arith.constant 0 : index
    %145 = vector.load %arg11[%c0_132, %c0_133, %c0_134] : memref<18x18x8xf32, #tpu.memory_space<vmem>>, vector<16x16x8xf32>
    %c9 = arith.constant 9 : index
    %c0_135 = arith.constant 0 : index
    %c0_136 = arith.constant 0 : index
    %146 = vector.load %arg4[%c9, %c0_135, %c0_136] : memref<27x8x8xf32, #tpu.memory_space<vmem>>, vector<1x8x8xf32>
    %147 = vector.shape_cast %146 : vector<1x8x8xf32> to vector<8x8xf32>
    %cst_137 = arith.constant dense<0.000000e+00> : vector<16x16x8xf32>
    %148 = tpu.matmul %145, %147, %cst_137 {dimension_numbers = #tpu.dot_dimension_numbers<[2], [0], [0, 1], [1], [0, 0, 0, 1, 1, 1], [], []>} : vector<16x16x8xf32>, vector<8x8xf32>, vector<16x16x8xf32> -> vector<16x16x8xf32>
    %149 = arith.addf %144, %148 : vector<16x16x8xf32>
    %c0_138 = arith.constant 0 : index
    %c1_139 = arith.constant 1 : index
    %c0_140 = arith.constant 0 : index
    %150 = vector.load %arg11[%c0_138, %c1_139, %c0_140] : memref<18x18x8xf32, #tpu.memory_space<vmem>>, vector<16x16x8xf32>
    %c10 = arith.constant 10 : index
    %c0_141 = arith.constant 0 : index
    %c0_142 = arith.constant 0 : index
    %151 = vector.load %arg4[%c10, %c0_141, %c0_142] : memref<27x8x8xf32, #tpu.memory_space<vmem>>, vector<1x8x8xf32>
    %152 = vector.shape_cast %151 : vector<1x8x8xf32> to vector<8x8xf32>
    %cst_143 = arith.constant dense<0.000000e+00> : vector<16x16x8xf32>
    %153 = tpu.matmul %150, %152, %cst_143 {dimension_numbers = #tpu.dot_dimension_numbers<[2], [0], [0, 1], [1], [0, 0, 0, 1, 1, 1], [], []>} : vector<16x16x8xf32>, vector<8x8xf32>, vector<16x16x8xf32> -> vector<16x16x8xf32>
    %154 = arith.addf %149, %153 : vector<16x16x8xf32>
    %c0_144 = arith.constant 0 : index
    %c2_145 = arith.constant 2 : index
    %c0_146 = arith.constant 0 : index
    %155 = vector.load %arg11[%c0_144, %c2_145, %c0_146] : memref<18x18x8xf32, #tpu.memory_space<vmem>>, vector<16x16x8xf32>
    %c11 = arith.constant 11 : index
    %c0_147 = arith.constant 0 : index
    %c0_148 = arith.constant 0 : index
    %156 = vector.load %arg4[%c11, %c0_147, %c0_148] : memref<27x8x8xf32, #tpu.memory_space<vmem>>, vector<1x8x8xf32>
    %157 = vector.shape_cast %156 : vector<1x8x8xf32> to vector<8x8xf32>
    %cst_149 = arith.constant dense<0.000000e+00> : vector<16x16x8xf32>
    %158 = tpu.matmul %155, %157, %cst_149 {dimension_numbers = #tpu.dot_dimension_numbers<[2], [0], [0, 1], [1], [0, 0, 0, 1, 1, 1], [], []>} : vector<16x16x8xf32>, vector<8x8xf32>, vector<16x16x8xf32> -> vector<16x16x8xf32>
    %159 = arith.addf %154, %158 : vector<16x16x8xf32>
    %c1_150 = arith.constant 1 : index
    %c0_151 = arith.constant 0 : index
    %c0_152 = arith.constant 0 : index
    %160 = vector.load %arg11[%c1_150, %c0_151, %c0_152] : memref<18x18x8xf32, #tpu.memory_space<vmem>>, vector<16x16x8xf32>
    %c12 = arith.constant 12 : index
    %c0_153 = arith.constant 0 : index
    %c0_154 = arith.constant 0 : index
    %161 = vector.load %arg4[%c12, %c0_153, %c0_154] : memref<27x8x8xf32, #tpu.memory_space<vmem>>, vector<1x8x8xf32>
    %162 = vector.shape_cast %161 : vector<1x8x8xf32> to vector<8x8xf32>
    %cst_155 = arith.constant dense<0.000000e+00> : vector<16x16x8xf32>
    %163 = tpu.matmul %160, %162, %cst_155 {dimension_numbers = #tpu.dot_dimension_numbers<[2], [0], [0, 1], [1], [0, 0, 0, 1, 1, 1], [], []>} : vector<16x16x8xf32>, vector<8x8xf32>, vector<16x16x8xf32> -> vector<16x16x8xf32>
    %164 = arith.addf %159, %163 : vector<16x16x8xf32>
    %c1_156 = arith.constant 1 : index
    %c1_157 = arith.constant 1 : index
    %c0_158 = arith.constant 0 : index
    %165 = vector.load %arg11[%c1_156, %c1_157, %c0_158] : memref<18x18x8xf32, #tpu.memory_space<vmem>>, vector<16x16x8xf32>
    %c13 = arith.constant 13 : index
    %c0_159 = arith.constant 0 : index
    %c0_160 = arith.constant 0 : index
    %166 = vector.load %arg4[%c13, %c0_159, %c0_160] : memref<27x8x8xf32, #tpu.memory_space<vmem>>, vector<1x8x8xf32>
    %167 = vector.shape_cast %166 : vector<1x8x8xf32> to vector<8x8xf32>
    %cst_161 = arith.constant dense<0.000000e+00> : vector<16x16x8xf32>
    %168 = tpu.matmul %165, %167, %cst_161 {dimension_numbers = #tpu.dot_dimension_numbers<[2], [0], [0, 1], [1], [0, 0, 0, 1, 1, 1], [], []>} : vector<16x16x8xf32>, vector<8x8xf32>, vector<16x16x8xf32> -> vector<16x16x8xf32>
    %169 = arith.addf %164, %168 : vector<16x16x8xf32>
    %c1_162 = arith.constant 1 : index
    %c2_163 = arith.constant 2 : index
    %c0_164 = arith.constant 0 : index
    %170 = vector.load %arg11[%c1_162, %c2_163, %c0_164] : memref<18x18x8xf32, #tpu.memory_space<vmem>>, vector<16x16x8xf32>
    %c14 = arith.constant 14 : index
    %c0_165 = arith.constant 0 : index
    %c0_166 = arith.constant 0 : index
    %171 = vector.load %arg4[%c14, %c0_165, %c0_166] : memref<27x8x8xf32, #tpu.memory_space<vmem>>, vector<1x8x8xf32>
    %172 = vector.shape_cast %171 : vector<1x8x8xf32> to vector<8x8xf32>
    %cst_167 = arith.constant dense<0.000000e+00> : vector<16x16x8xf32>
    %173 = tpu.matmul %170, %172, %cst_167 {dimension_numbers = #tpu.dot_dimension_numbers<[2], [0], [0, 1], [1], [0, 0, 0, 1, 1, 1], [], []>} : vector<16x16x8xf32>, vector<8x8xf32>, vector<16x16x8xf32> -> vector<16x16x8xf32>
    %174 = arith.addf %169, %173 : vector<16x16x8xf32>
    %c2_168 = arith.constant 2 : index
    %c0_169 = arith.constant 0 : index
    %c0_170 = arith.constant 0 : index
    %175 = vector.load %arg11[%c2_168, %c0_169, %c0_170] : memref<18x18x8xf32, #tpu.memory_space<vmem>>, vector<16x16x8xf32>
    %c15 = arith.constant 15 : index
    %c0_171 = arith.constant 0 : index
    %c0_172 = arith.constant 0 : index
    %176 = vector.load %arg4[%c15, %c0_171, %c0_172] : memref<27x8x8xf32, #tpu.memory_space<vmem>>, vector<1x8x8xf32>
    %177 = vector.shape_cast %176 : vector<1x8x8xf32> to vector<8x8xf32>
    %cst_173 = arith.constant dense<0.000000e+00> : vector<16x16x8xf32>
    %178 = tpu.matmul %175, %177, %cst_173 {dimension_numbers = #tpu.dot_dimension_numbers<[2], [0], [0, 1], [1], [0, 0, 0, 1, 1, 1], [], []>} : vector<16x16x8xf32>, vector<8x8xf32>, vector<16x16x8xf32> -> vector<16x16x8xf32>
    %179 = arith.addf %174, %178 : vector<16x16x8xf32>
    %c2_174 = arith.constant 2 : index
    %c1_175 = arith.constant 1 : index
    %c0_176 = arith.constant 0 : index
    %180 = vector.load %arg11[%c2_174, %c1_175, %c0_176] : memref<18x18x8xf32, #tpu.memory_space<vmem>>, vector<16x16x8xf32>
    %c16 = arith.constant 16 : index
    %c0_177 = arith.constant 0 : index
    %c0_178 = arith.constant 0 : index
    %181 = vector.load %arg4[%c16, %c0_177, %c0_178] : memref<27x8x8xf32, #tpu.memory_space<vmem>>, vector<1x8x8xf32>
    %182 = vector.shape_cast %181 : vector<1x8x8xf32> to vector<8x8xf32>
    %cst_179 = arith.constant dense<0.000000e+00> : vector<16x16x8xf32>
    %183 = tpu.matmul %180, %182, %cst_179 {dimension_numbers = #tpu.dot_dimension_numbers<[2], [0], [0, 1], [1], [0, 0, 0, 1, 1, 1], [], []>} : vector<16x16x8xf32>, vector<8x8xf32>, vector<16x16x8xf32> -> vector<16x16x8xf32>
    %184 = arith.addf %179, %183 : vector<16x16x8xf32>
    %c2_180 = arith.constant 2 : index
    %c2_181 = arith.constant 2 : index
    %c0_182 = arith.constant 0 : index
    %185 = vector.load %arg11[%c2_180, %c2_181, %c0_182] : memref<18x18x8xf32, #tpu.memory_space<vmem>>, vector<16x16x8xf32>
    %c17 = arith.constant 17 : index
    %c0_183 = arith.constant 0 : index
    %c0_184 = arith.constant 0 : index
    %186 = vector.load %arg4[%c17, %c0_183, %c0_184] : memref<27x8x8xf32, #tpu.memory_space<vmem>>, vector<1x8x8xf32>
    %187 = vector.shape_cast %186 : vector<1x8x8xf32> to vector<8x8xf32>
    %cst_185 = arith.constant dense<0.000000e+00> : vector<16x16x8xf32>
    %188 = tpu.matmul %185, %187, %cst_185 {dimension_numbers = #tpu.dot_dimension_numbers<[2], [0], [0, 1], [1], [0, 0, 0, 1, 1, 1], [], []>} : vector<16x16x8xf32>, vector<8x8xf32>, vector<16x16x8xf32> -> vector<16x16x8xf32>
    %189 = arith.addf %184, %188 : vector<16x16x8xf32>
    %c1_186 = arith.constant 1 : index
    %c0_187 = arith.constant 0 : index
    %190 = vector.load %arg5[%c1_186, %c0_187] : memref<3x8xf32, #tpu.memory_space<vmem>>, vector<1x8xf32>
    %191 = vector.shape_cast %190 : vector<1x8xf32> to vector<8xf32>
    %192 = vector.shape_cast %191 : vector<8xf32> to vector<1x1x8xf32>
    %193 = vector.broadcast %192 : vector<1x1x8xf32> to vector<16x16x8xf32>
    %194 = arith.addf %189, %193 : vector<16x16x8xf32>
    %cst_188 = arith.constant 0.000000e+00 : f32
    %195 = vector.broadcast %cst_188 : f32 to vector<16x16x8xf32>
    %196 = arith.maximumf %194, %195 : vector<16x16x8xf32>
    %c1_189 = arith.constant 1 : index
    %c1_190 = arith.constant 1 : index
    %c0_191 = arith.constant 0 : index
    %197 = vector.load %arg10[%c1_189, %c1_190, %c0_191] : memref<18x18x8xf32, #tpu.memory_space<vmem>>, vector<16x16x8xf32>
    tpu.vector_store %arg10[%c1_189, %c1_190, %c0_191], %196 {strides = array<i32>} : memref<18x18x8xf32, #tpu.memory_space<vmem>>, vector<16x16x8xf32>,
    %cst_192 = arith.constant 0.000000e+00 : f32
    %198 = vector.broadcast %cst_192 : f32 to vector<16x16x8xf32>
    %c0_193 = arith.constant 0 : index
    %c0_194 = arith.constant 0 : index
    %c0_195 = arith.constant 0 : index
    %199 = vector.load %arg10[%c0_193, %c0_194, %c0_195] : memref<18x18x8xf32, #tpu.memory_space<vmem>>, vector<16x16x8xf32>
    %c18 = arith.constant 18 : index
    %c0_196 = arith.constant 0 : index
    %c0_197 = arith.constant 0 : index
    %200 = vector.load %arg4[%c18, %c0_196, %c0_197] : memref<27x8x8xf32, #tpu.memory_space<vmem>>, vector<1x8x8xf32>
    %201 = vector.shape_cast %200 : vector<1x8x8xf32> to vector<8x8xf32>
    %cst_198 = arith.constant dense<0.000000e+00> : vector<16x16x8xf32>
    %202 = tpu.matmul %199, %201, %cst_198 {dimension_numbers = #tpu.dot_dimension_numbers<[2], [0], [0, 1], [1], [0, 0, 0, 1, 1, 1], [], []>} : vector<16x16x8xf32>, vector<8x8xf32>, vector<16x16x8xf32> -> vector<16x16x8xf32>
    %203 = arith.addf %198, %202 : vector<16x16x8xf32>
    %c0_199 = arith.constant 0 : index
    %c1_200 = arith.constant 1 : index
    %c0_201 = arith.constant 0 : index
    %204 = vector.load %arg10[%c0_199, %c1_200, %c0_201] : memref<18x18x8xf32, #tpu.memory_space<vmem>>, vector<16x16x8xf32>
    %c19 = arith.constant 19 : index
    %c0_202 = arith.constant 0 : index
    %c0_203 = arith.constant 0 : index
    %205 = vector.load %arg4[%c19, %c0_202, %c0_203] : memref<27x8x8xf32, #tpu.memory_space<vmem>>, vector<1x8x8xf32>
    %206 = vector.shape_cast %205 : vector<1x8x8xf32> to vector<8x8xf32>
    %cst_204 = arith.constant dense<0.000000e+00> : vector<16x16x8xf32>
    %207 = tpu.matmul %204, %206, %cst_204 {dimension_numbers = #tpu.dot_dimension_numbers<[2], [0], [0, 1], [1], [0, 0, 0, 1, 1, 1], [], []>} : vector<16x16x8xf32>, vector<8x8xf32>, vector<16x16x8xf32> -> vector<16x16x8xf32>
    %208 = arith.addf %203, %207 : vector<16x16x8xf32>
    %c0_205 = arith.constant 0 : index
    %c2_206 = arith.constant 2 : index
    %c0_207 = arith.constant 0 : index
    %209 = vector.load %arg10[%c0_205, %c2_206, %c0_207] : memref<18x18x8xf32, #tpu.memory_space<vmem>>, vector<16x16x8xf32>
    %c20 = arith.constant 20 : index
    %c0_208 = arith.constant 0 : index
    %c0_209 = arith.constant 0 : index
    %210 = vector.load %arg4[%c20, %c0_208, %c0_209] : memref<27x8x8xf32, #tpu.memory_space<vmem>>, vector<1x8x8xf32>
    %211 = vector.shape_cast %210 : vector<1x8x8xf32> to vector<8x8xf32>
    %cst_210 = arith.constant dense<0.000000e+00> : vector<16x16x8xf32>
    %212 = tpu.matmul %209, %211, %cst_210 {dimension_numbers = #tpu.dot_dimension_numbers<[2], [0], [0, 1], [1], [0, 0, 0, 1, 1, 1], [], []>} : vector<16x16x8xf32>, vector<8x8xf32>, vector<16x16x8xf32> -> vector<16x16x8xf32>
    %213 = arith.addf %208, %212 : vector<16x16x8xf32>
    %c1_211 = arith.constant 1 : index
    %c0_212 = arith.constant 0 : index
    %c0_213 = arith.constant 0 : index
    %214 = vector.load %arg10[%c1_211, %c0_212, %c0_213] : memref<18x18x8xf32, #tpu.memory_space<vmem>>, vector<16x16x8xf32>
    %c21 = arith.constant 21 : index
    %c0_214 = arith.constant 0 : index
    %c0_215 = arith.constant 0 : index
    %215 = vector.load %arg4[%c21, %c0_214, %c0_215] : memref<27x8x8xf32, #tpu.memory_space<vmem>>, vector<1x8x8xf32>
    %216 = vector.shape_cast %215 : vector<1x8x8xf32> to vector<8x8xf32>
    %cst_216 = arith.constant dense<0.000000e+00> : vector<16x16x8xf32>
    %217 = tpu.matmul %214, %216, %cst_216 {dimension_numbers = #tpu.dot_dimension_numbers<[2], [0], [0, 1], [1], [0, 0, 0, 1, 1, 1], [], []>} : vector<16x16x8xf32>, vector<8x8xf32>, vector<16x16x8xf32> -> vector<16x16x8xf32>
    %218 = arith.addf %213, %217 : vector<16x16x8xf32>
    %c1_217 = arith.constant 1 : index
    %c1_218 = arith.constant 1 : index
    %c0_219 = arith.constant 0 : index
    %219 = vector.load %arg10[%c1_217, %c1_218, %c0_219] : memref<18x18x8xf32, #tpu.memory_space<vmem>>, vector<16x16x8xf32>
    %c22 = arith.constant 22 : index
    %c0_220 = arith.constant 0 : index
    %c0_221 = arith.constant 0 : index
    %220 = vector.load %arg4[%c22, %c0_220, %c0_221] : memref<27x8x8xf32, #tpu.memory_space<vmem>>, vector<1x8x8xf32>
    %221 = vector.shape_cast %220 : vector<1x8x8xf32> to vector<8x8xf32>
    %cst_222 = arith.constant dense<0.000000e+00> : vector<16x16x8xf32>
    %222 = tpu.matmul %219, %221, %cst_222 {dimension_numbers = #tpu.dot_dimension_numbers<[2], [0], [0, 1], [1], [0, 0, 0, 1, 1, 1], [], []>} : vector<16x16x8xf32>, vector<8x8xf32>, vector<16x16x8xf32> -> vector<16x16x8xf32>
    %223 = arith.addf %218, %222 : vector<16x16x8xf32>
    %c1_223 = arith.constant 1 : index
    %c2_224 = arith.constant 2 : index
    %c0_225 = arith.constant 0 : index
    %224 = vector.load %arg10[%c1_223, %c2_224, %c0_225] : memref<18x18x8xf32, #tpu.memory_space<vmem>>, vector<16x16x8xf32>
    %c23 = arith.constant 23 : index
    %c0_226 = arith.constant 0 : index
    %c0_227 = arith.constant 0 : index
    %225 = vector.load %arg4[%c23, %c0_226, %c0_227] : memref<27x8x8xf32, #tpu.memory_space<vmem>>, vector<1x8x8xf32>
    %226 = vector.shape_cast %225 : vector<1x8x8xf32> to vector<8x8xf32>
    %cst_228 = arith.constant dense<0.000000e+00> : vector<16x16x8xf32>
    %227 = tpu.matmul %224, %226, %cst_228 {dimension_numbers = #tpu.dot_dimension_numbers<[2], [0], [0, 1], [1], [0, 0, 0, 1, 1, 1], [], []>} : vector<16x16x8xf32>, vector<8x8xf32>, vector<16x16x8xf32> -> vector<16x16x8xf32>
    %228 = arith.addf %223, %227 : vector<16x16x8xf32>
    %c2_229 = arith.constant 2 : index
    %c0_230 = arith.constant 0 : index
    %c0_231 = arith.constant 0 : index
    %229 = vector.load %arg10[%c2_229, %c0_230, %c0_231] : memref<18x18x8xf32, #tpu.memory_space<vmem>>, vector<16x16x8xf32>
    %c24 = arith.constant 24 : index
    %c0_232 = arith.constant 0 : index
    %c0_233 = arith.constant 0 : index
    %230 = vector.load %arg4[%c24, %c0_232, %c0_233] : memref<27x8x8xf32, #tpu.memory_space<vmem>>, vector<1x8x8xf32>
    %231 = vector.shape_cast %230 : vector<1x8x8xf32> to vector<8x8xf32>
    %cst_234 = arith.constant dense<0.000000e+00> : vector<16x16x8xf32>
    %232 = tpu.matmul %229, %231, %cst_234 {dimension_numbers = #tpu.dot_dimension_numbers<[2], [0], [0, 1], [1], [0, 0, 0, 1, 1, 1], [], []>} : vector<16x16x8xf32>, vector<8x8xf32>, vector<16x16x8xf32> -> vector<16x16x8xf32>
    %233 = arith.addf %228, %232 : vector<16x16x8xf32>
    %c2_235 = arith.constant 2 : index
    %c1_236 = arith.constant 1 : index
    %c0_237 = arith.constant 0 : index
    %234 = vector.load %arg10[%c2_235, %c1_236, %c0_237] : memref<18x18x8xf32, #tpu.memory_space<vmem>>, vector<16x16x8xf32>
    %c25 = arith.constant 25 : index
    %c0_238 = arith.constant 0 : index
    %c0_239 = arith.constant 0 : index
    %235 = vector.load %arg4[%c25, %c0_238, %c0_239] : memref<27x8x8xf32, #tpu.memory_space<vmem>>, vector<1x8x8xf32>
    %236 = vector.shape_cast %235 : vector<1x8x8xf32> to vector<8x8xf32>
    %cst_240 = arith.constant dense<0.000000e+00> : vector<16x16x8xf32>
    %237 = tpu.matmul %234, %236, %cst_240 {dimension_numbers = #tpu.dot_dimension_numbers<[2], [0], [0, 1], [1], [0, 0, 0, 1, 1, 1], [], []>} : vector<16x16x8xf32>, vector<8x8xf32>, vector<16x16x8xf32> -> vector<16x16x8xf32>
    %238 = arith.addf %233, %237 : vector<16x16x8xf32>
    %c2_241 = arith.constant 2 : index
    %c2_242 = arith.constant 2 : index
    %c0_243 = arith.constant 0 : index
    %239 = vector.load %arg10[%c2_241, %c2_242, %c0_243] : memref<18x18x8xf32, #tpu.memory_space<vmem>>, vector<16x16x8xf32>
    %c26 = arith.constant 26 : index
    %c0_244 = arith.constant 0 : index
    %c0_245 = arith.constant 0 : index
    %240 = vector.load %arg4[%c26, %c0_244, %c0_245] : memref<27x8x8xf32, #tpu.memory_space<vmem>>, vector<1x8x8xf32>
    %241 = vector.shape_cast %240 : vector<1x8x8xf32> to vector<8x8xf32>
    %cst_246 = arith.constant dense<0.000000e+00> : vector<16x16x8xf32>
    %242 = tpu.matmul %239, %241, %cst_246 {dimension_numbers = #tpu.dot_dimension_numbers<[2], [0], [0, 1], [1], [0, 0, 0, 1, 1, 1], [], []>} : vector<16x16x8xf32>, vector<8x8xf32>, vector<16x16x8xf32> -> vector<16x16x8xf32>
    %243 = arith.addf %238, %242 : vector<16x16x8xf32>
    %c2_247 = arith.constant 2 : index
    %c0_248 = arith.constant 0 : index
    %244 = vector.load %arg5[%c2_247, %c0_248] : memref<3x8xf32, #tpu.memory_space<vmem>>, vector<1x8xf32>
    %245 = vector.shape_cast %244 : vector<1x8xf32> to vector<8xf32>
    %246 = vector.shape_cast %245 : vector<8xf32> to vector<1x1x8xf32>
    %247 = vector.broadcast %246 : vector<1x1x8xf32> to vector<16x16x8xf32>
    %248 = arith.addf %243, %247 : vector<16x16x8xf32>
    %cst_249 = arith.constant 0.000000e+00 : f32
    %249 = vector.broadcast %cst_249 : f32 to vector<16x16x8xf32>
    %250 = arith.maximumf %248, %249 : vector<16x16x8xf32>
    %c1_250 = arith.constant 1 : index
    %c1_251 = arith.constant 1 : index
    %c0_252 = arith.constant 0 : index
    %251 = vector.load %arg11[%c1_250, %c1_251, %c0_252] : memref<18x18x8xf32, #tpu.memory_space<vmem>>, vector<16x16x8xf32>
    tpu.vector_store %arg11[%c1_250, %c1_251, %c0_252], %250 {strides = array<i32>} : memref<18x18x8xf32, #tpu.memory_space<vmem>>, vector<16x16x8xf32>,
    %cst_253 = arith.constant 0.000000e+00 : f32
    %252 = vector.broadcast %cst_253 : f32 to vector<16x16x1xf32>
    %c0_254 = arith.constant 0 : index
    %c0_255 = arith.constant 0 : index
    %c0_256 = arith.constant 0 : index
    %253 = vector.load %arg11[%c0_254, %c0_255, %c0_256] : memref<18x18x8xf32, #tpu.memory_space<vmem>>, vector<16x16x8xf32>
    %c0_257 = arith.constant 0 : index
    %c0_258 = arith.constant 0 : index
    %c0_259 = arith.constant 0 : index
    %254 = vector.load %arg6[%c0_257, %c0_258, %c0_259] : memref<9x8x1xf32, #tpu.memory_space<vmem>>, vector<1x8x1xf32>
    %255 = vector.shape_cast %254 : vector<1x8x1xf32> to vector<8x1xf32>
    %cst_260 = arith.constant dense<0.000000e+00> : vector<16x16x1xf32>
    %256 = tpu.matmul %253, %255, %cst_260 {dimension_numbers = #tpu.dot_dimension_numbers<[2], [0], [0, 1], [1], [0, 0, 0, 1, 1, 1], [], []>} : vector<16x16x8xf32>, vector<8x1xf32>, vector<16x16x1xf32> -> vector<16x16x1xf32>
    %257 = arith.addf %252, %256 : vector<16x16x1xf32>
    %c0_261 = arith.constant 0 : index
    %c1_262 = arith.constant 1 : index
    %c0_263 = arith.constant 0 : index
    %258 = vector.load %arg11[%c0_261, %c1_262, %c0_263] : memref<18x18x8xf32, #tpu.memory_space<vmem>>, vector<16x16x8xf32>
    %c1_264 = arith.constant 1 : index
    %c0_265 = arith.constant 0 : index
    %c0_266 = arith.constant 0 : index
    %259 = vector.load %arg6[%c1_264, %c0_265, %c0_266] : memref<9x8x1xf32, #tpu.memory_space<vmem>>, vector<1x8x1xf32>
    %260 = vector.shape_cast %259 : vector<1x8x1xf32> to vector<8x1xf32>
    %cst_267 = arith.constant dense<0.000000e+00> : vector<16x16x1xf32>
    %261 = tpu.matmul %258, %260, %cst_267 {dimension_numbers = #tpu.dot_dimension_numbers<[2], [0], [0, 1], [1], [0, 0, 0, 1, 1, 1], [], []>} : vector<16x16x8xf32>, vector<8x1xf32>, vector<16x16x1xf32> -> vector<16x16x1xf32>
    %262 = arith.addf %257, %261 : vector<16x16x1xf32>
    %c0_268 = arith.constant 0 : index
    %c2_269 = arith.constant 2 : index
    %c0_270 = arith.constant 0 : index
    %263 = vector.load %arg11[%c0_268, %c2_269, %c0_270] : memref<18x18x8xf32, #tpu.memory_space<vmem>>, vector<16x16x8xf32>
    %c2_271 = arith.constant 2 : index
    %c0_272 = arith.constant 0 : index
    %c0_273 = arith.constant 0 : index
    %264 = vector.load %arg6[%c2_271, %c0_272, %c0_273] : memref<9x8x1xf32, #tpu.memory_space<vmem>>, vector<1x8x1xf32>
    %265 = vector.shape_cast %264 : vector<1x8x1xf32> to vector<8x1xf32>
    %cst_274 = arith.constant dense<0.000000e+00> : vector<16x16x1xf32>
    %266 = tpu.matmul %263, %265, %cst_274 {dimension_numbers = #tpu.dot_dimension_numbers<[2], [0], [0, 1], [1], [0, 0, 0, 1, 1, 1], [], []>} : vector<16x16x8xf32>, vector<8x1xf32>, vector<16x16x1xf32> -> vector<16x16x1xf32>
    %267 = arith.addf %262, %266 : vector<16x16x1xf32>
    %c1_275 = arith.constant 1 : index
    %c0_276 = arith.constant 0 : index
    %c0_277 = arith.constant 0 : index
    %268 = vector.load %arg11[%c1_275, %c0_276, %c0_277] : memref<18x18x8xf32, #tpu.memory_space<vmem>>, vector<16x16x8xf32>
    %c3_278 = arith.constant 3 : index
    %c0_279 = arith.constant 0 : index
    %c0_280 = arith.constant 0 : index
    %269 = vector.load %arg6[%c3_278, %c0_279, %c0_280] : memref<9x8x1xf32, #tpu.memory_space<vmem>>, vector<1x8x1xf32>
    %270 = vector.shape_cast %269 : vector<1x8x1xf32> to vector<8x1xf32>
    %cst_281 = arith.constant dense<0.000000e+00> : vector<16x16x1xf32>
    %271 = tpu.matmul %268, %270, %cst_281 {dimension_numbers = #tpu.dot_dimension_numbers<[2], [0], [0, 1], [1], [0, 0, 0, 1, 1, 1], [], []>} : vector<16x16x8xf32>, vector<8x1xf32>, vector<16x16x1xf32> -> vector<16x16x1xf32>
    %272 = arith.addf %267, %271 : vector<16x16x1xf32>
    %c1_282 = arith.constant 1 : index
    %c1_283 = arith.constant 1 : index
    %c0_284 = arith.constant 0 : index
    %273 = vector.load %arg11[%c1_282, %c1_283, %c0_284] : memref<18x18x8xf32, #tpu.memory_space<vmem>>, vector<16x16x8xf32>
    %c4_285 = arith.constant 4 : index
    %c0_286 = arith.constant 0 : index
    %c0_287 = arith.constant 0 : index
    %274 = vector.load %arg6[%c4_285, %c0_286, %c0_287] : memref<9x8x1xf32, #tpu.memory_space<vmem>>, vector<1x8x1xf32>
    %275 = vector.shape_cast %274 : vector<1x8x1xf32> to vector<8x1xf32>
    %cst_288 = arith.constant dense<0.000000e+00> : vector<16x16x1xf32>
    %276 = tpu.matmul %273, %275, %cst_288 {dimension_numbers = #tpu.dot_dimension_numbers<[2], [0], [0, 1], [1], [0, 0, 0, 1, 1, 1], [], []>} : vector<16x16x8xf32>, vector<8x1xf32>, vector<16x16x1xf32> -> vector<16x16x1xf32>
    %277 = arith.addf %272, %276 : vector<16x16x1xf32>
    %c1_289 = arith.constant 1 : index
    %c2_290 = arith.constant 2 : index
    %c0_291 = arith.constant 0 : index
    %278 = vector.load %arg11[%c1_289, %c2_290, %c0_291] : memref<18x18x8xf32, #tpu.memory_space<vmem>>, vector<16x16x8xf32>
    %c5_292 = arith.constant 5 : index
    %c0_293 = arith.constant 0 : index
    %c0_294 = arith.constant 0 : index
    %279 = vector.load %arg6[%c5_292, %c0_293, %c0_294] : memref<9x8x1xf32, #tpu.memory_space<vmem>>, vector<1x8x1xf32>
    %280 = vector.shape_cast %279 : vector<1x8x1xf32> to vector<8x1xf32>
    %cst_295 = arith.constant dense<0.000000e+00> : vector<16x16x1xf32>
    %281 = tpu.matmul %278, %280, %cst_295 {dimension_numbers = #tpu.dot_dimension_numbers<[2], [0], [0, 1], [1], [0, 0, 0, 1, 1, 1], [], []>} : vector<16x16x8xf32>, vector<8x1xf32>, vector<16x16x1xf32> -> vector<16x16x1xf32>
    %282 = arith.addf %277, %281 : vector<16x16x1xf32>
    %c2_296 = arith.constant 2 : index
    %c0_297 = arith.constant 0 : index
    %c0_298 = arith.constant 0 : index
    %283 = vector.load %arg11[%c2_296, %c0_297, %c0_298] : memref<18x18x8xf32, #tpu.memory_space<vmem>>, vector<16x16x8xf32>
    %c6_299 = arith.constant 6 : index
    %c0_300 = arith.constant 0 : index
    %c0_301 = arith.constant 0 : index
    %284 = vector.load %arg6[%c6_299, %c0_300, %c0_301] : memref<9x8x1xf32, #tpu.memory_space<vmem>>, vector<1x8x1xf32>
    %285 = vector.shape_cast %284 : vector<1x8x1xf32> to vector<8x1xf32>
    %cst_302 = arith.constant dense<0.000000e+00> : vector<16x16x1xf32>
    %286 = tpu.matmul %283, %285, %cst_302 {dimension_numbers = #tpu.dot_dimension_numbers<[2], [0], [0, 1], [1], [0, 0, 0, 1, 1, 1], [], []>} : vector<16x16x8xf32>, vector<8x1xf32>, vector<16x16x1xf32> -> vector<16x16x1xf32>
    %287 = arith.addf %282, %286 : vector<16x16x1xf32>
    %c2_303 = arith.constant 2 : index
    %c1_304 = arith.constant 1 : index
    %c0_305 = arith.constant 0 : index
    %288 = vector.load %arg11[%c2_303, %c1_304, %c0_305] : memref<18x18x8xf32, #tpu.memory_space<vmem>>, vector<16x16x8xf32>
    %c7_306 = arith.constant 7 : index
    %c0_307 = arith.constant 0 : index
    %c0_308 = arith.constant 0 : index
    %289 = vector.load %arg6[%c7_306, %c0_307, %c0_308] : memref<9x8x1xf32, #tpu.memory_space<vmem>>, vector<1x8x1xf32>
    %290 = vector.shape_cast %289 : vector<1x8x1xf32> to vector<8x1xf32>
    %cst_309 = arith.constant dense<0.000000e+00> : vector<16x16x1xf32>
    %291 = tpu.matmul %288, %290, %cst_309 {dimension_numbers = #tpu.dot_dimension_numbers<[2], [0], [0, 1], [1], [0, 0, 0, 1, 1, 1], [], []>} : vector<16x16x8xf32>, vector<8x1xf32>, vector<16x16x1xf32> -> vector<16x16x1xf32>
    %292 = arith.addf %287, %291 : vector<16x16x1xf32>
    %c2_310 = arith.constant 2 : index
    %c2_311 = arith.constant 2 : index
    %c0_312 = arith.constant 0 : index
    %293 = vector.load %arg11[%c2_310, %c2_311, %c0_312] : memref<18x18x8xf32, #tpu.memory_space<vmem>>, vector<16x16x8xf32>
    %c8_313 = arith.constant 8 : index
    %c0_314 = arith.constant 0 : index
    %c0_315 = arith.constant 0 : index
    %294 = vector.load %arg6[%c8_313, %c0_314, %c0_315] : memref<9x8x1xf32, #tpu.memory_space<vmem>>, vector<1x8x1xf32>
    %295 = vector.shape_cast %294 : vector<1x8x1xf32> to vector<8x1xf32>
    %cst_316 = arith.constant dense<0.000000e+00> : vector<16x16x1xf32>
    %296 = tpu.matmul %293, %295, %cst_316 {dimension_numbers = #tpu.dot_dimension_numbers<[2], [0], [0, 1], [1], [0, 0, 0, 1, 1, 1], [], []>} : vector<16x16x8xf32>, vector<8x1xf32>, vector<16x16x1xf32> -> vector<16x16x1xf32>
    %297 = arith.addf %292, %296 : vector<16x16x1xf32>
    %c0_317 = arith.constant 0 : index
    %c0_318 = arith.constant 0 : index
    %c0_319 = arith.constant 0 : index
    %298 = vector.load %arg7[%c0_317, %c0_318, %c0_319] : memref<1x1x1xf32, #tpu.memory_space<vmem>>, vector<1x1x1xf32>
    %299 = vector.broadcast %298 : vector<1x1x1xf32> to vector<16x16x1xf32>
    %300 = arith.addf %297, %299 : vector<16x16x1xf32>
    %301 = arith.subf %7, %300 : vector<16x16x1xf32>
    %c0_320 = arith.constant 0 : index
    %c0_321 = arith.constant 0 : index
    %c0_322 = arith.constant 0 : index
    %c0_323 = arith.constant 0 : index
    %302 = vector.load %arg8[%c0_320, %c0_321, %c0_322, %c0_323] : memref<1x16x16x1xf32, #tpu.memory_space<vmem>>, vector<1x16x16x1xf32>
    %303 = vector.shape_cast %302 : vector<1x16x16x1xf32> to vector<16x16x1xf32>
    %304 = vector.shape_cast %301 : vector<16x16x1xf32> to vector<1x16x16x1xf32>
    tpu.vector_store %arg8[%c0_320, %c0_321, %c0_322, %c0_323], %304 {strides = array<i32>} : memref<1x16x16x1xf32, #tpu.memory_space<vmem>>, vector<1x16x16x1xf32>,
    return
  }
  func.func @transform_0(%arg0: i32) -> (i32, i32, i32, i32) {
    %c0_i32 = arith.constant 0 : i32
    %c0_i32_0 = arith.constant 0 : i32
    %c0_i32_1 = arith.constant 0 : i32
    %c0_i32_2 = arith.constant 0 : i32
    return %arg0, %c0_i32, %c0_i32_0, %c0_i32_1 : i32, i32, i32, i32
  }
  func.func @transform_1(%arg0: i32) -> (i32, i32) {
    %c0_i32 = arith.constant 0 : i32
    %c0_i32_0 = arith.constant 0 : i32
    %c0_i32_1 = arith.constant 0 : i32
    return %c0_i32, %c0_i32_0 : i32, i32
  }
  func.func @transform_2(%arg0: i32) -> (i32, i32) {
    %c0_i32 = arith.constant 0 : i32
    %c0_i32_0 = arith.constant 0 : i32
    %c0_i32_1 = arith.constant 0 : i32
    return %c0_i32, %c0_i32_0 : i32, i32
  }
  func.func @transform_3(%arg0: i32) -> (i32, i32, i32) {
    %c0_i32 = arith.constant 0 : i32
    %c0_i32_0 = arith.constant 0 : i32
    %c0_i32_1 = arith.constant 0 : i32
    %c0_i32_2 = arith.constant 0 : i32
    return %c0_i32, %c0_i32_0, %c0_i32_1 : i32, i32, i32
  }
  func.func @transform_4(%arg0: i32) -> (i32, i32) {
    %c0_i32 = arith.constant 0 : i32
    %c0_i32_0 = arith.constant 0 : i32
    %c0_i32_1 = arith.constant 0 : i32
    return %c0_i32, %c0_i32_0 : i32, i32
  }
  func.func @transform_5(%arg0: i32) -> (i32, i32, i32) {
    %c0_i32 = arith.constant 0 : i32
    %c0_i32_0 = arith.constant 0 : i32
    %c0_i32_1 = arith.constant 0 : i32
    %c0_i32_2 = arith.constant 0 : i32
    return %c0_i32, %c0_i32_0, %c0_i32_1 : i32, i32, i32
  }
  func.func @transform_6(%arg0: i32) -> (i32, i32, i32) {
    %c0_i32 = arith.constant 0 : i32
    %c0_i32_0 = arith.constant 0 : i32
    %c0_i32_1 = arith.constant 0 : i32
    %c0_i32_2 = arith.constant 0 : i32
    return %c0_i32, %c0_i32_0, %c0_i32_1 : i32, i32, i32
  }
  func.func @transform_7(%arg0: i32) -> (i32, i32, i32, i32) {
    %c0_i32 = arith.constant 0 : i32
    %c0_i32_0 = arith.constant 0 : i32
    %c0_i32_1 = arith.constant 0 : i32
    %c0_i32_2 = arith.constant 0 : i32
    return %arg0, %c0_i32, %c0_i32_0, %c0_i32_1 : i32, i32, i32, i32
  }
}

</mosaic_0001>

<llo_original>
// kernel: dncnn_forward.1
$region0: #{dncnn_forward.1}
  #allocation0 [shape = 'u32[]', space=smem, size = 0x4, offset = 0x4, fixed_abs, tag = 'smem constant byte address 0x4 - core index']
  #allocation1 [shape = 'u32[72,128]{1,0:T(1,128)}', space=vmem, size = 0x9000, scoped, tag = 'internal scratch']
  #allocation2 [shape = 'f32[18,18,1]{2,1,0:T(8,128)}', space=vmem, size = 0x36000, scoped, tag = 'scratch operand']
  #allocation3 [shape = 'f32[18,18,8]{2,1,0:T(8,128)}', space=vmem, size = 0x36000, scoped, tag = 'scratch operand']
  #allocation4 [shape = 'f32[18,18,8]{2,1,0:T(8,128)}', space=vmem, size = 0x36000, scoped, tag = 'scratch operand']
  #allocation5 [shape = 'f32[1,1,1]{2,1,0:T(1,128)S(1)}', space=vmem, size = 0x200, scoped, tag = 'scoped memory for dncnn_forward.1']
  %s0 = inlined_call_operand.vmem [shape: f32[2,16,16,1], index: 0, kind: input, shape index: {}]
  %s1 = inlined_call_operand.vmem [shape: f32[9,8], index: 1, kind: input, shape index: {}]
  %s2 = inlined_call_operand.vmem [shape: f32[1,8], index: 2, kind: input, shape index: {}]
  %s3 = inlined_call_operand.vmem [shape: f32[27,8,8], index: 3, kind: input, shape index: {}]
  %s4 = inlined_call_operand.vmem [shape: f32[3,8], index: 4, kind: input, shape index: {}]
  %s5 = inlined_call_operand.vmem [shape: f32[9,8,1], index: 5, kind: input, shape index: {}]
  %s6 = inlined_call_operand.<no memory space> [shape: f32[1,1,1], index: 6, kind: input, shape index: {}]
  %s7 = inlined_call_operand.vmem [shape: f32[2,16,16,1], index: 7, kind: output, shape index: {}]
  %s8 = sld [smem:[#allocation0]]
  $region61: #{dncnn_forward.1} parent=0
    _
  %s10 = ssub.s32 1, %s8
  %s11 = scalar_select 0, %s10, %s8
  %v12 = vstv %s6
  %13 = vst [vmem:[#allocation5] sm:$0x1] %v12
  loop: start=0, step=1, limit=4
  $region2: #{dncnn_forward.1} parent=0 // loop_pre_header
    _
  $region3: #{dncnn_forward.1} parent=0 // loop_header
    %s15 = sphi 0, %s19
    %p16 = scmp.ge.s32.totalorder %s15, 4
    %s25 = sphi 0, %s27
    %s28 = sphi 0, %s25
    %s29 = sphi 0, %s28
    %s45 = sphi 0, %s29
    %s49 = sphi 0, %s49
    %s51 = sphi 0, %s49
    %s52 = sphi 0, %s51
    %s66 = sphi 0, %s52
    %s70 = sphi 0, %s70
    %s72 = sphi 0, %s70
    %s73 = sphi 0, %s72
    %s87 = sphi 0, %s73
    %s91 = sphi 0, %s91
    %s93 = sphi 0, %s91
    %s94 = sphi 0, %s93
    %s108 = sphi 0, %s94
    %s112 = sphi 0, %s112
    %s114 = sphi 0, %s112
    %s115 = sphi 0, %s114
    %s129 = sphi 0, %s115
    %s133 = sphi 0, %s133
    %s135 = sphi 0, %s133
    %s136 = sphi 0, %s135
    %s150 = sphi 0, %s136
    %s154 = sphi 0, %s154
    %s156 = sphi 0, %s154
    %s157 = sphi 0, %s156
    %s171 = sphi 0, %s157
    %s177 = sphi 0, %s179
    %s180 = sphi 0, %s177
    %s181 = sphi 0, %s180
    %s197 = sphi 0, %s181
  $region4: #{dncnn_forward.1} parent=0 // loop_header_branch
    %18 = sbr.rel (%p16) target = $region8
  $region5: #{dncnn_forward.1} parent=0 // loop_body
    %s20 = ssub.s32 %s15, 1
    %s21 = ssub.s32 %s15, 2
    %s22 = sadd.s32 %s15, 1
    %s23 = ssub.s32 %s15, %s22
    %p24 = scmp.eq.s32.totalorder %s23, 0
    %s26 = sadd.s32 %s25, 1
    %s27 = scalar_select %p24, %s25, %s26
    %p30 = pneg %p24
    %p31 = scmp.eq.s32.totalorder %s15, 1
    %p32 = por %p30, %p31
    %p33 = scmp.ne.s32.totalorder %s25, %s28
    %p34 = scmp.eq.s32.totalorder %s15, 0
    %p35 = por %p33, %p34
    %p36 = scmp.ne.s32.totalorder %s25, %s28
    %p37 = scmp.eq.s32.totalorder %s20, 1
    %p38 = por %p36, %p37
    %p39 = scmp.ne.s32.totalorder %s28, %s29
    %p40 = scmp.eq.s32.totalorder %s20, 0
    %p41 = por %p39, %p40
    %p42 = scmp.ne.s32.totalorder %s28, %s29
    %p43 = scmp.eq.s32.totalorder %s21, 1
    %p44 = por %p42, %p43
    %p46 = scmp.ne.s32.totalorder %s29, %s45
    %p47 = scmp.eq.s32.totalorder %s21, 0
    %p48 = por %p46, %p47
    %s50 = sadd.s32 %s49, 1
    %p53 = scmp.eq.s32.totalorder %s15, 1
    %p54 = scmp.ne.s32.totalorder %s49, %s51
    %p55 = scmp.eq.s32.totalorder %s15, 0
    %p56 = por %p54, %p55
    %p57 = scmp.ne.s32.totalorder %s49, %s51
    %p58 = scmp.eq.s32.totalorder %s20, 1
    %p59 = por %p57, %p58
    %p60 = scmp.ne.s32.totalorder %s51, %s52
    %p61 = scmp.eq.s32.totalorder %s20, 0
    %p62 = por %p60, %p61
    %p63 = scmp.ne.s32.totalorder %s51, %s52
    %p64 = scmp.eq.s32.totalorder %s21, 1
    %p65 = por %p63, %p64
    %p67 = scmp.ne.s32.totalorder %s52, %s66
    %p68 = scmp.eq.s32.totalorder %s21, 0
    %p69 = por %p67, %p68
    %s71 = sadd.s32 %s70, 1
    %p74 = scmp.eq.s32.totalorder %s15, 1
    %p75 = scmp.ne.s32.totalorder %s70, %s72
    %p76 = scmp.eq.s32.totalorder %s15, 0
    %p77 = por %p75, %p76
    %p78 = scmp.ne.s32.totalorder %s70, %s72
    %p79 = scmp.eq.s32.totalorder %s20, 1
    %p80 = por %p78, %p79
    %p81 = scmp.ne.s32.totalorder %s72, %s73
    %p82 = scmp.eq.s32.totalorder %s20, 0
    %p83 = por %p81, %p82
    %p84 = scmp.ne.s32.totalorder %s72, %s73
    %p85 = scmp.eq.s32.totalorder %s21, 1
    %p86 = por %p84, %p85
    %p88 = scmp.ne.s32.totalorder %s73, %s87
    %p89 = scmp.eq.s32.totalorder %s21, 0
    %p90 = por %p88, %p89
    %s92 = sadd.s32 %s91, 1
    %p95 = scmp.eq.s32.totalorder %s15, 1
    %p96 = scmp.ne.s32.totalorder %s91, %s93
    %p97 = scmp.eq.s32.totalorder %s15, 0
    %p98 = por %p96, %p97
    %p99 = scmp.ne.s32.totalorder %s91, %s93
    %p100 = scmp.eq.s32.totalorder %s20, 1
    %p101 = por %p99, %p100
    %p102 = scmp.ne.s32.totalorder %s93, %s94
    %p103 = scmp.eq.s32.totalorder %s20, 0
    %p104 = por %p102, %p103
    %p105 = scmp.ne.s32.totalorder %s93, %s94
    %p106 = scmp.eq.s32.totalorder %s21, 1
    %p107 = por %p105, %p106
    %p109 = scmp.ne.s32.totalorder %s94, %s108
    %p110 = scmp.eq.s32.totalorder %s21, 0
    %p111 = por %p109, %p110
    %s113 = sadd.s32 %s112, 1
    %p116 = scmp.eq.s32.totalorder %s15, 1
    %p117 = scmp.ne.s32.totalorder %s112, %s114
    %p118 = scmp.eq.s32.totalorder %s15, 0
    %p119 = por %p117, %p118
    %p120 = scmp.ne.s32.totalorder %s112, %s114
    %p121 = scmp.eq.s32.totalorder %s20, 1
    %p122 = por %p120, %p121
    %p123 = scmp.ne.s32.totalorder %s114, %s115
    %p124 = scmp.eq.s32.totalorder %s20, 0
    %p125 = por %p123, %p124
    %p126 = scmp.ne.s32.totalorder %s114, %s115
    %p127 = scmp.eq.s32.totalorder %s21, 1
    %p128 = por %p126, %p127
    %p130 = scmp.ne.s32.totalorder %s115, %s129
    %p131 = scmp.eq.s32.totalorder %s21, 0
    %p132 = por %p130, %p131
    %s134 = sadd.s32 %s133, 1
    %p137 = scmp.eq.s32.totalorder %s15, 1
    %p138 = scmp.ne.s32.totalorder %s133, %s135
    %p139 = scmp.eq.s32.totalorder %s15, 0
    %p140 = por %p138, %p139
    %p141 = scmp.ne.s32.totalorder %s133, %s135
    %p142 = scmp.eq.s32.totalorder %s20, 1
    %p143 = por %p141, %p142
    %p144 = scmp.ne.s32.totalorder %s135, %s136
    %p145 = scmp.eq.s32.totalorder %s20, 0
    %p146 = por %p144, %p145
    %p147 = scmp.ne.s32.totalorder %s135, %s136
    %p148 = scmp.eq.s32.totalorder %s21, 1
    %p149 = por %p147, %p148
    %p151 = scmp.ne.s32.totalorder %s136, %s150
    %p152 = scmp.eq.s32.totalorder %s21, 0
    %p153 = por %p151, %p152
    %s155 = sadd.s32 %s154, 1
    %p158 = scmp.eq.s32.totalorder %s15, 1
    %p159 = scmp.ne.s32.totalorder %s154, %s156
    %p160 = scmp.eq.s32.totalorder %s15, 0
    %p161 = por %p159, %p160
    %p162 = scmp.ne.s32.totalorder %s154, %s156
    %p163 = scmp.eq.s32.totalorder %s20, 1
    %p164 = por %p162, %p163
    %p165 = scmp.ne.s32.totalorder %s156, %s157
    %p166 = scmp.eq.s32.totalorder %s20, 0
    %p167 = por %p165, %p166
    %p168 = scmp.ne.s32.totalorder %s156, %s157
    %p169 = scmp.eq.s32.totalorder %s21, 1
    %p170 = por %p168, %p169
    %p172 = scmp.ne.s32.totalorder %s157, %s171
    %p173 = scmp.eq.s32.totalorder %s21, 0
    %p174 = por %p172, %p173
    %s175 = ssub.s32 %s15, %s22
    %p176 = scmp.eq.s32.totalorder %s175, 0
    %s178 = sadd.s32 %s177, 1
    %s179 = scalar_select %p176, %s177, %s178
    %p182 = pneg %p176
    %p183 = scmp.eq.s32.totalorder %s15, 1
    %p184 = por %p182, %p183
    %p185 = scmp.ne.s32.totalorder %s177, %s180
    %p186 = scmp.eq.s32.totalorder %s15, 0
    %p187 = por %p185, %p186
    %p188 = scmp.ne.s32.totalorder %s177, %s180
    %p189 = scmp.eq.s32.totalorder %s20, 1
    %p190 = por %p188, %p189
    %p191 = scmp.ne.s32.totalorder %s180, %s181
    %p192 = scmp.eq.s32.totalorder %s20, 0
    %p193 = por %p191, %p192
    %p194 = scmp.ne.s32.totalorder %s180, %s181
    %p195 = scmp.eq.s32.totalorder %s21, 1
    %p196 = por %p194, %p195
    %p198 = scmp.ne.s32.totalorder %s181, %s197
    %p199 = scmp.eq.s32.totalorder %s21, 0
    %p200 = por %p198, %p199
    %p201 = scmp.le.s32.totalorder 1, %s15
    %p202 = scmp.lt.s32.totalorder %s15, 3
    %p203 = pnand %p201, %p202
    %p204 = pneg %p203
    // Predicated region
    $region9: #{dncnn_forward.1} parent=5 // pred_check
      _
    $region10: #{dncnn_forward.1} parent=5 // pred_check_branch
      %206 = sbr.rel (%p203) target = $region12
    $region11: #{dncnn_forward.1} parent=5 // pred_region
      %s207 = ssub.s32 %s15, 1
      // Predicated region
      $region13: #{dncnn_forward.1} parent=11 // pred_check
        %p208 = pneg %p62
      $region14: #{dncnn_forward.1} parent=11 // pred_check_branch
        %210 = sbr.rel (%p208) target = $region16
      $region15: #{dncnn_forward.1} parent=11 // pred_region
        _
      $region16: #{dncnn_forward.1} parent=11 // pred_fallthru
        _
      // Predicated region
      $region17: #{dncnn_forward.1} parent=11 // pred_check
        %p211 = pneg %p83
      $region18: #{dncnn_forward.1} parent=11 // pred_check_branch
        %213 = sbr.rel (%p211) target = $region20
      $region19: #{dncnn_forward.1} parent=11 // pred_region
        _
      $region20: #{dncnn_forward.1} parent=11 // pred_fallthru
        _
      // Predicated region
      $region21: #{dncnn_forward.1} parent=11 // pred_check
        %p214 = pneg %p104
      $region22: #{dncnn_forward.1} parent=11 // pred_check_branch
        %216 = sbr.rel (%p214) target = $region24
      $region23: #{dncnn_forward.1} parent=11 // pred_region
        _
      $region24: #{dncnn_forward.1} parent=11 // pred_fallthru
        _
      // Predicated region
      $region25: #{dncnn_forward.1} parent=11 // pred_check
        %p217 = pneg %p125
      $region26: #{dncnn_forward.1} parent=11 // pred_check_branch
        %219 = sbr.rel (%p217) target = $region28
      $region27: #{dncnn_forward.1} parent=11 // pred_region
        _
      $region28: #{dncnn_forward.1} parent=11 // pred_fallthru
        _
      // Predicated region
      $region29: #{dncnn_forward.1} parent=11 // pred_check
        %p220 = pneg %p146
      $region30: #{dncnn_forward.1} parent=11 // pred_check_branch
        %222 = sbr.rel (%p220) target = $region32
      $region31: #{dncnn_forward.1} parent=11 // pred_region
        _
      $region32: #{dncnn_forward.1} parent=11 // pred_fallthru
        _
      // Predicated region
      $region33: #{dncnn_forward.1} parent=11 // pred_check
        %p223 = pneg %p167
      $region34: #{dncnn_forward.1} parent=11 // pred_check_branch
        %225 = sbr.rel (%p223) target = $region36
      $region35: #{dncnn_forward.1} parent=11 // pred_region
        _
      $region36: #{dncnn_forward.1} parent=11 // pred_fallthru
        _
    $region12: #{dncnn_forward.1} parent=5 // pred_fallthru
      _
    %p226 = scmp.lt.s32.totalorder %s15, 2
    // Predicated region
    $region37: #{dncnn_forward.1} parent=5 // pred_check
      %p227 = pneg %p226
    $region38: #{dncnn_forward.1} parent=5 // pred_check_branch
      %229 = sbr.rel (%p227) target = $region40
    $region39: #{dncnn_forward.1} parent=5 // pred_region
      // Predicated region
      $region41: #{dncnn_forward.1} parent=39 // pred_check
        %p230 = pneg %p35
      $region42: #{dncnn_forward.1} parent=39 // pred_check_branch
        %232 = sbr.rel (%p230) target = $region44
      $region43: #{dncnn_forward.1} parent=39 // pred_region
        %p233 = scmp.lt.s32.totalorder %s15, 1
        %s234 = scalar_select %p233, %s15, 1
        %s235 = smul.addr %s234, 32
        %s236 = smul.addr %s235, 8
        %s237 = scalar_lea.vmem %s0, %s236
      $region44: #{dncnn_forward.1} parent=39 // pred_fallthru
        _
    $region40: #{dncnn_forward.1} parent=5 // pred_fallthru
      _
    %p238 = scmp.le.s32.totalorder 1, %s15
    %p239 = scmp.lt.s32.totalorder %s15, 3
    %p240 = pnand %p238, %p239
    %p241 = pneg %p240
    // Predicated region
    $region45: #{dncnn_forward.1} parent=5 // pred_check
      _
    $region46: #{dncnn_forward.1} parent=5 // pred_check_branch
      %243 = sbr.rel (%p240) target = $region48
    $region47: #{dncnn_forward.1} parent=5 // pred_region
      %s244 = ssub.s32 %s15, 1
      %p245 = scmp.lt.s32.totalorder %s20, 1
      %s246 = scalar_select %p245, %s20, 1
      %s247 = smul.addr %s246, 32
      %s248 = smul.addr %s247, 8
      %s249 = scalar_lea.vmem %s0, %s248
      %p250 = pneg %p41
      %p251 = pneg %p38
      %p252 = pneg %p62
      %p253 = pneg %p59
      %p254 = pneg %p83
      %p255 = pneg %p80
      %p256 = pneg %p104
      %p257 = pneg %p101
      %p258 = pneg %p125
      %p259 = pneg %p122
      %p260 = pneg %p146
      %p261 = pneg %p143
      %p262 = pneg %p167
      %p263 = pneg %p164
      %p264 = pneg %p193
      %p265 = pneg %p190
      %p266 = scmp.lt.s32.totalorder %s20, 1
      %s267 = scalar_select %p266, %s20, 1
      %s268 = smul.addr %s267, 32
      %s269 = smul.addr %s268, 8
      %s270 = scalar_lea.vmem %s7, %s269
      %p271 = scmp.lt.s32.totalorder %s20, 1
      %s272 = scalar_select %p271, %s20, 1
      %s273 = smul.addr %s272, 32
      %s274 = smul.addr %s273, 8
      %s275 = scalar_lea.vmem %s0, %s274
      %p276 = scmp.lt.s32.totalorder %s20, 1
      %s277 = scalar_select %p276, %s20, 1
      %s278 = smul.addr %s277, 32
      %s279 = smul.addr %s278, 8
      %s280 = scalar_lea.vmem %s7, %s279
      %vm281 = vcmask 7168
      %282 = vst.msk [vmem:[#allocation2] sm:$0xff] %vm281, 0.0
      %283 = vst.msk [vmem:[#allocation2 + $0x8] sm:$0xff] %vm281, 0.0
      %vm284 = vcmask 1024
      %285 = vst.msk [vmem:[#allocation2 + $0x10] sm:$0x3] %vm284, 0.0
      %286 = vst.msk [vmem:[#allocation2 + $0x18] sm:$0xff] %vm281, 0.0
      %287 = vst.msk [vmem:[#allocation2 + $0x20] sm:$0xff] %vm281, 0.0
      %288 = vst.msk [vmem:[#allocation2 + $0x28] sm:$0x3] %vm284, 0.0
      %289 = vst.msk [vmem:[#allocation2 + $0x30] sm:$0xff] %vm281, 0.0
      %290 = vst.msk [vmem:[#allocation2 + $0x38] sm:$0xff] %vm281, 0.0
      %291 = vst.msk [vmem:[#allocation2 + $0x40] sm:$0x3] %vm284, 0.0
      %292 = vst.msk [vmem:[#allocation2 + $0x48] sm:$0xff] %vm281, 0.0
      %293 = vst.msk [vmem:[#allocation2 + $0x50] sm:$0xff] %vm281, 0.0
      %294 = vst.msk [vmem:[#allocation2 + $0x58] sm:$0x3] %vm284, 0.0
      %295 = vst.msk [vmem:[#allocation2 + $0x60] sm:$0xff] %vm281, 0.0
      %296 = vst.msk [vmem:[#allocation2 + $0x68] sm:$0xff] %vm281, 0.0
      %297 = vst.msk [vmem:[#allocation2 + $0x70] sm:$0x3] %vm284, 0.0
      %298 = vst.msk [vmem:[#allocation2 + $0x78] sm:$0xff] %vm281, 0.0
      %299 = vst.msk [vmem:[#allocation2 + $0x80] sm:$0xff] %vm281, 0.0
      %300 = vst.msk [vmem:[#allocation2 + $0x88] sm:$0x3] %vm284, 0.0
      %301 = vst.msk [vmem:[#allocation2 + $0x90] sm:$0xff] %vm281, 0.0
      %302 = vst.msk [vmem:[#allocation2 + $0x98] sm:$0xff] %vm281, 0.0
      %303 = vst.msk [vmem:[#allocation2 + $0xa0] sm:$0x3] %vm284, 0.0
      %304 = vst.msk [vmem:[#allocation2 + $0xa8] sm:$0xff] %vm281, 0.0
      %305 = vst.msk [vmem:[#allocation2 + $0xb0] sm:$0xff] %vm281, 0.0
      %306 = vst.msk [vmem:[#allocation2 + $0xb8] sm:$0x3] %vm284, 0.0
      %307 = vst.msk [vmem:[#allocation2 + $0xc0] sm:$0xff] %vm281, 0.0
      %308 = vst.msk [vmem:[#allocation2 + $0xc8] sm:$0xff] %vm281, 0.0
      %309 = vst.msk [vmem:[#allocation2 + $0xd0] sm:$0x3] %vm284, 0.0
      %310 = vst.msk [vmem:[#allocation2 + $0xd8] sm:$0xff] %vm281, 0.0
      %311 = vst.msk [vmem:[#allocation2 + $0xe0] sm:$0xff] %vm281, 0.0
      %312 = vst.msk [vmem:[#allocation2 + $0xe8] sm:$0x3] %vm284, 0.0
      %313 = vst.msk [vmem:[#allocation2 + $0xf0] sm:$0xff] %vm281, 0.0
      %314 = vst.msk [vmem:[#allocation2 + $0xf8] sm:$0xff] %vm281, 0.0
      %315 = vst.msk [vmem:[#allocation2 + $0x100] sm:$0x3] %vm284, 0.0
      %316 = vst.msk [vmem:[#allocation2 + $0x108] sm:$0xff] %vm281, 0.0
      %317 = vst.msk [vmem:[#allocation2 + $0x110] sm:$0xff] %vm281, 0.0
      %318 = vst.msk [vmem:[#allocation2 + $0x118] sm:$0x3] %vm284, 0.0
      %319 = vst.msk [vmem:[#allocation2 + $0x120] sm:$0xff] %vm281, 0.0
      %320 = vst.msk [vmem:[#allocation2 + $0x128] sm:$0xff] %vm281, 0.0
      %321 = vst.msk [vmem:[#allocation2 + $0x130] sm:$0x3] %vm284, 0.0
      %322 = vst.msk [vmem:[#allocation2 + $0x138] sm:$0xff] %vm281, 0.0
      %323 = vst.msk [vmem:[#allocation2 + $0x140] sm:$0xff] %vm281, 0.0
      %324 = vst.msk [vmem:[#allocation2 + $0x148] sm:$0x3] %vm284, 0.0
      %325 = vst.msk [vmem:[#allocation2 + $0x150] sm:$0xff] %vm281, 0.0
      %326 = vst.msk [vmem:[#allocation2 + $0x158] sm:$0xff] %vm281, 0.0
      %327 = vst.msk [vmem:[#allocation2 + $0x160] sm:$0x3] %vm284, 0.0
      %328 = vst.msk [vmem:[#allocation2 + $0x168] sm:$0xff] %vm281, 0.0
      %329 = vst.msk [vmem:[#allocation2 + $0x170] sm:$0xff] %vm281, 0.0
      %330 = vst.msk [vmem:[#allocation2 + $0x178] sm:$0x3] %vm284, 0.0
      %331 = vst.msk [vmem:[#allocation2 + $0x180] sm:$0xff] %vm281, 0.0
      %332 = vst.msk [vmem:[#allocation2 + $0x188] sm:$0xff] %vm281, 0.0
      %333 = vst.msk [vmem:[#allocation2 + $0x190] sm:$0x3] %vm284, 0.0
      %334 = vst.msk [vmem:[#allocation2 + $0x198] sm:$0xff] %vm281, 0.0
      %335 = vst.msk [vmem:[#allocation2 + $0x1a0] sm:$0xff] %vm281, 0.0
      %336 = vst.msk [vmem:[#allocation2 + $0x1a8] sm:$0x3] %vm284, 0.0
      %vm337 = vcmask 64512
      %338 = vst.msk [vmem:[#allocation3] sm:$0xff] %vm337, 0.0
      %339 = vst.msk [vmem:[#allocation3 + $0x8] sm:$0xff] %vm337, 0.0
      %vm340 = vcmask 58368
      %341 = vst.msk [vmem:[#allocation3 + $0x10] sm:$0x3] %vm340, 0.0
      %342 = vst.msk [vmem:[#allocation3 + $0x18] sm:$0xff] %vm337, 0.0
      %343 = vst.msk [vmem:[#allocation3 + $0x20] sm:$0xff] %vm337, 0.0
      %344 = vst.msk [vmem:[#allocation3 + $0x28] sm:$0x3] %vm340, 0.0
      %345 = vst.msk [vmem:[#allocation3 + $0x30] sm:$0xff] %vm337, 0.0
      %346 = vst.msk [vmem:[#allocation3 + $0x38] sm:$0xff] %vm337, 0.0
      %347 = vst.msk [vmem:[#allocation3 + $0x40] sm:$0x3] %vm340, 0.0
      %348 = vst.msk [vmem:[#allocation3 + $0x48] sm:$0xff] %vm337, 0.0
      %349 = vst.msk [vmem:[#allocation3 + $0x50] sm:$0xff] %vm337, 0.0
      %350 = vst.msk [vmem:[#allocation3 + $0x58] sm:$0x3] %vm340, 0.0
      %351 = vst.msk [vmem:[#allocation3 + $0x60] sm:$0xff] %vm337, 0.0
      %352 = vst.msk [vmem:[#allocation3 + $0x68] sm:$0xff] %vm337, 0.0
      %353 = vst.msk [vmem:[#allocation3 + $0x70] sm:$0x3] %vm340, 0.0
      %354 = vst.msk [vmem:[#allocation3 + $0x78] sm:$0xff] %vm337, 0.0
      %355 = vst.msk [vmem:[#allocation3 + $0x80] sm:$0xff] %vm337, 0.0
      %356 = vst.msk [vmem:[#allocation3 + $0x88] sm:$0x3] %vm340, 0.0
      %357 = vst.msk [vmem:[#allocation3 + $0x90] sm:$0xff] %vm337, 0.0
      %358 = vst.msk [vmem:[#allocation3 + $0x98] sm:$0xff] %vm337, 0.0
      %359 = vst.msk [vmem:[#allocation3 + $0xa0] sm:$0x3] %vm340, 0.0
      %360 = vst.msk [vmem:[#allocation3 + $0xa8] sm:$0xff] %vm337, 0.0
      %361 = vst.msk [vmem:[#allocation3 + $0xb0] sm:$0xff] %vm337, 0.0
      %362 = vst.msk [vmem:[#allocation3 + $0xb8] sm:$0x3] %vm340, 0.0
      %363 = vst.msk [vmem:[#allocation3 + $0xc0] sm:$0xff] %vm337, 0.0
      %364 = vst.msk [vmem:[#allocation3 + $0xc8] sm:$0xff] %vm337, 0.0
      %365 = vst.msk [vmem:[#allocation3 + $0xd0] sm:$0x3] %vm340, 0.0
      %366 = vst.msk [vmem:[#allocation3 + $0xd8] sm:$0xff] %vm337, 0.0
      %367 = vst.msk [vmem:[#allocation3 + $0xe0] sm:$0xff] %vm337, 0.0
      %368 = vst.msk [vmem:[#allocation3 + $0xe8] sm:$0x3] %vm340, 0.0
      %369 = vst.msk [vmem:[#allocation3 + $0xf0] sm:$0xff] %vm337, 0.0
      %370 = vst.msk [vmem:[#allocation3 + $0xf8] sm:$0xff] %vm337, 0.0
      %371 = vst.msk [vmem:[#allocation3 + $0x100] sm:$0x3] %vm340, 0.0
      %372 = vst.msk [vmem:[#allocation3 + $0x108] sm:$0xff] %vm337, 0.0
      %373 = vst.msk [vmem:[#allocation3 + $0x110] sm:$0xff] %vm337, 0.0
      %374 = vst.msk [vmem:[#allocation3 + $0x118] sm:$0x3] %vm340, 0.0
      %375 = vst.msk [vmem:[#allocation3 + $0x120] sm:$0xff] %vm337, 0.0
      %376 = vst.msk [vmem:[#allocation3 + $0x128] sm:$0xff] %vm337, 0.0
      %377 = vst.msk [vmem:[#allocation3 + $0x130] sm:$0x3] %vm340, 0.0
      %378 = vst.msk [vmem:[#allocation3 + $0x138] sm:$0xff] %vm337, 0.0
      %379 = vst.msk [vmem:[#allocation3 + $0x140] sm:$0xff] %vm337, 0.0
      %380 = vst.msk [vmem:[#allocation3 + $0x148] sm:$0x3] %vm340, 0.0
      %381 = vst.msk [vmem:[#allocation3 + $0x150] sm:$0xff] %vm337, 0.0
      %382 = vst.msk [vmem:[#allocation3 + $0x158] sm:$0xff] %vm337, 0.0
      %383 = vst.msk [vmem:[#allocation3 + $0x160] sm:$0x3] %vm340, 0.0
      %384 = vst.msk [vmem:[#allocation3 + $0x168] sm:$0xff] %vm337, 0.0
      %385 = vst.msk [vmem:[#allocation3 + $0x170] sm:$0xff] %vm337, 0.0
      %386 = vst.msk [vmem:[#allocation3 + $0x178] sm:$0x3] %vm340, 0.0
      %387 = vst.msk [vmem:[#allocation3 + $0x180] sm:$0xff] %vm337, 0.0
      %388 = vst.msk [vmem:[#allocation3 + $0x188] sm:$0xff] %vm337, 0.0
      %389 = vst.msk [vmem:[#allocation3 + $0x190] sm:$0x3] %vm340, 0.0
      %390 = vst.msk [vmem:[#allocation3 + $0x198] sm:$0xff] %vm337, 0.0
      %391 = vst.msk [vmem:[#allocation3 + $0x1a0] sm:$0xff] %vm337, 0.0
      %392 = vst.msk [vmem:[#allocation3 + $0x1a8] sm:$0x3] %vm340, 0.0
      %393 = vst.msk [vmem:[#allocation4] sm:$0xff] %vm337, 0.0
      %394 = vst.msk [vmem:[#allocation4 + $0x8] sm:$0xff] %vm337, 0.0
      %395 = vst.msk [vmem:[#allocation4 + $0x10] sm:$0x3] %vm340, 0.0
      %396 = vst.msk [vmem:[#allocation4 + $0x18] sm:$0xff] %vm337, 0.0
      %397 = vst.msk [vmem:[#allocation4 + $0x20] sm:$0xff] %vm337, 0.0
      %398 = vst.msk [vmem:[#allocation4 + $0x28] sm:$0x3] %vm340, 0.0
      %399 = vst.msk [vmem:[#allocation4 + $0x30] sm:$0xff] %vm337, 0.0
      %400 = vst.msk [vmem:[#allocation4 + $0x38] sm:$0xff] %vm337, 0.0
      %401 = vst.msk [vmem:[#allocation4 + $0x40] sm:$0x3] %vm340, 0.0
      %402 = vst.msk [vmem:[#allocation4 + $0x48] sm:$0xff] %vm337, 0.0
      %403 = vst.msk [vmem:[#allocation4 + $0x50] sm:$0xff] %vm337, 0.0
      %404 = vst.msk [vmem:[#allocation4 + $0x58] sm:$0x3] %vm340, 0.0
      %405 = vst.msk [vmem:[#allocation4 + $0x60] sm:$0xff] %vm337, 0.0
      %406 = vst.msk [vmem:[#allocation4 + $0x68] sm:$0xff] %vm337, 0.0
      %407 = vst.msk [vmem:[#allocation4 + $0x70] sm:$0x3] %vm340, 0.0
      %408 = vst.msk [vmem:[#allocation4 + $0x78] sm:$0xff] %vm337, 0.0
      %409 = vst.msk [vmem:[#allocation4 + $0x80] sm:$0xff] %vm337, 0.0
      %410 = vst.msk [vmem:[#allocation4 + $0x88] sm:$0x3] %vm340, 0.0
      %411 = vst.msk [vmem:[#allocation4 + $0x90] sm:$0xff] %vm337, 0.0
      %412 = vst.msk [vmem:[#allocation4 + $0x98] sm:$0xff] %vm337, 0.0
      %413 = vst.msk [vmem:[#allocation4 + $0xa0] sm:$0x3] %vm340, 0.0
      %414 = vst.msk [vmem:[#allocation4 + $0xa8] sm:$0xff] %vm337, 0.0
      %415 = vst.msk [vmem:[#allocation4 + $0xb0] sm:$0xff] %vm337, 0.0
      %416 = vst.msk [vmem:[#allocation4 + $0xb8] sm:$0x3] %vm340, 0.0
      %417 = vst.msk [vmem:[#allocation4 + $0xc0] sm:$0xff] %vm337, 0.0
      %418 = vst.msk [vmem:[#allocation4 + $0xc8] sm:$0xff] %vm337, 0.0
      %419 = vst.msk [vmem:[#allocation4 + $0xd0] sm:$0x3] %vm340, 0.0
      %420 = vst.msk [vmem:[#allocation4 + $0xd8] sm:$0xff] %vm337, 0.0
      %421 = vst.msk [vmem:[#allocation4 + $0xe0] sm:$0xff] %vm337, 0.0
      %422 = vst.msk [vmem:[#allocation4 + $0xe8] sm:$0x3] %vm340, 0.0
      %423 = vst.msk [vmem:[#allocation4 + $0xf0] sm:$0xff] %vm337, 0.0
      %424 = vst.msk [vmem:[#allocation4 + $0xf8] sm:$0xff] %vm337, 0.0
      %425 = vst.msk [vmem:[#allocation4 + $0x100] sm:$0x3] %vm340, 0.0
      %426 = vst.msk [vmem:[#allocation4 + $0x108] sm:$0xff] %vm337, 0.0
      %427 = vst.msk [vmem:[#allocation4 + $0x110] sm:$0xff] %vm337, 0.0
      %428 = vst.msk [vmem:[#allocation4 + $0x118] sm:$0x3] %vm340, 0.0
      %429 = vst.msk [vmem:[#allocation4 + $0x120] sm:$0xff] %vm337, 0.0
      %430 = vst.msk [vmem:[#allocation4 + $0x128] sm:$0xff] %vm337, 0.0
      %431 = vst.msk [vmem:[#allocation4 + $0x130] sm:$0x3] %vm340, 0.0
      %432 = vst.msk [vmem:[#allocation4 + $0x138] sm:$0xff] %vm337, 0.0
      %433 = vst.msk [vmem:[#allocation4 + $0x140] sm:$0xff] %vm337, 0.0
      %434 = vst.msk [vmem:[#allocation4 + $0x148] sm:$0x3] %vm340, 0.0
      %435 = vst.msk [vmem:[#allocation4 + $0x150] sm:$0xff] %vm337, 0.0
      %436 = vst.msk [vmem:[#allocation4 + $0x158] sm:$0xff] %vm337, 0.0
      %437 = vst.msk [vmem:[#allocation4 + $0x160] sm:$0x3] %vm340, 0.0
      %438 = vst.msk [vmem:[#allocation4 + $0x168] sm:$0xff] %vm337, 0.0
      %439 = vst.msk [vmem:[#allocation4 + $0x170] sm:$0xff] %vm337, 0.0
      %440 = vst.msk [vmem:[#allocation4 + $0x178] sm:$0x3] %vm340, 0.0
      %441 = vst.msk [vmem:[#allocation4 + $0x180] sm:$0xff] %vm337, 0.0
      %442 = vst.msk [vmem:[#allocation4 + $0x188] sm:$0xff] %vm337, 0.0
      %443 = vst.msk [vmem:[#allocation4 + $0x190] sm:$0x3] %vm340, 0.0
      %444 = vst.msk [vmem:[#allocation4 + $0x198] sm:$0xff] %vm337, 0.0
      %445 = vst.msk [vmem:[#allocation4 + $0x1a0] sm:$0xff] %vm337, 0.0
      %446 = vst.msk [vmem:[#allocation4 + $0x1a8] sm:$0x3] %vm340, 0.0
      %v447 = vld [vmem:[%s275] sm:$0xff]
      %v448 = vld [vmem:[%s275 + $0x8] sm:$0xff]
      %v449 = vld [vmem:[%s275 + $0x10] sm:$0xff]
      %v450 = vld [vmem:[%s275 + $0x18] sm:$0xff]
      %v451 = vld [vmem:[%s275 + $0x20] sm:$0xff]
      %v452 = vld [vmem:[%s275 + $0x28] sm:$0xff]
      %v453 = vld [vmem:[%s275 + $0x30] sm:$0xff]
      %v454 = vld [vmem:[%s275 + $0x38] sm:$0xff]
      %v455 = vld [vmem:[%s275 + $0x40] sm:$0xff]
      %v456 = vld [vmem:[%s275 + $0x48] sm:$0xff]
      %v457 = vld [vmem:[%s275 + $0x50] sm:$0xff]
      %v458 = vld [vmem:[%s275 + $0x58] sm:$0xff]
      %v459 = vld [vmem:[%s275 + $0x60] sm:$0xff]
      %v460 = vld [vmem:[%s275 + $0x68] sm:$0xff]
      %v461 = vld [vmem:[%s275 + $0x70] sm:$0xff]
      %v462 = vld [vmem:[%s275 + $0x78] sm:$0xff]
      %v463 = vld [vmem:[%s275 + $0x80] sm:$0xff]
      %v464 = vld [vmem:[%s275 + $0x88] sm:$0xff]
      %v465 = vld [vmem:[%s275 + $0x90] sm:$0xff]
      %v466 = vld [vmem:[%s275 + $0x98] sm:$0xff]
      %v467 = vld [vmem:[%s275 + $0xa0] sm:$0xff]
      %v468 = vld [vmem:[%s275 + $0xa8] sm:$0xff]
      %v469 = vld [vmem:[%s275 + $0xb0] sm:$0xff]
      %v470 = vld [vmem:[%s275 + $0xb8] sm:$0xff]
      %v471 = vld [vmem:[%s275 + $0xc0] sm:$0xff]
      %v472 = vld [vmem:[%s275 + $0xc8] sm:$0xff]
      %v473 = vld [vmem:[%s275 + $0xd0] sm:$0xff]
      %v474 = vld [vmem:[%s275 + $0xd8] sm:$0xff]
      %v475 = vld [vmem:[%s275 + $0xe0] sm:$0xff]
      %v476 = vld [vmem:[%s275 + $0xe8] sm:$0xff]
      %v477 = vld [vmem:[%s275 + $0xf0] sm:$0xff]
      %v478 = vld [vmem:[%s275 + $0xf8] sm:$0xff]
      %s479 = scalar_lea.vmem [#allocation2], 24
      %480 = vst.msk [vmem:[%s479 + $0x1] sm:$0xff] %vm281, %v447
      %481 = vst.msk [vmem:[%s479 + $0x9] sm:$0xff] %vm281, %v448
      %482 = vst.msk [vmem:[%s479 + $0x19] sm:$0xff] %vm281, %v449
      %483 = vst.msk [vmem:[%s479 + $0x21] sm:$0xff] %vm281, %v450
      %484 = vst.msk [vmem:[%s479 + $0x31] sm:$0xff] %vm281, %v451
      %485 = vst.msk [vmem:[%s479 + $0x39] sm:$0xff] %vm281, %v452
      %486 = vst.msk [vmem:[%s479 + $0x49] sm:$0xff] %vm281, %v453
      %487 = vst.msk [vmem:[%s479 + $0x51] sm:$0xff] %vm281, %v454
      %488 = vst.msk [vmem:[%s479 + $0x61] sm:$0xff] %vm281, %v455
      %489 = vst.msk [vmem:[%s479 + $0x69] sm:$0xff] %vm281, %v456
      %490 = vst.msk [vmem:[%s479 + $0x79] sm:$0xff] %vm281, %v457
      %491 = vst.msk [vmem:[%s479 + $0x81] sm:$0xff] %vm281, %v458
      %492 = vst.msk [vmem:[%s479 + $0x91] sm:$0xff] %vm281, %v459
      %493 = vst.msk [vmem:[%s479 + $0x99] sm:$0xff] %vm281, %v460
      %494 = vst.msk [vmem:[%s479 + $0xa9] sm:$0xff] %vm281, %v461
      %495 = vst.msk [vmem:[%s479 + $0xb1] sm:$0xff] %vm281, %v462
      %496 = vst.msk [vmem:[%s479 + $0xc1] sm:$0xff] %vm281, %v463
      %497 = vst.msk [vmem:[%s479 + $0xc9] sm:$0xff] %vm281, %v464
      %498 = vst.msk [vmem:[%s479 + $0xd9] sm:$0xff] %vm281, %v465
      %499 = vst.msk [vmem:[%s479 + $0xe1] sm:$0xff] %vm281, %v466
      %500 = vst.msk [vmem:[%s479 + $0xf1] sm:$0xff] %vm281, %v467
      %501 = vst.msk [vmem:[%s479 + $0xf9] sm:$0xff] %vm281, %v468
      %502 = vst.msk [vmem:[%s479 + $0x109] sm:$0xff] %vm281, %v469
      %503 = vst.msk [vmem:[%s479 + $0x111] sm:$0xff] %vm281, %v470
      %504 = vst.msk [vmem:[%s479 + $0x121] sm:$0xff] %vm281, %v471
      %505 = vst.msk [vmem:[%s479 + $0x129] sm:$0xff] %vm281, %v472
      %506 = vst.msk [vmem:[%s479 + $0x139] sm:$0xff] %vm281, %v473
      %507 = vst.msk [vmem:[%s479 + $0x141] sm:$0xff] %vm281, %v474
      %508 = vst.msk [vmem:[%s479 + $0x151] sm:$0xff] %vm281, %v475
      %509 = vst.msk [vmem:[%s479 + $0x159] sm:$0xff] %vm281, %v476
      %510 = vst.msk [vmem:[%s479 + $0x169] sm:$0xff] %vm281, %v477
      %511 = vst.msk [vmem:[%s479 + $0x171] sm:$0xff] %vm281, %v478
      %v512 = vld [vmem:[#allocation2] sm:$0xff]
      %v513 = vld [vmem:[#allocation2 + $0x8] sm:$0xff]
      %v514 = vld [vmem:[#allocation2 + $0x18] sm:$0xff]
      %v515 = vld [vmem:[#allocation2 + $0x20] sm:$0xff]
      %v516 = vld [vmem:[#allocation2 + $0x30] sm:$0xff]
      %v517 = vld [vmem:[#allocation2 + $0x38] sm:$0xff]
      %v518 = vld [vmem:[#allocation2 + $0x48] sm:$0xff]
      %v519 = vld [vmem:[#allocation2 + $0x50] sm:$0xff]
      %v520 = vld [vmem:[#allocation2 + $0x60] sm:$0xff]
      %v521 = vld [vmem:[#allocation2 + $0x68] sm:$0xff]
      %v522 = vld [vmem:[#allocation2 + $0x78] sm:$0xff]
      %v523 = vld [vmem:[#allocation2 + $0x80] sm:$0xff]
      %v524 = vld [vmem:[#allocation2 + $0x90] sm:$0xff]
      %v525 = vld [vmem:[#allocation2 + $0x98] sm:$0xff]
      %v526 = vld [vmem:[#allocation2 + $0xa8] sm:$0xff]
      %v527 = vld [vmem:[#allocation2 + $0xb0] sm:$0xff]
      %v528 = vld [vmem:[#allocation2 + $0xc0] sm:$0xff]
      %v529 = vld [vmem:[#allocation2 + $0xc8] sm:$0xff]
      %v530 = vld [vmem:[#allocation2 + $0xd8] sm:$0xff]
      %v531 = vld [vmem:[#allocation2 + $0xe0] sm:$0xff]
      %v532 = vld [vmem:[#allocation2 + $0xf0] sm:$0xff]
      %v533 = vld [vmem:[#allocation2 + $0xf8] sm:$0xff]
      %v534 = vld [vmem:[#allocation2 + $0x108] sm:$0xff]
      %v535 = vld [vmem:[#allocation2 + $0x110] sm:$0xff]
      %v536 = vld [vmem:[#allocation2 + $0x120] sm:$0xff]
      %v537 = vld [vmem:[#allocation2 + $0x128] sm:$0xff]
      %v538 = vld [vmem:[#allocation2 + $0x138] sm:$0xff]
      %v539 = vld [vmem:[#allocation2 + $0x140] sm:$0xff]
      %v540 = vld [vmem:[#allocation2 + $0x150] sm:$0xff]
      %v541 = vld [vmem:[#allocation2 + $0x158] sm:$0xff]
      %v542 = vld [vmem:[#allocation2 + $0x168] sm:$0xff]
      %v543 = vld [vmem:[#allocation2 + $0x170] sm:$0xff]
      %v544 = vld [vmem:[%s1] sm:$0x1]
      %546 = vset.pattern.permute.xlu0 0
      %547 = vperm.xlu0 %546, %v512
      %v548 = vpop.permute.xlu0 %547
      %551 = vset.pattern.permute.xlu0 0
      %552 = vperm.xlu0 %551, %v513
      %v553 = vpop.permute.xlu0 %552
      %556 = vset.pattern.permute.xlu0 0
      %557 = vperm.xlu0 %556, %v514
      %v558 = vpop.permute.xlu0 %557
      %561 = vset.pattern.permute.xlu0 0
      %562 = vperm.xlu0 %561, %v515
      %v563 = vpop.permute.xlu0 %562
      %566 = vset.pattern.permute.xlu0 0
      %567 = vperm.xlu0 %566, %v516
      %v568 = vpop.permute.xlu0 %567
      %571 = vset.pattern.permute.xlu0 0
      %572 = vperm.xlu0 %571, %v517
      %v573 = vpop.permute.xlu0 %572
      %576 = vset.pattern.permute.xlu0 0
      %577 = vperm.xlu0 %576, %v518
      %v578 = vpop.permute.xlu0 %577
      %581 = vset.pattern.permute.xlu0 0
      %582 = vperm.xlu0 %581, %v519
      %v583 = vpop.permute.xlu0 %582
      %586 = vset.pattern.permute.xlu0 0
      %587 = vperm.xlu0 %586, %v520
      %v588 = vpop.permute.xlu0 %587
      %591 = vset.pattern.permute.xlu0 0
      %592 = vperm.xlu0 %591, %v521
      %v593 = vpop.permute.xlu0 %592
      %596 = vset.pattern.permute.xlu0 0
      %597 = vperm.xlu0 %596, %v522
      %v598 = vpop.permute.xlu0 %597
      %601 = vset.pattern.permute.xlu0 0
      %602 = vperm.xlu0 %601, %v523
      %v603 = vpop.permute.xlu0 %602
      %606 = vset.pattern.permute.xlu0 0
      %607 = vperm.xlu0 %606, %v524
      %v608 = vpop.permute.xlu0 %607
      %611 = vset.pattern.permute.xlu0 0
      %612 = vperm.xlu0 %611, %v525
      %v613 = vpop.permute.xlu0 %612
      %616 = vset.pattern.permute.xlu0 0
      %617 = vperm.xlu0 %616, %v526
      %v618 = vpop.permute.xlu0 %617
      %621 = vset.pattern.permute.xlu0 0
      %622 = vperm.xlu0 %621, %v527
      %v623 = vpop.permute.xlu0 %622
      %626 = vset.pattern.permute.xlu0 0
      %627 = vperm.xlu0 %626, %v528
      %v628 = vpop.permute.xlu0 %627
      %631 = vset.pattern.permute.xlu0 0
      %632 = vperm.xlu0 %631, %v529
      %v633 = vpop.permute.xlu0 %632
      %636 = vset.pattern.permute.xlu0 0
      %637 = vperm.xlu0 %636, %v530
      %v638 = vpop.permute.xlu0 %637
      %641 = vset.pattern.permute.xlu0 0
      %642 = vperm.xlu0 %641, %v531
      %v643 = vpop.permute.xlu0 %642
      %646 = vset.pattern.permute.xlu0 0
      %647 = vperm.xlu0 %646, %v532
      %v648 = vpop.permute.xlu0 %647
      %651 = vset.pattern.permute.xlu0 0
      %652 = vperm.xlu0 %651, %v533
      %v653 = vpop.permute.xlu0 %652
      %656 = vset.pattern.permute.xlu0 0
      %657 = vperm.xlu0 %656, %v534
      %v658 = vpop.permute.xlu0 %657
      %661 = vset.pattern.permute.xlu0 0
      %662 = vperm.xlu0 %661, %v535
      %v663 = vpop.permute.xlu0 %662
      %666 = vset.pattern.permute.xlu0 0
      %667 = vperm.xlu0 %666, %v536
      %v668 = vpop.permute.xlu0 %667
      %671 = vset.pattern.permute.xlu0 0
      %672 = vperm.xlu0 %671, %v537
      %v673 = vpop.permute.xlu0 %672
      %676 = vset.pattern.permute.xlu0 0
      %677 = vperm.xlu0 %676, %v538
      %v678 = vpop.permute.xlu0 %677
      %681 = vset.pattern.permute.xlu0 0
      %682 = vperm.xlu0 %681, %v539
      %v683 = vpop.permute.xlu0 %682
      %686 = vset.pattern.permute.xlu0 0
      %687 = vperm.xlu0 %686, %v540
      %v688 = vpop.permute.xlu0 %687
      %691 = vset.pattern.permute.xlu0 0
      %692 = vperm.xlu0 %691, %v541
      %v693 = vpop.permute.xlu0 %692
      %696 = vset.pattern.permute.xlu0 0
      %697 = vperm.xlu0 %696, %v542
      %v698 = vpop.permute.xlu0 %697
      %701 = vset.pattern.permute.xlu0 0
      %702 = vperm.xlu0 %701, %v543
      %v703 = vpop.permute.xlu0 %702
      %v705 = vperm.slane %v544, 0
      %v706 = vmul.f32 %v548, %v705
      %v707 = vmul.f32 %v553, %v705
      %v708 = vmul.f32 %v558, %v705
      %v709 = vmul.f32 %v563, %v705
      %v710 = vmul.f32 %v568, %v705
      %v711 = vmul.f32 %v573, %v705
      %v712 = vmul.f32 %v578, %v705
      %v713 = vmul.f32 %v583, %v705
      %v714 = vmul.f32 %v588, %v705
      %v715 = vmul.f32 %v593, %v705
      %v716 = vmul.f32 %v598, %v705
      %v717 = vmul.f32 %v603, %v705
      %v718 = vmul.f32 %v608, %v705
      %v719 = vmul.f32 %v613, %v705
      %v720 = vmul.f32 %v618, %v705
      %v721 = vmul.f32 %v623, %v705
      %v722 = vmul.f32 %v628, %v705
      %v723 = vmul.f32 %v633, %v705
      %v724 = vmul.f32 %v638, %v705
      %v725 = vmul.f32 %v643, %v705
      %v726 = vmul.f32 %v648, %v705
      %v727 = vmul.f32 %v653, %v705
      %v728 = vmul.f32 %v658, %v705
      %v729 = vmul.f32 %v663, %v705
      %v730 = vmul.f32 %v668, %v705
      %v731 = vmul.f32 %v673, %v705
      %v732 = vmul.f32 %v678, %v705
      %v733 = vmul.f32 %v683, %v705
      %v734 = vmul.f32 %v688, %v705
      %v735 = vmul.f32 %v693, %v705
      %v736 = vmul.f32 %v698, %v705
      %v737 = vmul.f32 %v703, %v705
      %v738 = vadd.f32 %v706, 0.0
      %v739 = vadd.f32 %v707, 0.0
      %v740 = vadd.f32 %v708, 0.0
      %v741 = vadd.f32 %v709, 0.0
      %v742 = vadd.f32 %v710, 0.0
      %v743 = vadd.f32 %v711, 0.0
      %v744 = vadd.f32 %v712, 0.0
      %v745 = vadd.f32 %v713, 0.0
      %v746 = vadd.f32 %v714, 0.0
      %v747 = vadd.f32 %v715, 0.0
      %v748 = vadd.f32 %v716, 0.0
      %v749 = vadd.f32 %v717, 0.0
      %v750 = vadd.f32 %v718, 0.0
      %v751 = vadd.f32 %v719, 0.0
      %v752 = vadd.f32 %v720, 0.0
      %v753 = vadd.f32 %v721, 0.0
      %v754 = vadd.f32 %v722, 0.0
      %v755 = vadd.f32 %v723, 0.0
      %v756 = vadd.f32 %v724, 0.0
      %v757 = vadd.f32 %v725, 0.0
      %v758 = vadd.f32 %v726, 0.0
      %v759 = vadd.f32 %v727, 0.0
      %v760 = vadd.f32 %v728, 0.0
      %v761 = vadd.f32 %v729, 0.0
      %v762 = vadd.f32 %v730, 0.0
      %v763 = vadd.f32 %v731, 0.0
      %v764 = vadd.f32 %v732, 0.0
      %v765 = vadd.f32 %v733, 0.0
      %v766 = vadd.f32 %v734, 0.0
      %v767 = vadd.f32 %v735, 0.0
      %v768 = vadd.f32 %v736, 0.0
      %v769 = vadd.f32 %v737, 0.0
      %v770 = vld [vmem:[#allocation2 + $0x1] sm:$0xff]
      %v771 = vld [vmem:[#allocation2 + $0x9] sm:$0xff]
      %v772 = vld [vmem:[#allocation2 + $0x19] sm:$0xff]
      %v773 = vld [vmem:[#allocation2 + $0x21] sm:$0xff]
      %v774 = vld [vmem:[#allocation2 + $0x31] sm:$0xff]
      %v775 = vld [vmem:[#allocation2 + $0x39] sm:$0xff]
      %v776 = vld [vmem:[#allocation2 + $0x49] sm:$0xff]
      %v777 = vld [vmem:[#allocation2 + $0x51] sm:$0xff]
      %v778 = vld [vmem:[#allocation2 + $0x61] sm:$0xff]
      %v779 = vld [vmem:[#allocation2 + $0x69] sm:$0xff]
      %v780 = vld [vmem:[#allocation2 + $0x79] sm:$0xff]
      %v781 = vld [vmem:[#allocation2 + $0x81] sm:$0xff]
      %v782 = vld [vmem:[#allocation2 + $0x91] sm:$0xff]
      %v783 = vld [vmem:[#allocation2 + $0x99] sm:$0xff]
      %v784 = vld [vmem:[#allocation2 + $0xa9] sm:$0xff]
      %v785 = vld [vmem:[#allocation2 + $0xb1] sm:$0xff]
      %v786 = vld [vmem:[#allocation2 + $0xc1] sm:$0xff]
      %v787 = vld [vmem:[#allocation2 + $0xc9] sm:$0xff]
      %v788 = vld [vmem:[#allocation2 + $0xd9] sm:$0xff]
      %v789 = vld [vmem:[#allocation2 + $0xe1] sm:$0xff]
      %v790 = vld [vmem:[#allocation2 + $0xf1] sm:$0xff]
      %v791 = vld [vmem:[#allocation2 + $0xf9] sm:$0xff]
      %v792 = vld [vmem:[#allocation2 + $0x109] sm:$0xff]
      %v793 = vld [vmem:[#allocation2 + $0x111] sm:$0xff]
      %v794 = vld [vmem:[#allocation2 + $0x121] sm:$0xff]
      %v795 = vld [vmem:[#allocation2 + $0x129] sm:$0xff]
      %v796 = vld [vmem:[#allocation2 + $0x139] sm:$0xff]
      %v797 = vld [vmem:[#allocation2 + $0x141] sm:$0xff]
      %v798 = vld [vmem:[#allocation2 + $0x151] sm:$0xff]
      %v799 = vld [vmem:[#allocation2 + $0x159] sm:$0xff]
      %v800 = vld [vmem:[#allocation2 + $0x169] sm:$0xff]
      %v801 = vld [vmem:[#allocation2 + $0x171] sm:$0xff]
      %v802 = vld [vmem:[%s1 + $0x1] sm:$0x1]
      %804 = vset.pattern.permute.xlu0 0
      %805 = vperm.xlu0 %804, %v770
      %v806 = vpop.permute.xlu0 %805
      %809 = vset.pattern.permute.xlu0 0
      %810 = vperm.xlu0 %809, %v771
      %v811 = vpop.permute.xlu0 %810
      %814 = vset.pattern.permute.xlu0 0
      %815 = vperm.xlu0 %814, %v772
      %v816 = vpop.permute.xlu0 %815
      %819 = vset.pattern.permute.xlu0 0
      %820 = vperm.xlu0 %819, %v773
      %v821 = vpop.permute.xlu0 %820
      %824 = vset.pattern.permute.xlu0 0
      %825 = vperm.xlu0 %824, %v774
      %v826 = vpop.permute.xlu0 %825
      %829 = vset.pattern.permute.xlu0 0
      %830 = vperm.xlu0 %829, %v775
      %v831 = vpop.permute.xlu0 %830
      %834 = vset.pattern.permute.xlu0 0
      %835 = vperm.xlu0 %834, %v776
      %v836 = vpop.permute.xlu0 %835
      %839 = vset.pattern.permute.xlu0 0
      %840 = vperm.xlu0 %839, %v777
      %v841 = vpop.permute.xlu0 %840
      %844 = vset.pattern.permute.xlu0 0
      %845 = vperm.xlu0 %844, %v778
      %v846 = vpop.permute.xlu0 %845
      %849 = vset.pattern.permute.xlu0 0
      %850 = vperm.xlu0 %849, %v779
      %v851 = vpop.permute.xlu0 %850
      %854 = vset.pattern.permute.xlu0 0
      %855 = vperm.xlu0 %854, %v780
      %v856 = vpop.permute.xlu0 %855
      %859 = vset.pattern.permute.xlu0 0
      %860 = vperm.xlu0 %859, %v781
      %v861 = vpop.permute.xlu0 %860
      %864 = vset.pattern.permute.xlu0 0
      %865 = vperm.xlu0 %864, %v782
      %v866 = vpop.permute.xlu0 %865
      %869 = vset.pattern.permute.xlu0 0
      %870 = vperm.xlu0 %869, %v783
      %v871 = vpop.permute.xlu0 %870
      %874 = vset.pattern.permute.xlu0 0
      %875 = vperm.xlu0 %874, %v784
      %v876 = vpop.permute.xlu0 %875
      %879 = vset.pattern.permute.xlu0 0
      %880 = vperm.xlu0 %879, %v785
      %v881 = vpop.permute.xlu0 %880
      %884 = vset.pattern.permute.xlu0 0
      %885 = vperm.xlu0 %884, %v786
      %v886 = vpop.permute.xlu0 %885
      %889 = vset.pattern.permute.xlu0 0
      %890 = vperm.xlu0 %889, %v787
      %v891 = vpop.permute.xlu0 %890
      %894 = vset.pattern.permute.xlu0 0
      %895 = vperm.xlu0 %894, %v788
      %v896 = vpop.permute.xlu0 %895
      %899 = vset.pattern.permute.xlu0 0
      %900 = vperm.xlu0 %899, %v789
      %v901 = vpop.permute.xlu0 %900
      %904 = vset.pattern.permute.xlu0 0
      %905 = vperm.xlu0 %904, %v790
      %v906 = vpop.permute.xlu0 %905
      %909 = vset.pattern.permute.xlu0 0
      %910 = vperm.xlu0 %909, %v791
      %v911 = vpop.permute.xlu0 %910
      %914 = vset.pattern.permute.xlu0 0
      %915 = vperm.xlu0 %914, %v792
      %v916 = vpop.permute.xlu0 %915
      %919 = vset.pattern.permute.xlu0 0
      %920 = vperm.xlu0 %919, %v793
      %v921 = vpop.permute.xlu0 %920
      %924 = vset.pattern.permute.xlu0 0
      %925 = vperm.xlu0 %924, %v794
      %v926 = vpop.permute.xlu0 %925
      %929 = vset.pattern.permute.xlu0 0
      %930 = vperm.xlu0 %929, %v795
      %v931 = vpop.permute.xlu0 %930
      %934 = vset.pattern.permute.xlu0 0
      %935 = vperm.xlu0 %934, %v796
      %v936 = vpop.permute.xlu0 %935
      %939 = vset.pattern.permute.xlu0 0
      %940 = vperm.xlu0 %939, %v797
      %v941 = vpop.permute.xlu0 %940
      %944 = vset.pattern.permute.xlu0 0
      %945 = vperm.xlu0 %944, %v798
      %v946 = vpop.permute.xlu0 %945
      %949 = vset.pattern.permute.xlu0 0
      %950 = vperm.xlu0 %949, %v799
      %v951 = vpop.permute.xlu0 %950
      %954 = vset.pattern.permute.xlu0 0
      %955 = vperm.xlu0 %954, %v800
      %v956 = vpop.permute.xlu0 %955
      %959 = vset.pattern.permute.xlu0 0
      %960 = vperm.xlu0 %959, %v801
      %v961 = vpop.permute.xlu0 %960
      %v963 = vperm.slane %v802, 0
      %v964 = vmul.f32 %v806, %v963
      %v965 = vmul.f32 %v811, %v963
      %v966 = vmul.f32 %v816, %v963
      %v967 = vmul.f32 %v821, %v963
      %v968 = vmul.f32 %v826, %v963
      %v969 = vmul.f32 %v831, %v963
      %v970 = vmul.f32 %v836, %v963
      %v971 = vmul.f32 %v841, %v963
      %v972 = vmul.f32 %v846, %v963
      %v973 = vmul.f32 %v851, %v963
      %v974 = vmul.f32 %v856, %v963
      %v975 = vmul.f32 %v861, %v963
      %v976 = vmul.f32 %v866, %v963
      %v977 = vmul.f32 %v871, %v963
      %v978 = vmul.f32 %v876, %v963
      %v979 = vmul.f32 %v881, %v963
      %v980 = vmul.f32 %v886, %v963
      %v981 = vmul.f32 %v891, %v963
      %v982 = vmul.f32 %v896, %v963
      %v983 = vmul.f32 %v901, %v963
      %v984 = vmul.f32 %v906, %v963
      %v985 = vmul.f32 %v911, %v963
      %v986 = vmul.f32 %v916, %v963
      %v987 = vmul.f32 %v921, %v963
      %v988 = vmul.f32 %v926, %v963
      %v989 = vmul.f32 %v931, %v963
      %v990 = vmul.f32 %v936, %v963
      %v991 = vmul.f32 %v941, %v963
      %v992 = vmul.f32 %v946, %v963
      %v993 = vmul.f32 %v951, %v963
      %v994 = vmul.f32 %v956, %v963
      %v995 = vmul.f32 %v961, %v963
      %v996 = vadd.f32 %v738, %v964
      %v997 = vadd.f32 %v739, %v965
      %v998 = vadd.f32 %v740, %v966
      %v999 = vadd.f32 %v741, %v967
      %v1000 = vadd.f32 %v742, %v968
      %v1001 = vadd.f32 %v743, %v969
      %v1002 = vadd.f32 %v744, %v970
      %v1003 = vadd.f32 %v745, %v971
      %v1004 = vadd.f32 %v746, %v972
      %v1005 = vadd.f32 %v747, %v973
      %v1006 = vadd.f32 %v748, %v974
      %v1007 = vadd.f32 %v749, %v975
      %v1008 = vadd.f32 %v750, %v976
      %v1009 = vadd.f32 %v751, %v977
      %v1010 = vadd.f32 %v752, %v978
      %v1011 = vadd.f32 %v753, %v979
      %v1012 = vadd.f32 %v754, %v980
      %v1013 = vadd.f32 %v755, %v981
      %v1014 = vadd.f32 %v756, %v982
      %v1015 = vadd.f32 %v757, %v983
      %v1016 = vadd.f32 %v758, %v984
      %v1017 = vadd.f32 %v759, %v985
      %v1018 = vadd.f32 %v760, %v986
      %v1019 = vadd.f32 %v761, %v987
      %v1020 = vadd.f32 %v762, %v988
      %v1021 = vadd.f32 %v763, %v989
      %v1022 = vadd.f32 %v764, %v990
      %v1023 = vadd.f32 %v765, %v991
      %v1024 = vadd.f32 %v766, %v992
      %v1025 = vadd.f32 %v767, %v993
      %v1026 = vadd.f32 %v768, %v994
      %v1027 = vadd.f32 %v769, %v995
      %v1028 = vld [vmem:[#allocation2 + $0x2] sm:$0xff]
      %v1029 = vld [vmem:[#allocation2 + $0xa] sm:$0xff]
      %v1030 = vld [vmem:[#allocation2 + $0x1a] sm:$0xff]
      %v1031 = vld [vmem:[#allocation2 + $0x22] sm:$0xff]
      %v1032 = vld [vmem:[#allocation2 + $0x32] sm:$0xff]
      %v1033 = vld [vmem:[#allocation2 + $0x3a] sm:$0xff]
      %v1034 = vld [vmem:[#allocation2 + $0x4a] sm:$0xff]
      %v1035 = vld [vmem:[#allocation2 + $0x52] sm:$0xff]
      %v1036 = vld [vmem:[#allocation2 + $0x62] sm:$0xff]
      %v1037 = vld [vmem:[#allocation2 + $0x6a] sm:$0xff]
      %v1038 = vld [vmem:[#allocation2 + $0x7a] sm:$0xff]
      %v1039 = vld [vmem:[#allocation2 + $0x82] sm:$0xff]
      %v1040 = vld [vmem:[#allocation2 + $0x92] sm:$0xff]
      %v1041 = vld [vmem:[#allocation2 + $0x9a] sm:$0xff]
      %v1042 = vld [vmem:[#allocation2 + $0xaa] sm:$0xff]
      %v1043 = vld [vmem:[#allocation2 + $0xb2] sm:$0xff]
      %v1044 = vld [vmem:[#allocation2 + $0xc2] sm:$0xff]
      %v1045 = vld [vmem:[#allocation2 + $0xca] sm:$0xff]
      %v1046 = vld [vmem:[#allocation2 + $0xda] sm:$0xff]
      %v1047 = vld [vmem:[#allocation2 + $0xe2] sm:$0xff]
      %v1048 = vld [vmem:[#allocation2 + $0xf2] sm:$0xff]
      %v1049 = vld [vmem:[#allocation2 + $0xfa] sm:$0xff]
      %v1050 = vld [vmem:[#allocation2 + $0x10a] sm:$0xff]
      %v1051 = vld [vmem:[#allocation2 + $0x112] sm:$0xff]
      %v1052 = vld [vmem:[#allocation2 + $0x122] sm:$0xff]
      %v1053 = vld [vmem:[#allocation2 + $0x12a] sm:$0xff]
      %v1054 = vld [vmem:[#allocation2 + $0x13a] sm:$0xff]
      %v1055 = vld [vmem:[#allocation2 + $0x142] sm:$0xff]
      %v1056 = vld [vmem:[#allocation2 + $0x152] sm:$0xff]
      %v1057 = vld [vmem:[#allocation2 + $0x15a] sm:$0xff]
      %v1058 = vld [vmem:[#allocation2 + $0x16a] sm:$0xff]
      %v1059 = vld [vmem:[#allocation2 + $0x172] sm:$0xff]
      %v1060 = vld [vmem:[%s1 + $0x2] sm:$0x1]
      %1062 = vset.pattern.permute.xlu0 0
      %1063 = vperm.xlu0 %1062, %v1028
      %v1064 = vpop.permute.xlu0 %1063
      %1067 = vset.pattern.permute.xlu0 0
      %1068 = vperm.xlu0 %1067, %v1029
      %v1069 = vpop.permute.xlu0 %1068
      %1072 = vset.pattern.permute.xlu0 0
      %1073 = vperm.xlu0 %1072, %v1030
      %v1074 = vpop.permute.xlu0 %1073
      %1077 = vset.pattern.permute.xlu0 0
      %1078 = vperm.xlu0 %1077, %v1031
      %v1079 = vpop.permute.xlu0 %1078
      %1082 = vset.pattern.permute.xlu0 0
      %1083 = vperm.xlu0 %1082, %v1032
      %v1084 = vpop.permute.xlu0 %1083
      %1087 = vset.pattern.permute.xlu0 0
      %1088 = vperm.xlu0 %1087, %v1033
      %v1089 = vpop.permute.xlu0 %1088
      %1092 = vset.pattern.permute.xlu0 0
      %1093 = vperm.xlu0 %1092, %v1034
      %v1094 = vpop.permute.xlu0 %1093
      %1097 = vset.pattern.permute.xlu0 0
      %1098 = vperm.xlu0 %1097, %v1035
      %v1099 = vpop.permute.xlu0 %1098
      %1102 = vset.pattern.permute.xlu0 0
      %1103 = vperm.xlu0 %1102, %v1036
      %v1104 = vpop.permute.xlu0 %1103
      %1107 = vset.pattern.permute.xlu0 0
      %1108 = vperm.xlu0 %1107, %v1037
      %v1109 = vpop.permute.xlu0 %1108
      %1112 = vset.pattern.permute.xlu0 0
      %1113 = vperm.xlu0 %1112, %v1038
      %v1114 = vpop.permute.xlu0 %1113
      %1117 = vset.pattern.permute.xlu0 0
      %1118 = vperm.xlu0 %1117, %v1039
      %v1119 = vpop.permute.xlu0 %1118
      %1122 = vset.pattern.permute.xlu0 0
      %1123 = vperm.xlu0 %1122, %v1040
      %v1124 = vpop.permute.xlu0 %1123
      %1127 = vset.pattern.permute.xlu0 0
      %1128 = vperm.xlu0 %1127, %v1041
      %v1129 = vpop.permute.xlu0 %1128
      %1132 = vset.pattern.permute.xlu0 0
      %1133 = vperm.xlu0 %1132, %v1042
      %v1134 = vpop.permute.xlu0 %1133
      %1137 = vset.pattern.permute.xlu0 0
      %1138 = vperm.xlu0 %1137, %v1043
      %v1139 = vpop.permute.xlu0 %1138
      %1142 = vset.pattern.permute.xlu0 0
      %1143 = vperm.xlu0 %1142, %v1044
      %v1144 = vpop.permute.xlu0 %1143
      %1147 = vset.pattern.permute.xlu0 0
      %1148 = vperm.xlu0 %1147, %v1045
      %v1149 = vpop.permute.xlu0 %1148
      %1152 = vset.pattern.permute.xlu0 0
      %1153 = vperm.xlu0 %1152, %v1046
      %v1154 = vpop.permute.xlu0 %1153
      %1157 = vset.pattern.permute.xlu0 0
      %1158 = vperm.xlu0 %1157, %v1047
      %v1159 = vpop.permute.xlu0 %1158
      %1162 = vset.pattern.permute.xlu0 0
      %1163 = vperm.xlu0 %1162, %v1048
      %v1164 = vpop.permute.xlu0 %1163
      %1167 = vset.pattern.permute.xlu0 0
      %1168 = vperm.xlu0 %1167, %v1049
      %v1169 = vpop.permute.xlu0 %1168
      %1172 = vset.pattern.permute.xlu0 0
      %1173 = vperm.xlu0 %1172, %v1050
      %v1174 = vpop.permute.xlu0 %1173
      %1177 = vset.pattern.permute.xlu0 0
      %1178 = vperm.xlu0 %1177, %v1051
      %v1179 = vpop.permute.xlu0 %1178
      %1182 = vset.pattern.permute.xlu0 0
      %1183 = vperm.xlu0 %1182, %v1052
      %v1184 = vpop.permute.xlu0 %1183
      %1187 = vset.pattern.permute.xlu0 0
      %1188 = vperm.xlu0 %1187, %v1053
      %v1189 = vpop.permute.xlu0 %1188
      %1192 = vset.pattern.permute.xlu0 0
      %1193 = vperm.xlu0 %1192, %v1054
      %v1194 = vpop.permute.xlu0 %1193
      %1197 = vset.pattern.permute.xlu0 0
      %1198 = vperm.xlu0 %1197, %v1055
      %v1199 = vpop.permute.xlu0 %1198
      %1202 = vset.pattern.permute.xlu0 0
      %1203 = vperm.xlu0 %1202, %v1056
      %v1204 = vpop.permute.xlu0 %1203
      %1207 = vset.pattern.permute.xlu0 0
      %1208 = vperm.xlu0 %1207, %v1057
      %v1209 = vpop.permute.xlu0 %1208
      %1212 = vset.pattern.permute.xlu0 0
      %1213 = vperm.xlu0 %1212, %v1058
      %v1214 = vpop.permute.xlu0 %1213
      %1217 = vset.pattern.permute.xlu0 0
      %1218 = vperm.xlu0 %1217, %v1059
      %v1219 = vpop.permute.xlu0 %1218
      %v1221 = vperm.slane %v1060, 0
      %v1222 = vmul.f32 %v1064, %v1221
      %v1223 = vmul.f32 %v1069, %v1221
      %v1224 = vmul.f32 %v1074, %v1221
      %v1225 = vmul.f32 %v1079, %v1221
      %v1226 = vmul.f32 %v1084, %v1221
      %v1227 = vmul.f32 %v1089, %v1221
      %v1228 = vmul.f32 %v1094, %v1221
      %v1229 = vmul.f32 %v1099, %v1221
      %v1230 = vmul.f32 %v1104, %v1221
      %v1231 = vmul.f32 %v1109, %v1221
      %v1232 = vmul.f32 %v1114, %v1221
      %v1233 = vmul.f32 %v1119, %v1221
      %v1234 = vmul.f32 %v1124, %v1221
      %v1235 = vmul.f32 %v1129, %v1221
      %v1236 = vmul.f32 %v1134, %v1221
      %v1237 = vmul.f32 %v1139, %v1221
      %v1238 = vmul.f32 %v1144, %v1221
      %v1239 = vmul.f32 %v1149, %v1221
      %v1240 = vmul.f32 %v1154, %v1221
      %v1241 = vmul.f32 %v1159, %v1221
      %v1242 = vmul.f32 %v1164, %v1221
      %v1243 = vmul.f32 %v1169, %v1221
      %v1244 = vmul.f32 %v1174, %v1221
      %v1245 = vmul.f32 %v1179, %v1221
      %v1246 = vmul.f32 %v1184, %v1221
      %v1247 = vmul.f32 %v1189, %v1221
      %v1248 = vmul.f32 %v1194, %v1221
      %v1249 = vmul.f32 %v1199, %v1221
      %v1250 = vmul.f32 %v1204, %v1221
      %v1251 = vmul.f32 %v1209, %v1221
      %v1252 = vmul.f32 %v1214, %v1221
      %v1253 = vmul.f32 %v1219, %v1221
      %v1254 = vadd.f32 %v996, %v1222
      %v1255 = vadd.f32 %v997, %v1223
      %v1256 = vadd.f32 %v998, %v1224
      %v1257 = vadd.f32 %v999, %v1225
      %v1258 = vadd.f32 %v1000, %v1226
      %v1259 = vadd.f32 %v1001, %v1227
      %v1260 = vadd.f32 %v1002, %v1228
      %v1261 = vadd.f32 %v1003, %v1229
      %v1262 = vadd.f32 %v1004, %v1230
      %v1263 = vadd.f32 %v1005, %v1231
      %v1264 = vadd.f32 %v1006, %v1232
      %v1265 = vadd.f32 %v1007, %v1233
      %v1266 = vadd.f32 %v1008, %v1234
      %v1267 = vadd.f32 %v1009, %v1235
      %v1268 = vadd.f32 %v1010, %v1236
      %v1269 = vadd.f32 %v1011, %v1237
      %v1270 = vadd.f32 %v1012, %v1238
      %v1271 = vadd.f32 %v1013, %v1239
      %v1272 = vadd.f32 %v1014, %v1240
      %v1273 = vadd.f32 %v1015, %v1241
      %v1274 = vadd.f32 %v1016, %v1242
      %v1275 = vadd.f32 %v1017, %v1243
      %v1276 = vadd.f32 %v1018, %v1244
      %v1277 = vadd.f32 %v1019, %v1245
      %v1278 = vadd.f32 %v1020, %v1246
      %v1279 = vadd.f32 %v1021, %v1247
      %v1280 = vadd.f32 %v1022, %v1248
      %v1281 = vadd.f32 %v1023, %v1249
      %v1282 = vadd.f32 %v1024, %v1250
      %v1283 = vadd.f32 %v1025, %v1251
      %v1284 = vadd.f32 %v1026, %v1252
      %v1285 = vadd.f32 %v1027, %v1253
      %v1286 = vld [vmem:[%s479] sm:$0xff]
      %v1287 = vld [vmem:[%s479 + $0x8] sm:$0xff]
      %v1288 = vld [vmem:[%s479 + $0x18] sm:$0xff]
      %v1289 = vld [vmem:[%s479 + $0x20] sm:$0xff]
      %v1290 = vld [vmem:[%s479 + $0x30] sm:$0xff]
      %v1291 = vld [vmem:[%s479 + $0x38] sm:$0xff]
      %v1292 = vld [vmem:[%s479 + $0x48] sm:$0xff]
      %v1293 = vld [vmem:[%s479 + $0x50] sm:$0xff]
      %v1294 = vld [vmem:[%s479 + $0x60] sm:$0xff]
      %v1295 = vld [vmem:[%s479 + $0x68] sm:$0xff]
      %v1296 = vld [vmem:[%s479 + $0x78] sm:$0xff]
      %v1297 = vld [vmem:[%s479 + $0x80] sm:$0xff]
      %v1298 = vld [vmem:[%s479 + $0x90] sm:$0xff]
      %v1299 = vld [vmem:[%s479 + $0x98] sm:$0xff]
      %v1300 = vld [vmem:[%s479 + $0xa8] sm:$0xff]
      %v1301 = vld [vmem:[%s479 + $0xb0] sm:$0xff]
      %v1302 = vld [vmem:[%s479 + $0xc0] sm:$0xff]
      %v1303 = vld [vmem:[%s479 + $0xc8] sm:$0xff]
      %v1304 = vld [vmem:[%s479 + $0xd8] sm:$0xff]
      %v1305 = vld [vmem:[%s479 + $0xe0] sm:$0xff]
      %v1306 = vld [vmem:[%s479 + $0xf0] sm:$0xff]
      %v1307 = vld [vmem:[%s479 + $0xf8] sm:$0xff]
      %v1308 = vld [vmem:[%s479 + $0x108] sm:$0xff]
      %v1309 = vld [vmem:[%s479 + $0x110] sm:$0xff]
      %v1310 = vld [vmem:[%s479 + $0x120] sm:$0xff]
      %v1311 = vld [vmem:[%s479 + $0x128] sm:$0xff]
      %v1312 = vld [vmem:[%s479 + $0x138] sm:$0xff]
      %v1313 = vld [vmem:[%s479 + $0x140] sm:$0xff]
      %v1314 = vld [vmem:[%s479 + $0x150] sm:$0xff]
      %v1315 = vld [vmem:[%s479 + $0x158] sm:$0xff]
      %v1316 = vld [vmem:[%s479 + $0x168] sm:$0xff]
      %v1317 = vld [vmem:[%s479 + $0x170] sm:$0xff]
      %v1318 = vld [vmem:[%s1 + $0x3] sm:$0x1]
      %1320 = vset.pattern.permute.xlu0 0
      %1321 = vperm.xlu0 %1320, %v1286
      %v1322 = vpop.permute.xlu0 %1321
      %1325 = vset.pattern.permute.xlu0 0
      %1326 = vperm.xlu0 %1325, %v1287
      %v1327 = vpop.permute.xlu0 %1326
      %1330 = vset.pattern.permute.xlu0 0
      %1331 = vperm.xlu0 %1330, %v1288
      %v1332 = vpop.permute.xlu0 %1331
      %1335 = vset.pattern.permute.xlu0 0
      %1336 = vperm.xlu0 %1335, %v1289
      %v1337 = vpop.permute.xlu0 %1336
      %1340 = vset.pattern.permute.xlu0 0
      %1341 = vperm.xlu0 %1340, %v1290
      %v1342 = vpop.permute.xlu0 %1341
      %1345 = vset.pattern.permute.xlu0 0
      %1346 = vperm.xlu0 %1345, %v1291
      %v1347 = vpop.permute.xlu0 %1346
      %1350 = vset.pattern.permute.xlu0 0
      %1351 = vperm.xlu0 %1350, %v1292
      %v1352 = vpop.permute.xlu0 %1351
      %1355 = vset.pattern.permute.xlu0 0
      %1356 = vperm.xlu0 %1355, %v1293
      %v1357 = vpop.permute.xlu0 %1356
      %1360 = vset.pattern.permute.xlu0 0
      %1361 = vperm.xlu0 %1360, %v1294
      %v1362 = vpop.permute.xlu0 %1361
      %1365 = vset.pattern.permute.xlu0 0
      %1366 = vperm.xlu0 %1365, %v1295
      %v1367 = vpop.permute.xlu0 %1366
      %1370 = vset.pattern.permute.xlu0 0
      %1371 = vperm.xlu0 %1370, %v1296
      %v1372 = vpop.permute.xlu0 %1371
      %1375 = vset.pattern.permute.xlu0 0
      %1376 = vperm.xlu0 %1375, %v1297
      %v1377 = vpop.permute.xlu0 %1376
      %1380 = vset.pattern.permute.xlu0 0
      %1381 = vperm.xlu0 %1380, %v1298
      %v1382 = vpop.permute.xlu0 %1381
      %1385 = vset.pattern.permute.xlu0 0
      %1386 = vperm.xlu0 %1385, %v1299
      %v1387 = vpop.permute.xlu0 %1386
      %1390 = vset.pattern.permute.xlu0 0
      %1391 = vperm.xlu0 %1390, %v1300
      %v1392 = vpop.permute.xlu0 %1391
      %1395 = vset.pattern.permute.xlu0 0
      %1396 = vperm.xlu0 %1395, %v1301
      %v1397 = vpop.permute.xlu0 %1396
      %1400 = vset.pattern.permute.xlu0 0
      %1401 = vperm.xlu0 %1400, %v1302
      %v1402 = vpop.permute.xlu0 %1401
      %1405 = vset.pattern.permute.xlu0 0
      %1406 = vperm.xlu0 %1405, %v1303
      %v1407 = vpop.permute.xlu0 %1406
      %1410 = vset.pattern.permute.xlu0 0
      %1411 = vperm.xlu0 %1410, %v1304
      %v1412 = vpop.permute.xlu0 %1411
      %1415 = vset.pattern.permute.xlu0 0
      %1416 = vperm.xlu0 %1415, %v1305
      %v1417 = vpop.permute.xlu0 %1416
      %1420 = vset.pattern.permute.xlu0 0
      %1421 = vperm.xlu0 %1420, %v1306
      %v1422 = vpop.permute.xlu0 %1421
      %1425 = vset.pattern.permute.xlu0 0
      %1426 = vperm.xlu0 %1425, %v1307
      %v1427 = vpop.permute.xlu0 %1426
      %1430 = vset.pattern.permute.xlu0 0
      %1431 = vperm.xlu0 %1430, %v1308
      %v1432 = vpop.permute.xlu0 %1431
      %1435 = vset.pattern.permute.xlu0 0
      %1436 = vperm.xlu0 %1435, %v1309
      %v1437 = vpop.permute.xlu0 %1436
      %1440 = vset.pattern.permute.xlu0 0
      %1441 = vperm.xlu0 %1440, %v1310
      %v1442 = vpop.permute.xlu0 %1441
      %1445 = vset.pattern.permute.xlu0 0
      %1446 = vperm.xlu0 %1445, %v1311
      %v1447 = vpop.permute.xlu0 %1446
      %1450 = vset.pattern.permute.xlu0 0
      %1451 = vperm.xlu0 %1450, %v1312
      %v1452 = vpop.permute.xlu0 %1451
      %1455 = vset.pattern.permute.xlu0 0
      %1456 = vperm.xlu0 %1455, %v1313
      %v1457 = vpop.permute.xlu0 %1456
      %1460 = vset.pattern.permute.xlu0 0
      %1461 = vperm.xlu0 %1460, %v1314
      %v1462 = vpop.permute.xlu0 %1461
      %1465 = vset.pattern.permute.xlu0 0
      %1466 = vperm.xlu0 %1465, %v1315
      %v1467 = vpop.permute.xlu0 %1466
      %1470 = vset.pattern.permute.xlu0 0
      %1471 = vperm.xlu0 %1470, %v1316
      %v1472 = vpop.permute.xlu0 %1471
      %1475 = vset.pattern.permute.xlu0 0
      %1476 = vperm.xlu0 %1475, %v1317
      %v1477 = vpop.permute.xlu0 %1476
      %v1479 = vperm.slane %v1318, 0
      %v1480 = vmul.f32 %v1322, %v1479
      %v1481 = vmul.f32 %v1327, %v1479
      %v1482 = vmul.f32 %v1332, %v1479
      %v1483 = vmul.f32 %v1337, %v1479
      %v1484 = vmul.f32 %v1342, %v1479
      %v1485 = vmul.f32 %v1347, %v1479
      %v1486 = vmul.f32 %v1352, %v1479
      %v1487 = vmul.f32 %v1357, %v1479
      %v1488 = vmul.f32 %v1362, %v1479
      %v1489 = vmul.f32 %v1367, %v1479
      %v1490 = vmul.f32 %v1372, %v1479
      %v1491 = vmul.f32 %v1377, %v1479
      %v1492 = vmul.f32 %v1382, %v1479
      %v1493 = vmul.f32 %v1387, %v1479
      %v1494 = vmul.f32 %v1392, %v1479
      %v1495 = vmul.f32 %v1397, %v1479
      %v1496 = vmul.f32 %v1402, %v1479
      %v1497 = vmul.f32 %v1407, %v1479
      %v1498 = vmul.f32 %v1412, %v1479
      %v1499 = vmul.f32 %v1417, %v1479
      %v1500 = vmul.f32 %v1422, %v1479
      %v1501 = vmul.f32 %v1427, %v1479
      %v1502 = vmul.f32 %v1432, %v1479
      %v1503 = vmul.f32 %v1437, %v1479
      %v1504 = vmul.f32 %v1442, %v1479
      %v1505 = vmul.f32 %v1447, %v1479
      %v1506 = vmul.f32 %v1452, %v1479
      %v1507 = vmul.f32 %v1457, %v1479
      %v1508 = vmul.f32 %v1462, %v1479
      %v1509 = vmul.f32 %v1467, %v1479
      %v1510 = vmul.f32 %v1472, %v1479
      %v1511 = vmul.f32 %v1477, %v1479
      %v1512 = vadd.f32 %v1254, %v1480
      %v1513 = vadd.f32 %v1255, %v1481
      %v1514 = vadd.f32 %v1256, %v1482
      %v1515 = vadd.f32 %v1257, %v1483
      %v1516 = vadd.f32 %v1258, %v1484
      %v1517 = vadd.f32 %v1259, %v1485
      %v1518 = vadd.f32 %v1260, %v1486
      %v1519 = vadd.f32 %v1261, %v1487
      %v1520 = vadd.f32 %v1262, %v1488
      %v1521 = vadd.f32 %v1263, %v1489
      %v1522 = vadd.f32 %v1264, %v1490
      %v1523 = vadd.f32 %v1265, %v1491
      %v1524 = vadd.f32 %v1266, %v1492
      %v1525 = vadd.f32 %v1267, %v1493
      %v1526 = vadd.f32 %v1268, %v1494
      %v1527 = vadd.f32 %v1269, %v1495
      %v1528 = vadd.f32 %v1270, %v1496
      %v1529 = vadd.f32 %v1271, %v1497
      %v1530 = vadd.f32 %v1272, %v1498
      %v1531 = vadd.f32 %v1273, %v1499
      %v1532 = vadd.f32 %v1274, %v1500
      %v1533 = vadd.f32 %v1275, %v1501
      %v1534 = vadd.f32 %v1276, %v1502
      %v1535 = vadd.f32 %v1277, %v1503
      %v1536 = vadd.f32 %v1278, %v1504
      %v1537 = vadd.f32 %v1279, %v1505
      %v1538 = vadd.f32 %v1280, %v1506
      %v1539 = vadd.f32 %v1281, %v1507
      %v1540 = vadd.f32 %v1282, %v1508
      %v1541 = vadd.f32 %v1283, %v1509
      %v1542 = vadd.f32 %v1284, %v1510
      %v1543 = vadd.f32 %v1285, %v1511
      %v1544 = vld [vmem:[%s479 + $0x1] sm:$0xff]
      %v1545 = vld [vmem:[%s479 + $0x9] sm:$0xff]
      %v1546 = vld [vmem:[%s479 + $0x19] sm:$0xff]
      %v1547 = vld [vmem:[%s479 + $0x21] sm:$0xff]
      %v1548 = vld [vmem:[%s479 + $0x31] sm:$0xff]
      %v1549 = vld [vmem:[%s479 + $0x39] sm:$0xff]
      %v1550 = vld [vmem:[%s479 + $0x49] sm:$0xff]
      %v1551 = vld [vmem:[%s479 + $0x51] sm:$0xff]
      %v1552 = vld [vmem:[%s479 + $0x61] sm:$0xff]
      %v1553 = vld [vmem:[%s479 + $0x69] sm:$0xff]
      %v1554 = vld [vmem:[%s479 + $0x79] sm:$0xff]
      %v1555 = vld [vmem:[%s479 + $0x81] sm:$0xff]
      %v1556 = vld [vmem:[%s479 + $0x91] sm:$0xff]
      %v1557 = vld [vmem:[%s479 + $0x99] sm:$0xff]
      %v1558 = vld [vmem:[%s479 + $0xa9] sm:$0xff]
      %v1559 = vld [vmem:[%s479 + $0xb1] sm:$0xff]
      %v1560 = vld [vmem:[%s479 + $0xc1] sm:$0xff]
      %v1561 = vld [vmem:[%s479 + $0xc9] sm:$0xff]
      %v1562 = vld [vmem:[%s479 + $0xd9] sm:$0xff]
      %v1563 = vld [vmem:[%s479 + $0xe1] sm:$0xff]
      %v1564 = vld [vmem:[%s479 + $0xf1] sm:$0xff]
      %v1565 = vld [vmem:[%s479 + $0xf9] sm:$0xff]
      %v1566 = vld [vmem:[%s479 + $0x109] sm:$0xff]
      %v1567 = vld [vmem:[%s479 + $0x111] sm:$0xff]
      %v1568 = vld [vmem:[%s479 + $0x121] sm:$0xff]
      %v1569 = vld [vmem:[%s479 + $0x129] sm:$0xff]
      %v1570 = vld [vmem:[%s479 + $0x139] sm:$0xff]
      %v1571 = vld [vmem:[%s479 + $0x141] sm:$0xff]
      %v1572 = vld [vmem:[%s479 + $0x151] sm:$0xff]
      %v1573 = vld [vmem:[%s479 + $0x159] sm:$0xff]
      %v1574 = vld [vmem:[%s479 + $0x169] sm:$0xff]
      %v1575 = vld [vmem:[%s479 + $0x171] sm:$0xff]
      %v1576 = vld [vmem:[%s1 + $0x4] sm:$0x1]
      %1578 = vset.pattern.permute.xlu0 0
      %1579 = vperm.xlu0 %1578, %v1544
      %v1580 = vpop.permute.xlu0 %1579
      %1583 = vset.pattern.permute.xlu0 0
      %1584 = vperm.xlu0 %1583, %v1545
      %v1585 = vpop.permute.xlu0 %1584
      %1588 = vset.pattern.permute.xlu0 0
      %1589 = vperm.xlu0 %1588, %v1546
      %v1590 = vpop.permute.xlu0 %1589
      %1593 = vset.pattern.permute.xlu0 0
      %1594 = vperm.xlu0 %1593, %v1547
      %v1595 = vpop.permute.xlu0 %1594
      %1598 = vset.pattern.permute.xlu0 0
      %1599 = vperm.xlu0 %1598, %v1548
      %v1600 = vpop.permute.xlu0 %1599
      %1603 = vset.pattern.permute.xlu0 0
      %1604 = vperm.xlu0 %1603, %v1549
      %v1605 = vpop.permute.xlu0 %1604
      %1608 = vset.pattern.permute.xlu0 0
      %1609 = vperm.xlu0 %1608, %v1550
      %v1610 = vpop.permute.xlu0 %1609
      %1613 = vset.pattern.permute.xlu0 0
      %1614 = vperm.xlu0 %1613, %v1551
      %v1615 = vpop.permute.xlu0 %1614
      %1618 = vset.pattern.permute.xlu0 0
      %1619 = vperm.xlu0 %1618, %v1552
      %v1620 = vpop.permute.xlu0 %1619
      %1623 = vset.pattern.permute.xlu0 0
      %1624 = vperm.xlu0 %1623, %v1553
      %v1625 = vpop.permute.xlu0 %1624
      %1628 = vset.pattern.permute.xlu0 0
      %1629 = vperm.xlu0 %1628, %v1554
      %v1630 = vpop.permute.xlu0 %1629
      %1633 = vset.pattern.permute.xlu0 0
      %1634 = vperm.xlu0 %1633, %v1555
      %v1635 = vpop.permute.xlu0 %1634
      %1638 = vset.pattern.permute.xlu0 0
      %1639 = vperm.xlu0 %1638, %v1556
      %v1640 = vpop.permute.xlu0 %1639
      %1643 = vset.pattern.permute.xlu0 0
      %1644 = vperm.xlu0 %1643, %v1557
      %v1645 = vpop.permute.xlu0 %1644
      %1648 = vset.pattern.permute.xlu0 0
      %1649 = vperm.xlu0 %1648, %v1558
      %v1650 = vpop.permute.xlu0 %1649
      %1653 = vset.pattern.permute.xlu0 0
      %1654 = vperm.xlu0 %1653, %v1559
      %v1655 = vpop.permute.xlu0 %1654
      %1658 = vset.pattern.permute.xlu0 0
      %1659 = vperm.xlu0 %1658, %v1560
      %v1660 = vpop.permute.xlu0 %1659
      %1663 = vset.pattern.permute.xlu0 0
      %1664 = vperm.xlu0 %1663, %v1561
      %v1665 = vpop.permute.xlu0 %1664
      %1668 = vset.pattern.permute.xlu0 0
      %1669 = vperm.xlu0 %1668, %v1562
      %v1670 = vpop.permute.xlu0 %1669
      %1673 = vset.pattern.permute.xlu0 0
      %1674 = vperm.xlu0 %1673, %v1563
      %v1675 = vpop.permute.xlu0 %1674
      %1678 = vset.pattern.permute.xlu0 0
      %1679 = vperm.xlu0 %1678, %v1564
      %v1680 = vpop.permute.xlu0 %1679
      %1683 = vset.pattern.permute.xlu0 0
      %1684 = vperm.xlu0 %1683, %v1565
      %v1685 = vpop.permute.xlu0 %1684
      %1688 = vset.pattern.permute.xlu0 0
      %1689 = vperm.xlu0 %1688, %v1566
      %v1690 = vpop.permute.xlu0 %1689
      %1693 = vset.pattern.permute.xlu0 0
      %1694 = vperm.xlu0 %1693, %v1567
      %v1695 = vpop.permute.xlu0 %1694
      %1698 = vset.pattern.permute.xlu0 0
      %1699 = vperm.xlu0 %1698, %v1568
      %v1700 = vpop.permute.xlu0 %1699
      %1703 = vset.pattern.permute.xlu0 0
      %1704 = vperm.xlu0 %1703, %v1569
      %v1705 = vpop.permute.xlu0 %1704
      %1708 = vset.pattern.permute.xlu0 0
      %1709 = vperm.xlu0 %1708, %v1570
      %v1710 = vpop.permute.xlu0 %1709
      %1713 = vset.pattern.permute.xlu0 0
      %1714 = vperm.xlu0 %1713, %v1571
      %v1715 = vpop.permute.xlu0 %1714
      %1718 = vset.pattern.permute.xlu0 0
      %1719 = vperm.xlu0 %1718, %v1572
      %v1720 = vpop.permute.xlu0 %1719
      %1723 = vset.pattern.permute.xlu0 0
      %1724 = vperm.xlu0 %1723, %v1573
      %v1725 = vpop.permute.xlu0 %1724
      %1728 = vset.pattern.permute.xlu0 0
      %1729 = vperm.xlu0 %1728, %v1574
      %v1730 = vpop.permute.xlu0 %1729
      %1733 = vset.pattern.permute.xlu0 0
      %1734 = vperm.xlu0 %1733, %v1575
      %v1735 = vpop.permute.xlu0 %1734
      %v1737 = vperm.slane %v1576, 0
      %v1738 = vmul.f32 %v1580, %v1737
      %v1739 = vmul.f32 %v1585, %v1737
      %v1740 = vmul.f32 %v1590, %v1737
      %v1741 = vmul.f32 %v1595, %v1737
      %v1742 = vmul.f32 %v1600, %v1737
      %v1743 = vmul.f32 %v1605, %v1737
      %v1744 = vmul.f32 %v1610, %v1737
      %v1745 = vmul.f32 %v1615, %v1737
      %v1746 = vmul.f32 %v1620, %v1737
      %v1747 = vmul.f32 %v1625, %v1737
      %v1748 = vmul.f32 %v1630, %v1737
      %v1749 = vmul.f32 %v1635, %v1737
      %v1750 = vmul.f32 %v1640, %v1737
      %v1751 = vmul.f32 %v1645, %v1737
      %v1752 = vmul.f32 %v1650, %v1737
      %v1753 = vmul.f32 %v1655, %v1737
      %v1754 = vmul.f32 %v1660, %v1737
      %v1755 = vmul.f32 %v1665, %v1737
      %v1756 = vmul.f32 %v1670, %v1737
      %v1757 = vmul.f32 %v1675, %v1737
      %v1758 = vmul.f32 %v1680, %v1737
      %v1759 = vmul.f32 %v1685, %v1737
      %v1760 = vmul.f32 %v1690, %v1737
      %v1761 = vmul.f32 %v1695, %v1737
      %v1762 = vmul.f32 %v1700, %v1737
      %v1763 = vmul.f32 %v1705, %v1737
      %v1764 = vmul.f32 %v1710, %v1737
      %v1765 = vmul.f32 %v1715, %v1737
      %v1766 = vmul.f32 %v1720, %v1737
      %v1767 = vmul.f32 %v1725, %v1737
      %v1768 = vmul.f32 %v1730, %v1737
      %v1769 = vmul.f32 %v1735, %v1737
      %v1770 = vadd.f32 %v1512, %v1738
      %v1771 = vadd.f32 %v1513, %v1739
      %v1772 = vadd.f32 %v1514, %v1740
      %v1773 = vadd.f32 %v1515, %v1741
      %v1774 = vadd.f32 %v1516, %v1742
      %v1775 = vadd.f32 %v1517, %v1743
      %v1776 = vadd.f32 %v1518, %v1744
      %v1777 = vadd.f32 %v1519, %v1745
      %v1778 = vadd.f32 %v1520, %v1746
      %v1779 = vadd.f32 %v1521, %v1747
      %v1780 = vadd.f32 %v1522, %v1748
      %v1781 = vadd.f32 %v1523, %v1749
      %v1782 = vadd.f32 %v1524, %v1750
      %v1783 = vadd.f32 %v1525, %v1751
      %v1784 = vadd.f32 %v1526, %v1752
      %v1785 = vadd.f32 %v1527, %v1753
      %v1786 = vadd.f32 %v1528, %v1754
      %v1787 = vadd.f32 %v1529, %v1755
      %v1788 = vadd.f32 %v1530, %v1756
      %v1789 = vadd.f32 %v1531, %v1757
      %v1790 = vadd.f32 %v1532, %v1758
      %v1791 = vadd.f32 %v1533, %v1759
      %v1792 = vadd.f32 %v1534, %v1760
      %v1793 = vadd.f32 %v1535, %v1761
      %v1794 = vadd.f32 %v1536, %v1762
      %v1795 = vadd.f32 %v1537, %v1763
      %v1796 = vadd.f32 %v1538, %v1764
      %v1797 = vadd.f32 %v1539, %v1765
      %v1798 = vadd.f32 %v1540, %v1766
      %v1799 = vadd.f32 %v1541, %v1767
      %v1800 = vadd.f32 %v1542, %v1768
      %v1801 = vadd.f32 %v1543, %v1769
      %v1802 = vld [vmem:[%s479 + $0x2] sm:$0xff]
      %v1803 = vld [vmem:[%s479 + $0xa] sm:$0xff]
      %v1804 = vld [vmem:[%s479 + $0x1a] sm:$0xff]
      %v1805 = vld [vmem:[%s479 + $0x22] sm:$0xff]
      %v1806 = vld [vmem:[%s479 + $0x32] sm:$0xff]
      %v1807 = vld [vmem:[%s479 + $0x3a] sm:$0xff]
      %v1808 = vld [vmem:[%s479 + $0x4a] sm:$0xff]
      %v1809 = vld [vmem:[%s479 + $0x52] sm:$0xff]
      %v1810 = vld [vmem:[%s479 + $0x62] sm:$0xff]
      %v1811 = vld [vmem:[%s479 + $0x6a] sm:$0xff]
      %v1812 = vld [vmem:[%s479 + $0x7a] sm:$0xff]
      %v1813 = vld [vmem:[%s479 + $0x82] sm:$0xff]
      %v1814 = vld [vmem:[%s479 + $0x92] sm:$0xff]
      %v1815 = vld [vmem:[%s479 + $0x9a] sm:$0xff]
      %v1816 = vld [vmem:[%s479 + $0xaa] sm:$0xff]
      %v1817 = vld [vmem:[%s479 + $0xb2] sm:$0xff]
      %v1818 = vld [vmem:[%s479 + $0xc2] sm:$0xff]
      %v1819 = vld [vmem:[%s479 + $0xca] sm:$0xff]
      %v1820 = vld [vmem:[%s479 + $0xda] sm:$0xff]
      %v1821 = vld [vmem:[%s479 + $0xe2] sm:$0xff]
      %v1822 = vld [vmem:[%s479 + $0xf2] sm:$0xff]
      %v1823 = vld [vmem:[%s479 + $0xfa] sm:$0xff]
      %v1824 = vld [vmem:[%s479 + $0x10a] sm:$0xff]
      %v1825 = vld [vmem:[%s479 + $0x112] sm:$0xff]
      %v1826 = vld [vmem:[%s479 + $0x122] sm:$0xff]
      %v1827 = vld [vmem:[%s479 + $0x12a] sm:$0xff]
      %v1828 = vld [vmem:[%s479 + $0x13a] sm:$0xff]
      %v1829 = vld [vmem:[%s479 + $0x142] sm:$0xff]
      %v1830 = vld [vmem:[%s479 + $0x152] sm:$0xff]
      %v1831 = vld [vmem:[%s479 + $0x15a] sm:$0xff]
      %v1832 = vld [vmem:[%s479 + $0x16a] sm:$0xff]
      %v1833 = vld [vmem:[%s479 + $0x172] sm:$0xff]
      %v1834 = vld [vmem:[%s1 + $0x5] sm:$0x1]
      %1836 = vset.pattern.permute.xlu0 0
      %1837 = vperm.xlu0 %1836, %v1802
      %v1838 = vpop.permute.xlu0 %1837
      %1841 = vset.pattern.permute.xlu0 0
      %1842 = vperm.xlu0 %1841, %v1803
      %v1843 = vpop.permute.xlu0 %1842
      %1846 = vset.pattern.permute.xlu0 0
      %1847 = vperm.xlu0 %1846, %v1804
      %v1848 = vpop.permute.xlu0 %1847
      %1851 = vset.pattern.permute.xlu0 0
      %1852 = vperm.xlu0 %1851, %v1805
      %v1853 = vpop.permute.xlu0 %1852
      %1856 = vset.pattern.permute.xlu0 0
      %1857 = vperm.xlu0 %1856, %v1806
      %v1858 = vpop.permute.xlu0 %1857
      %1861 = vset.pattern.permute.xlu0 0
      %1862 = vperm.xlu0 %1861, %v1807
      %v1863 = vpop.permute.xlu0 %1862
      %1866 = vset.pattern.permute.xlu0 0
      %1867 = vperm.xlu0 %1866, %v1808
      %v1868 = vpop.permute.xlu0 %1867
      %1871 = vset.pattern.permute.xlu0 0
      %1872 = vperm.xlu0 %1871, %v1809
      %v1873 = vpop.permute.xlu0 %1872
      %1876 = vset.pattern.permute.xlu0 0
      %1877 = vperm.xlu0 %1876, %v1810
      %v1878 = vpop.permute.xlu0 %1877
      %1881 = vset.pattern.permute.xlu0 0
      %1882 = vperm.xlu0 %1881, %v1811
      %v1883 = vpop.permute.xlu0 %1882
      %1886 = vset.pattern.permute.xlu0 0
      %1887 = vperm.xlu0 %1886, %v1812
      %v1888 = vpop.permute.xlu0 %1887
      %1891 = vset.pattern.permute.xlu0 0
      %1892 = vperm.xlu0 %1891, %v1813
      %v1893 = vpop.permute.xlu0 %1892
      %1896 = vset.pattern.permute.xlu0 0
      %1897 = vperm.xlu0 %1896, %v1814
      %v1898 = vpop.permute.xlu0 %1897
      %1901 = vset.pattern.permute.xlu0 0
      %1902 = vperm.xlu0 %1901, %v1815
      %v1903 = vpop.permute.xlu0 %1902
      %1906 = vset.pattern.permute.xlu0 0
      %1907 = vperm.xlu0 %1906, %v1816
      %v1908 = vpop.permute.xlu0 %1907
      %1911 = vset.pattern.permute.xlu0 0
      %1912 = vperm.xlu0 %1911, %v1817
      %v1913 = vpop.permute.xlu0 %1912
      %1916 = vset.pattern.permute.xlu0 0
      %1917 = vperm.xlu0 %1916, %v1818
      %v1918 = vpop.permute.xlu0 %1917
      %1921 = vset.pattern.permute.xlu0 0
      %1922 = vperm.xlu0 %1921, %v1819
      %v1923 = vpop.permute.xlu0 %1922
      %1926 = vset.pattern.permute.xlu0 0
      %1927 = vperm.xlu0 %1926, %v1820
      %v1928 = vpop.permute.xlu0 %1927
      %1931 = vset.pattern.permute.xlu0 0
      %1932 = vperm.xlu0 %1931, %v1821
      %v1933 = vpop.permute.xlu0 %1932
      %1936 = vset.pattern.permute.xlu0 0
      %1937 = vperm.xlu0 %1936, %v1822
      %v1938 = vpop.permute.xlu0 %1937
      %1941 = vset.pattern.permute.xlu0 0
      %1942 = vperm.xlu0 %1941, %v1823
      %v1943 = vpop.permute.xlu0 %1942
      %1946 = vset.pattern.permute.xlu0 0
      %1947 = vperm.xlu0 %1946, %v1824
      %v1948 = vpop.permute.xlu0 %1947
      %1951 = vset.pattern.permute.xlu0 0
      %1952 = vperm.xlu0 %1951, %v1825
      %v1953 = vpop.permute.xlu0 %1952
      %1956 = vset.pattern.permute.xlu0 0
      %1957 = vperm.xlu0 %1956, %v1826
      %v1958 = vpop.permute.xlu0 %1957
      %1961 = vset.pattern.permute.xlu0 0
      %1962 = vperm.xlu0 %1961, %v1827
      %v1963 = vpop.permute.xlu0 %1962
      %1966 = vset.pattern.permute.xlu0 0
      %1967 = vperm.xlu0 %1966, %v1828
      %v1968 = vpop.permute.xlu0 %1967
      %1971 = vset.pattern.permute.xlu0 0
      %1972 = vperm.xlu0 %1971, %v1829
      %v1973 = vpop.permute.xlu0 %1972
      %1976 = vset.pattern.permute.xlu0 0
      %1977 = vperm.xlu0 %1976, %v1830
      %v1978 = vpop.permute.xlu0 %1977
      %1981 = vset.pattern.permute.xlu0 0
      %1982 = vperm.xlu0 %1981, %v1831
      %v1983 = vpop.permute.xlu0 %1982
      %1986 = vset.pattern.permute.xlu0 0
      %1987 = vperm.xlu0 %1986, %v1832
      %v1988 = vpop.permute.xlu0 %1987
      %1991 = vset.pattern.permute.xlu0 0
      %1992 = vperm.xlu0 %1991, %v1833
      %v1993 = vpop.permute.xlu0 %1992
      %v1995 = vperm.slane %v1834, 0
      %v1996 = vmul.f32 %v1838, %v1995
      %v1997 = vmul.f32 %v1843, %v1995
      %v1998 = vmul.f32 %v1848, %v1995
      %v1999 = vmul.f32 %v1853, %v1995
      %v2000 = vmul.f32 %v1858, %v1995
      %v2001 = vmul.f32 %v1863, %v1995
      %v2002 = vmul.f32 %v1868, %v1995
      %v2003 = vmul.f32 %v1873, %v1995
      %v2004 = vmul.f32 %v1878, %v1995
      %v2005 = vmul.f32 %v1883, %v1995
      %v2006 = vmul.f32 %v1888, %v1995
      %v2007 = vmul.f32 %v1893, %v1995
      %v2008 = vmul.f32 %v1898, %v1995
      %v2009 = vmul.f32 %v1903, %v1995
      %v2010 = vmul.f32 %v1908, %v1995
      %v2011 = vmul.f32 %v1913, %v1995
      %v2012 = vmul.f32 %v1918, %v1995
      %v2013 = vmul.f32 %v1923, %v1995
      %v2014 = vmul.f32 %v1928, %v1995
      %v2015 = vmul.f32 %v1933, %v1995
      %v2016 = vmul.f32 %v1938, %v1995
      %v2017 = vmul.f32 %v1943, %v1995
      %v2018 = vmul.f32 %v1948, %v1995
      %v2019 = vmul.f32 %v1953, %v1995
      %v2020 = vmul.f32 %v1958, %v1995
      %v2021 = vmul.f32 %v1963, %v1995
      %v2022 = vmul.f32 %v1968, %v1995
      %v2023 = vmul.f32 %v1973, %v1995
      %v2024 = vmul.f32 %v1978, %v1995
      %v2025 = vmul.f32 %v1983, %v1995
      %v2026 = vmul.f32 %v1988, %v1995
      %v2027 = vmul.f32 %v1993, %v1995
      %v2028 = vadd.f32 %v1770, %v1996
      %v2029 = vadd.f32 %v1771, %v1997
      %v2030 = vadd.f32 %v1772, %v1998
      %v2031 = vadd.f32 %v1773, %v1999
      %v2032 = vadd.f32 %v1774, %v2000
      %v2033 = vadd.f32 %v1775, %v2001
      %v2034 = vadd.f32 %v1776, %v2002
      %v2035 = vadd.f32 %v1777, %v2003
      %v2036 = vadd.f32 %v1778, %v2004
      %v2037 = vadd.f32 %v1779, %v2005
      %v2038 = vadd.f32 %v1780, %v2006
      %v2039 = vadd.f32 %v1781, %v2007
      %v2040 = vadd.f32 %v1782, %v2008
      %v2041 = vadd.f32 %v1783, %v2009
      %v2042 = vadd.f32 %v1784, %v2010
      %v2043 = vadd.f32 %v1785, %v2011
      %v2044 = vadd.f32 %v1786, %v2012
      %v2045 = vadd.f32 %v1787, %v2013
      %v2046 = vadd.f32 %v1788, %v2014
      %v2047 = vadd.f32 %v1789, %v2015
      %v2048 = vadd.f32 %v1790, %v2016
      %v2049 = vadd.f32 %v1791, %v2017
      %v2050 = vadd.f32 %v1792, %v2018
      %v2051 = vadd.f32 %v1793, %v2019
      %v2052 = vadd.f32 %v1794, %v2020
      %v2053 = vadd.f32 %v1795, %v2021
      %v2054 = vadd.f32 %v1796, %v2022
      %v2055 = vadd.f32 %v1797, %v2023
      %v2056 = vadd.f32 %v1798, %v2024
      %v2057 = vadd.f32 %v1799, %v2025
      %v2058 = vadd.f32 %v1800, %v2026
      %v2059 = vadd.f32 %v1801, %v2027
      %s2060 = scalar_lea.vmem [#allocation2], 48
      %v2061 = vld [vmem:[%s2060] sm:$0xff]
      %v2062 = vld [vmem:[%s2060 + $0x8] sm:$0xff]
      %v2063 = vld [vmem:[%s2060 + $0x18] sm:$0xff]
      %v2064 = vld [vmem:[%s2060 + $0x20] sm:$0xff]
      %v2065 = vld [vmem:[%s2060 + $0x30] sm:$0xff]
      %v2066 = vld [vmem:[%s2060 + $0x38] sm:$0xff]
      %v2067 = vld [vmem:[%s2060 + $0x48] sm:$0xff]
      %v2068 = vld [vmem:[%s2060 + $0x50] sm:$0xff]
      %v2069 = vld [vmem:[%s2060 + $0x60] sm:$0xff]
      %v2070 = vld [vmem:[%s2060 + $0x68] sm:$0xff]
      %v2071 = vld [vmem:[%s2060 + $0x78] sm:$0xff]
      %v2072 = vld [vmem:[%s2060 + $0x80] sm:$0xff]
      %v2073 = vld [vmem:[%s2060 + $0x90] sm:$0xff]
      %v2074 = vld [vmem:[%s2060 + $0x98] sm:$0xff]
      %v2075 = vld [vmem:[%s2060 + $0xa8] sm:$0xff]
      %v2076 = vld [vmem:[%s2060 + $0xb0] sm:$0xff]
      %v2077 = vld [vmem:[%s2060 + $0xc0] sm:$0xff]
      %v2078 = vld [vmem:[%s2060 + $0xc8] sm:$0xff]
      %v2079 = vld [vmem:[%s2060 + $0xd8] sm:$0xff]
      %v2080 = vld [vmem:[%s2060 + $0xe0] sm:$0xff]
      %v2081 = vld [vmem:[%s2060 + $0xf0] sm:$0xff]
      %v2082 = vld [vmem:[%s2060 + $0xf8] sm:$0xff]
      %v2083 = vld [vmem:[%s2060 + $0x108] sm:$0xff]
      %v2084 = vld [vmem:[%s2060 + $0x110] sm:$0xff]
      %v2085 = vld [vmem:[%s2060 + $0x120] sm:$0xff]
      %v2086 = vld [vmem:[%s2060 + $0x128] sm:$0xff]
      %v2087 = vld [vmem:[%s2060 + $0x138] sm:$0xff]
      %v2088 = vld [vmem:[%s2060 + $0x140] sm:$0xff]
      %v2089 = vld [vmem:[%s2060 + $0x150] sm:$0xff]
      %v2090 = vld [vmem:[%s2060 + $0x158] sm:$0xff]
      %v2091 = vld [vmem:[%s2060 + $0x168] sm:$0xff]
      %v2092 = vld [vmem:[%s2060 + $0x170] sm:$0xff]
      %v2093 = vld [vmem:[%s1 + $0x6] sm:$0x1]
      %2095 = vset.pattern.permute.xlu0 0
      %2096 = vperm.xlu0 %2095, %v2061
      %v2097 = vpop.permute.xlu0 %2096
      %2100 = vset.pattern.permute.xlu0 0
      %2101 = vperm.xlu0 %2100, %v2062
      %v2102 = vpop.permute.xlu0 %2101
      %2105 = vset.pattern.permute.xlu0 0
      %2106 = vperm.xlu0 %2105, %v2063
      %v2107 = vpop.permute.xlu0 %2106
      %2110 = vset.pattern.permute.xlu0 0
      %2111 = vperm.xlu0 %2110, %v2064
      %v2112 = vpop.permute.xlu0 %2111
      %2115 = vset.pattern.permute.xlu0 0
      %2116 = vperm.xlu0 %2115, %v2065
      %v2117 = vpop.permute.xlu0 %2116
      %2120 = vset.pattern.permute.xlu0 0
      %2121 = vperm.xlu0 %2120, %v2066
      %v2122 = vpop.permute.xlu0 %2121
      %2125 = vset.pattern.permute.xlu0 0
      %2126 = vperm.xlu0 %2125, %v2067
      %v2127 = vpop.permute.xlu0 %2126
      %2130 = vset.pattern.permute.xlu0 0
      %2131 = vperm.xlu0 %2130, %v2068
      %v2132 = vpop.permute.xlu0 %2131
      %2135 = vset.pattern.permute.xlu0 0
      %2136 = vperm.xlu0 %2135, %v2069
      %v2137 = vpop.permute.xlu0 %2136
      %2140 = vset.pattern.permute.xlu0 0
      %2141 = vperm.xlu0 %2140, %v2070
      %v2142 = vpop.permute.xlu0 %2141
      %2145 = vset.pattern.permute.xlu0 0
      %2146 = vperm.xlu0 %2145, %v2071
      %v2147 = vpop.permute.xlu0 %2146
      %2150 = vset.pattern.permute.xlu0 0
      %2151 = vperm.xlu0 %2150, %v2072
      %v2152 = vpop.permute.xlu0 %2151
      %2155 = vset.pattern.permute.xlu0 0
      %2156 = vperm.xlu0 %2155, %v2073
      %v2157 = vpop.permute.xlu0 %2156
      %2160 = vset.pattern.permute.xlu0 0
      %2161 = vperm.xlu0 %2160, %v2074
      %v2162 = vpop.permute.xlu0 %2161
      %2165 = vset.pattern.permute.xlu0 0
      %2166 = vperm.xlu0 %2165, %v2075
      %v2167 = vpop.permute.xlu0 %2166
      %2170 = vset.pattern.permute.xlu0 0
      %2171 = vperm.xlu0 %2170, %v2076
      %v2172 = vpop.permute.xlu0 %2171
      %2175 = vset.pattern.permute.xlu0 0
      %2176 = vperm.xlu0 %2175, %v2077
      %v2177 = vpop.permute.xlu0 %2176
      %2180 = vset.pattern.permute.xlu0 0
      %2181 = vperm.xlu0 %2180, %v2078
      %v2182 = vpop.permute.xlu0 %2181
      %2185 = vset.pattern.permute.xlu0 0
      %2186 = vperm.xlu0 %2185, %v2079
      %v2187 = vpop.permute.xlu0 %2186
      %2190 = vset.pattern.permute.xlu0 0
      %2191 = vperm.xlu0 %2190, %v2080
      %v2192 = vpop.permute.xlu0 %2191
      %2195 = vset.pattern.permute.xlu0 0
      %2196 = vperm.xlu0 %2195, %v2081
      %v2197 = vpop.permute.xlu0 %2196
      %2200 = vset.pattern.permute.xlu0 0
      %2201 = vperm.xlu0 %2200, %v2082
      %v2202 = vpop.permute.xlu0 %2201
      %2205 = vset.pattern.permute.xlu0 0
      %2206 = vperm.xlu0 %2205, %v2083
      %v2207 = vpop.permute.xlu0 %2206
      %2210 = vset.pattern.permute.xlu0 0
      %2211 = vperm.xlu0 %2210, %v2084
      %v2212 = vpop.permute.xlu0 %2211
      %2215 = vset.pattern.permute.xlu0 0
      %2216 = vperm.xlu0 %2215, %v2085
      %v2217 = vpop.permute.xlu0 %2216
      %2220 = vset.pattern.permute.xlu0 0
      %2221 = vperm.xlu0 %2220, %v2086
      %v2222 = vpop.permute.xlu0 %2221
      %2225 = vset.pattern.permute.xlu0 0
      %2226 = vperm.xlu0 %2225, %v2087
      %v2227 = vpop.permute.xlu0 %2226
      %2230 = vset.pattern.permute.xlu0 0
      %2231 = vperm.xlu0 %2230, %v2088
      %v2232 = vpop.permute.xlu0 %2231
      %2235 = vset.pattern.permute.xlu0 0
      %2236 = vperm.xlu0 %2235, %v2089
      %v2237 = vpop.permute.xlu0 %2236
      %2240 = vset.pattern.permute.xlu0 0
      %2241 = vperm.xlu0 %2240, %v2090
      %v2242 = vpop.permute.xlu0 %2241
      %2245 = vset.pattern.permute.xlu0 0
      %2246 = vperm.xlu0 %2245, %v2091
      %v2247 = vpop.permute.xlu0 %2246
      %2250 = vset.pattern.permute.xlu0 0
      %2251 = vperm.xlu0 %2250, %v2092
      %v2252 = vpop.permute.xlu0 %2251
      %v2254 = vperm.slane %v2093, 0
      %v2255 = vmul.f32 %v2097, %v2254
      %v2256 = vmul.f32 %v2102, %v2254
      %v2257 = vmul.f32 %v2107, %v2254
      %v2258 = vmul.f32 %v2112, %v2254
      %v2259 = vmul.f32 %v2117, %v2254
      %v2260 = vmul.f32 %v2122, %v2254
      %v2261 = vmul.f32 %v2127, %v2254
      %v2262 = vmul.f32 %v2132, %v2254
      %v2263 = vmul.f32 %v2137, %v2254
      %v2264 = vmul.f32 %v2142, %v2254
      %v2265 = vmul.f32 %v2147, %v2254
      %v2266 = vmul.f32 %v2152, %v2254
      %v2267 = vmul.f32 %v2157, %v2254
      %v2268 = vmul.f32 %v2162, %v2254
      %v2269 = vmul.f32 %v2167, %v2254
      %v2270 = vmul.f32 %v2172, %v2254
      %v2271 = vmul.f32 %v2177, %v2254
      %v2272 = vmul.f32 %v2182, %v2254
      %v2273 = vmul.f32 %v2187, %v2254
      %v2274 = vmul.f32 %v2192, %v2254
      %v2275 = vmul.f32 %v2197, %v2254
      %v2276 = vmul.f32 %v2202, %v2254
      %v2277 = vmul.f32 %v2207, %v2254
      %v2278 = vmul.f32 %v2212, %v2254
      %v2279 = vmul.f32 %v2217, %v2254
      %v2280 = vmul.f32 %v2222, %v2254
      %v2281 = vmul.f32 %v2227, %v2254
      %v2282 = vmul.f32 %v2232, %v2254
      %v2283 = vmul.f32 %v2237, %v2254
      %v2284 = vmul.f32 %v2242, %v2254
      %v2285 = vmul.f32 %v2247, %v2254
      %v2286 = vmul.f32 %v2252, %v2254
      %v2287 = vadd.f32 %v2028, %v2255
      %v2288 = vadd.f32 %v2029, %v2256
      %v2289 = vadd.f32 %v2030, %v2257
      %v2290 = vadd.f32 %v2031, %v2258
      %v2291 = vadd.f32 %v2032, %v2259
      %v2292 = vadd.f32 %v2033, %v2260
      %v2293 = vadd.f32 %v2034, %v2261
      %v2294 = vadd.f32 %v2035, %v2262
      %v2295 = vadd.f32 %v2036, %v2263
      %v2296 = vadd.f32 %v2037, %v2264
      %v2297 = vadd.f32 %v2038, %v2265
      %v2298 = vadd.f32 %v2039, %v2266
      %v2299 = vadd.f32 %v2040, %v2267
      %v2300 = vadd.f32 %v2041, %v2268
      %v2301 = vadd.f32 %v2042, %v2269
      %v2302 = vadd.f32 %v2043, %v2270
      %v2303 = vadd.f32 %v2044, %v2271
      %v2304 = vadd.f32 %v2045, %v2272
      %v2305 = vadd.f32 %v2046, %v2273
      %v2306 = vadd.f32 %v2047, %v2274
      %v2307 = vadd.f32 %v2048, %v2275
      %v2308 = vadd.f32 %v2049, %v2276
      %v2309 = vadd.f32 %v2050, %v2277
      %v2310 = vadd.f32 %v2051, %v2278
      %v2311 = vadd.f32 %v2052, %v2279
      %v2312 = vadd.f32 %v2053, %v2280
      %v2313 = vadd.f32 %v2054, %v2281
      %v2314 = vadd.f32 %v2055, %v2282
      %v2315 = vadd.f32 %v2056, %v2283
      %v2316 = vadd.f32 %v2057, %v2284
      %v2317 = vadd.f32 %v2058, %v2285
      %v2318 = vadd.f32 %v2059, %v2286
      %v2319 = vld [vmem:[%s2060 + $0x1] sm:$0xff]
      %v2320 = vld [vmem:[%s2060 + $0x9] sm:$0xff]
      %v2321 = vld [vmem:[%s2060 + $0x19] sm:$0xff]
      %v2322 = vld [vmem:[%s2060 + $0x21] sm:$0xff]
      %v2323 = vld [vmem:[%s2060 + $0x31] sm:$0xff]
      %v2324 = vld [vmem:[%s2060 + $0x39] sm:$0xff]
      %v2325 = vld [vmem:[%s2060 + $0x49] sm:$0xff]
      %v2326 = vld [vmem:[%s2060 + $0x51] sm:$0xff]
      %v2327 = vld [vmem:[%s2060 + $0x61] sm:$0xff]
      %v2328 = vld [vmem:[%s2060 + $0x69] sm:$0xff]
      %v2329 = vld [vmem:[%s2060 + $0x79] sm:$0xff]
      %v2330 = vld [vmem:[%s2060 + $0x81] sm:$0xff]
      %v2331 = vld [vmem:[%s2060 + $0x91] sm:$0xff]
      %v2332 = vld [vmem:[%s2060 + $0x99] sm:$0xff]
      %v2333 = vld [vmem:[%s2060 + $0xa9] sm:$0xff]
      %v2334 = vld [vmem:[%s2060 + $0xb1] sm:$0xff]
      %v2335 = vld [vmem:[%s2060 + $0xc1] sm:$0xff]
      %v2336 = vld [vmem:[%s2060 + $0xc9] sm:$0xff]
      %v2337 = vld [vmem:[%s2060 + $0xd9] sm:$0xff]
      %v2338 = vld [vmem:[%s2060 + $0xe1] sm:$0xff]
      %v2339 = vld [vmem:[%s2060 + $0xf1] sm:$0xff]
      %v2340 = vld [vmem:[%s2060 + $0xf9] sm:$0xff]
      %v2341 = vld [vmem:[%s2060 + $0x109] sm:$0xff]
      %v2342 = vld [vmem:[%s2060 + $0x111] sm:$0xff]
      %v2343 = vld [vmem:[%s2060 + $0x121] sm:$0xff]
      %v2344 = vld [vmem:[%s2060 + $0x129] sm:$0xff]
      %v2345 = vld [vmem:[%s2060 + $0x139] sm:$0xff]
      %v2346 = vld [vmem:[%s2060 + $0x141] sm:$0xff]
      %v2347 = vld [vmem:[%s2060 + $0x151] sm:$0xff]
      %v2348 = vld [vmem:[%s2060 + $0x159] sm:$0xff]
      %v2349 = vld [vmem:[%s2060 + $0x169] sm:$0xff]
      %v2350 = vld [vmem:[%s2060 + $0x171] sm:$0xff]
      %v2351 = vld [vmem:[%s1 + $0x7] sm:$0x1]
      %2353 = vset.pattern.permute.xlu0 0
      %2354 = vperm.xlu0 %2353, %v2319
      %v2355 = vpop.permute.xlu0 %2354
      %2358 = vset.pattern.permute.xlu0 0
      %2359 = vperm.xlu0 %2358, %v2320
      %v2360 = vpop.permute.xlu0 %2359
      %2363 = vset.pattern.permute.xlu0 0
      %2364 = vperm.xlu0 %2363, %v2321
      %v2365 = vpop.permute.xlu0 %2364
      %2368 = vset.pattern.permute.xlu0 0
      %2369 = vperm.xlu0 %2368, %v2322
      %v2370 = vpop.permute.xlu0 %2369
      %2373 = vset.pattern.permute.xlu0 0
      %2374 = vperm.xlu0 %2373, %v2323
      %v2375 = vpop.permute.xlu0 %2374
      %2378 = vset.pattern.permute.xlu0 0
      %2379 = vperm.xlu0 %2378, %v2324
      %v2380 = vpop.permute.xlu0 %2379
      %2383 = vset.pattern.permute.xlu0 0
      %2384 = vperm.xlu0 %2383, %v2325
      %v2385 = vpop.permute.xlu0 %2384
      %2388 = vset.pattern.permute.xlu0 0
      %2389 = vperm.xlu0 %2388, %v2326
      %v2390 = vpop.permute.xlu0 %2389
      %2393 = vset.pattern.permute.xlu0 0
      %2394 = vperm.xlu0 %2393, %v2327
      %v2395 = vpop.permute.xlu0 %2394
      %2398 = vset.pattern.permute.xlu0 0
      %2399 = vperm.xlu0 %2398, %v2328
      %v2400 = vpop.permute.xlu0 %2399
      %2403 = vset.pattern.permute.xlu0 0
      %2404 = vperm.xlu0 %2403, %v2329
      %v2405 = vpop.permute.xlu0 %2404
      %2408 = vset.pattern.permute.xlu0 0
      %2409 = vperm.xlu0 %2408, %v2330
      %v2410 = vpop.permute.xlu0 %2409
      %2413 = vset.pattern.permute.xlu0 0
      %2414 = vperm.xlu0 %2413, %v2331
      %v2415 = vpop.permute.xlu0 %2414
      %2418 = vset.pattern.permute.xlu0 0
      %2419 = vperm.xlu0 %2418, %v2332
      %v2420 = vpop.permute.xlu0 %2419
      %2423 = vset.pattern.permute.xlu0 0
      %2424 = vperm.xlu0 %2423, %v2333
      %v2425 = vpop.permute.xlu0 %2424
      %2428 = vset.pattern.permute.xlu0 0
      %2429 = vperm.xlu0 %2428, %v2334
      %v2430 = vpop.permute.xlu0 %2429
      %2433 = vset.pattern.permute.xlu0 0
      %2434 = vperm.xlu0 %2433, %v2335
      %v2435 = vpop.permute.xlu0 %2434
      %2438 = vset.pattern.permute.xlu0 0
      %2439 = vperm.xlu0 %2438, %v2336
      %v2440 = vpop.permute.xlu0 %2439
      %2443 = vset.pattern.permute.xlu0 0
      %2444 = vperm.xlu0 %2443, %v2337
      %v2445 = vpop.permute.xlu0 %2444
      %2448 = vset.pattern.permute.xlu0 0
      %2449 = vperm.xlu0 %2448, %v2338
      %v2450 = vpop.permute.xlu0 %2449
      %2453 = vset.pattern.permute.xlu0 0
      %2454 = vperm.xlu0 %2453, %v2339
      %v2455 = vpop.permute.xlu0 %2454
      %2458 = vset.pattern.permute.xlu0 0
      %2459 = vperm.xlu0 %2458, %v2340
      %v2460 = vpop.permute.xlu0 %2459
      %2463 = vset.pattern.permute.xlu0 0
      %2464 = vperm.xlu0 %2463, %v2341
      %v2465 = vpop.permute.xlu0 %2464
      %2468 = vset.pattern.permute.xlu0 0
      %2469 = vperm.xlu0 %2468, %v2342
      %v2470 = vpop.permute.xlu0 %2469
      %2473 = vset.pattern.permute.xlu0 0
      %2474 = vperm.xlu0 %2473, %v2343
      %v2475 = vpop.permute.xlu0 %2474
      %2478 = vset.pattern.permute.xlu0 0
      %2479 = vperm.xlu0 %2478, %v2344
      %v2480 = vpop.permute.xlu0 %2479
      %2483 = vset.pattern.permute.xlu0 0
      %2484 = vperm.xlu0 %2483, %v2345
      %v2485 = vpop.permute.xlu0 %2484
      %2488 = vset.pattern.permute.xlu0 0
      %2489 = vperm.xlu0 %2488, %v2346
      %v2490 = vpop.permute.xlu0 %2489
      %2493 = vset.pattern.permute.xlu0 0
      %2494 = vperm.xlu0 %2493, %v2347
      %v2495 = vpop.permute.xlu0 %2494
      %2498 = vset.pattern.permute.xlu0 0
      %2499 = vperm.xlu0 %2498, %v2348
      %v2500 = vpop.permute.xlu0 %2499
      %2503 = vset.pattern.permute.xlu0 0
      %2504 = vperm.xlu0 %2503, %v2349
      %v2505 = vpop.permute.xlu0 %2504
      %2508 = vset.pattern.permute.xlu0 0
      %2509 = vperm.xlu0 %2508, %v2350
      %v2510 = vpop.permute.xlu0 %2509
      %v2512 = vperm.slane %v2351, 0
      %v2513 = vmul.f32 %v2355, %v2512
      %v2514 = vmul.f32 %v2360, %v2512
      %v2515 = vmul.f32 %v2365, %v2512
      %v2516 = vmul.f32 %v2370, %v2512
      %v2517 = vmul.f32 %v2375, %v2512
      %v2518 = vmul.f32 %v2380, %v2512
      %v2519 = vmul.f32 %v2385, %v2512
      %v2520 = vmul.f32 %v2390, %v2512
      %v2521 = vmul.f32 %v2395, %v2512
      %v2522 = vmul.f32 %v2400, %v2512
      %v2523 = vmul.f32 %v2405, %v2512
      %v2524 = vmul.f32 %v2410, %v2512
      %v2525 = vmul.f32 %v2415, %v2512
      %v2526 = vmul.f32 %v2420, %v2512
      %v2527 = vmul.f32 %v2425, %v2512
      %v2528 = vmul.f32 %v2430, %v2512
      %v2529 = vmul.f32 %v2435, %v2512
      %v2530 = vmul.f32 %v2440, %v2512
      %v2531 = vmul.f32 %v2445, %v2512
      %v2532 = vmul.f32 %v2450, %v2512
      %v2533 = vmul.f32 %v2455, %v2512
      %v2534 = vmul.f32 %v2460, %v2512
      %v2535 = vmul.f32 %v2465, %v2512
      %v2536 = vmul.f32 %v2470, %v2512
      %v2537 = vmul.f32 %v2475, %v2512
      %v2538 = vmul.f32 %v2480, %v2512
      %v2539 = vmul.f32 %v2485, %v2512
      %v2540 = vmul.f32 %v2490, %v2512
      %v2541 = vmul.f32 %v2495, %v2512
      %v2542 = vmul.f32 %v2500, %v2512
      %v2543 = vmul.f32 %v2505, %v2512
      %v2544 = vmul.f32 %v2510, %v2512
      %v2545 = vadd.f32 %v2287, %v2513
      %v2546 = vadd.f32 %v2288, %v2514
      %v2547 = vadd.f32 %v2289, %v2515
      %v2548 = vadd.f32 %v2290, %v2516
      %v2549 = vadd.f32 %v2291, %v2517
      %v2550 = vadd.f32 %v2292, %v2518
      %v2551 = vadd.f32 %v2293, %v2519
      %v2552 = vadd.f32 %v2294, %v2520
      %v2553 = vadd.f32 %v2295, %v2521
      %v2554 = vadd.f32 %v2296, %v2522
      %v2555 = vadd.f32 %v2297, %v2523
      %v2556 = vadd.f32 %v2298, %v2524
      %v2557 = vadd.f32 %v2299, %v2525
      %v2558 = vadd.f32 %v2300, %v2526
      %v2559 = vadd.f32 %v2301, %v2527
      %v2560 = vadd.f32 %v2302, %v2528
      %v2561 = vadd.f32 %v2303, %v2529
      %v2562 = vadd.f32 %v2304, %v2530
      %v2563 = vadd.f32 %v2305, %v2531
      %v2564 = vadd.f32 %v2306, %v2532
      %v2565 = vadd.f32 %v2307, %v2533
      %v2566 = vadd.f32 %v2308, %v2534
      %v2567 = vadd.f32 %v2309, %v2535
      %v2568 = vadd.f32 %v2310, %v2536
      %v2569 = vadd.f32 %v2311, %v2537
      %v2570 = vadd.f32 %v2312, %v2538
      %v2571 = vadd.f32 %v2313, %v2539
      %v2572 = vadd.f32 %v2314, %v2540
      %v2573 = vadd.f32 %v2315, %v2541
      %v2574 = vadd.f32 %v2316, %v2542
      %v2575 = vadd.f32 %v2317, %v2543
      %v2576 = vadd.f32 %v2318, %v2544
      %v2577 = vld [vmem:[%s2060 + $0x2] sm:$0xff]
      %v2578 = vld [vmem:[%s2060 + $0xa] sm:$0xff]
      %v2579 = vld [vmem:[%s2060 + $0x1a] sm:$0xff]
      %v2580 = vld [vmem:[%s2060 + $0x22] sm:$0xff]
      %v2581 = vld [vmem:[%s2060 + $0x32] sm:$0xff]
      %v2582 = vld [vmem:[%s2060 + $0x3a] sm:$0xff]
      %v2583 = vld [vmem:[%s2060 + $0x4a] sm:$0xff]
      %v2584 = vld [vmem:[%s2060 + $0x52] sm:$0xff]
      %v2585 = vld [vmem:[%s2060 + $0x62] sm:$0xff]
      %v2586 = vld [vmem:[%s2060 + $0x6a] sm:$0xff]
      %v2587 = vld [vmem:[%s2060 + $0x7a] sm:$0xff]
      %v2588 = vld [vmem:[%s2060 + $0x82] sm:$0xff]
      %v2589 = vld [vmem:[%s2060 + $0x92] sm:$0xff]
      %v2590 = vld [vmem:[%s2060 + $0x9a] sm:$0xff]
      %v2591 = vld [vmem:[%s2060 + $0xaa] sm:$0xff]
      %v2592 = vld [vmem:[%s2060 + $0xb2] sm:$0xff]
      %v2593 = vld [vmem:[%s2060 + $0xc2] sm:$0xff]
      %v2594 = vld [vmem:[%s2060 + $0xca] sm:$0xff]
      %v2595 = vld [vmem:[%s2060 + $0xda] sm:$0xff]
      %v2596 = vld [vmem:[%s2060 + $0xe2] sm:$0xff]
      %v2597 = vld [vmem:[%s2060 + $0xf2] sm:$0xff]
      %v2598 = vld [vmem:[%s2060 + $0xfa] sm:$0xff]
      %v2599 = vld [vmem:[%s2060 + $0x10a] sm:$0xff]
      %v2600 = vld [vmem:[%s2060 + $0x112] sm:$0xff]
      %v2601 = vld [vmem:[%s2060 + $0x122] sm:$0xff]
      %v2602 = vld [vmem:[%s2060 + $0x12a] sm:$0xff]
      %v2603 = vld [vmem:[%s2060 + $0x13a] sm:$0xff]
      %v2604 = vld [vmem:[%s2060 + $0x142] sm:$0xff]
      %v2605 = vld [vmem:[%s2060 + $0x152] sm:$0xff]
      %v2606 = vld [vmem:[%s2060 + $0x15a] sm:$0xff]
      %v2607 = vld [vmem:[%s2060 + $0x16a] sm:$0xff]
      %v2608 = vld [vmem:[%s2060 + $0x172] sm:$0xff]
      %v2609 = vld [vmem:[%s1 + $0x8] sm:$0x1]
      %2611 = vset.pattern.permute.xlu0 0
      %2612 = vperm.xlu0 %2611, %v2577
      %v2613 = vpop.permute.xlu0 %2612
      %2616 = vset.pattern.permute.xlu0 0
      %2617 = vperm.xlu0 %2616, %v2578
      %v2618 = vpop.permute.xlu0 %2617
      %2621 = vset.pattern.permute.xlu0 0
      %2622 = vperm.xlu0 %2621, %v2579
      %v2623 = vpop.permute.xlu0 %2622
      %2626 = vset.pattern.permute.xlu0 0
      %2627 = vperm.xlu0 %2626, %v2580
      %v2628 = vpop.permute.xlu0 %2627
      %2631 = vset.pattern.permute.xlu0 0
      %2632 = vperm.xlu0 %2631, %v2581
      %v2633 = vpop.permute.xlu0 %2632
      %2636 = vset.pattern.permute.xlu0 0
      %2637 = vperm.xlu0 %2636, %v2582
      %v2638 = vpop.permute.xlu0 %2637
      %2641 = vset.pattern.permute.xlu0 0
      %2642 = vperm.xlu0 %2641, %v2583
      %v2643 = vpop.permute.xlu0 %2642
      %2646 = vset.pattern.permute.xlu0 0
      %2647 = vperm.xlu0 %2646, %v2584
      %v2648 = vpop.permute.xlu0 %2647
      %2651 = vset.pattern.permute.xlu0 0
      %2652 = vperm.xlu0 %2651, %v2585
      %v2653 = vpop.permute.xlu0 %2652
      %2656 = vset.pattern.permute.xlu0 0
      %2657 = vperm.xlu0 %2656, %v2586
      %v2658 = vpop.permute.xlu0 %2657
      %2661 = vset.pattern.permute.xlu0 0
      %2662 = vperm.xlu0 %2661, %v2587
      %v2663 = vpop.permute.xlu0 %2662
      %2666 = vset.pattern.permute.xlu0 0
      %2667 = vperm.xlu0 %2666, %v2588
      %v2668 = vpop.permute.xlu0 %2667
      %2671 = vset.pattern.permute.xlu0 0
      %2672 = vperm.xlu0 %2671, %v2589
      %v2673 = vpop.permute.xlu0 %2672
      %2676 = vset.pattern.permute.xlu0 0
      %2677 = vperm.xlu0 %2676, %v2590
      %v2678 = vpop.permute.xlu0 %2677
      %2681 = vset.pattern.permute.xlu0 0
      %2682 = vperm.xlu0 %2681, %v2591
      %v2683 = vpop.permute.xlu0 %2682
      %2686 = vset.pattern.permute.xlu0 0
      %2687 = vperm.xlu0 %2686, %v2592
      %v2688 = vpop.permute.xlu0 %2687
      %2691 = vset.pattern.permute.xlu0 0
      %2692 = vperm.xlu0 %2691, %v2593
      %v2693 = vpop.permute.xlu0 %2692
      %2696 = vset.pattern.permute.xlu0 0
      %2697 = vperm.xlu0 %2696, %v2594
      %v2698 = vpop.permute.xlu0 %2697
      %2701 = vset.pattern.permute.xlu0 0
      %2702 = vperm.xlu0 %2701, %v2595
      %v2703 = vpop.permute.xlu0 %2702
      %2706 = vset.pattern.permute.xlu0 0
      %2707 = vperm.xlu0 %2706, %v2596
      %v2708 = vpop.permute.xlu0 %2707
      %2711 = vset.pattern.permute.xlu0 0
      %2712 = vperm.xlu0 %2711, %v2597
      %v2713 = vpop.permute.xlu0 %2712
      %2716 = vset.pattern.permute.xlu0 0
      %2717 = vperm.xlu0 %2716, %v2598
      %v2718 = vpop.permute.xlu0 %2717
      %2721 = vset.pattern.permute.xlu0 0
      %2722 = vperm.xlu0 %2721, %v2599
      %v2723 = vpop.permute.xlu0 %2722
      %2726 = vset.pattern.permute.xlu0 0
      %2727 = vperm.xlu0 %2726, %v2600
      %v2728 = vpop.permute.xlu0 %2727
      %2731 = vset.pattern.permute.xlu0 0
      %2732 = vperm.xlu0 %2731, %v2601
      %v2733 = vpop.permute.xlu0 %2732
      %2736 = vset.pattern.permute.xlu0 0
      %2737 = vperm.xlu0 %2736, %v2602
      %v2738 = vpop.permute.xlu0 %2737
      %2741 = vset.pattern.permute.xlu0 0
      %2742 = vperm.xlu0 %2741, %v2603
      %v2743 = vpop.permute.xlu0 %2742
      %2746 = vset.pattern.permute.xlu0 0
      %2747 = vperm.xlu0 %2746, %v2604
      %v2748 = vpop.permute.xlu0 %2747
      %2751 = vset.pattern.permute.xlu0 0
      %2752 = vperm.xlu0 %2751, %v2605
      %v2753 = vpop.permute.xlu0 %2752
      %2756 = vset.pattern.permute.xlu0 0
      %2757 = vperm.xlu0 %2756, %v2606
      %v2758 = vpop.permute.xlu0 %2757
      %2761 = vset.pattern.permute.xlu0 0
      %2762 = vperm.xlu0 %2761, %v2607
      %v2763 = vpop.permute.xlu0 %2762
      %2766 = vset.pattern.permute.xlu0 0
      %2767 = vperm.xlu0 %2766, %v2608
      %v2768 = vpop.permute.xlu0 %2767
      %v2770 = vperm.slane %v2609, 0
      %v2771 = vmul.f32 %v2613, %v2770
      %v2772 = vmul.f32 %v2618, %v2770
      %v2773 = vmul.f32 %v2623, %v2770
      %v2774 = vmul.f32 %v2628, %v2770
      %v2775 = vmul.f32 %v2633, %v2770
      %v2776 = vmul.f32 %v2638, %v2770
      %v2777 = vmul.f32 %v2643, %v2770
      %v2778 = vmul.f32 %v2648, %v2770
      %v2779 = vmul.f32 %v2653, %v2770
      %v2780 = vmul.f32 %v2658, %v2770
      %v2781 = vmul.f32 %v2663, %v2770
      %v2782 = vmul.f32 %v2668, %v2770
      %v2783 = vmul.f32 %v2673, %v2770
      %v2784 = vmul.f32 %v2678, %v2770
      %v2785 = vmul.f32 %v2683, %v2770
      %v2786 = vmul.f32 %v2688, %v2770
      %v2787 = vmul.f32 %v2693, %v2770
      %v2788 = vmul.f32 %v2698, %v2770
      %v2789 = vmul.f32 %v2703, %v2770
      %v2790 = vmul.f32 %v2708, %v2770
      %v2791 = vmul.f32 %v2713, %v2770
      %v2792 = vmul.f32 %v2718, %v2770
      %v2793 = vmul.f32 %v2723, %v2770
      %v2794 = vmul.f32 %v2728, %v2770
      %v2795 = vmul.f32 %v2733, %v2770
      %v2796 = vmul.f32 %v2738, %v2770
      %v2797 = vmul.f32 %v2743, %v2770
      %v2798 = vmul.f32 %v2748, %v2770
      %v2799 = vmul.f32 %v2753, %v2770
      %v2800 = vmul.f32 %v2758, %v2770
      %v2801 = vmul.f32 %v2763, %v2770
      %v2802 = vmul.f32 %v2768, %v2770
      %v2803 = vadd.f32 %v2545, %v2771
      %v2804 = vadd.f32 %v2546, %v2772
      %v2805 = vadd.f32 %v2547, %v2773
      %v2806 = vadd.f32 %v2548, %v2774
      %v2807 = vadd.f32 %v2549, %v2775
      %v2808 = vadd.f32 %v2550, %v2776
      %v2809 = vadd.f32 %v2551, %v2777
      %v2810 = vadd.f32 %v2552, %v2778
      %v2811 = vadd.f32 %v2553, %v2779
      %v2812 = vadd.f32 %v2554, %v2780
      %v2813 = vadd.f32 %v2555, %v2781
      %v2814 = vadd.f32 %v2556, %v2782
      %v2815 = vadd.f32 %v2557, %v2783
      %v2816 = vadd.f32 %v2558, %v2784
      %v2817 = vadd.f32 %v2559, %v2785
      %v2818 = vadd.f32 %v2560, %v2786
      %v2819 = vadd.f32 %v2561, %v2787
      %v2820 = vadd.f32 %v2562, %v2788
      %v2821 = vadd.f32 %v2563, %v2789
      %v2822 = vadd.f32 %v2564, %v2790
      %v2823 = vadd.f32 %v2565, %v2791
      %v2824 = vadd.f32 %v2566, %v2792
      %v2825 = vadd.f32 %v2567, %v2793
      %v2826 = vadd.f32 %v2568, %v2794
      %v2827 = vadd.f32 %v2569, %v2795
      %v2828 = vadd.f32 %v2570, %v2796
      %v2829 = vadd.f32 %v2571, %v2797
      %v2830 = vadd.f32 %v2572, %v2798
      %v2831 = vadd.f32 %v2573, %v2799
      %v2832 = vadd.f32 %v2574, %v2800
      %v2833 = vadd.f32 %v2575, %v2801
      %v2834 = vadd.f32 %v2576, %v2802
      %v2835 = vld [vmem:[%s2] sm:$0x1]
      %v2837 = vperm.slane %v2835, 0
      %v2839 = vadd.f32 %v2803, %v2837
      %v2840 = vadd.f32 %v2804, %v2837
      %v2841 = vadd.f32 %v2805, %v2837
      %v2842 = vadd.f32 %v2806, %v2837
      %v2843 = vadd.f32 %v2807, %v2837
      %v2844 = vadd.f32 %v2808, %v2837
      %v2845 = vadd.f32 %v2809, %v2837
      %v2846 = vadd.f32 %v2810, %v2837
      %v2847 = vadd.f32 %v2811, %v2837
      %v2848 = vadd.f32 %v2812, %v2837
      %v2849 = vadd.f32 %v2813, %v2837
      %v2850 = vadd.f32 %v2814, %v2837
      %v2851 = vadd.f32 %v2815, %v2837
      %v2852 = vadd.f32 %v2816, %v2837
      %v2853 = vadd.f32 %v2817, %v2837
      %v2854 = vadd.f32 %v2818, %v2837
      %v2855 = vadd.f32 %v2819, %v2837
      %v2856 = vadd.f32 %v2820, %v2837
      %v2857 = vadd.f32 %v2821, %v2837
      %v2858 = vadd.f32 %v2822, %v2837
      %v2859 = vadd.f32 %v2823, %v2837
      %v2860 = vadd.f32 %v2824, %v2837
      %v2861 = vadd.f32 %v2825, %v2837
      %v2862 = vadd.f32 %v2826, %v2837
      %v2863 = vadd.f32 %v2827, %v2837
      %v2864 = vadd.f32 %v2828, %v2837
      %v2865 = vadd.f32 %v2829, %v2837
      %v2866 = vadd.f32 %v2830, %v2837
      %v2867 = vadd.f32 %v2831, %v2837
      %v2868 = vadd.f32 %v2832, %v2837
      %v2869 = vadd.f32 %v2833, %v2837
      %v2870 = vadd.f32 %v2834, %v2837
      %v2871 = vmax.f32 %v2839, 0.0
      %v2872 = vmax.f32 %v2840, 0.0
      %v2873 = vmax.f32 %v2841, 0.0
      %v2874 = vmax.f32 %v2842, 0.0
      %v2875 = vmax.f32 %v2843, 0.0
      %v2876 = vmax.f32 %v2844, 0.0
      %v2877 = vmax.f32 %v2845, 0.0
      %v2878 = vmax.f32 %v2846, 0.0
      %v2879 = vmax.f32 %v2847, 0.0
      %v2880 = vmax.f32 %v2848, 0.0
      %v2881 = vmax.f32 %v2849, 0.0
      %v2882 = vmax.f32 %v2850, 0.0
      %v2883 = vmax.f32 %v2851, 0.0
      %v2884 = vmax.f32 %v2852, 0.0
      %v2885 = vmax.f32 %v2853, 0.0
      %v2886 = vmax.f32 %v2854, 0.0
      %v2887 = vmax.f32 %v2855, 0.0
      %v2888 = vmax.f32 %v2856, 0.0
      %v2889 = vmax.f32 %v2857, 0.0
      %v2890 = vmax.f32 %v2858, 0.0
      %v2891 = vmax.f32 %v2859, 0.0
      %v2892 = vmax.f32 %v2860, 0.0
      %v2893 = vmax.f32 %v2861, 0.0
      %v2894 = vmax.f32 %v2862, 0.0
      %v2895 = vmax.f32 %v2863, 0.0
      %v2896 = vmax.f32 %v2864, 0.0
      %v2897 = vmax.f32 %v2865, 0.0
      %v2898 = vmax.f32 %v2866, 0.0
      %v2899 = vmax.f32 %v2867, 0.0
      %v2900 = vmax.f32 %v2868, 0.0
      %v2901 = vmax.f32 %v2869, 0.0
      %v2902 = vmax.f32 %v2870, 0.0
      %s2903 = scalar_lea.vmem [#allocation3], 24
      %2904 = vst.msk [vmem:[%s2903 + $0x1] sm:$0xff] %vm337, %v2871
      %2905 = vst.msk [vmem:[%s2903 + $0x9] sm:$0xff] %vm337, %v2872
      %2906 = vst.msk [vmem:[%s2903 + $0x19] sm:$0xff] %vm337, %v2873
      %2907 = vst.msk [vmem:[%s2903 + $0x21] sm:$0xff] %vm337, %v2874
      %2908 = vst.msk [vmem:[%s2903 + $0x31] sm:$0xff] %vm337, %v2875
      %2909 = vst.msk [vmem:[%s2903 + $0x39] sm:$0xff] %vm337, %v2876
      %2910 = vst.msk [vmem:[%s2903 + $0x49] sm:$0xff] %vm337, %v2877
      %2911 = vst.msk [vmem:[%s2903 + $0x51] sm:$0xff] %vm337, %v2878
      %2912 = vst.msk [vmem:[%s2903 + $0x61] sm:$0xff] %vm337, %v2879
      %2913 = vst.msk [vmem:[%s2903 + $0x69] sm:$0xff] %vm337, %v2880
      %2914 = vst.msk [vmem:[%s2903 + $0x79] sm:$0xff] %vm337, %v2881
      %2915 = vst.msk [vmem:[%s2903 + $0x81] sm:$0xff] %vm337, %v2882
      %2916 = vst.msk [vmem:[%s2903 + $0x91] sm:$0xff] %vm337, %v2883
      %2917 = vst.msk [vmem:[%s2903 + $0x99] sm:$0xff] %vm337, %v2884
      %2918 = vst.msk [vmem:[%s2903 + $0xa9] sm:$0xff] %vm337, %v2885
      %2919 = vst.msk [vmem:[%s2903 + $0xb1] sm:$0xff] %vm337, %v2886
      %2920 = vst.msk [vmem:[%s2903 + $0xc1] sm:$0xff] %vm337, %v2887
      %2921 = vst.msk [vmem:[%s2903 + $0xc9] sm:$0xff] %vm337, %v2888
      %2922 = vst.msk [vmem:[%s2903 + $0xd9] sm:$0xff] %vm337, %v2889
      %2923 = vst.msk [vmem:[%s2903 + $0xe1] sm:$0xff] %vm337, %v2890
      %2924 = vst.msk [vmem:[%s2903 + $0xf1] sm:$0xff] %vm337, %v2891
      %2925 = vst.msk [vmem:[%s2903 + $0xf9] sm:$0xff] %vm337, %v2892
      %2926 = vst.msk [vmem:[%s2903 + $0x109] sm:$0xff] %vm337, %v2893
      %2927 = vst.msk [vmem:[%s2903 + $0x111] sm:$0xff] %vm337, %v2894
      %2928 = vst.msk [vmem:[%s2903 + $0x121] sm:$0xff] %vm337, %v2895
      %2929 = vst.msk [vmem:[%s2903 + $0x129] sm:$0xff] %vm337, %v2896
      %2930 = vst.msk [vmem:[%s2903 + $0x139] sm:$0xff] %vm337, %v2897
      %2931 = vst.msk [vmem:[%s2903 + $0x141] sm:$0xff] %vm337, %v2898
      %2932 = vst.msk [vmem:[%s2903 + $0x151] sm:$0xff] %vm337, %v2899
      %2933 = vst.msk [vmem:[%s2903 + $0x159] sm:$0xff] %vm337, %v2900
      %2934 = vst.msk [vmem:[%s2903 + $0x169] sm:$0xff] %vm337, %v2901
      %2935 = vst.msk [vmem:[%s2903 + $0x171] sm:$0xff] %vm337, %v2902
      %v2936 = vld [vmem:[#allocation3] sm:$0xff]
      %v2937 = vld [vmem:[#allocation3 + $0x8] sm:$0xff]
      %v2938 = vld [vmem:[#allocation3 + $0x18] sm:$0xff]
      %v2939 = vld [vmem:[#allocation3 + $0x20] sm:$0xff]
      %v2940 = vld [vmem:[#allocation3 + $0x30] sm:$0xff]
      %v2941 = vld [vmem:[#allocation3 + $0x38] sm:$0xff]
      %v2942 = vld [vmem:[#allocation3 + $0x48] sm:$0xff]
      %v2943 = vld [vmem:[#allocation3 + $0x50] sm:$0xff]
      %v2944 = vld [vmem:[#allocation3 + $0x60] sm:$0xff]
      %v2945 = vld [vmem:[#allocation3 + $0x68] sm:$0xff]
      %v2946 = vld [vmem:[#allocation3 + $0x78] sm:$0xff]
      %v2947 = vld [vmem:[#allocation3 + $0x80] sm:$0xff]
      %v2948 = vld [vmem:[#allocation3 + $0x90] sm:$0xff]
      %v2949 = vld [vmem:[#allocation3 + $0x98] sm:$0xff]
      %v2950 = vld [vmem:[#allocation3 + $0xa8] sm:$0xff]
      %v2951 = vld [vmem:[#allocation3 + $0xb0] sm:$0xff]
      %v2952 = vld [vmem:[#allocation3 + $0xc0] sm:$0xff]
      %v2953 = vld [vmem:[#allocation3 + $0xc8] sm:$0xff]
      %v2954 = vld [vmem:[#allocation3 + $0xd8] sm:$0xff]
      %v2955 = vld [vmem:[#allocation3 + $0xe0] sm:$0xff]
      %v2956 = vld [vmem:[#allocation3 + $0xf0] sm:$0xff]
      %v2957 = vld [vmem:[#allocation3 + $0xf8] sm:$0xff]
      %v2958 = vld [vmem:[#allocation3 + $0x108] sm:$0xff]
      %v2959 = vld [vmem:[#allocation3 + $0x110] sm:$0xff]
      %v2960 = vld [vmem:[#allocation3 + $0x120] sm:$0xff]
      %v2961 = vld [vmem:[#allocation3 + $0x128] sm:$0xff]
      %v2962 = vld [vmem:[#allocation3 + $0x138] sm:$0xff]
      %v2963 = vld [vmem:[#allocation3 + $0x140] sm:$0xff]
      %v2964 = vld [vmem:[#allocation3 + $0x150] sm:$0xff]
      %v2965 = vld [vmem:[#allocation3 + $0x158] sm:$0xff]
      %v2966 = vld [vmem:[#allocation3 + $0x168] sm:$0xff]
      %v2967 = vld [vmem:[#allocation3 + $0x170] sm:$0xff]
      %v2968 = vld [vmem:[%s3] sm:$0xff]
      %v2969 = vld [vmem:[#allocation3 + $0x1] sm:$0xff]
      %v2970 = vld [vmem:[#allocation3 + $0x9] sm:$0xff]
      %v2971 = vld [vmem:[#allocation3 + $0x19] sm:$0xff]
      %v2972 = vld [vmem:[#allocation3 + $0x21] sm:$0xff]
      %v2973 = vld [vmem:[#allocation3 + $0x31] sm:$0xff]
      %v2974 = vld [vmem:[#allocation3 + $0x39] sm:$0xff]
      %v2975 = vld [vmem:[#allocation3 + $0x49] sm:$0xff]
      %v2976 = vld [vmem:[#allocation3 + $0x51] sm:$0xff]
      %v2977 = vld [vmem:[#allocation3 + $0x61] sm:$0xff]
      %v2978 = vld [vmem:[#allocation3 + $0x69] sm:$0xff]
      %v2979 = vld [vmem:[#allocation3 + $0x79] sm:$0xff]
      %v2980 = vld [vmem:[#allocation3 + $0x81] sm:$0xff]
      %v2981 = vld [vmem:[#allocation3 + $0x91] sm:$0xff]
      %v2982 = vld [vmem:[#allocation3 + $0x99] sm:$0xff]
      %v2983 = vld [vmem:[#allocation3 + $0xa9] sm:$0xff]
      %v2984 = vld [vmem:[#allocation3 + $0xb1] sm:$0xff]
      %v2985 = vld [vmem:[#allocation3 + $0xc1] sm:$0xff]
      %v2986 = vld [vmem:[#allocation3 + $0xc9] sm:$0xff]
      %v2987 = vld [vmem:[#allocation3 + $0xd9] sm:$0xff]
      %v2988 = vld [vmem:[#allocation3 + $0xe1] sm:$0xff]
      %v2989 = vld [vmem:[#allocation3 + $0xf1] sm:$0xff]
      %v2990 = vld [vmem:[#allocation3 + $0xf9] sm:$0xff]
      %v2991 = vld [vmem:[#allocation3 + $0x109] sm:$0xff]
      %v2992 = vld [vmem:[#allocation3 + $0x111] sm:$0xff]
      %v2993 = vld [vmem:[#allocation3 + $0x121] sm:$0xff]
      %v2994 = vld [vmem:[#allocation3 + $0x129] sm:$0xff]
      %v2995 = vld [vmem:[#allocation3 + $0x139] sm:$0xff]
      %v2996 = vld [vmem:[#allocation3 + $0x141] sm:$0xff]
      %v2997 = vld [vmem:[#allocation3 + $0x151] sm:$0xff]
      %v2998 = vld [vmem:[#allocation3 + $0x159] sm:$0xff]
      %v2999 = vld [vmem:[#allocation3 + $0x169] sm:$0xff]
      %v3000 = vld [vmem:[#allocation3 + $0x171] sm:$0xff]
      %s3001 = scalar_lea.vmem %s3, 8
      %v3002 = vld [vmem:[%s3001] sm:$0xff]
      %v3004 = vsel %vm337, %v2969, 0
      %v3007 = vsel %vm337, %v2970, 0
      %v3010 = vsel %vm337, %v2971, 0
      %v3013 = vsel %vm337, %v2972, 0
      %v3016 = vsel %vm337, %v2973, 0
      %v3019 = vsel %vm337, %v2974, 0
      %v3022 = vsel %vm337, %v2975, 0
      %v3025 = vsel %vm337, %v2976, 0
      %v3028 = vsel %vm337, %v2977, 0
      %v3031 = vsel %vm337, %v2978, 0
      %v3034 = vsel %vm337, %v2979, 0
      %v3037 = vsel %vm337, %v2980, 0
      %v3040 = vsel %vm337, %v2981, 0
      %v3043 = vsel %vm337, %v2982, 0
      %v3046 = vsel %vm337, %v2983, 0
      %v3049 = vsel %vm337, %v2984, 0
      %v3052 = vsel %vm337, %v2985, 0
      %v3055 = vsel %vm337, %v2986, 0
      %v3058 = vsel %vm337, %v2987, 0
      %v3061 = vsel %vm337, %v2988, 0
      %v3064 = vsel %vm337, %v2989, 0
      %v3067 = vsel %vm337, %v2990, 0
      %v3070 = vsel %vm337, %v2991, 0
      %v3073 = vsel %vm337, %v2992, 0
      %v3076 = vsel %vm337, %v2993, 0
      %v3079 = vsel %vm337, %v2994, 0
      %v3082 = vsel %vm337, %v2995, 0
      %v3085 = vsel %vm337, %v2996, 0
      %v3088 = vsel %vm337, %v2997, 0
      %v3091 = vsel %vm337, %v2998, 0
      %v3094 = vsel %vm337, %v2999, 0
      %v3097 = vsel %vm337, %v3000, 0
      %3099 = vmatpush.msra.mxu0 0.0
      %3100 = vmatpush.msra.mxu0 0.0
      %3101 = vmatpush.msra.mxu0 0.0
      %3102 = vmatpush.msra.mxu0 0.0
      %3103 = vmatpush.msra.mxu0 0.0
      %3104 = vmatpush.msra.mxu0 0.0
      %3105 = vmatpush.msra.mxu0 0.0
      %3106 = vmatpush.msra.mxu0 0.0
      %3107 = vmatpush.msra.mxu0 0.0
      %3108 = vmatpush.msra.mxu0 0.0
      %3109 = vmatpush.msra.mxu0 0.0
      %3110 = vmatpush.msra.mxu0 0.0
      %3111 = vmatpush.msra.mxu0 0.0
      %3112 = vmatpush.msra.mxu0 0.0
      %3113 = vmatpush.msra.mxu0 0.0
      %3114 = vmatpush.msra.mxu0 %v3002
      %3115 = vmatmul.f32.gmra.mxu0 %v3004
      %v3116 = vpop.f32.mrf.mxu0
      %v3117 = vadd.f32 0.0, %v3116
      %3118 = vmatmul.f32.gmra.mxu0 %v3007
      %v3119 = vpop.f32.mrf.mxu0
      %v3120 = vadd.f32 0.0, %v3119
      %3121 = vmatmul.f32.gmra.mxu0 %v3010
      %v3122 = vpop.f32.mrf.mxu0
      %v3123 = vadd.f32 0.0, %v3122
      %3124 = vmatmul.f32.gmra.mxu0 %v3013
      %v3125 = vpop.f32.mrf.mxu0
      %v3126 = vadd.f32 0.0, %v3125
      %3127 = vmatmul.f32.gmra.mxu0 %v3016
      %v3128 = vpop.f32.mrf.mxu0
      %v3129 = vadd.f32 0.0, %v3128
      %3130 = vmatmul.f32.gmra.mxu0 %v3019
      %v3131 = vpop.f32.mrf.mxu0
      %v3132 = vadd.f32 0.0, %v3131
      %3133 = vmatmul.f32.gmra.mxu0 %v3022
      %v3134 = vpop.f32.mrf.mxu0
      %v3135 = vadd.f32 0.0, %v3134
      %3136 = vmatmul.f32.gmra.mxu0 %v3025
      %v3137 = vpop.f32.mrf.mxu0
      %v3138 = vadd.f32 0.0, %v3137
      %3139 = vmatmul.f32.gmra.mxu0 %v3028
      %v3140 = vpop.f32.mrf.mxu0
      %v3141 = vadd.f32 0.0, %v3140
      %3142 = vmatmul.f32.gmra.mxu0 %v3031
      %v3143 = vpop.f32.mrf.mxu0
      %v3144 = vadd.f32 0.0, %v3143
      %3145 = vmatmul.f32.gmra.mxu0 %v3034
      %v3146 = vpop.f32.mrf.mxu0
      %v3147 = vadd.f32 0.0, %v3146
      %3148 = vmatmul.f32.gmra.mxu0 %v3037
      %v3149 = vpop.f32.mrf.mxu0
      %v3150 = vadd.f32 0.0, %v3149
      %3151 = vmatmul.f32.gmra.mxu0 %v3040
      %v3152 = vpop.f32.mrf.mxu0
      %v3153 = vadd.f32 0.0, %v3152
      %3154 = vmatmul.f32.gmra.mxu0 %v3043
      %v3155 = vpop.f32.mrf.mxu0
      %v3156 = vadd.f32 0.0, %v3155
      %3157 = vmatmul.f32.gmra.mxu0 %v3046
      %v3158 = vpop.f32.mrf.mxu0
      %v3159 = vadd.f32 0.0, %v3158
      %3160 = vmatmul.f32.gmra.mxu0 %v3049
      %v3161 = vpop.f32.mrf.mxu0
      %v3162 = vadd.f32 0.0, %v3161
      %3163 = vmatmul.f32.gmra.mxu0 %v3052
      %v3164 = vpop.f32.mrf.mxu0
      %v3165 = vadd.f32 0.0, %v3164
      %3166 = vmatmul.f32.gmra.mxu0 %v3055
      %v3167 = vpop.f32.mrf.mxu0
      %v3168 = vadd.f32 0.0, %v3167
      %3169 = vmatmul.f32.gmra.mxu0 %v3058
      %v3170 = vpop.f32.mrf.mxu0
      %v3171 = vadd.f32 0.0, %v3170
      %3172 = vmatmul.f32.gmra.mxu0 %v3061
      %v3173 = vpop.f32.mrf.mxu0
      %v3174 = vadd.f32 0.0, %v3173
      %3175 = vmatmul.f32.gmra.mxu0 %v3064
      %v3176 = vpop.f32.mrf.mxu0
      %v3177 = vadd.f32 0.0, %v3176
      %3178 = vmatmul.f32.gmra.mxu0 %v3067
      %v3179 = vpop.f32.mrf.mxu0
      %v3180 = vadd.f32 0.0, %v3179
      %3181 = vmatmul.f32.gmra.mxu0 %v3070
      %v3182 = vpop.f32.mrf.mxu0
      %v3183 = vadd.f32 0.0, %v3182
      %3184 = vmatmul.f32.gmra.mxu0 %v3073
      %v3185 = vpop.f32.mrf.mxu0
      %v3186 = vadd.f32 0.0, %v3185
      %3187 = vmatmul.f32.gmra.mxu0 %v3076
      %v3188 = vpop.f32.mrf.mxu0
      %v3189 = vadd.f32 0.0, %v3188
      %3190 = vmatmul.f32.gmra.mxu0 %v3079
      %v3191 = vpop.f32.mrf.mxu0
      %v3192 = vadd.f32 0.0, %v3191
      %3193 = vmatmul.f32.gmra.mxu0 %v3082
      %v3194 = vpop.f32.mrf.mxu0
      %v3195 = vadd.f32 0.0, %v3194
      %3196 = vmatmul.f32.gmra.mxu0 %v3085
      %v3197 = vpop.f32.mrf.mxu0
      %v3198 = vadd.f32 0.0, %v3197
      %3199 = vmatmul.f32.gmra.mxu0 %v3088
      %v3200 = vpop.f32.mrf.mxu0
      %v3201 = vadd.f32 0.0, %v3200
      %3202 = vmatmul.f32.gmra.mxu0 %v3091
      %v3203 = vpop.f32.mrf.mxu0
      %v3204 = vadd.f32 0.0, %v3203
      %3205 = vmatmul.f32.gmra.mxu0 %v3094
      %v3206 = vpop.f32.mrf.mxu0
      %v3207 = vadd.f32 0.0, %v3206
      %3208 = vmatmul.f32.gmra.mxu0 %v3097
      %v3209 = vpop.f32.mrf.mxu0
      %v3210 = vadd.f32 0.0, %v3209
      %3211 = vdwg.mxu0
      %v3213 = vsel %vm337, %v2936, 0
      %v3216 = vsel %vm337, %v2937, 0
      %v3219 = vsel %vm337, %v2938, 0
      %v3222 = vsel %vm337, %v2939, 0
      %v3225 = vsel %vm337, %v2940, 0
      %v3228 = vsel %vm337, %v2941, 0
      %v3231 = vsel %vm337, %v2942, 0
      %v3234 = vsel %vm337, %v2943, 0
      %v3237 = vsel %vm337, %v2944, 0
      %v3240 = vsel %vm337, %v2945, 0
      %v3243 = vsel %vm337, %v2946, 0
      %v3246 = vsel %vm337, %v2947, 0
      %v3249 = vsel %vm337, %v2948, 0
      %v3252 = vsel %vm337, %v2949, 0
      %v3255 = vsel %vm337, %v2950, 0
      %v3258 = vsel %vm337, %v2951, 0
      %v3261 = vsel %vm337, %v2952, 0
      %v3264 = vsel %vm337, %v2953, 0
      %v3267 = vsel %vm337, %v2954, 0
      %v3270 = vsel %vm337, %v2955, 0
      %v3273 = vsel %vm337, %v2956, 0
      %v3276 = vsel %vm337, %v2957, 0
      %v3279 = vsel %vm337, %v2958, 0
      %v3282 = vsel %vm337, %v2959, 0
      %v3285 = vsel %vm337, %v2960, 0
      %v3288 = vsel %vm337, %v2961, 0
      %v3291 = vsel %vm337, %v2962, 0
      %v3294 = vsel %vm337, %v2963, 0
      %v3297 = vsel %vm337, %v2964, 0
      %v3300 = vsel %vm337, %v2965, 0
      %v3303 = vsel %vm337, %v2966, 0
      %v3306 = vsel %vm337, %v2967, 0
      %3308 = vmatpush.msra.mxu0 0.0
      %3309 = vmatpush.msra.mxu0 0.0
      %3310 = vmatpush.msra.mxu0 0.0
      %3311 = vmatpush.msra.mxu0 0.0
      %3312 = vmatpush.msra.mxu0 0.0
      %3313 = vmatpush.msra.mxu0 0.0
      %3314 = vmatpush.msra.mxu0 0.0
      %3315 = vmatpush.msra.mxu0 0.0
      %3316 = vmatpush.msra.mxu0 0.0
      %3317 = vmatpush.msra.mxu0 0.0
      %3318 = vmatpush.msra.mxu0 0.0
      %3319 = vmatpush.msra.mxu0 0.0
      %3320 = vmatpush.msra.mxu0 0.0
      %3321 = vmatpush.msra.mxu0 0.0
      %3322 = vmatpush.msra.mxu0 0.0
      %3323 = vmatpush.msra.mxu0 %v2968
      %3324 = vmatmul.f32.gmra.mxu0 %v3213
      %v3325 = vpop.f32.mrf.mxu0
      %v3326 = vadd.f32 %v3117, %v3325
      %3327 = vmatmul.f32.gmra.mxu0 %v3216
      %v3328 = vpop.f32.mrf.mxu0
      %v3329 = vadd.f32 %v3120, %v3328
      %3330 = vmatmul.f32.gmra.mxu0 %v3219
      %v3331 = vpop.f32.mrf.mxu0
      %v3332 = vadd.f32 %v3123, %v3331
      %3333 = vmatmul.f32.gmra.mxu0 %v3222
      %v3334 = vpop.f32.mrf.mxu0
      %v3335 = vadd.f32 %v3126, %v3334
      %3336 = vmatmul.f32.gmra.mxu0 %v3225
      %v3337 = vpop.f32.mrf.mxu0
      %v3338 = vadd.f32 %v3129, %v3337
      %3339 = vmatmul.f32.gmra.mxu0 %v3228
      %v3340 = vpop.f32.mrf.mxu0
      %v3341 = vadd.f32 %v3132, %v3340
      %3342 = vmatmul.f32.gmra.mxu0 %v3231
      %v3343 = vpop.f32.mrf.mxu0
      %v3344 = vadd.f32 %v3135, %v3343
      %3345 = vmatmul.f32.gmra.mxu0 %v3234
      %v3346 = vpop.f32.mrf.mxu0
      %v3347 = vadd.f32 %v3138, %v3346
      %3348 = vmatmul.f32.gmra.mxu0 %v3237
      %v3349 = vpop.f32.mrf.mxu0
      %v3350 = vadd.f32 %v3141, %v3349
      %3351 = vmatmul.f32.gmra.mxu0 %v3240
      %v3352 = vpop.f32.mrf.mxu0
      %v3353 = vadd.f32 %v3144, %v3352
      %3354 = vmatmul.f32.gmra.mxu0 %v3243
      %v3355 = vpop.f32.mrf.mxu0
      %v3356 = vadd.f32 %v3147, %v3355
      %3357 = vmatmul.f32.gmra.mxu0 %v3246
      %v3358 = vpop.f32.mrf.mxu0
      %v3359 = vadd.f32 %v3150, %v3358
      %3360 = vmatmul.f32.gmra.mxu0 %v3249
      %v3361 = vpop.f32.mrf.mxu0
      %v3362 = vadd.f32 %v3153, %v3361
      %3363 = vmatmul.f32.gmra.mxu0 %v3252
      %v3364 = vpop.f32.mrf.mxu0
      %v3365 = vadd.f32 %v3156, %v3364
      %3366 = vmatmul.f32.gmra.mxu0 %v3255
      %v3367 = vpop.f32.mrf.mxu0
      %v3368 = vadd.f32 %v3159, %v3367
      %3369 = vmatmul.f32.gmra.mxu0 %v3258
      %v3370 = vpop.f32.mrf.mxu0
      %v3371 = vadd.f32 %v3162, %v3370
      %3372 = vmatmul.f32.gmra.mxu0 %v3261
      %v3373 = vpop.f32.mrf.mxu0
      %v3374 = vadd.f32 %v3165, %v3373
      %3375 = vmatmul.f32.gmra.mxu0 %v3264
      %v3376 = vpop.f32.mrf.mxu0
      %v3377 = vadd.f32 %v3168, %v3376
      %3378 = vmatmul.f32.gmra.mxu0 %v3267
      %v3379 = vpop.f32.mrf.mxu0
      %v3380 = vadd.f32 %v3171, %v3379
      %3381 = vmatmul.f32.gmra.mxu0 %v3270
      %v3382 = vpop.f32.mrf.mxu0
      %v3383 = vadd.f32 %v3174, %v3382
      %3384 = vmatmul.f32.gmra.mxu0 %v3273
      %v3385 = vpop.f32.mrf.mxu0
      %v3386 = vadd.f32 %v3177, %v3385
      %3387 = vmatmul.f32.gmra.mxu0 %v3276
      %v3388 = vpop.f32.mrf.mxu0
      %v3389 = vadd.f32 %v3180, %v3388
      %3390 = vmatmul.f32.gmra.mxu0 %v3279
      %v3391 = vpop.f32.mrf.mxu0
      %v3392 = vadd.f32 %v3183, %v3391
      %3393 = vmatmul.f32.gmra.mxu0 %v3282
      %v3394 = vpop.f32.mrf.mxu0
      %v3395 = vadd.f32 %v3186, %v3394
      %3396 = vmatmul.f32.gmra.mxu0 %v3285
      %v3397 = vpop.f32.mrf.mxu0
      %v3398 = vadd.f32 %v3189, %v3397
      %3399 = vmatmul.f32.gmra.mxu0 %v3288
      %v3400 = vpop.f32.mrf.mxu0
      %v3401 = vadd.f32 %v3192, %v3400
      %3402 = vmatmul.f32.gmra.mxu0 %v3291
      %v3403 = vpop.f32.mrf.mxu0
      %v3404 = vadd.f32 %v3195, %v3403
      %3405 = vmatmul.f32.gmra.mxu0 %v3294
      %v3406 = vpop.f32.mrf.mxu0
      %v3407 = vadd.f32 %v3198, %v3406
      %3408 = vmatmul.f32.gmra.mxu0 %v3297
      %v3409 = vpop.f32.mrf.mxu0
      %v3410 = vadd.f32 %v3201, %v3409
      %3411 = vmatmul.f32.gmra.mxu0 %v3300
      %v3412 = vpop.f32.mrf.mxu0
      %v3413 = vadd.f32 %v3204, %v3412
      %3414 = vmatmul.f32.gmra.mxu0 %v3303
      %v3415 = vpop.f32.mrf.mxu0
      %v3416 = vadd.f32 %v3207, %v3415
      %3417 = vmatmul.f32.gmra.mxu0 %v3306
      %v3418 = vpop.f32.mrf.mxu0
      %v3419 = vadd.f32 %v3210, %v3418
      %3420 = vdwg.mxu0
      %v3421 = vld [vmem:[#allocation3 + $0x2] sm:$0xff]
      %v3422 = vld [vmem:[#allocation3 + $0xa] sm:$0xff]
      %v3423 = vld [vmem:[#allocation3 + $0x1a] sm:$0xff]
      %v3424 = vld [vmem:[#allocation3 + $0x22] sm:$0xff]
      %v3425 = vld [vmem:[#allocation3 + $0x32] sm:$0xff]
      %v3426 = vld [vmem:[#allocation3 + $0x3a] sm:$0xff]
      %v3427 = vld [vmem:[#allocation3 + $0x4a] sm:$0xff]
      %v3428 = vld [vmem:[#allocation3 + $0x52] sm:$0xff]
      %v3429 = vld [vmem:[#allocation3 + $0x62] sm:$0xff]
      %v3430 = vld [vmem:[#allocation3 + $0x6a] sm:$0xff]
      %v3431 = vld [vmem:[#allocation3 + $0x7a] sm:$0xff]
      %v3432 = vld [vmem:[#allocation3 + $0x82] sm:$0xff]
      %v3433 = vld [vmem:[#allocation3 + $0x92] sm:$0xff]
      %v3434 = vld [vmem:[#allocation3 + $0x9a] sm:$0xff]
      %v3435 = vld [vmem:[#allocation3 + $0xaa] sm:$0xff]
      %v3436 = vld [vmem:[#allocation3 + $0xb2] sm:$0xff]
      %v3437 = vld [vmem:[#allocation3 + $0xc2] sm:$0xff]
      %v3438 = vld [vmem:[#allocation3 + $0xca] sm:$0xff]
      %v3439 = vld [vmem:[#allocation3 + $0xda] sm:$0xff]
      %v3440 = vld [vmem:[#allocation3 + $0xe2] sm:$0xff]
      %v3441 = vld [vmem:[#allocation3 + $0xf2] sm:$0xff]
      %v3442 = vld [vmem:[#allocation3 + $0xfa] sm:$0xff]
      %v3443 = vld [vmem:[#allocation3 + $0x10a] sm:$0xff]
      %v3444 = vld [vmem:[#allocation3 + $0x112] sm:$0xff]
      %v3445 = vld [vmem:[#allocation3 + $0x122] sm:$0xff]
      %v3446 = vld [vmem:[#allocation3 + $0x12a] sm:$0xff]
      %v3447 = vld [vmem:[#allocation3 + $0x13a] sm:$0xff]
      %v3448 = vld [vmem:[#allocation3 + $0x142] sm:$0xff]
      %v3449 = vld [vmem:[#allocation3 + $0x152] sm:$0xff]
      %v3450 = vld [vmem:[#allocation3 + $0x15a] sm:$0xff]
      %v3451 = vld [vmem:[#allocation3 + $0x16a] sm:$0xff]
      %v3452 = vld [vmem:[#allocation3 + $0x172] sm:$0xff]
      %s3453 = scalar_lea.vmem %s3, 16
      %v3454 = vld [vmem:[%s3453] sm:$0xff]
      %v3456 = vsel %vm337, %v3421, 0
      %v3459 = vsel %vm337, %v3422, 0
      %v3462 = vsel %vm337, %v3423, 0
      %v3465 = vsel %vm337, %v3424, 0
      %v3468 = vsel %vm337, %v3425, 0
      %v3471 = vsel %vm337, %v3426, 0
      %v3474 = vsel %vm337, %v3427, 0
      %v3477 = vsel %vm337, %v3428, 0
      %v3480 = vsel %vm337, %v3429, 0
      %v3483 = vsel %vm337, %v3430, 0
      %v3486 = vsel %vm337, %v3431, 0
      %v3489 = vsel %vm337, %v3432, 0
      %v3492 = vsel %vm337, %v3433, 0
      %v3495 = vsel %vm337, %v3434, 0
      %v3498 = vsel %vm337, %v3435, 0
      %v3501 = vsel %vm337, %v3436, 0
      %v3504 = vsel %vm337, %v3437, 0
      %v3507 = vsel %vm337, %v3438, 0
      %v3510 = vsel %vm337, %v3439, 0
      %v3513 = vsel %vm337, %v3440, 0
      %v3516 = vsel %vm337, %v3441, 0
      %v3519 = vsel %vm337, %v3442, 0
      %v3522 = vsel %vm337, %v3443, 0
      %v3525 = vsel %vm337, %v3444, 0
      %v3528 = vsel %vm337, %v3445, 0
      %v3531 = vsel %vm337, %v3446, 0
      %v3534 = vsel %vm337, %v3447, 0
      %v3537 = vsel %vm337, %v3448, 0
      %v3540 = vsel %vm337, %v3449, 0
      %v3543 = vsel %vm337, %v3450, 0
      %v3546 = vsel %vm337, %v3451, 0
      %v3549 = vsel %vm337, %v3452, 0
      %3551 = vmatpush.msra.mxu0 0.0
      %3552 = vmatpush.msra.mxu0 0.0
      %3553 = vmatpush.msra.mxu0 0.0
      %3554 = vmatpush.msra.mxu0 0.0
      %3555 = vmatpush.msra.mxu0 0.0
      %3556 = vmatpush.msra.mxu0 0.0
      %3557 = vmatpush.msra.mxu0 0.0
      %3558 = vmatpush.msra.mxu0 0.0
      %3559 = vmatpush.msra.mxu0 0.0
      %3560 = vmatpush.msra.mxu0 0.0
      %3561 = vmatpush.msra.mxu0 0.0
      %3562 = vmatpush.msra.mxu0 0.0
      %3563 = vmatpush.msra.mxu0 0.0
      %3564 = vmatpush.msra.mxu0 0.0
      %3565 = vmatpush.msra.mxu0 0.0
      %3566 = vmatpush.msra.mxu0 %v3454
      %3567 = vmatmul.f32.gmra.mxu0 %v3456
      %v3568 = vpop.f32.mrf.mxu0
      %v3569 = vadd.f32 0.0, %v3568
      %3570 = vmatmul.f32.gmra.mxu0 %v3459
      %v3571 = vpop.f32.mrf.mxu0
      %v3572 = vadd.f32 0.0, %v3571
      %3573 = vmatmul.f32.gmra.mxu0 %v3462
      %v3574 = vpop.f32.mrf.mxu0
      %v3575 = vadd.f32 0.0, %v3574
      %3576 = vmatmul.f32.gmra.mxu0 %v3465
      %v3577 = vpop.f32.mrf.mxu0
      %v3578 = vadd.f32 0.0, %v3577
      %3579 = vmatmul.f32.gmra.mxu0 %v3468
      %v3580 = vpop.f32.mrf.mxu0
      %v3581 = vadd.f32 0.0, %v3580
      %3582 = vmatmul.f32.gmra.mxu0 %v3471
      %v3583 = vpop.f32.mrf.mxu0
      %v3584 = vadd.f32 0.0, %v3583
      %3585 = vmatmul.f32.gmra.mxu0 %v3474
      %v3586 = vpop.f32.mrf.mxu0
      %v3587 = vadd.f32 0.0, %v3586
      %3588 = vmatmul.f32.gmra.mxu0 %v3477
      %v3589 = vpop.f32.mrf.mxu0
      %v3590 = vadd.f32 0.0, %v3589
      %3591 = vmatmul.f32.gmra.mxu0 %v3480
      %v3592 = vpop.f32.mrf.mxu0
      %v3593 = vadd.f32 0.0, %v3592
      %3594 = vmatmul.f32.gmra.mxu0 %v3483
      %v3595 = vpop.f32.mrf.mxu0
      %v3596 = vadd.f32 0.0, %v3595
      %3597 = vmatmul.f32.gmra.mxu0 %v3486
      %v3598 = vpop.f32.mrf.mxu0
      %v3599 = vadd.f32 0.0, %v3598
      %3600 = vmatmul.f32.gmra.mxu0 %v3489
      %v3601 = vpop.f32.mrf.mxu0
      %v3602 = vadd.f32 0.0, %v3601
      %3603 = vmatmul.f32.gmra.mxu0 %v3492
      %v3604 = vpop.f32.mrf.mxu0
      %v3605 = vadd.f32 0.0, %v3604
      %3606 = vmatmul.f32.gmra.mxu0 %v3495
      %v3607 = vpop.f32.mrf.mxu0
      %v3608 = vadd.f32 0.0, %v3607
      %3609 = vmatmul.f32.gmra.mxu0 %v3498
      %v3610 = vpop.f32.mrf.mxu0
      %v3611 = vadd.f32 0.0, %v3610
      %3612 = vmatmul.f32.gmra.mxu0 %v3501
      %v3613 = vpop.f32.mrf.mxu0
      %v3614 = vadd.f32 0.0, %v3613
      %3615 = vmatmul.f32.gmra.mxu0 %v3504
      %v3616 = vpop.f32.mrf.mxu0
      %v3617 = vadd.f32 0.0, %v3616
      %3618 = vmatmul.f32.gmra.mxu0 %v3507
      %v3619 = vpop.f32.mrf.mxu0
      %v3620 = vadd.f32 0.0, %v3619
      %3621 = vmatmul.f32.gmra.mxu0 %v3510
      %v3622 = vpop.f32.mrf.mxu0
      %v3623 = vadd.f32 0.0, %v3622
      %3624 = vmatmul.f32.gmra.mxu0 %v3513
      %v3625 = vpop.f32.mrf.mxu0
      %v3626 = vadd.f32 0.0, %v3625
      %3627 = vmatmul.f32.gmra.mxu0 %v3516
      %v3628 = vpop.f32.mrf.mxu0
      %v3629 = vadd.f32 0.0, %v3628
      %3630 = vmatmul.f32.gmra.mxu0 %v3519
      %v3631 = vpop.f32.mrf.mxu0
      %v3632 = vadd.f32 0.0, %v3631
      %3633 = vmatmul.f32.gmra.mxu0 %v3522
      %v3634 = vpop.f32.mrf.mxu0
      %v3635 = vadd.f32 0.0, %v3634
      %3636 = vmatmul.f32.gmra.mxu0 %v3525
      %v3637 = vpop.f32.mrf.mxu0
      %v3638 = vadd.f32 0.0, %v3637
      %3639 = vmatmul.f32.gmra.mxu0 %v3528
      %v3640 = vpop.f32.mrf.mxu0
      %v3641 = vadd.f32 0.0, %v3640
      %3642 = vmatmul.f32.gmra.mxu0 %v3531
      %v3643 = vpop.f32.mrf.mxu0
      %v3644 = vadd.f32 0.0, %v3643
      %3645 = vmatmul.f32.gmra.mxu0 %v3534
      %v3646 = vpop.f32.mrf.mxu0
      %v3647 = vadd.f32 0.0, %v3646
      %3648 = vmatmul.f32.gmra.mxu0 %v3537
      %v3649 = vpop.f32.mrf.mxu0
      %v3650 = vadd.f32 0.0, %v3649
      %3651 = vmatmul.f32.gmra.mxu0 %v3540
      %v3652 = vpop.f32.mrf.mxu0
      %v3653 = vadd.f32 0.0, %v3652
      %3654 = vmatmul.f32.gmra.mxu0 %v3543
      %v3655 = vpop.f32.mrf.mxu0
      %v3656 = vadd.f32 0.0, %v3655
      %3657 = vmatmul.f32.gmra.mxu0 %v3546
      %v3658 = vpop.f32.mrf.mxu0
      %v3659 = vadd.f32 0.0, %v3658
      %3660 = vmatmul.f32.gmra.mxu0 %v3549
      %v3661 = vpop.f32.mrf.mxu0
      %v3662 = vadd.f32 0.0, %v3661
      %3663 = vdwg.mxu0
      %v3664 = vadd.f32 %v3326, %v3569
      %v3665 = vadd.f32 %v3329, %v3572
      %v3666 = vadd.f32 %v3332, %v3575
      %v3667 = vadd.f32 %v3335, %v3578
      %v3668 = vadd.f32 %v3338, %v3581
      %v3669 = vadd.f32 %v3341, %v3584
      %v3670 = vadd.f32 %v3344, %v3587
      %v3671 = vadd.f32 %v3347, %v3590
      %v3672 = vadd.f32 %v3350, %v3593
      %v3673 = vadd.f32 %v3353, %v3596
      %v3674 = vadd.f32 %v3356, %v3599
      %v3675 = vadd.f32 %v3359, %v3602
      %v3676 = vadd.f32 %v3362, %v3605
      %v3677 = vadd.f32 %v3365, %v3608
      %v3678 = vadd.f32 %v3368, %v3611
      %v3679 = vadd.f32 %v3371, %v3614
      %v3680 = vadd.f32 %v3374, %v3617
      %v3681 = vadd.f32 %v3377, %v3620
      %v3682 = vadd.f32 %v3380, %v3623
      %v3683 = vadd.f32 %v3383, %v3626
      %v3684 = vadd.f32 %v3386, %v3629
      %v3685 = vadd.f32 %v3389, %v3632
      %v3686 = vadd.f32 %v3392, %v3635
      %v3687 = vadd.f32 %v3395, %v3638
      %v3688 = vadd.f32 %v3398, %v3641
      %v3689 = vadd.f32 %v3401, %v3644
      %v3690 = vadd.f32 %v3404, %v3647
      %v3691 = vadd.f32 %v3407, %v3650
      %v3692 = vadd.f32 %v3410, %v3653
      %v3693 = vadd.f32 %v3413, %v3656
      %v3694 = vadd.f32 %v3416, %v3659
      %v3695 = vadd.f32 %v3419, %v3662
      %v3696 = vld [vmem:[%s2903] sm:$0xff]
      %v3697 = vld [vmem:[%s2903 + $0x8] sm:$0xff]
      %v3698 = vld [vmem:[%s2903 + $0x18] sm:$0xff]
      %v3699 = vld [vmem:[%s2903 + $0x20] sm:$0xff]
      %v3700 = vld [vmem:[%s2903 + $0x30] sm:$0xff]
      %v3701 = vld [vmem:[%s2903 + $0x38] sm:$0xff]
      %v3702 = vld [vmem:[%s2903 + $0x48] sm:$0xff]
      %v3703 = vld [vmem:[%s2903 + $0x50] sm:$0xff]
      %v3704 = vld [vmem:[%s2903 + $0x60] sm:$0xff]
      %v3705 = vld [vmem:[%s2903 + $0x68] sm:$0xff]
      %v3706 = vld [vmem:[%s2903 + $0x78] sm:$0xff]
      %v3707 = vld [vmem:[%s2903 + $0x80] sm:$0xff]
      %v3708 = vld [vmem:[%s2903 + $0x90] sm:$0xff]
      %v3709 = vld [vmem:[%s2903 + $0x98] sm:$0xff]
      %v3710 = vld [vmem:[%s2903 + $0xa8] sm:$0xff]
      %v3711 = vld [vmem:[%s2903 + $0xb0] sm:$0xff]
      %v3712 = vld [vmem:[%s2903 + $0xc0] sm:$0xff]
      %v3713 = vld [vmem:[%s2903 + $0xc8] sm:$0xff]
      %v3714 = vld [vmem:[%s2903 + $0xd8] sm:$0xff]
      %v3715 = vld [vmem:[%s2903 + $0xe0] sm:$0xff]
      %v3716 = vld [vmem:[%s2903 + $0xf0] sm:$0xff]
      %v3717 = vld [vmem:[%s2903 + $0xf8] sm:$0xff]
      %v3718 = vld [vmem:[%s2903 + $0x108] sm:$0xff]
      %v3719 = vld [vmem:[%s2903 + $0x110] sm:$0xff]
      %v3720 = vld [vmem:[%s2903 + $0x120] sm:$0xff]
      %v3721 = vld [vmem:[%s2903 + $0x128] sm:$0xff]
      %v3722 = vld [vmem:[%s2903 + $0x138] sm:$0xff]
      %v3723 = vld [vmem:[%s2903 + $0x140] sm:$0xff]
      %v3724 = vld [vmem:[%s2903 + $0x150] sm:$0xff]
      %v3725 = vld [vmem:[%s2903 + $0x158] sm:$0xff]
      %v3726 = vld [vmem:[%s2903 + $0x168] sm:$0xff]
      %v3727 = vld [vmem:[%s2903 + $0x170] sm:$0xff]
      %s3728 = scalar_lea.vmem %s3, 24
      %v3729 = vld [vmem:[%s3728] sm:$0xff]
      %v3731 = vsel %vm337, %v3696, 0
      %v3734 = vsel %vm337, %v3697, 0
      %v3737 = vsel %vm337, %v3698, 0
      %v3740 = vsel %vm337, %v3699, 0
      %v3743 = vsel %vm337, %v3700, 0
      %v3746 = vsel %vm337, %v3701, 0
      %v3749 = vsel %vm337, %v3702, 0
      %v3752 = vsel %vm337, %v3703, 0
      %v3755 = vsel %vm337, %v3704, 0
      %v3758 = vsel %vm337, %v3705, 0
      %v3761 = vsel %vm337, %v3706, 0
      %v3764 = vsel %vm337, %v3707, 0
      %v3767 = vsel %vm337, %v3708, 0
      %v3770 = vsel %vm337, %v3709, 0
      %v3773 = vsel %vm337, %v3710, 0
      %v3776 = vsel %vm337, %v3711, 0
      %v3779 = vsel %vm337, %v3712, 0
      %v3782 = vsel %vm337, %v3713, 0
      %v3785 = vsel %vm337, %v3714, 0
      %v3788 = vsel %vm337, %v3715, 0
      %v3791 = vsel %vm337, %v3716, 0
      %v3794 = vsel %vm337, %v3717, 0
      %v3797 = vsel %vm337, %v3718, 0
      %v3800 = vsel %vm337, %v3719, 0
      %v3803 = vsel %vm337, %v3720, 0
      %v3806 = vsel %vm337, %v3721, 0
      %v3809 = vsel %vm337, %v3722, 0
      %v3812 = vsel %vm337, %v3723, 0
      %v3815 = vsel %vm337, %v3724, 0
      %v3818 = vsel %vm337, %v3725, 0
      %v3821 = vsel %vm337, %v3726, 0
      %v3824 = vsel %vm337, %v3727, 0
      %3826 = vmatpush.msra.mxu0 0.0
      %3827 = vmatpush.msra.mxu0 0.0
      %3828 = vmatpush.msra.mxu0 0.0
      %3829 = vmatpush.msra.mxu0 0.0
      %3830 = vmatpush.msra.mxu0 0.0
      %3831 = vmatpush.msra.mxu0 0.0
      %3832 = vmatpush.msra.mxu0 0.0
      %3833 = vmatpush.msra.mxu0 0.0
      %3834 = vmatpush.msra.mxu0 0.0
      %3835 = vmatpush.msra.mxu0 0.0
      %3836 = vmatpush.msra.mxu0 0.0
      %3837 = vmatpush.msra.mxu0 0.0
      %3838 = vmatpush.msra.mxu0 0.0
      %3839 = vmatpush.msra.mxu0 0.0
      %3840 = vmatpush.msra.mxu0 0.0
      %3841 = vmatpush.msra.mxu0 %v3729
      %3842 = vmatmul.f32.gmra.mxu0 %v3731
      %v3843 = vpop.f32.mrf.mxu0
      %v3844 = vadd.f32 0.0, %v3843
      %3845 = vmatmul.f32.gmra.mxu0 %v3734
      %v3846 = vpop.f32.mrf.mxu0
      %v3847 = vadd.f32 0.0, %v3846
      %3848 = vmatmul.f32.gmra.mxu0 %v3737
      %v3849 = vpop.f32.mrf.mxu0
      %v3850 = vadd.f32 0.0, %v3849
      %3851 = vmatmul.f32.gmra.mxu0 %v3740
      %v3852 = vpop.f32.mrf.mxu0
      %v3853 = vadd.f32 0.0, %v3852
      %3854 = vmatmul.f32.gmra.mxu0 %v3743
      %v3855 = vpop.f32.mrf.mxu0
      %v3856 = vadd.f32 0.0, %v3855
      %3857 = vmatmul.f32.gmra.mxu0 %v3746
      %v3858 = vpop.f32.mrf.mxu0
      %v3859 = vadd.f32 0.0, %v3858
      %3860 = vmatmul.f32.gmra.mxu0 %v3749
      %v3861 = vpop.f32.mrf.mxu0
      %v3862 = vadd.f32 0.0, %v3861
      %3863 = vmatmul.f32.gmra.mxu0 %v3752
      %v3864 = vpop.f32.mrf.mxu0
      %v3865 = vadd.f32 0.0, %v3864
      %3866 = vmatmul.f32.gmra.mxu0 %v3755
      %v3867 = vpop.f32.mrf.mxu0
      %v3868 = vadd.f32 0.0, %v3867
      %3869 = vmatmul.f32.gmra.mxu0 %v3758
      %v3870 = vpop.f32.mrf.mxu0
      %v3871 = vadd.f32 0.0, %v3870
      %3872 = vmatmul.f32.gmra.mxu0 %v3761
      %v3873 = vpop.f32.mrf.mxu0
      %v3874 = vadd.f32 0.0, %v3873
      %3875 = vmatmul.f32.gmra.mxu0 %v3764
      %v3876 = vpop.f32.mrf.mxu0
      %v3877 = vadd.f32 0.0, %v3876
      %3878 = vmatmul.f32.gmra.mxu0 %v3767
      %v3879 = vpop.f32.mrf.mxu0
      %v3880 = vadd.f32 0.0, %v3879
      %3881 = vmatmul.f32.gmra.mxu0 %v3770
      %v3882 = vpop.f32.mrf.mxu0
      %v3883 = vadd.f32 0.0, %v3882
      %3884 = vmatmul.f32.gmra.mxu0 %v3773
      %v3885 = vpop.f32.mrf.mxu0
      %v3886 = vadd.f32 0.0, %v3885
      %3887 = vmatmul.f32.gmra.mxu0 %v3776
      %v3888 = vpop.f32.mrf.mxu0
      %v3889 = vadd.f32 0.0, %v3888
      %3890 = vmatmul.f32.gmra.mxu0 %v3779
      %v3891 = vpop.f32.mrf.mxu0
      %v3892 = vadd.f32 0.0, %v3891
      %3893 = vmatmul.f32.gmra.mxu0 %v3782
      %v3894 = vpop.f32.mrf.mxu0
      %v3895 = vadd.f32 0.0, %v3894
      %3896 = vmatmul.f32.gmra.mxu0 %v3785
      %v3897 = vpop.f32.mrf.mxu0
      %v3898 = vadd.f32 0.0, %v3897
      %3899 = vmatmul.f32.gmra.mxu0 %v3788
      %v3900 = vpop.f32.mrf.mxu0
      %v3901 = vadd.f32 0.0, %v3900
      %3902 = vmatmul.f32.gmra.mxu0 %v3791
      %v3903 = vpop.f32.mrf.mxu0
      %v3904 = vadd.f32 0.0, %v3903
      %3905 = vmatmul.f32.gmra.mxu0 %v3794
      %v3906 = vpop.f32.mrf.mxu0
      %v3907 = vadd.f32 0.0, %v3906
      %3908 = vmatmul.f32.gmra.mxu0 %v3797
      %v3909 = vpop.f32.mrf.mxu0
      %v3910 = vadd.f32 0.0, %v3909
      %3911 = vmatmul.f32.gmra.mxu0 %v3800
      %v3912 = vpop.f32.mrf.mxu0
      %v3913 = vadd.f32 0.0, %v3912
      %3914 = vmatmul.f32.gmra.mxu0 %v3803
      %v3915 = vpop.f32.mrf.mxu0
      %v3916 = vadd.f32 0.0, %v3915
      %3917 = vmatmul.f32.gmra.mxu0 %v3806
      %v3918 = vpop.f32.mrf.mxu0
      %v3919 = vadd.f32 0.0, %v3918
      %3920 = vmatmul.f32.gmra.mxu0 %v3809
      %v3921 = vpop.f32.mrf.mxu0
      %v3922 = vadd.f32 0.0, %v3921
      %3923 = vmatmul.f32.gmra.mxu0 %v3812
      %v3924 = vpop.f32.mrf.mxu0
      %v3925 = vadd.f32 0.0, %v3924
      %3926 = vmatmul.f32.gmra.mxu0 %v3815
      %v3927 = vpop.f32.mrf.mxu0
      %v3928 = vadd.f32 0.0, %v3927
      %3929 = vmatmul.f32.gmra.mxu0 %v3818
      %v3930 = vpop.f32.mrf.mxu0
      %v3931 = vadd.f32 0.0, %v3930
      %3932 = vmatmul.f32.gmra.mxu0 %v3821
      %v3933 = vpop.f32.mrf.mxu0
      %v3934 = vadd.f32 0.0, %v3933
      %3935 = vmatmul.f32.gmra.mxu0 %v3824
      %v3936 = vpop.f32.mrf.mxu0
      %v3937 = vadd.f32 0.0, %v3936
      %3938 = vdwg.mxu0
      %v3939 = vadd.f32 %v3664, %v3844
      %v3940 = vadd.f32 %v3665, %v3847
      %v3941 = vadd.f32 %v3666, %v3850
      %v3942 = vadd.f32 %v3667, %v3853
      %v3943 = vadd.f32 %v3668, %v3856
      %v3944 = vadd.f32 %v3669, %v3859
      %v3945 = vadd.f32 %v3670, %v3862
      %v3946 = vadd.f32 %v3671, %v3865
      %v3947 = vadd.f32 %v3672, %v3868
      %v3948 = vadd.f32 %v3673, %v3871
      %v3949 = vadd.f32 %v3674, %v3874
      %v3950 = vadd.f32 %v3675, %v3877
      %v3951 = vadd.f32 %v3676, %v3880
      %v3952 = vadd.f32 %v3677, %v3883
      %v3953 = vadd.f32 %v3678, %v3886
      %v3954 = vadd.f32 %v3679, %v3889
      %v3955 = vadd.f32 %v3680, %v3892
      %v3956 = vadd.f32 %v3681, %v3895
      %v3957 = vadd.f32 %v3682, %v3898
      %v3958 = vadd.f32 %v3683, %v3901
      %v3959 = vadd.f32 %v3684, %v3904
      %v3960 = vadd.f32 %v3685, %v3907
      %v3961 = vadd.f32 %v3686, %v3910
      %v3962 = vadd.f32 %v3687, %v3913
      %v3963 = vadd.f32 %v3688, %v3916
      %v3964 = vadd.f32 %v3689, %v3919
      %v3965 = vadd.f32 %v3690, %v3922
      %v3966 = vadd.f32 %v3691, %v3925
      %v3967 = vadd.f32 %v3692, %v3928
      %v3968 = vadd.f32 %v3693, %v3931
      %v3969 = vadd.f32 %v3694, %v3934
      %v3970 = vadd.f32 %v3695, %v3937
      %v3971 = vld [vmem:[%s2903 + $0x1] sm:$0xff]
      %v3972 = vld [vmem:[%s2903 + $0x9] sm:$0xff]
      %v3973 = vld [vmem:[%s2903 + $0x19] sm:$0xff]
      %v3974 = vld [vmem:[%s2903 + $0x21] sm:$0xff]
      %v3975 = vld [vmem:[%s2903 + $0x31] sm:$0xff]
      %v3976 = vld [vmem:[%s2903 + $0x39] sm:$0xff]
      %v3977 = vld [vmem:[%s2903 + $0x49] sm:$0xff]
      %v3978 = vld [vmem:[%s2903 + $0x51] sm:$0xff]
      %v3979 = vld [vmem:[%s2903 + $0x61] sm:$0xff]
      %v3980 = vld [vmem:[%s2903 + $0x69] sm:$0xff]
      %v3981 = vld [vmem:[%s2903 + $0x79] sm:$0xff]
      %v3982 = vld [vmem:[%s2903 + $0x81] sm:$0xff]
      %v3983 = vld [vmem:[%s2903 + $0x91] sm:$0xff]
      %v3984 = vld [vmem:[%s2903 + $0x99] sm:$0xff]
      %v3985 = vld [vmem:[%s2903 + $0xa9] sm:$0xff]
      %v3986 = vld [vmem:[%s2903 + $0xb1] sm:$0xff]
      %v3987 = vld [vmem:[%s2903 + $0xc1] sm:$0xff]
      %v3988 = vld [vmem:[%s2903 + $0xc9] sm:$0xff]
      %v3989 = vld [vmem:[%s2903 + $0xd9] sm:$0xff]
      %v3990 = vld [vmem:[%s2903 + $0xe1] sm:$0xff]
      %v3991 = vld [vmem:[%s2903 + $0xf1] sm:$0xff]
      %v3992 = vld [vmem:[%s2903 + $0xf9] sm:$0xff]
      %v3993 = vld [vmem:[%s2903 + $0x109] sm:$0xff]
      %v3994 = vld [vmem:[%s2903 + $0x111] sm:$0xff]
      %v3995 = vld [vmem:[%s2903 + $0x121] sm:$0xff]
      %v3996 = vld [vmem:[%s2903 + $0x129] sm:$0xff]
      %v3997 = vld [vmem:[%s2903 + $0x139] sm:$0xff]
      %v3998 = vld [vmem:[%s2903 + $0x141] sm:$0xff]
      %v3999 = vld [vmem:[%s2903 + $0x151] sm:$0xff]
      %v4000 = vld [vmem:[%s2903 + $0x159] sm:$0xff]
      %v4001 = vld [vmem:[%s2903 + $0x169] sm:$0xff]
      %v4002 = vld [vmem:[%s2903 + $0x171] sm:$0xff]
      %s4003 = scalar_lea.vmem %s3, 32
      %v4004 = vld [vmem:[%s4003] sm:$0xff]
      %v4006 = vsel %vm337, %v3971, 0
      %v4009 = vsel %vm337, %v3972, 0
      %v4012 = vsel %vm337, %v3973, 0
      %v4015 = vsel %vm337, %v3974, 0
      %v4018 = vsel %vm337, %v3975, 0
      %v4021 = vsel %vm337, %v3976, 0
      %v4024 = vsel %vm337, %v3977, 0
      %v4027 = vsel %vm337, %v3978, 0
      %v4030 = vsel %vm337, %v3979, 0
      %v4033 = vsel %vm337, %v3980, 0
      %v4036 = vsel %vm337, %v3981, 0
      %v4039 = vsel %vm337, %v3982, 0
      %v4042 = vsel %vm337, %v3983, 0
      %v4045 = vsel %vm337, %v3984, 0
      %v4048 = vsel %vm337, %v3985, 0
      %v4051 = vsel %vm337, %v3986, 0
      %v4054 = vsel %vm337, %v3987, 0
      %v4057 = vsel %vm337, %v3988, 0
      %v4060 = vsel %vm337, %v3989, 0
      %v4063 = vsel %vm337, %v3990, 0
      %v4066 = vsel %vm337, %v3991, 0
      %v4069 = vsel %vm337, %v3992, 0
      %v4072 = vsel %vm337, %v3993, 0
      %v4075 = vsel %vm337, %v3994, 0
      %v4078 = vsel %vm337, %v3995, 0
      %v4081 = vsel %vm337, %v3996, 0
      %v4084 = vsel %vm337, %v3997, 0
      %v4087 = vsel %vm337, %v3998, 0
      %v4090 = vsel %vm337, %v3999, 0
      %v4093 = vsel %vm337, %v4000, 0
      %v4096 = vsel %vm337, %v4001, 0
      %v4099 = vsel %vm337, %v4002, 0
      %4101 = vmatpush.msra.mxu0 0.0
      %4102 = vmatpush.msra.mxu0 0.0
      %4103 = vmatpush.msra.mxu0 0.0
      %4104 = vmatpush.msra.mxu0 0.0
      %4105 = vmatpush.msra.mxu0 0.0
      %4106 = vmatpush.msra.mxu0 0.0
      %4107 = vmatpush.msra.mxu0 0.0
      %4108 = vmatpush.msra.mxu0 0.0
      %4109 = vmatpush.msra.mxu0 0.0
      %4110 = vmatpush.msra.mxu0 0.0
      %4111 = vmatpush.msra.mxu0 0.0
      %4112 = vmatpush.msra.mxu0 0.0
      %4113 = vmatpush.msra.mxu0 0.0
      %4114 = vmatpush.msra.mxu0 0.0
      %4115 = vmatpush.msra.mxu0 0.0
      %4116 = vmatpush.msra.mxu0 %v4004
      %4117 = vmatmul.f32.gmra.mxu0 %v4006
      %v4118 = vpop.f32.mrf.mxu0
      %v4119 = vadd.f32 0.0, %v4118
      %4120 = vmatmul.f32.gmra.mxu0 %v4009
      %v4121 = vpop.f32.mrf.mxu0
      %v4122 = vadd.f32 0.0, %v4121
      %4123 = vmatmul.f32.gmra.mxu0 %v4012
      %v4124 = vpop.f32.mrf.mxu0
      %v4125 = vadd.f32 0.0, %v4124
      %4126 = vmatmul.f32.gmra.mxu0 %v4015
      %v4127 = vpop.f32.mrf.mxu0
      %v4128 = vadd.f32 0.0, %v4127
      %4129 = vmatmul.f32.gmra.mxu0 %v4018
      %v4130 = vpop.f32.mrf.mxu0
      %v4131 = vadd.f32 0.0, %v4130
      %4132 = vmatmul.f32.gmra.mxu0 %v4021
      %v4133 = vpop.f32.mrf.mxu0
      %v4134 = vadd.f32 0.0, %v4133
      %4135 = vmatmul.f32.gmra.mxu0 %v4024
      %v4136 = vpop.f32.mrf.mxu0
      %v4137 = vadd.f32 0.0, %v4136
      %4138 = vmatmul.f32.gmra.mxu0 %v4027
      %v4139 = vpop.f32.mrf.mxu0
      %v4140 = vadd.f32 0.0, %v4139
      %4141 = vmatmul.f32.gmra.mxu0 %v4030
      %v4142 = vpop.f32.mrf.mxu0
      %v4143 = vadd.f32 0.0, %v4142
      %4144 = vmatmul.f32.gmra.mxu0 %v4033
      %v4145 = vpop.f32.mrf.mxu0
      %v4146 = vadd.f32 0.0, %v4145
      %4147 = vmatmul.f32.gmra.mxu0 %v4036
      %v4148 = vpop.f32.mrf.mxu0
      %v4149 = vadd.f32 0.0, %v4148
      %4150 = vmatmul.f32.gmra.mxu0 %v4039
      %v4151 = vpop.f32.mrf.mxu0
      %v4152 = vadd.f32 0.0, %v4151
      %4153 = vmatmul.f32.gmra.mxu0 %v4042
      %v4154 = vpop.f32.mrf.mxu0
      %v4155 = vadd.f32 0.0, %v4154
      %4156 = vmatmul.f32.gmra.mxu0 %v4045
      %v4157 = vpop.f32.mrf.mxu0
      %v4158 = vadd.f32 0.0, %v4157
      %4159 = vmatmul.f32.gmra.mxu0 %v4048
      %v4160 = vpop.f32.mrf.mxu0
      %v4161 = vadd.f32 0.0, %v4160
      %4162 = vmatmul.f32.gmra.mxu0 %v4051
      %v4163 = vpop.f32.mrf.mxu0
      %v4164 = vadd.f32 0.0, %v4163
      %4165 = vmatmul.f32.gmra.mxu0 %v4054
      %v4166 = vpop.f32.mrf.mxu0
      %v4167 = vadd.f32 0.0, %v4166
      %4168 = vmatmul.f32.gmra.mxu0 %v4057
      %v4169 = vpop.f32.mrf.mxu0
      %v4170 = vadd.f32 0.0, %v4169
      %4171 = vmatmul.f32.gmra.mxu0 %v4060
      %v4172 = vpop.f32.mrf.mxu0
      %v4173 = vadd.f32 0.0, %v4172
      %4174 = vmatmul.f32.gmra.mxu0 %v4063
      %v4175 = vpop.f32.mrf.mxu0
      %v4176 = vadd.f32 0.0, %v4175
      %4177 = vmatmul.f32.gmra.mxu0 %v4066
      %v4178 = vpop.f32.mrf.mxu0
      %v4179 = vadd.f32 0.0, %v4178
      %4180 = vmatmul.f32.gmra.mxu0 %v4069
      %v4181 = vpop.f32.mrf.mxu0
      %v4182 = vadd.f32 0.0, %v4181
      %4183 = vmatmul.f32.gmra.mxu0 %v4072
      %v4184 = vpop.f32.mrf.mxu0
      %v4185 = vadd.f32 0.0, %v4184
      %4186 = vmatmul.f32.gmra.mxu0 %v4075
      %v4187 = vpop.f32.mrf.mxu0
      %v4188 = vadd.f32 0.0, %v4187
      %4189 = vmatmul.f32.gmra.mxu0 %v4078
      %v4190 = vpop.f32.mrf.mxu0
      %v4191 = vadd.f32 0.0, %v4190
      %4192 = vmatmul.f32.gmra.mxu0 %v4081
      %v4193 = vpop.f32.mrf.mxu0
      %v4194 = vadd.f32 0.0, %v4193
      %4195 = vmatmul.f32.gmra.mxu0 %v4084
      %v4196 = vpop.f32.mrf.mxu0
      %v4197 = vadd.f32 0.0, %v4196
      %4198 = vmatmul.f32.gmra.mxu0 %v4087
      %v4199 = vpop.f32.mrf.mxu0
      %v4200 = vadd.f32 0.0, %v4199
      %4201 = vmatmul.f32.gmra.mxu0 %v4090
      %v4202 = vpop.f32.mrf.mxu0
      %v4203 = vadd.f32 0.0, %v4202
      %4204 = vmatmul.f32.gmra.mxu0 %v4093
      %v4205 = vpop.f32.mrf.mxu0
      %v4206 = vadd.f32 0.0, %v4205
      %4207 = vmatmul.f32.gmra.mxu0 %v4096
      %v4208 = vpop.f32.mrf.mxu0
      %v4209 = vadd.f32 0.0, %v4208
      %4210 = vmatmul.f32.gmra.mxu0 %v4099
      %v4211 = vpop.f32.mrf.mxu0
      %v4212 = vadd.f32 0.0, %v4211
      %4213 = vdwg.mxu0
      %v4214 = vadd.f32 %v3939, %v4119
      %v4215 = vadd.f32 %v3940, %v4122
      %v4216 = vadd.f32 %v3941, %v4125
      %v4217 = vadd.f32 %v3942, %v4128
      %v4218 = vadd.f32 %v3943, %v4131
      %v4219 = vadd.f32 %v3944, %v4134
      %v4220 = vadd.f32 %v3945, %v4137
      %v4221 = vadd.f32 %v3946, %v4140
      %v4222 = vadd.f32 %v3947, %v4143
      %v4223 = vadd.f32 %v3948, %v4146
      %v4224 = vadd.f32 %v3949, %v4149
      %v4225 = vadd.f32 %v3950, %v4152
      %v4226 = vadd.f32 %v3951, %v4155
      %v4227 = vadd.f32 %v3952, %v4158
      %v4228 = vadd.f32 %v3953, %v4161
      %v4229 = vadd.f32 %v3954, %v4164
      %v4230 = vadd.f32 %v3955, %v4167
      %v4231 = vadd.f32 %v3956, %v4170
      %v4232 = vadd.f32 %v3957, %v4173
      %v4233 = vadd.f32 %v3958, %v4176
      %v4234 = vadd.f32 %v3959, %v4179
      %v4235 = vadd.f32 %v3960, %v4182
      %v4236 = vadd.f32 %v3961, %v4185
      %v4237 = vadd.f32 %v3962, %v4188
      %v4238 = vadd.f32 %v3963, %v4191
      %v4239 = vadd.f32 %v3964, %v4194
      %v4240 = vadd.f32 %v3965, %v4197
      %v4241 = vadd.f32 %v3966, %v4200
      %v4242 = vadd.f32 %v3967, %v4203
      %v4243 = vadd.f32 %v3968, %v4206
      %v4244 = vadd.f32 %v3969, %v4209
      %v4245 = vadd.f32 %v3970, %v4212
      %v4246 = vld [vmem:[%s2903 + $0x2] sm:$0xff]
      %v4247 = vld [vmem:[%s2903 + $0xa] sm:$0xff]
      %v4248 = vld [vmem:[%s2903 + $0x1a] sm:$0xff]
      %v4249 = vld [vmem:[%s2903 + $0x22] sm:$0xff]
      %v4250 = vld [vmem:[%s2903 + $0x32] sm:$0xff]
      %v4251 = vld [vmem:[%s2903 + $0x3a] sm:$0xff]
      %v4252 = vld [vmem:[%s2903 + $0x4a] sm:$0xff]
      %v4253 = vld [vmem:[%s2903 + $0x52] sm:$0xff]
      %v4254 = vld [vmem:[%s2903 + $0x62] sm:$0xff]
      %v4255 = vld [vmem:[%s2903 + $0x6a] sm:$0xff]
      %v4256 = vld [vmem:[%s2903 + $0x7a] sm:$0xff]
      %v4257 = vld [vmem:[%s2903 + $0x82] sm:$0xff]
      %v4258 = vld [vmem:[%s2903 + $0x92] sm:$0xff]
      %v4259 = vld [vmem:[%s2903 + $0x9a] sm:$0xff]
      %v4260 = vld [vmem:[%s2903 + $0xaa] sm:$0xff]
      %v4261 = vld [vmem:[%s2903 + $0xb2] sm:$0xff]
      %v4262 = vld [vmem:[%s2903 + $0xc2] sm:$0xff]
      %v4263 = vld [vmem:[%s2903 + $0xca] sm:$0xff]
      %v4264 = vld [vmem:[%s2903 + $0xda] sm:$0xff]
      %v4265 = vld [vmem:[%s2903 + $0xe2] sm:$0xff]
      %v4266 = vld [vmem:[%s2903 + $0xf2] sm:$0xff]
      %v4267 = vld [vmem:[%s2903 + $0xfa] sm:$0xff]
      %v4268 = vld [vmem:[%s2903 + $0x10a] sm:$0xff]
      %v4269 = vld [vmem:[%s2903 + $0x112] sm:$0xff]
      %v4270 = vld [vmem:[%s2903 + $0x122] sm:$0xff]
      %v4271 = vld [vmem:[%s2903 + $0x12a] sm:$0xff]
      %v4272 = vld [vmem:[%s2903 + $0x13a] sm:$0xff]
      %v4273 = vld [vmem:[%s2903 + $0x142] sm:$0xff]
      %v4274 = vld [vmem:[%s2903 + $0x152] sm:$0xff]
      %v4275 = vld [vmem:[%s2903 + $0x15a] sm:$0xff]
      %v4276 = vld [vmem:[%s2903 + $0x16a] sm:$0xff]
      %v4277 = vld [vmem:[%s2903 + $0x172] sm:$0xff]
      %s4278 = scalar_lea.vmem %s3, 40
      %v4279 = vld [vmem:[%s4278] sm:$0xff]
      %v4281 = vsel %vm337, %v4246, 0
      %v4284 = vsel %vm337, %v4247, 0
      %v4287 = vsel %vm337, %v4248, 0
      %v4290 = vsel %vm337, %v4249, 0
      %v4293 = vsel %vm337, %v4250, 0
      %v4296 = vsel %vm337, %v4251, 0
      %v4299 = vsel %vm337, %v4252, 0
      %v4302 = vsel %vm337, %v4253, 0
      %v4305 = vsel %vm337, %v4254, 0
      %v4308 = vsel %vm337, %v4255, 0
      %v4311 = vsel %vm337, %v4256, 0
      %v4314 = vsel %vm337, %v4257, 0
      %v4317 = vsel %vm337, %v4258, 0
      %v4320 = vsel %vm337, %v4259, 0
      %v4323 = vsel %vm337, %v4260, 0
      %v4326 = vsel %vm337, %v4261, 0
      %v4329 = vsel %vm337, %v4262, 0
      %v4332 = vsel %vm337, %v4263, 0
      %v4335 = vsel %vm337, %v4264, 0
      %v4338 = vsel %vm337, %v4265, 0
      %v4341 = vsel %vm337, %v4266, 0
      %v4344 = vsel %vm337, %v4267, 0
      %v4347 = vsel %vm337, %v4268, 0
      %v4350 = vsel %vm337, %v4269, 0
      %v4353 = vsel %vm337, %v4270, 0
      %v4356 = vsel %vm337, %v4271, 0
      %v4359 = vsel %vm337, %v4272, 0
      %v4362 = vsel %vm337, %v4273, 0
      %v4365 = vsel %vm337, %v4274, 0
      %v4368 = vsel %vm337, %v4275, 0
      %v4371 = vsel %vm337, %v4276, 0
      %v4374 = vsel %vm337, %v4277, 0
      %4376 = vmatpush.msra.mxu0 0.0
      %4377 = vmatpush.msra.mxu0 0.0
      %4378 = vmatpush.msra.mxu0 0.0
      %4379 = vmatpush.msra.mxu0 0.0
      %4380 = vmatpush.msra.mxu0 0.0
      %4381 = vmatpush.msra.mxu0 0.0
      %4382 = vmatpush.msra.mxu0 0.0
      %4383 = vmatpush.msra.mxu0 0.0
      %4384 = vmatpush.msra.mxu0 0.0
      %4385 = vmatpush.msra.mxu0 0.0
      %4386 = vmatpush.msra.mxu0 0.0
      %4387 = vmatpush.msra.mxu0 0.0
      %4388 = vmatpush.msra.mxu0 0.0
      %4389 = vmatpush.msra.mxu0 0.0
      %4390 = vmatpush.msra.mxu0 0.0
      %4391 = vmatpush.msra.mxu0 %v4279
      %4392 = vmatmul.f32.gmra.mxu0 %v4281
      %v4393 = vpop.f32.mrf.mxu0
      %v4394 = vadd.f32 0.0, %v4393
      %4395 = vmatmul.f32.gmra.mxu0 %v4284
      %v4396 = vpop.f32.mrf.mxu0
      %v4397 = vadd.f32 0.0, %v4396
      %4398 = vmatmul.f32.gmra.mxu0 %v4287
      %v4399 = vpop.f32.mrf.mxu0
      %v4400 = vadd.f32 0.0, %v4399
      %4401 = vmatmul.f32.gmra.mxu0 %v4290
      %v4402 = vpop.f32.mrf.mxu0
      %v4403 = vadd.f32 0.0, %v4402
      %4404 = vmatmul.f32.gmra.mxu0 %v4293
      %v4405 = vpop.f32.mrf.mxu0
      %v4406 = vadd.f32 0.0, %v4405
      %4407 = vmatmul.f32.gmra.mxu0 %v4296
      %v4408 = vpop.f32.mrf.mxu0
      %v4409 = vadd.f32 0.0, %v4408
      %4410 = vmatmul.f32.gmra.mxu0 %v4299
      %v4411 = vpop.f32.mrf.mxu0
      %v4412 = vadd.f32 0.0, %v4411
      %4413 = vmatmul.f32.gmra.mxu0 %v4302
      %v4414 = vpop.f32.mrf.mxu0
      %v4415 = vadd.f32 0.0, %v4414
      %4416 = vmatmul.f32.gmra.mxu0 %v4305
      %v4417 = vpop.f32.mrf.mxu0
      %v4418 = vadd.f32 0.0, %v4417
      %4419 = vmatmul.f32.gmra.mxu0 %v4308
      %v4420 = vpop.f32.mrf.mxu0
      %v4421 = vadd.f32 0.0, %v4420
      %4422 = vmatmul.f32.gmra.mxu0 %v4311
      %v4423 = vpop.f32.mrf.mxu0
      %v4424 = vadd.f32 0.0, %v4423
      %4425 = vmatmul.f32.gmra.mxu0 %v4314
      %v4426 = vpop.f32.mrf.mxu0
      %v4427 = vadd.f32 0.0, %v4426
      %4428 = vmatmul.f32.gmra.mxu0 %v4317
      %v4429 = vpop.f32.mrf.mxu0
      %v4430 = vadd.f32 0.0, %v4429
      %4431 = vmatmul.f32.gmra.mxu0 %v4320
      %v4432 = vpop.f32.mrf.mxu0
      %v4433 = vadd.f32 0.0, %v4432
      %4434 = vmatmul.f32.gmra.mxu0 %v4323
      %v4435 = vpop.f32.mrf.mxu0
      %v4436 = vadd.f32 0.0, %v4435
      %4437 = vmatmul.f32.gmra.mxu0 %v4326
      %v4438 = vpop.f32.mrf.mxu0
      %v4439 = vadd.f32 0.0, %v4438
      %4440 = vmatmul.f32.gmra.mxu0 %v4329
      %v4441 = vpop.f32.mrf.mxu0
      %v4442 = vadd.f32 0.0, %v4441
      %4443 = vmatmul.f32.gmra.mxu0 %v4332
      %v4444 = vpop.f32.mrf.mxu0
      %v4445 = vadd.f32 0.0, %v4444
      %4446 = vmatmul.f32.gmra.mxu0 %v4335
      %v4447 = vpop.f32.mrf.mxu0
      %v4448 = vadd.f32 0.0, %v4447
      %4449 = vmatmul.f32.gmra.mxu0 %v4338
      %v4450 = vpop.f32.mrf.mxu0
      %v4451 = vadd.f32 0.0, %v4450
      %4452 = vmatmul.f32.gmra.mxu0 %v4341
      %v4453 = vpop.f32.mrf.mxu0
      %v4454 = vadd.f32 0.0, %v4453
      %4455 = vmatmul.f32.gmra.mxu0 %v4344
      %v4456 = vpop.f32.mrf.mxu0
      %v4457 = vadd.f32 0.0, %v4456
      %4458 = vmatmul.f32.gmra.mxu0 %v4347
      %v4459 = vpop.f32.mrf.mxu0
      %v4460 = vadd.f32 0.0, %v4459
      %4461 = vmatmul.f32.gmra.mxu0 %v4350
      %v4462 = vpop.f32.mrf.mxu0
      %v4463 = vadd.f32 0.0, %v4462
      %4464 = vmatmul.f32.gmra.mxu0 %v4353
      %v4465 = vpop.f32.mrf.mxu0
      %v4466 = vadd.f32 0.0, %v4465
      %4467 = vmatmul.f32.gmra.mxu0 %v4356
      %v4468 = vpop.f32.mrf.mxu0
      %v4469 = vadd.f32 0.0, %v4468
      %4470 = vmatmul.f32.gmra.mxu0 %v4359
      %v4471 = vpop.f32.mrf.mxu0
      %v4472 = vadd.f32 0.0, %v4471
      %4473 = vmatmul.f32.gmra.mxu0 %v4362
      %v4474 = vpop.f32.mrf.mxu0
      %v4475 = vadd.f32 0.0, %v4474
      %4476 = vmatmul.f32.gmra.mxu0 %v4365
      %v4477 = vpop.f32.mrf.mxu0
      %v4478 = vadd.f32 0.0, %v4477
      %4479 = vmatmul.f32.gmra.mxu0 %v4368
      %v4480 = vpop.f32.mrf.mxu0
      %v4481 = vadd.f32 0.0, %v4480
      %4482 = vmatmul.f32.gmra.mxu0 %v4371
      %v4483 = vpop.f32.mrf.mxu0
      %v4484 = vadd.f32 0.0, %v4483
      %4485 = vmatmul.f32.gmra.mxu0 %v4374
      %v4486 = vpop.f32.mrf.mxu0
      %v4487 = vadd.f32 0.0, %v4486
      %4488 = vdwg.mxu0
      %v4489 = vadd.f32 %v4214, %v4394
      %v4490 = vadd.f32 %v4215, %v4397
      %v4491 = vadd.f32 %v4216, %v4400
      %v4492 = vadd.f32 %v4217, %v4403
      %v4493 = vadd.f32 %v4218, %v4406
      %v4494 = vadd.f32 %v4219, %v4409
      %v4495 = vadd.f32 %v4220, %v4412
      %v4496 = vadd.f32 %v4221, %v4415
      %v4497 = vadd.f32 %v4222, %v4418
      %v4498 = vadd.f32 %v4223, %v4421
      %v4499 = vadd.f32 %v4224, %v4424
      %v4500 = vadd.f32 %v4225, %v4427
      %v4501 = vadd.f32 %v4226, %v4430
      %v4502 = vadd.f32 %v4227, %v4433
      %v4503 = vadd.f32 %v4228, %v4436
      %v4504 = vadd.f32 %v4229, %v4439
      %v4505 = vadd.f32 %v4230, %v4442
      %v4506 = vadd.f32 %v4231, %v4445
      %v4507 = vadd.f32 %v4232, %v4448
      %v4508 = vadd.f32 %v4233, %v4451
      %v4509 = vadd.f32 %v4234, %v4454
      %v4510 = vadd.f32 %v4235, %v4457
      %v4511 = vadd.f32 %v4236, %v4460
      %v4512 = vadd.f32 %v4237, %v4463
      %v4513 = vadd.f32 %v4238, %v4466
      %v4514 = vadd.f32 %v4239, %v4469
      %v4515 = vadd.f32 %v4240, %v4472
      %v4516 = vadd.f32 %v4241, %v4475
      %v4517 = vadd.f32 %v4242, %v4478
      %v4518 = vadd.f32 %v4243, %v4481
      %v4519 = vadd.f32 %v4244, %v4484
      %v4520 = vadd.f32 %v4245, %v4487
      %s4521 = scalar_lea.vmem [#allocation3], 48
      %v4522 = vld [vmem:[%s4521] sm:$0xff]
      %v4523 = vld [vmem:[%s4521 + $0x8] sm:$0xff]
      %v4524 = vld [vmem:[%s4521 + $0x18] sm:$0xff]
      %v4525 = vld [vmem:[%s4521 + $0x20] sm:$0xff]
      %v4526 = vld [vmem:[%s4521 + $0x30] sm:$0xff]
      %v4527 = vld [vmem:[%s4521 + $0x38] sm:$0xff]
      %v4528 = vld [vmem:[%s4521 + $0x48] sm:$0xff]
      %v4529 = vld [vmem:[%s4521 + $0x50] sm:$0xff]
      %v4530 = vld [vmem:[%s4521 + $0x60] sm:$0xff]
      %v4531 = vld [vmem:[%s4521 + $0x68] sm:$0xff]
      %v4532 = vld [vmem:[%s4521 + $0x78] sm:$0xff]
      %v4533 = vld [vmem:[%s4521 + $0x80] sm:$0xff]
      %v4534 = vld [vmem:[%s4521 + $0x90] sm:$0xff]
      %v4535 = vld [vmem:[%s4521 + $0x98] sm:$0xff]
      %v4536 = vld [vmem:[%s4521 + $0xa8] sm:$0xff]
      %v4537 = vld [vmem:[%s4521 + $0xb0] sm:$0xff]
      %v4538 = vld [vmem:[%s4521 + $0xc0] sm:$0xff]
      %v4539 = vld [vmem:[%s4521 + $0xc8] sm:$0xff]
      %v4540 = vld [vmem:[%s4521 + $0xd8] sm:$0xff]
      %v4541 = vld [vmem:[%s4521 + $0xe0] sm:$0xff]
      %v4542 = vld [vmem:[%s4521 + $0xf0] sm:$0xff]
      %v4543 = vld [vmem:[%s4521 + $0xf8] sm:$0xff]
      %v4544 = vld [vmem:[%s4521 + $0x108] sm:$0xff]
      %v4545 = vld [vmem:[%s4521 + $0x110] sm:$0xff]
      %v4546 = vld [vmem:[%s4521 + $0x120] sm:$0xff]
      %v4547 = vld [vmem:[%s4521 + $0x128] sm:$0xff]
      %v4548 = vld [vmem:[%s4521 + $0x138] sm:$0xff]
      %v4549 = vld [vmem:[%s4521 + $0x140] sm:$0xff]
      %v4550 = vld [vmem:[%s4521 + $0x150] sm:$0xff]
      %v4551 = vld [vmem:[%s4521 + $0x158] sm:$0xff]
      %v4552 = vld [vmem:[%s4521 + $0x168] sm:$0xff]
      %v4553 = vld [vmem:[%s4521 + $0x170] sm:$0xff]
      %s4554 = scalar_lea.vmem %s3, 48
      %v4555 = vld [vmem:[%s4554] sm:$0xff]
      %v4557 = vsel %vm337, %v4522, 0
      %v4560 = vsel %vm337, %v4523, 0
      %v4563 = vsel %vm337, %v4524, 0
      %v4566 = vsel %vm337, %v4525, 0
      %v4569 = vsel %vm337, %v4526, 0
      %v4572 = vsel %vm337, %v4527, 0
      %v4575 = vsel %vm337, %v4528, 0
      %v4578 = vsel %vm337, %v4529, 0
      %v4581 = vsel %vm337, %v4530, 0
      %v4584 = vsel %vm337, %v4531, 0
      %v4587 = vsel %vm337, %v4532, 0
      %v4590 = vsel %vm337, %v4533, 0
      %v4593 = vsel %vm337, %v4534, 0
      %v4596 = vsel %vm337, %v4535, 0
      %v4599 = vsel %vm337, %v4536, 0
      %v4602 = vsel %vm337, %v4537, 0
      %v4605 = vsel %vm337, %v4538, 0
      %v4608 = vsel %vm337, %v4539, 0
      %v4611 = vsel %vm337, %v4540, 0
      %v4614 = vsel %vm337, %v4541, 0
      %v4617 = vsel %vm337, %v4542, 0
      %v4620 = vsel %vm337, %v4543, 0
      %v4623 = vsel %vm337, %v4544, 0
      %v4626 = vsel %vm337, %v4545, 0
      %v4629 = vsel %vm337, %v4546, 0
      %v4632 = vsel %vm337, %v4547, 0
      %v4635 = vsel %vm337, %v4548, 0
      %v4638 = vsel %vm337, %v4549, 0
      %v4641 = vsel %vm337, %v4550, 0
      %v4644 = vsel %vm337, %v4551, 0
      %v4647 = vsel %vm337, %v4552, 0
      %v4650 = vsel %vm337, %v4553, 0
      %4652 = vmatpush.msra.mxu0 0.0
      %4653 = vmatpush.msra.mxu0 0.0
      %4654 = vmatpush.msra.mxu0 0.0
      %4655 = vmatpush.msra.mxu0 0.0
      %4656 = vmatpush.msra.mxu0 0.0
      %4657 = vmatpush.msra.mxu0 0.0
      %4658 = vmatpush.msra.mxu0 0.0
      %4659 = vmatpush.msra.mxu0 0.0
      %4660 = vmatpush.msra.mxu0 0.0
      %4661 = vmatpush.msra.mxu0 0.0
      %4662 = vmatpush.msra.mxu0 0.0
      %4663 = vmatpush.msra.mxu0 0.0
      %4664 = vmatpush.msra.mxu0 0.0
      %4665 = vmatpush.msra.mxu0 0.0
      %4666 = vmatpush.msra.mxu0 0.0
      %4667 = vmatpush.msra.mxu0 %v4555
      %4668 = vmatmul.f32.gmra.mxu0 %v4557
      %v4669 = vpop.f32.mrf.mxu0
      %v4670 = vadd.f32 0.0, %v4669
      %4671 = vmatmul.f32.gmra.mxu0 %v4560
      %v4672 = vpop.f32.mrf.mxu0
      %v4673 = vadd.f32 0.0, %v4672
      %4674 = vmatmul.f32.gmra.mxu0 %v4563
      %v4675 = vpop.f32.mrf.mxu0
      %v4676 = vadd.f32 0.0, %v4675
      %4677 = vmatmul.f32.gmra.mxu0 %v4566
      %v4678 = vpop.f32.mrf.mxu0
      %v4679 = vadd.f32 0.0, %v4678
      %4680 = vmatmul.f32.gmra.mxu0 %v4569
      %v4681 = vpop.f32.mrf.mxu0
      %v4682 = vadd.f32 0.0, %v4681
      %4683 = vmatmul.f32.gmra.mxu0 %v4572
      %v4684 = vpop.f32.mrf.mxu0
      %v4685 = vadd.f32 0.0, %v4684
      %4686 = vmatmul.f32.gmra.mxu0 %v4575
      %v4687 = vpop.f32.mrf.mxu0
      %v4688 = vadd.f32 0.0, %v4687
      %4689 = vmatmul.f32.gmra.mxu0 %v4578
      %v4690 = vpop.f32.mrf.mxu0
      %v4691 = vadd.f32 0.0, %v4690
      %4692 = vmatmul.f32.gmra.mxu0 %v4581
      %v4693 = vpop.f32.mrf.mxu0
      %v4694 = vadd.f32 0.0, %v4693
      %4695 = vmatmul.f32.gmra.mxu0 %v4584
      %v4696 = vpop.f32.mrf.mxu0
      %v4697 = vadd.f32 0.0, %v4696
      %4698 = vmatmul.f32.gmra.mxu0 %v4587
      %v4699 = vpop.f32.mrf.mxu0
      %v4700 = vadd.f32 0.0, %v4699
      %4701 = vmatmul.f32.gmra.mxu0 %v4590
      %v4702 = vpop.f32.mrf.mxu0
      %v4703 = vadd.f32 0.0, %v4702
      %4704 = vmatmul.f32.gmra.mxu0 %v4593
      %v4705 = vpop.f32.mrf.mxu0
      %v4706 = vadd.f32 0.0, %v4705
      %4707 = vmatmul.f32.gmra.mxu0 %v4596
      %v4708 = vpop.f32.mrf.mxu0
      %v4709 = vadd.f32 0.0, %v4708
      %4710 = vmatmul.f32.gmra.mxu0 %v4599
      %v4711 = vpop.f32.mrf.mxu0
      %v4712 = vadd.f32 0.0, %v4711
      %4713 = vmatmul.f32.gmra.mxu0 %v4602
      %v4714 = vpop.f32.mrf.mxu0
      %v4715 = vadd.f32 0.0, %v4714
      %4716 = vmatmul.f32.gmra.mxu0 %v4605
      %v4717 = vpop.f32.mrf.mxu0
      %v4718 = vadd.f32 0.0, %v4717
      %4719 = vmatmul.f32.gmra.mxu0 %v4608
      %v4720 = vpop.f32.mrf.mxu0
      %v4721 = vadd.f32 0.0, %v4720
      %4722 = vmatmul.f32.gmra.mxu0 %v4611
      %v4723 = vpop.f32.mrf.mxu0
      %v4724 = vadd.f32 0.0, %v4723
      %4725 = vmatmul.f32.gmra.mxu0 %v4614
      %v4726 = vpop.f32.mrf.mxu0
      %v4727 = vadd.f32 0.0, %v4726
      %4728 = vmatmul.f32.gmra.mxu0 %v4617
      %v4729 = vpop.f32.mrf.mxu0
      %v4730 = vadd.f32 0.0, %v4729
      %4731 = vmatmul.f32.gmra.mxu0 %v4620
      %v4732 = vpop.f32.mrf.mxu0
      %v4733 = vadd.f32 0.0, %v4732
      %4734 = vmatmul.f32.gmra.mxu0 %v4623
      %v4735 = vpop.f32.mrf.mxu0
      %v4736 = vadd.f32 0.0, %v4735
      %4737 = vmatmul.f32.gmra.mxu0 %v4626
      %v4738 = vpop.f32.mrf.mxu0
      %v4739 = vadd.f32 0.0, %v4738
      %4740 = vmatmul.f32.gmra.mxu0 %v4629
      %v4741 = vpop.f32.mrf.mxu0
      %v4742 = vadd.f32 0.0, %v4741
      %4743 = vmatmul.f32.gmra.mxu0 %v4632
      %v4744 = vpop.f32.mrf.mxu0
      %v4745 = vadd.f32 0.0, %v4744
      %4746 = vmatmul.f32.gmra.mxu0 %v4635
      %v4747 = vpop.f32.mrf.mxu0
      %v4748 = vadd.f32 0.0, %v4747
      %4749 = vmatmul.f32.gmra.mxu0 %v4638
      %v4750 = vpop.f32.mrf.mxu0
      %v4751 = vadd.f32 0.0, %v4750
      %4752 = vmatmul.f32.gmra.mxu0 %v4641
      %v4753 = vpop.f32.mrf.mxu0
      %v4754 = vadd.f32 0.0, %v4753
      %4755 = vmatmul.f32.gmra.mxu0 %v4644
      %v4756 = vpop.f32.mrf.mxu0
      %v4757 = vadd.f32 0.0, %v4756
      %4758 = vmatmul.f32.gmra.mxu0 %v4647
      %v4759 = vpop.f32.mrf.mxu0
      %v4760 = vadd.f32 0.0, %v4759
      %4761 = vmatmul.f32.gmra.mxu0 %v4650
      %v4762 = vpop.f32.mrf.mxu0
      %v4763 = vadd.f32 0.0, %v4762
      %4764 = vdwg.mxu0
      %v4765 = vadd.f32 %v4489, %v4670
      %v4766 = vadd.f32 %v4490, %v4673
      %v4767 = vadd.f32 %v4491, %v4676
      %v4768 = vadd.f32 %v4492, %v4679
      %v4769 = vadd.f32 %v4493, %v4682
      %v4770 = vadd.f32 %v4494, %v4685
      %v4771 = vadd.f32 %v4495, %v4688
      %v4772 = vadd.f32 %v4496, %v4691
      %v4773 = vadd.f32 %v4497, %v4694
      %v4774 = vadd.f32 %v4498, %v4697
      %v4775 = vadd.f32 %v4499, %v4700
      %v4776 = vadd.f32 %v4500, %v4703
      %v4777 = vadd.f32 %v4501, %v4706
      %v4778 = vadd.f32 %v4502, %v4709
      %v4779 = vadd.f32 %v4503, %v4712
      %v4780 = vadd.f32 %v4504, %v4715
      %v4781 = vadd.f32 %v4505, %v4718
      %v4782 = vadd.f32 %v4506, %v4721
      %v4783 = vadd.f32 %v4507, %v4724
      %v4784 = vadd.f32 %v4508, %v4727
      %v4785 = vadd.f32 %v4509, %v4730
      %v4786 = vadd.f32 %v4510, %v4733
      %v4787 = vadd.f32 %v4511, %v4736
      %v4788 = vadd.f32 %v4512, %v4739
      %v4789 = vadd.f32 %v4513, %v4742
      %v4790 = vadd.f32 %v4514, %v4745
      %v4791 = vadd.f32 %v4515, %v4748
      %v4792 = vadd.f32 %v4516, %v4751
      %v4793 = vadd.f32 %v4517, %v4754
      %v4794 = vadd.f32 %v4518, %v4757
      %v4795 = vadd.f32 %v4519, %v4760
      %v4796 = vadd.f32 %v4520, %v4763
      %v4797 = vld [vmem:[%s4521 + $0x1] sm:$0xff]
      %v4798 = vld [vmem:[%s4521 + $0x9] sm:$0xff]
      %v4799 = vld [vmem:[%s4521 + $0x19] sm:$0xff]
      %v4800 = vld [vmem:[%s4521 + $0x21] sm:$0xff]
      %v4801 = vld [vmem:[%s4521 + $0x31] sm:$0xff]
      %v4802 = vld [vmem:[%s4521 + $0x39] sm:$0xff]
      %v4803 = vld [vmem:[%s4521 + $0x49] sm:$0xff]
      %v4804 = vld [vmem:[%s4521 + $0x51] sm:$0xff]
      %v4805 = vld [vmem:[%s4521 + $0x61] sm:$0xff]
      %v4806 = vld [vmem:[%s4521 + $0x69] sm:$0xff]
      %v4807 = vld [vmem:[%s4521 + $0x79] sm:$0xff]
      %v4808 = vld [vmem:[%s4521 + $0x81] sm:$0xff]
      %v4809 = vld [vmem:[%s4521 + $0x91] sm:$0xff]
      %v4810 = vld [vmem:[%s4521 + $0x99] sm:$0xff]
      %v4811 = vld [vmem:[%s4521 + $0xa9] sm:$0xff]
      %v4812 = vld [vmem:[%s4521 + $0xb1] sm:$0xff]
      %v4813 = vld [vmem:[%s4521 + $0xc1] sm:$0xff]
      %v4814 = vld [vmem:[%s4521 + $0xc9] sm:$0xff]
      %v4815 = vld [vmem:[%s4521 + $0xd9] sm:$0xff]
      %v4816 = vld [vmem:[%s4521 + $0xe1] sm:$0xff]
      %v4817 = vld [vmem:[%s4521 + $0xf1] sm:$0xff]
      %v4818 = vld [vmem:[%s4521 + $0xf9] sm:$0xff]
      %v4819 = vld [vmem:[%s4521 + $0x109] sm:$0xff]
      %v4820 = vld [vmem:[%s4521 + $0x111] sm:$0xff]
      %v4821 = vld [vmem:[%s4521 + $0x121] sm:$0xff]
      %v4822 = vld [vmem:[%s4521 + $0x129] sm:$0xff]
      %v4823 = vld [vmem:[%s4521 + $0x139] sm:$0xff]
      %v4824 = vld [vmem:[%s4521 + $0x141] sm:$0xff]
      %v4825 = vld [vmem:[%s4521 + $0x151] sm:$0xff]
      %v4826 = vld [vmem:[%s4521 + $0x159] sm:$0xff]
      %v4827 = vld [vmem:[%s4521 + $0x169] sm:$0xff]
      %v4828 = vld [vmem:[%s4521 + $0x171] sm:$0xff]
      %s4829 = scalar_lea.vmem %s3, 56
      %v4830 = vld [vmem:[%s4829] sm:$0xff]
      %v4832 = vsel %vm337, %v4797, 0
      %v4835 = vsel %vm337, %v4798, 0
      %v4838 = vsel %vm337, %v4799, 0
      %v4841 = vsel %vm337, %v4800, 0
      %v4844 = vsel %vm337, %v4801, 0
      %v4847 = vsel %vm337, %v4802, 0
      %v4850 = vsel %vm337, %v4803, 0
      %v4853 = vsel %vm337, %v4804, 0
      %v4856 = vsel %vm337, %v4805, 0
      %v4859 = vsel %vm337, %v4806, 0
      %v4862 = vsel %vm337, %v4807, 0
      %v4865 = vsel %vm337, %v4808, 0
      %v4868 = vsel %vm337, %v4809, 0
      %v4871 = vsel %vm337, %v4810, 0
      %v4874 = vsel %vm337, %v4811, 0
      %v4877 = vsel %vm337, %v4812, 0
      %v4880 = vsel %vm337, %v4813, 0
      %v4883 = vsel %vm337, %v4814, 0
      %v4886 = vsel %vm337, %v4815, 0
      %v4889 = vsel %vm337, %v4816, 0
      %v4892 = vsel %vm337, %v4817, 0
      %v4895 = vsel %vm337, %v4818, 0
      %v4898 = vsel %vm337, %v4819, 0
      %v4901 = vsel %vm337, %v4820, 0
      %v4904 = vsel %vm337, %v4821, 0
      %v4907 = vsel %vm337, %v4822, 0
      %v4910 = vsel %vm337, %v4823, 0
      %v4913 = vsel %vm337, %v4824, 0
      %v4916 = vsel %vm337, %v4825, 0
      %v4919 = vsel %vm337, %v4826, 0
      %v4922 = vsel %vm337, %v4827, 0
      %v4925 = vsel %vm337, %v4828, 0
      %4927 = vmatpush.msra.mxu0 0.0
      %4928 = vmatpush.msra.mxu0 0.0
      %4929 = vmatpush.msra.mxu0 0.0
      %4930 = vmatpush.msra.mxu0 0.0
      %4931 = vmatpush.msra.mxu0 0.0
      %4932 = vmatpush.msra.mxu0 0.0
      %4933 = vmatpush.msra.mxu0 0.0
      %4934 = vmatpush.msra.mxu0 0.0
      %4935 = vmatpush.msra.mxu0 0.0
      %4936 = vmatpush.msra.mxu0 0.0
      %4937 = vmatpush.msra.mxu0 0.0
      %4938 = vmatpush.msra.mxu0 0.0
      %4939 = vmatpush.msra.mxu0 0.0
      %4940 = vmatpush.msra.mxu0 0.0
      %4941 = vmatpush.msra.mxu0 0.0
      %4942 = vmatpush.msra.mxu0 %v4830
      %4943 = vmatmul.f32.gmra.mxu0 %v4832
      %v4944 = vpop.f32.mrf.mxu0
      %v4945 = vadd.f32 0.0, %v4944
      %4946 = vmatmul.f32.gmra.mxu0 %v4835
      %v4947 = vpop.f32.mrf.mxu0
      %v4948 = vadd.f32 0.0, %v4947
      %4949 = vmatmul.f32.gmra.mxu0 %v4838
      %v4950 = vpop.f32.mrf.mxu0
      %v4951 = vadd.f32 0.0, %v4950
      %4952 = vmatmul.f32.gmra.mxu0 %v4841
      %v4953 = vpop.f32.mrf.mxu0
      %v4954 = vadd.f32 0.0, %v4953
      %4955 = vmatmul.f32.gmra.mxu0 %v4844
      %v4956 = vpop.f32.mrf.mxu0
      %v4957 = vadd.f32 0.0, %v4956
      %4958 = vmatmul.f32.gmra.mxu0 %v4847
      %v4959 = vpop.f32.mrf.mxu0
      %v4960 = vadd.f32 0.0, %v4959
      %4961 = vmatmul.f32.gmra.mxu0 %v4850
      %v4962 = vpop.f32.mrf.mxu0
      %v4963 = vadd.f32 0.0, %v4962
      %4964 = vmatmul.f32.gmra.mxu0 %v4853
      %v4965 = vpop.f32.mrf.mxu0
      %v4966 = vadd.f32 0.0, %v4965
      %4967 = vmatmul.f32.gmra.mxu0 %v4856
      %v4968 = vpop.f32.mrf.mxu0
      %v4969 = vadd.f32 0.0, %v4968
      %4970 = vmatmul.f32.gmra.mxu0 %v4859
      %v4971 = vpop.f32.mrf.mxu0
      %v4972 = vadd.f32 0.0, %v4971
      %4973 = vmatmul.f32.gmra.mxu0 %v4862
      %v4974 = vpop.f32.mrf.mxu0
      %v4975 = vadd.f32 0.0, %v4974
      %4976 = vmatmul.f32.gmra.mxu0 %v4865
      %v4977 = vpop.f32.mrf.mxu0
      %v4978 = vadd.f32 0.0, %v4977
      %4979 = vmatmul.f32.gmra.mxu0 %v4868
      %v4980 = vpop.f32.mrf.mxu0
      %v4981 = vadd.f32 0.0, %v4980
      %4982 = vmatmul.f32.gmra.mxu0 %v4871
      %v4983 = vpop.f32.mrf.mxu0
      %v4984 = vadd.f32 0.0, %v4983
      %4985 = vmatmul.f32.gmra.mxu0 %v4874
      %v4986 = vpop.f32.mrf.mxu0
      %v4987 = vadd.f32 0.0, %v4986
      %4988 = vmatmul.f32.gmra.mxu0 %v4877
      %v4989 = vpop.f32.mrf.mxu0
      %v4990 = vadd.f32 0.0, %v4989
      %4991 = vmatmul.f32.gmra.mxu0 %v4880
      %v4992 = vpop.f32.mrf.mxu0
      %v4993 = vadd.f32 0.0, %v4992
      %4994 = vmatmul.f32.gmra.mxu0 %v4883
      %v4995 = vpop.f32.mrf.mxu0
      %v4996 = vadd.f32 0.0, %v4995
      %4997 = vmatmul.f32.gmra.mxu0 %v4886
      %v4998 = vpop.f32.mrf.mxu0
      %v4999 = vadd.f32 0.0, %v4998
      %5000 = vmatmul.f32.gmra.mxu0 %v4889
      %v5001 = vpop.f32.mrf.mxu0
      %v5002 = vadd.f32 0.0, %v5001
      %5003 = vmatmul.f32.gmra.mxu0 %v4892
      %v5004 = vpop.f32.mrf.mxu0
      %v5005 = vadd.f32 0.0, %v5004
      %5006 = vmatmul.f32.gmra.mxu0 %v4895
      %v5007 = vpop.f32.mrf.mxu0
      %v5008 = vadd.f32 0.0, %v5007
      %5009 = vmatmul.f32.gmra.mxu0 %v4898
      %v5010 = vpop.f32.mrf.mxu0
      %v5011 = vadd.f32 0.0, %v5010
      %5012 = vmatmul.f32.gmra.mxu0 %v4901
      %v5013 = vpop.f32.mrf.mxu0
      %v5014 = vadd.f32 0.0, %v5013
      %5015 = vmatmul.f32.gmra.mxu0 %v4904
      %v5016 = vpop.f32.mrf.mxu0
      %v5017 = vadd.f32 0.0, %v5016
      %5018 = vmatmul.f32.gmra.mxu0 %v4907
      %v5019 = vpop.f32.mrf.mxu0
      %v5020 = vadd.f32 0.0, %v5019
      %5021 = vmatmul.f32.gmra.mxu0 %v4910
      %v5022 = vpop.f32.mrf.mxu0
      %v5023 = vadd.f32 0.0, %v5022
      %5024 = vmatmul.f32.gmra.mxu0 %v4913
      %v5025 = vpop.f32.mrf.mxu0
      %v5026 = vadd.f32 0.0, %v5025
      %5027 = vmatmul.f32.gmra.mxu0 %v4916
      %v5028 = vpop.f32.mrf.mxu0
      %v5029 = vadd.f32 0.0, %v5028
      %5030 = vmatmul.f32.gmra.mxu0 %v4919
      %v5031 = vpop.f32.mrf.mxu0
      %v5032 = vadd.f32 0.0, %v5031
      %5033 = vmatmul.f32.gmra.mxu0 %v4922
      %v5034 = vpop.f32.mrf.mxu0
      %v5035 = vadd.f32 0.0, %v5034
      %5036 = vmatmul.f32.gmra.mxu0 %v4925
      %v5037 = vpop.f32.mrf.mxu0
      %v5038 = vadd.f32 0.0, %v5037
      %5039 = vdwg.mxu0
      %v5040 = vadd.f32 %v4765, %v4945
      %v5041 = vadd.f32 %v4766, %v4948
      %v5042 = vadd.f32 %v4767, %v4951
      %v5043 = vadd.f32 %v4768, %v4954
      %v5044 = vadd.f32 %v4769, %v4957
      %v5045 = vadd.f32 %v4770, %v4960
      %v5046 = vadd.f32 %v4771, %v4963
      %v5047 = vadd.f32 %v4772, %v4966
      %v5048 = vadd.f32 %v4773, %v4969
      %v5049 = vadd.f32 %v4774, %v4972
      %v5050 = vadd.f32 %v4775, %v4975
      %v5051 = vadd.f32 %v4776, %v4978
      %v5052 = vadd.f32 %v4777, %v4981
      %v5053 = vadd.f32 %v4778, %v4984
      %v5054 = vadd.f32 %v4779, %v4987
      %v5055 = vadd.f32 %v4780, %v4990
      %v5056 = vadd.f32 %v4781, %v4993
      %v5057 = vadd.f32 %v4782, %v4996
      %v5058 = vadd.f32 %v4783, %v4999
      %v5059 = vadd.f32 %v4784, %v5002
      %v5060 = vadd.f32 %v4785, %v5005
      %v5061 = vadd.f32 %v4786, %v5008
      %v5062 = vadd.f32 %v4787, %v5011
      %v5063 = vadd.f32 %v4788, %v5014
      %v5064 = vadd.f32 %v4789, %v5017
      %v5065 = vadd.f32 %v4790, %v5020
      %v5066 = vadd.f32 %v4791, %v5023
      %v5067 = vadd.f32 %v4792, %v5026
      %v5068 = vadd.f32 %v4793, %v5029
      %v5069 = vadd.f32 %v4794, %v5032
      %v5070 = vadd.f32 %v4795, %v5035
      %v5071 = vadd.f32 %v4796, %v5038
      %v5072 = vld [vmem:[%s4521 + $0x2] sm:$0xff]
      %v5073 = vld [vmem:[%s4521 + $0xa] sm:$0xff]
      %v5074 = vld [vmem:[%s4521 + $0x1a] sm:$0xff]
      %v5075 = vld [vmem:[%s4521 + $0x22] sm:$0xff]
      %v5076 = vld [vmem:[%s4521 + $0x32] sm:$0xff]
      %v5077 = vld [vmem:[%s4521 + $0x3a] sm:$0xff]
      %v5078 = vld [vmem:[%s4521 + $0x4a] sm:$0xff]
      %v5079 = vld [vmem:[%s4521 + $0x52] sm:$0xff]
      %v5080 = vld [vmem:[%s4521 + $0x62] sm:$0xff]
      %v5081 = vld [vmem:[%s4521 + $0x6a] sm:$0xff]
      %v5082 = vld [vmem:[%s4521 + $0x7a] sm:$0xff]
      %v5083 = vld [vmem:[%s4521 + $0x82] sm:$0xff]
      %v5084 = vld [vmem:[%s4521 + $0x92] sm:$0xff]
      %v5085 = vld [vmem:[%s4521 + $0x9a] sm:$0xff]
      %v5086 = vld [vmem:[%s4521 + $0xaa] sm:$0xff]
      %v5087 = vld [vmem:[%s4521 + $0xb2] sm:$0xff]
      %v5088 = vld [vmem:[%s4521 + $0xc2] sm:$0xff]
      %v5089 = vld [vmem:[%s4521 + $0xca] sm:$0xff]
      %v5090 = vld [vmem:[%s4521 + $0xda] sm:$0xff]
      %v5091 = vld [vmem:[%s4521 + $0xe2] sm:$0xff]
      %v5092 = vld [vmem:[%s4521 + $0xf2] sm:$0xff]
      %v5093 = vld [vmem:[%s4521 + $0xfa] sm:$0xff]
      %v5094 = vld [vmem:[%s4521 + $0x10a] sm:$0xff]
      %v5095 = vld [vmem:[%s4521 + $0x112] sm:$0xff]
      %v5096 = vld [vmem:[%s4521 + $0x122] sm:$0xff]
      %v5097 = vld [vmem:[%s4521 + $0x12a] sm:$0xff]
      %v5098 = vld [vmem:[%s4521 + $0x13a] sm:$0xff]
      %v5099 = vld [vmem:[%s4521 + $0x142] sm:$0xff]
      %v5100 = vld [vmem:[%s4521 + $0x152] sm:$0xff]
      %v5101 = vld [vmem:[%s4521 + $0x15a] sm:$0xff]
      %v5102 = vld [vmem:[%s4521 + $0x16a] sm:$0xff]
      %v5103 = vld [vmem:[%s4521 + $0x172] sm:$0xff]
      %s5104 = scalar_lea.vmem %s3, 64
      %v5105 = vld [vmem:[%s5104] sm:$0xff]
      %v5107 = vsel %vm337, %v5072, 0
      %v5110 = vsel %vm337, %v5073, 0
      %v5113 = vsel %vm337, %v5074, 0
      %v5116 = vsel %vm337, %v5075, 0
      %v5119 = vsel %vm337, %v5076, 0
      %v5122 = vsel %vm337, %v5077, 0
      %v5125 = vsel %vm337, %v5078, 0
      %v5128 = vsel %vm337, %v5079, 0
      %v5131 = vsel %vm337, %v5080, 0
      %v5134 = vsel %vm337, %v5081, 0
      %v5137 = vsel %vm337, %v5082, 0
      %v5140 = vsel %vm337, %v5083, 0
      %v5143 = vsel %vm337, %v5084, 0
      %v5146 = vsel %vm337, %v5085, 0
      %v5149 = vsel %vm337, %v5086, 0
      %v5152 = vsel %vm337, %v5087, 0
      %v5155 = vsel %vm337, %v5088, 0
      %v5158 = vsel %vm337, %v5089, 0
      %v5161 = vsel %vm337, %v5090, 0
      %v5164 = vsel %vm337, %v5091, 0
      %v5167 = vsel %vm337, %v5092, 0
      %v5170 = vsel %vm337, %v5093, 0
      %v5173 = vsel %vm337, %v5094, 0
      %v5176 = vsel %vm337, %v5095, 0
      %v5179 = vsel %vm337, %v5096, 0
      %v5182 = vsel %vm337, %v5097, 0
      %v5185 = vsel %vm337, %v5098, 0
      %v5188 = vsel %vm337, %v5099, 0
      %v5191 = vsel %vm337, %v5100, 0
      %v5194 = vsel %vm337, %v5101, 0
      %v5197 = vsel %vm337, %v5102, 0
      %v5200 = vsel %vm337, %v5103, 0
      %5202 = vmatpush.msra.mxu0 0.0
      %5203 = vmatpush.msra.mxu0 0.0
      %5204 = vmatpush.msra.mxu0 0.0
      %5205 = vmatpush.msra.mxu0 0.0
      %5206 = vmatpush.msra.mxu0 0.0
      %5207 = vmatpush.msra.mxu0 0.0
      %5208 = vmatpush.msra.mxu0 0.0
      %5209 = vmatpush.msra.mxu0 0.0
      %5210 = vmatpush.msra.mxu0 0.0
      %5211 = vmatpush.msra.mxu0 0.0
      %5212 = vmatpush.msra.mxu0 0.0
      %5213 = vmatpush.msra.mxu0 0.0
      %5214 = vmatpush.msra.mxu0 0.0
      %5215 = vmatpush.msra.mxu0 0.0
      %5216 = vmatpush.msra.mxu0 0.0
      %5217 = vmatpush.msra.mxu0 %v5105
      %5218 = vmatmul.f32.gmra.mxu0 %v5107
      %v5219 = vpop.f32.mrf.mxu0
      %v5220 = vadd.f32 0.0, %v5219
      %5221 = vmatmul.f32.gmra.mxu0 %v5110
      %v5222 = vpop.f32.mrf.mxu0
      %v5223 = vadd.f32 0.0, %v5222
      %5224 = vmatmul.f32.gmra.mxu0 %v5113
      %v5225 = vpop.f32.mrf.mxu0
      %v5226 = vadd.f32 0.0, %v5225
      %5227 = vmatmul.f32.gmra.mxu0 %v5116
      %v5228 = vpop.f32.mrf.mxu0
      %v5229 = vadd.f32 0.0, %v5228
      %5230 = vmatmul.f32.gmra.mxu0 %v5119
      %v5231 = vpop.f32.mrf.mxu0
      %v5232 = vadd.f32 0.0, %v5231
      %5233 = vmatmul.f32.gmra.mxu0 %v5122
      %v5234 = vpop.f32.mrf.mxu0
      %v5235 = vadd.f32 0.0, %v5234
      %5236 = vmatmul.f32.gmra.mxu0 %v5125
      %v5237 = vpop.f32.mrf.mxu0
      %v5238 = vadd.f32 0.0, %v5237
      %5239 = vmatmul.f32.gmra.mxu0 %v5128
      %v5240 = vpop.f32.mrf.mxu0
      %v5241 = vadd.f32 0.0, %v5240
      %5242 = vmatmul.f32.gmra.mxu0 %v5131
      %v5243 = vpop.f32.mrf.mxu0
      %v5244 = vadd.f32 0.0, %v5243
      %5245 = vmatmul.f32.gmra.mxu0 %v5134
      %v5246 = vpop.f32.mrf.mxu0
      %v5247 = vadd.f32 0.0, %v5246
      %5248 = vmatmul.f32.gmra.mxu0 %v5137
      %v5249 = vpop.f32.mrf.mxu0
      %v5250 = vadd.f32 0.0, %v5249
      %5251 = vmatmul.f32.gmra.mxu0 %v5140
      %v5252 = vpop.f32.mrf.mxu0
      %v5253 = vadd.f32 0.0, %v5252
      %5254 = vmatmul.f32.gmra.mxu0 %v5143
      %v5255 = vpop.f32.mrf.mxu0
      %v5256 = vadd.f32 0.0, %v5255
      %5257 = vmatmul.f32.gmra.mxu0 %v5146
      %v5258 = vpop.f32.mrf.mxu0
      %v5259 = vadd.f32 0.0, %v5258
      %5260 = vmatmul.f32.gmra.mxu0 %v5149
      %v5261 = vpop.f32.mrf.mxu0
      %v5262 = vadd.f32 0.0, %v5261
      %5263 = vmatmul.f32.gmra.mxu0 %v5152
      %v5264 = vpop.f32.mrf.mxu0
      %v5265 = vadd.f32 0.0, %v5264
      %5266 = vmatmul.f32.gmra.mxu0 %v5155
      %v5267 = vpop.f32.mrf.mxu0
      %v5268 = vadd.f32 0.0, %v5267
      %5269 = vmatmul.f32.gmra.mxu0 %v5158
      %v5270 = vpop.f32.mrf.mxu0
      %v5271 = vadd.f32 0.0, %v5270
      %5272 = vmatmul.f32.gmra.mxu0 %v5161
      %v5273 = vpop.f32.mrf.mxu0
      %v5274 = vadd.f32 0.0, %v5273
      %5275 = vmatmul.f32.gmra.mxu0 %v5164
      %v5276 = vpop.f32.mrf.mxu0
      %v5277 = vadd.f32 0.0, %v5276
      %5278 = vmatmul.f32.gmra.mxu0 %v5167
      %v5279 = vpop.f32.mrf.mxu0
      %v5280 = vadd.f32 0.0, %v5279
      %5281 = vmatmul.f32.gmra.mxu0 %v5170
      %v5282 = vpop.f32.mrf.mxu0
      %v5283 = vadd.f32 0.0, %v5282
      %5284 = vmatmul.f32.gmra.mxu0 %v5173
      %v5285 = vpop.f32.mrf.mxu0
      %v5286 = vadd.f32 0.0, %v5285
      %5287 = vmatmul.f32.gmra.mxu0 %v5176
      %v5288 = vpop.f32.mrf.mxu0
      %v5289 = vadd.f32 0.0, %v5288
      %5290 = vmatmul.f32.gmra.mxu0 %v5179
      %v5291 = vpop.f32.mrf.mxu0
      %v5292 = vadd.f32 0.0, %v5291
      %5293 = vmatmul.f32.gmra.mxu0 %v5182
      %v5294 = vpop.f32.mrf.mxu0
      %v5295 = vadd.f32 0.0, %v5294
      %5296 = vmatmul.f32.gmra.mxu0 %v5185
      %v5297 = vpop.f32.mrf.mxu0
      %v5298 = vadd.f32 0.0, %v5297
      %5299 = vmatmul.f32.gmra.mxu0 %v5188
      %v5300 = vpop.f32.mrf.mxu0
      %v5301 = vadd.f32 0.0, %v5300
      %5302 = vmatmul.f32.gmra.mxu0 %v5191
      %v5303 = vpop.f32.mrf.mxu0
      %v5304 = vadd.f32 0.0, %v5303
      %5305 = vmatmul.f32.gmra.mxu0 %v5194
      %v5306 = vpop.f32.mrf.mxu0
      %v5307 = vadd.f32 0.0, %v5306
      %5308 = vmatmul.f32.gmra.mxu0 %v5197
      %v5309 = vpop.f32.mrf.mxu0
      %v5310 = vadd.f32 0.0, %v5309
      %5311 = vmatmul.f32.gmra.mxu0 %v5200
      %v5312 = vpop.f32.mrf.mxu0
      %v5313 = vadd.f32 0.0, %v5312
      %5314 = vdwg.mxu0
      %v5315 = vadd.f32 %v5040, %v5220
      %v5316 = vadd.f32 %v5041, %v5223
      %v5317 = vadd.f32 %v5042, %v5226
      %v5318 = vadd.f32 %v5043, %v5229
      %v5319 = vadd.f32 %v5044, %v5232
      %v5320 = vadd.f32 %v5045, %v5235
      %v5321 = vadd.f32 %v5046, %v5238
      %v5322 = vadd.f32 %v5047, %v5241
      %v5323 = vadd.f32 %v5048, %v5244
      %v5324 = vadd.f32 %v5049, %v5247
      %v5325 = vadd.f32 %v5050, %v5250
      %v5326 = vadd.f32 %v5051, %v5253
      %v5327 = vadd.f32 %v5052, %v5256
      %v5328 = vadd.f32 %v5053, %v5259
      %v5329 = vadd.f32 %v5054, %v5262
      %v5330 = vadd.f32 %v5055, %v5265
      %v5331 = vadd.f32 %v5056, %v5268
      %v5332 = vadd.f32 %v5057, %v5271
      %v5333 = vadd.f32 %v5058, %v5274
      %v5334 = vadd.f32 %v5059, %v5277
      %v5335 = vadd.f32 %v5060, %v5280
      %v5336 = vadd.f32 %v5061, %v5283
      %v5337 = vadd.f32 %v5062, %v5286
      %v5338 = vadd.f32 %v5063, %v5289
      %v5339 = vadd.f32 %v5064, %v5292
      %v5340 = vadd.f32 %v5065, %v5295
      %v5341 = vadd.f32 %v5066, %v5298
      %v5342 = vadd.f32 %v5067, %v5301
      %v5343 = vadd.f32 %v5068, %v5304
      %v5344 = vadd.f32 %v5069, %v5307
      %v5345 = vadd.f32 %v5070, %v5310
      %v5346 = vadd.f32 %v5071, %v5313
      %v5347 = vld [vmem:[%s4] sm:$0x1]
      %v5348 = vperm.slane %v5347, 0
      %v5349 = vadd.f32 %v5315, %v5348
      %v5350 = vadd.f32 %v5316, %v5348
      %v5351 = vadd.f32 %v5317, %v5348
      %v5352 = vadd.f32 %v5318, %v5348
      %v5353 = vadd.f32 %v5319, %v5348
      %v5354 = vadd.f32 %v5320, %v5348
      %v5355 = vadd.f32 %v5321, %v5348
      %v5356 = vadd.f32 %v5322, %v5348
      %v5357 = vadd.f32 %v5323, %v5348
      %v5358 = vadd.f32 %v5324, %v5348
      %v5359 = vadd.f32 %v5325, %v5348
      %v5360 = vadd.f32 %v5326, %v5348
      %v5361 = vadd.f32 %v5327, %v5348
      %v5362 = vadd.f32 %v5328, %v5348
      %v5363 = vadd.f32 %v5329, %v5348
      %v5364 = vadd.f32 %v5330, %v5348
      %v5365 = vadd.f32 %v5331, %v5348
      %v5366 = vadd.f32 %v5332, %v5348
      %v5367 = vadd.f32 %v5333, %v5348
      %v5368 = vadd.f32 %v5334, %v5348
      %v5369 = vadd.f32 %v5335, %v5348
      %v5370 = vadd.f32 %v5336, %v5348
      %v5371 = vadd.f32 %v5337, %v5348
      %v5372 = vadd.f32 %v5338, %v5348
      %v5373 = vadd.f32 %v5339, %v5348
      %v5374 = vadd.f32 %v5340, %v5348
      %v5375 = vadd.f32 %v5341, %v5348
      %v5376 = vadd.f32 %v5342, %v5348
      %v5377 = vadd.f32 %v5343, %v5348
      %v5378 = vadd.f32 %v5344, %v5348
      %v5379 = vadd.f32 %v5345, %v5348
      %v5380 = vadd.f32 %v5346, %v5348
      %v5381 = vmax.f32 %v5349, 0.0
      %v5382 = vmax.f32 %v5350, 0.0
      %v5383 = vmax.f32 %v5351, 0.0
      %v5384 = vmax.f32 %v5352, 0.0
      %v5385 = vmax.f32 %v5353, 0.0
      %v5386 = vmax.f32 %v5354, 0.0
      %v5387 = vmax.f32 %v5355, 0.0
      %v5388 = vmax.f32 %v5356, 0.0
      %v5389 = vmax.f32 %v5357, 0.0
      %v5390 = vmax.f32 %v5358, 0.0
      %v5391 = vmax.f32 %v5359, 0.0
      %v5392 = vmax.f32 %v5360, 0.0
      %v5393 = vmax.f32 %v5361, 0.0
      %v5394 = vmax.f32 %v5362, 0.0
      %v5395 = vmax.f32 %v5363, 0.0
      %v5396 = vmax.f32 %v5364, 0.0
      %v5397 = vmax.f32 %v5365, 0.0
      %v5398 = vmax.f32 %v5366, 0.0
      %v5399 = vmax.f32 %v5367, 0.0
      %v5400 = vmax.f32 %v5368, 0.0
      %v5401 = vmax.f32 %v5369, 0.0
      %v5402 = vmax.f32 %v5370, 0.0
      %v5403 = vmax.f32 %v5371, 0.0
      %v5404 = vmax.f32 %v5372, 0.0
      %v5405 = vmax.f32 %v5373, 0.0
      %v5406 = vmax.f32 %v5374, 0.0
      %v5407 = vmax.f32 %v5375, 0.0
      %v5408 = vmax.f32 %v5376, 0.0
      %v5409 = vmax.f32 %v5377, 0.0
      %v5410 = vmax.f32 %v5378, 0.0
      %v5411 = vmax.f32 %v5379, 0.0
      %v5412 = vmax.f32 %v5380, 0.0
      %s5413 = scalar_lea.vmem [#allocation4], 24
      %5414 = vst.msk [vmem:[%s5413 + $0x1] sm:$0xff] %vm337, %v5381
      %5415 = vst.msk [vmem:[%s5413 + $0x9] sm:$0xff] %vm337, %v5382
      %5416 = vst.msk [vmem:[%s5413 + $0x19] sm:$0xff] %vm337, %v5383
      %5417 = vst.msk [vmem:[%s5413 + $0x21] sm:$0xff] %vm337, %v5384
      %5418 = vst.msk [vmem:[%s5413 + $0x31] sm:$0xff] %vm337, %v5385
      %5419 = vst.msk [vmem:[%s5413 + $0x39] sm:$0xff] %vm337, %v5386
      %5420 = vst.msk [vmem:[%s5413 + $0x49] sm:$0xff] %vm337, %v5387
      %5421 = vst.msk [vmem:[%s5413 + $0x51] sm:$0xff] %vm337, %v5388
      %5422 = vst.msk [vmem:[%s5413 + $0x61] sm:$0xff] %vm337, %v5389
      %5423 = vst.msk [vmem:[%s5413 + $0x69] sm:$0xff] %vm337, %v5390
      %5424 = vst.msk [vmem:[%s5413 + $0x79] sm:$0xff] %vm337, %v5391
      %5425 = vst.msk [vmem:[%s5413 + $0x81] sm:$0xff] %vm337, %v5392
      %5426 = vst.msk [vmem:[%s5413 + $0x91] sm:$0xff] %vm337, %v5393
      %5427 = vst.msk [vmem:[%s5413 + $0x99] sm:$0xff] %vm337, %v5394
      %5428 = vst.msk [vmem:[%s5413 + $0xa9] sm:$0xff] %vm337, %v5395
      %5429 = vst.msk [vmem:[%s5413 + $0xb1] sm:$0xff] %vm337, %v5396
      %5430 = vst.msk [vmem:[%s5413 + $0xc1] sm:$0xff] %vm337, %v5397
      %5431 = vst.msk [vmem:[%s5413 + $0xc9] sm:$0xff] %vm337, %v5398
      %5432 = vst.msk [vmem:[%s5413 + $0xd9] sm:$0xff] %vm337, %v5399
      %5433 = vst.msk [vmem:[%s5413 + $0xe1] sm:$0xff] %vm337, %v5400
      %5434 = vst.msk [vmem:[%s5413 + $0xf1] sm:$0xff] %vm337, %v5401
      %5435 = vst.msk [vmem:[%s5413 + $0xf9] sm:$0xff] %vm337, %v5402
      %5436 = vst.msk [vmem:[%s5413 + $0x109] sm:$0xff] %vm337, %v5403
      %5437 = vst.msk [vmem:[%s5413 + $0x111] sm:$0xff] %vm337, %v5404
      %5438 = vst.msk [vmem:[%s5413 + $0x121] sm:$0xff] %vm337, %v5405
      %5439 = vst.msk [vmem:[%s5413 + $0x129] sm:$0xff] %vm337, %v5406
      %5440 = vst.msk [vmem:[%s5413 + $0x139] sm:$0xff] %vm337, %v5407
      %5441 = vst.msk [vmem:[%s5413 + $0x141] sm:$0xff] %vm337, %v5408
      %5442 = vst.msk [vmem:[%s5413 + $0x151] sm:$0xff] %vm337, %v5409
      %5443 = vst.msk [vmem:[%s5413 + $0x159] sm:$0xff] %vm337, %v5410
      %5444 = vst.msk [vmem:[%s5413 + $0x169] sm:$0xff] %vm337, %v5411
      %5445 = vst.msk [vmem:[%s5413 + $0x171] sm:$0xff] %vm337, %v5412
      %v5446 = vld [vmem:[#allocation4] sm:$0xff]
      %v5447 = vld [vmem:[#allocation4 + $0x8] sm:$0xff]
      %v5448 = vld [vmem:[#allocation4 + $0x18] sm:$0xff]
      %v5449 = vld [vmem:[#allocation4 + $0x20] sm:$0xff]
      %v5450 = vld [vmem:[#allocation4 + $0x30] sm:$0xff]
      %v5451 = vld [vmem:[#allocation4 + $0x38] sm:$0xff]
      %v5452 = vld [vmem:[#allocation4 + $0x48] sm:$0xff]
      %v5453 = vld [vmem:[#allocation4 + $0x50] sm:$0xff]
      %v5454 = vld [vmem:[#allocation4 + $0x60] sm:$0xff]
      %v5455 = vld [vmem:[#allocation4 + $0x68] sm:$0xff]
      %v5456 = vld [vmem:[#allocation4 + $0x78] sm:$0xff]
      %v5457 = vld [vmem:[#allocation4 + $0x80] sm:$0xff]
      %v5458 = vld [vmem:[#allocation4 + $0x90] sm:$0xff]
      %v5459 = vld [vmem:[#allocation4 + $0x98] sm:$0xff]
      %v5460 = vld [vmem:[#allocation4 + $0xa8] sm:$0xff]
      %v5461 = vld [vmem:[#allocation4 + $0xb0] sm:$0xff]
      %v5462 = vld [vmem:[#allocation4 + $0xc0] sm:$0xff]
      %v5463 = vld [vmem:[#allocation4 + $0xc8] sm:$0xff]
      %v5464 = vld [vmem:[#allocation4 + $0xd8] sm:$0xff]
      %v5465 = vld [vmem:[#allocation4 + $0xe0] sm:$0xff]
      %v5466 = vld [vmem:[#allocation4 + $0xf0] sm:$0xff]
      %v5467 = vld [vmem:[#allocation4 + $0xf8] sm:$0xff]
      %v5468 = vld [vmem:[#allocation4 + $0x108] sm:$0xff]
      %v5469 = vld [vmem:[#allocation4 + $0x110] sm:$0xff]
      %v5470 = vld [vmem:[#allocation4 + $0x120] sm:$0xff]
      %v5471 = vld [vmem:[#allocation4 + $0x128] sm:$0xff]
      %v5472 = vld [vmem:[#allocation4 + $0x138] sm:$0xff]
      %v5473 = vld [vmem:[#allocation4 + $0x140] sm:$0xff]
      %v5474 = vld [vmem:[#allocation4 + $0x150] sm:$0xff]
      %v5475 = vld [vmem:[#allocation4 + $0x158] sm:$0xff]
      %v5476 = vld [vmem:[#allocation4 + $0x168] sm:$0xff]
      %v5477 = vld [vmem:[#allocation4 + $0x170] sm:$0xff]
      %s5478 = scalar_lea.vmem %s3, 72
      %v5479 = vld [vmem:[%s5478] sm:$0xff]
      %v5480 = vld [vmem:[#allocation4 + $0x1] sm:$0xff]
      %v5481 = vld [vmem:[#allocation4 + $0x9] sm:$0xff]
      %v5482 = vld [vmem:[#allocation4 + $0x19] sm:$0xff]
      %v5483 = vld [vmem:[#allocation4 + $0x21] sm:$0xff]
      %v5484 = vld [vmem:[#allocation4 + $0x31] sm:$0xff]
      %v5485 = vld [vmem:[#allocation4 + $0x39] sm:$0xff]
      %v5486 = vld [vmem:[#allocation4 + $0x49] sm:$0xff]
      %v5487 = vld [vmem:[#allocation4 + $0x51] sm:$0xff]
      %v5488 = vld [vmem:[#allocation4 + $0x61] sm:$0xff]
      %v5489 = vld [vmem:[#allocation4 + $0x69] sm:$0xff]
      %v5490 = vld [vmem:[#allocation4 + $0x79] sm:$0xff]
      %v5491 = vld [vmem:[#allocation4 + $0x81] sm:$0xff]
      %v5492 = vld [vmem:[#allocation4 + $0x91] sm:$0xff]
      %v5493 = vld [vmem:[#allocation4 + $0x99] sm:$0xff]
      %v5494 = vld [vmem:[#allocation4 + $0xa9] sm:$0xff]
      %v5495 = vld [vmem:[#allocation4 + $0xb1] sm:$0xff]
      %v5496 = vld [vmem:[#allocation4 + $0xc1] sm:$0xff]
      %v5497 = vld [vmem:[#allocation4 + $0xc9] sm:$0xff]
      %v5498 = vld [vmem:[#allocation4 + $0xd9] sm:$0xff]
      %v5499 = vld [vmem:[#allocation4 + $0xe1] sm:$0xff]
      %v5500 = vld [vmem:[#allocation4 + $0xf1] sm:$0xff]
      %v5501 = vld [vmem:[#allocation4 + $0xf9] sm:$0xff]
      %v5502 = vld [vmem:[#allocation4 + $0x109] sm:$0xff]
      %v5503 = vld [vmem:[#allocation4 + $0x111] sm:$0xff]
      %v5504 = vld [vmem:[#allocation4 + $0x121] sm:$0xff]
      %v5505 = vld [vmem:[#allocation4 + $0x129] sm:$0xff]
      %v5506 = vld [vmem:[#allocation4 + $0x139] sm:$0xff]
      %v5507 = vld [vmem:[#allocation4 + $0x141] sm:$0xff]
      %v5508 = vld [vmem:[#allocation4 + $0x151] sm:$0xff]
      %v5509 = vld [vmem:[#allocation4 + $0x159] sm:$0xff]
      %v5510 = vld [vmem:[#allocation4 + $0x169] sm:$0xff]
      %v5511 = vld [vmem:[#allocation4 + $0x171] sm:$0xff]
      %s5512 = scalar_lea.vmem %s3, 80
      %v5513 = vld [vmem:[%s5512] sm:$0xff]
      %v5515 = vsel %vm337, %v5480, 0
      %v5518 = vsel %vm337, %v5481, 0
      %v5521 = vsel %vm337, %v5482, 0
      %v5524 = vsel %vm337, %v5483, 0
      %v5527 = vsel %vm337, %v5484, 0
      %v5530 = vsel %vm337, %v5485, 0
      %v5533 = vsel %vm337, %v5486, 0
      %v5536 = vsel %vm337, %v5487, 0
      %v5539 = vsel %vm337, %v5488, 0
      %v5542 = vsel %vm337, %v5489, 0
      %v5545 = vsel %vm337, %v5490, 0
      %v5548 = vsel %vm337, %v5491, 0
      %v5551 = vsel %vm337, %v5492, 0
      %v5554 = vsel %vm337, %v5493, 0
      %v5557 = vsel %vm337, %v5494, 0
      %v5560 = vsel %vm337, %v5495, 0
      %v5563 = vsel %vm337, %v5496, 0
      %v5566 = vsel %vm337, %v5497, 0
      %v5569 = vsel %vm337, %v5498, 0
      %v5572 = vsel %vm337, %v5499, 0
      %v5575 = vsel %vm337, %v5500, 0
      %v5578 = vsel %vm337, %v5501, 0
      %v5581 = vsel %vm337, %v5502, 0
      %v5584 = vsel %vm337, %v5503, 0
      %v5587 = vsel %vm337, %v5504, 0
      %v5590 = vsel %vm337, %v5505, 0
      %v5593 = vsel %vm337, %v5506, 0
      %v5596 = vsel %vm337, %v5507, 0
      %v5599 = vsel %vm337, %v5508, 0
      %v5602 = vsel %vm337, %v5509, 0
      %v5605 = vsel %vm337, %v5510, 0
      %v5608 = vsel %vm337, %v5511, 0
      %5610 = vmatpush.msra.mxu0 0.0
      %5611 = vmatpush.msra.mxu0 0.0
      %5612 = vmatpush.msra.mxu0 0.0
      %5613 = vmatpush.msra.mxu0 0.0
      %5614 = vmatpush.msra.mxu0 0.0
      %5615 = vmatpush.msra.mxu0 0.0
      %5616 = vmatpush.msra.mxu0 0.0
      %5617 = vmatpush.msra.mxu0 0.0
      %5618 = vmatpush.msra.mxu0 0.0
      %5619 = vmatpush.msra.mxu0 0.0
      %5620 = vmatpush.msra.mxu0 0.0
      %5621 = vmatpush.msra.mxu0 0.0
      %5622 = vmatpush.msra.mxu0 0.0
      %5623 = vmatpush.msra.mxu0 0.0
      %5624 = vmatpush.msra.mxu0 0.0
      %5625 = vmatpush.msra.mxu0 %v5513
      %5626 = vmatmul.f32.gmra.mxu0 %v5515
      %v5627 = vpop.f32.mrf.mxu0
      %v5628 = vadd.f32 0.0, %v5627
      %5629 = vmatmul.f32.gmra.mxu0 %v5518
      %v5630 = vpop.f32.mrf.mxu0
      %v5631 = vadd.f32 0.0, %v5630
      %5632 = vmatmul.f32.gmra.mxu0 %v5521
      %v5633 = vpop.f32.mrf.mxu0
      %v5634 = vadd.f32 0.0, %v5633
      %5635 = vmatmul.f32.gmra.mxu0 %v5524
      %v5636 = vpop.f32.mrf.mxu0
      %v5637 = vadd.f32 0.0, %v5636
      %5638 = vmatmul.f32.gmra.mxu0 %v5527
      %v5639 = vpop.f32.mrf.mxu0
      %v5640 = vadd.f32 0.0, %v5639
      %5641 = vmatmul.f32.gmra.mxu0 %v5530
      %v5642 = vpop.f32.mrf.mxu0
      %v5643 = vadd.f32 0.0, %v5642
      %5644 = vmatmul.f32.gmra.mxu0 %v5533
      %v5645 = vpop.f32.mrf.mxu0
      %v5646 = vadd.f32 0.0, %v5645
      %5647 = vmatmul.f32.gmra.mxu0 %v5536
      %v5648 = vpop.f32.mrf.mxu0
      %v5649 = vadd.f32 0.0, %v5648
      %5650 = vmatmul.f32.gmra.mxu0 %v5539
      %v5651 = vpop.f32.mrf.mxu0
      %v5652 = vadd.f32 0.0, %v5651
      %5653 = vmatmul.f32.gmra.mxu0 %v5542
      %v5654 = vpop.f32.mrf.mxu0
      %v5655 = vadd.f32 0.0, %v5654
      %5656 = vmatmul.f32.gmra.mxu0 %v5545
      %v5657 = vpop.f32.mrf.mxu0
      %v5658 = vadd.f32 0.0, %v5657
      %5659 = vmatmul.f32.gmra.mxu0 %v5548
      %v5660 = vpop.f32.mrf.mxu0
      %v5661 = vadd.f32 0.0, %v5660
      %5662 = vmatmul.f32.gmra.mxu0 %v5551
      %v5663 = vpop.f32.mrf.mxu0
      %v5664 = vadd.f32 0.0, %v5663
      %5665 = vmatmul.f32.gmra.mxu0 %v5554
      %v5666 = vpop.f32.mrf.mxu0
      %v5667 = vadd.f32 0.0, %v5666
      %5668 = vmatmul.f32.gmra.mxu0 %v5557
      %v5669 = vpop.f32.mrf.mxu0
      %v5670 = vadd.f32 0.0, %v5669
      %5671 = vmatmul.f32.gmra.mxu0 %v5560
      %v5672 = vpop.f32.mrf.mxu0
      %v5673 = vadd.f32 0.0, %v5672
      %5674 = vmatmul.f32.gmra.mxu0 %v5563
      %v5675 = vpop.f32.mrf.mxu0
      %v5676 = vadd.f32 0.0, %v5675
      %5677 = vmatmul.f32.gmra.mxu0 %v5566
      %v5678 = vpop.f32.mrf.mxu0
      %v5679 = vadd.f32 0.0, %v5678
      %5680 = vmatmul.f32.gmra.mxu0 %v5569
      %v5681 = vpop.f32.mrf.mxu0
      %v5682 = vadd.f32 0.0, %v5681
      %5683 = vmatmul.f32.gmra.mxu0 %v5572
      %v5684 = vpop.f32.mrf.mxu0
      %v5685 = vadd.f32 0.0, %v5684
      %5686 = vmatmul.f32.gmra.mxu0 %v5575
      %v5687 = vpop.f32.mrf.mxu0
      %v5688 = vadd.f32 0.0, %v5687
      %5689 = vmatmul.f32.gmra.mxu0 %v5578
      %v5690 = vpop.f32.mrf.mxu0
      %v5691 = vadd.f32 0.0, %v5690
      %5692 = vmatmul.f32.gmra.mxu0 %v5581
      %v5693 = vpop.f32.mrf.mxu0
      %v5694 = vadd.f32 0.0, %v5693
      %5695 = vmatmul.f32.gmra.mxu0 %v5584
      %v5696 = vpop.f32.mrf.mxu0
      %v5697 = vadd.f32 0.0, %v5696
      %5698 = vmatmul.f32.gmra.mxu0 %v5587
      %v5699 = vpop.f32.mrf.mxu0
      %v5700 = vadd.f32 0.0, %v5699
      %5701 = vmatmul.f32.gmra.mxu0 %v5590
      %v5702 = vpop.f32.mrf.mxu0
      %v5703 = vadd.f32 0.0, %v5702
      %5704 = vmatmul.f32.gmra.mxu0 %v5593
      %v5705 = vpop.f32.mrf.mxu0
      %v5706 = vadd.f32 0.0, %v5705
      %5707 = vmatmul.f32.gmra.mxu0 %v5596
      %v5708 = vpop.f32.mrf.mxu0
      %v5709 = vadd.f32 0.0, %v5708
      %5710 = vmatmul.f32.gmra.mxu0 %v5599
      %v5711 = vpop.f32.mrf.mxu0
      %v5712 = vadd.f32 0.0, %v5711
      %5713 = vmatmul.f32.gmra.mxu0 %v5602
      %v5714 = vpop.f32.mrf.mxu0
      %v5715 = vadd.f32 0.0, %v5714
      %5716 = vmatmul.f32.gmra.mxu0 %v5605
      %v5717 = vpop.f32.mrf.mxu0
      %v5718 = vadd.f32 0.0, %v5717
      %5719 = vmatmul.f32.gmra.mxu0 %v5608
      %v5720 = vpop.f32.mrf.mxu0
      %v5721 = vadd.f32 0.0, %v5720
      %5722 = vdwg.mxu0
      %v5724 = vsel %vm337, %v5446, 0
      %v5727 = vsel %vm337, %v5447, 0
      %v5730 = vsel %vm337, %v5448, 0
      %v5733 = vsel %vm337, %v5449, 0
      %v5736 = vsel %vm337, %v5450, 0
      %v5739 = vsel %vm337, %v5451, 0
      %v5742 = vsel %vm337, %v5452, 0
      %v5745 = vsel %vm337, %v5453, 0
      %v5748 = vsel %vm337, %v5454, 0
      %v5751 = vsel %vm337, %v5455, 0
      %v5754 = vsel %vm337, %v5456, 0
      %v5757 = vsel %vm337, %v5457, 0
      %v5760 = vsel %vm337, %v5458, 0
      %v5763 = vsel %vm337, %v5459, 0
      %v5766 = vsel %vm337, %v5460, 0
      %v5769 = vsel %vm337, %v5461, 0
      %v5772 = vsel %vm337, %v5462, 0
      %v5775 = vsel %vm337, %v5463, 0
      %v5778 = vsel %vm337, %v5464, 0
      %v5781 = vsel %vm337, %v5465, 0
      %v5784 = vsel %vm337, %v5466, 0
      %v5787 = vsel %vm337, %v5467, 0
      %v5790 = vsel %vm337, %v5468, 0
      %v5793 = vsel %vm337, %v5469, 0
      %v5796 = vsel %vm337, %v5470, 0
      %v5799 = vsel %vm337, %v5471, 0
      %v5802 = vsel %vm337, %v5472, 0
      %v5805 = vsel %vm337, %v5473, 0
      %v5808 = vsel %vm337, %v5474, 0
      %v5811 = vsel %vm337, %v5475, 0
      %v5814 = vsel %vm337, %v5476, 0
      %v5817 = vsel %vm337, %v5477, 0
      %5819 = vmatpush.msra.mxu0 0.0
      %5820 = vmatpush.msra.mxu0 0.0
      %5821 = vmatpush.msra.mxu0 0.0
      %5822 = vmatpush.msra.mxu0 0.0
      %5823 = vmatpush.msra.mxu0 0.0
      %5824 = vmatpush.msra.mxu0 0.0
      %5825 = vmatpush.msra.mxu0 0.0
      %5826 = vmatpush.msra.mxu0 0.0
      %5827 = vmatpush.msra.mxu0 0.0
      %5828 = vmatpush.msra.mxu0 0.0
      %5829 = vmatpush.msra.mxu0 0.0
      %5830 = vmatpush.msra.mxu0 0.0
      %5831 = vmatpush.msra.mxu0 0.0
      %5832 = vmatpush.msra.mxu0 0.0
      %5833 = vmatpush.msra.mxu0 0.0
      %5834 = vmatpush.msra.mxu0 %v5479
      %5835 = vmatmul.f32.gmra.mxu0 %v5724
      %v5836 = vpop.f32.mrf.mxu0
      %v5837 = vadd.f32 %v5628, %v5836
      %5838 = vmatmul.f32.gmra.mxu0 %v5727
      %v5839 = vpop.f32.mrf.mxu0
      %v5840 = vadd.f32 %v5631, %v5839
      %5841 = vmatmul.f32.gmra.mxu0 %v5730
      %v5842 = vpop.f32.mrf.mxu0
      %v5843 = vadd.f32 %v5634, %v5842
      %5844 = vmatmul.f32.gmra.mxu0 %v5733
      %v5845 = vpop.f32.mrf.mxu0
      %v5846 = vadd.f32 %v5637, %v5845
      %5847 = vmatmul.f32.gmra.mxu0 %v5736
      %v5848 = vpop.f32.mrf.mxu0
      %v5849 = vadd.f32 %v5640, %v5848
      %5850 = vmatmul.f32.gmra.mxu0 %v5739
      %v5851 = vpop.f32.mrf.mxu0
      %v5852 = vadd.f32 %v5643, %v5851
      %5853 = vmatmul.f32.gmra.mxu0 %v5742
      %v5854 = vpop.f32.mrf.mxu0
      %v5855 = vadd.f32 %v5646, %v5854
      %5856 = vmatmul.f32.gmra.mxu0 %v5745
      %v5857 = vpop.f32.mrf.mxu0
      %v5858 = vadd.f32 %v5649, %v5857
      %5859 = vmatmul.f32.gmra.mxu0 %v5748
      %v5860 = vpop.f32.mrf.mxu0
      %v5861 = vadd.f32 %v5652, %v5860
      %5862 = vmatmul.f32.gmra.mxu0 %v5751
      %v5863 = vpop.f32.mrf.mxu0
      %v5864 = vadd.f32 %v5655, %v5863
      %5865 = vmatmul.f32.gmra.mxu0 %v5754
      %v5866 = vpop.f32.mrf.mxu0
      %v5867 = vadd.f32 %v5658, %v5866
      %5868 = vmatmul.f32.gmra.mxu0 %v5757
      %v5869 = vpop.f32.mrf.mxu0
      %v5870 = vadd.f32 %v5661, %v5869
      %5871 = vmatmul.f32.gmra.mxu0 %v5760
      %v5872 = vpop.f32.mrf.mxu0
      %v5873 = vadd.f32 %v5664, %v5872
      %5874 = vmatmul.f32.gmra.mxu0 %v5763
      %v5875 = vpop.f32.mrf.mxu0
      %v5876 = vadd.f32 %v5667, %v5875
      %5877 = vmatmul.f32.gmra.mxu0 %v5766
      %v5878 = vpop.f32.mrf.mxu0
      %v5879 = vadd.f32 %v5670, %v5878
      %5880 = vmatmul.f32.gmra.mxu0 %v5769
      %v5881 = vpop.f32.mrf.mxu0
      %v5882 = vadd.f32 %v5673, %v5881
      %5883 = vmatmul.f32.gmra.mxu0 %v5772
      %v5884 = vpop.f32.mrf.mxu0
      %v5885 = vadd.f32 %v5676, %v5884
      %5886 = vmatmul.f32.gmra.mxu0 %v5775
      %v5887 = vpop.f32.mrf.mxu0
      %v5888 = vadd.f32 %v5679, %v5887
      %5889 = vmatmul.f32.gmra.mxu0 %v5778
      %v5890 = vpop.f32.mrf.mxu0
      %v5891 = vadd.f32 %v5682, %v5890
      %5892 = vmatmul.f32.gmra.mxu0 %v5781
      %v5893 = vpop.f32.mrf.mxu0
      %v5894 = vadd.f32 %v5685, %v5893
      %5895 = vmatmul.f32.gmra.mxu0 %v5784
      %v5896 = vpop.f32.mrf.mxu0
      %v5897 = vadd.f32 %v5688, %v5896
      %5898 = vmatmul.f32.gmra.mxu0 %v5787
      %v5899 = vpop.f32.mrf.mxu0
      %v5900 = vadd.f32 %v5691, %v5899
      %5901 = vmatmul.f32.gmra.mxu0 %v5790
      %v5902 = vpop.f32.mrf.mxu0
      %v5903 = vadd.f32 %v5694, %v5902
      %5904 = vmatmul.f32.gmra.mxu0 %v5793
      %v5905 = vpop.f32.mrf.mxu0
      %v5906 = vadd.f32 %v5697, %v5905
      %5907 = vmatmul.f32.gmra.mxu0 %v5796
      %v5908 = vpop.f32.mrf.mxu0
      %v5909 = vadd.f32 %v5700, %v5908
      %5910 = vmatmul.f32.gmra.mxu0 %v5799
      %v5911 = vpop.f32.mrf.mxu0
      %v5912 = vadd.f32 %v5703, %v5911
      %5913 = vmatmul.f32.gmra.mxu0 %v5802
      %v5914 = vpop.f32.mrf.mxu0
      %v5915 = vadd.f32 %v5706, %v5914
      %5916 = vmatmul.f32.gmra.mxu0 %v5805
      %v5917 = vpop.f32.mrf.mxu0
      %v5918 = vadd.f32 %v5709, %v5917
      %5919 = vmatmul.f32.gmra.mxu0 %v5808
      %v5920 = vpop.f32.mrf.mxu0
      %v5921 = vadd.f32 %v5712, %v5920
      %5922 = vmatmul.f32.gmra.mxu0 %v5811
      %v5923 = vpop.f32.mrf.mxu0
      %v5924 = vadd.f32 %v5715, %v5923
      %5925 = vmatmul.f32.gmra.mxu0 %v5814
      %v5926 = vpop.f32.mrf.mxu0
      %v5927 = vadd.f32 %v5718, %v5926
      %5928 = vmatmul.f32.gmra.mxu0 %v5817
      %v5929 = vpop.f32.mrf.mxu0
      %v5930 = vadd.f32 %v5721, %v5929
      %5931 = vdwg.mxu0
      %v5932 = vld [vmem:[#allocation4 + $0x2] sm:$0xff]
      %v5933 = vld [vmem:[#allocation4 + $0xa] sm:$0xff]
      %v5934 = vld [vmem:[#allocation4 + $0x1a] sm:$0xff]
      %v5935 = vld [vmem:[#allocation4 + $0x22] sm:$0xff]
      %v5936 = vld [vmem:[#allocation4 + $0x32] sm:$0xff]
      %v5937 = vld [vmem:[#allocation4 + $0x3a] sm:$0xff]
      %v5938 = vld [vmem:[#allocation4 + $0x4a] sm:$0xff]
      %v5939 = vld [vmem:[#allocation4 + $0x52] sm:$0xff]
      %v5940 = vld [vmem:[#allocation4 + $0x62] sm:$0xff]
      %v5941 = vld [vmem:[#allocation4 + $0x6a] sm:$0xff]
      %v5942 = vld [vmem:[#allocation4 + $0x7a] sm:$0xff]
      %v5943 = vld [vmem:[#allocation4 + $0x82] sm:$0xff]
      %v5944 = vld [vmem:[#allocation4 + $0x92] sm:$0xff]
      %v5945 = vld [vmem:[#allocation4 + $0x9a] sm:$0xff]
      %v5946 = vld [vmem:[#allocation4 + $0xaa] sm:$0xff]
      %v5947 = vld [vmem:[#allocation4 + $0xb2] sm:$0xff]
      %v5948 = vld [vmem:[#allocation4 + $0xc2] sm:$0xff]
      %v5949 = vld [vmem:[#allocation4 + $0xca] sm:$0xff]
      %v5950 = vld [vmem:[#allocation4 + $0xda] sm:$0xff]
      %v5951 = vld [vmem:[#allocation4 + $0xe2] sm:$0xff]
      %v5952 = vld [vmem:[#allocation4 + $0xf2] sm:$0xff]
      %v5953 = vld [vmem:[#allocation4 + $0xfa] sm:$0xff]
      %v5954 = vld [vmem:[#allocation4 + $0x10a] sm:$0xff]
      %v5955 = vld [vmem:[#allocation4 + $0x112] sm:$0xff]
      %v5956 = vld [vmem:[#allocation4 + $0x122] sm:$0xff]
      %v5957 = vld [vmem:[#allocation4 + $0x12a] sm:$0xff]
      %v5958 = vld [vmem:[#allocation4 + $0x13a] sm:$0xff]
      %v5959 = vld [vmem:[#allocation4 + $0x142] sm:$0xff]
      %v5960 = vld [vmem:[#allocation4 + $0x152] sm:$0xff]
      %v5961 = vld [vmem:[#allocation4 + $0x15a] sm:$0xff]
      %v5962 = vld [vmem:[#allocation4 + $0x16a] sm:$0xff]
      %v5963 = vld [vmem:[#allocation4 + $0x172] sm:$0xff]
      %s5964 = scalar_lea.vmem %s3, 88
      %v5965 = vld [vmem:[%s5964] sm:$0xff]
      %v5967 = vsel %vm337, %v5932, 0
      %v5970 = vsel %vm337, %v5933, 0
      %v5973 = vsel %vm337, %v5934, 0
      %v5976 = vsel %vm337, %v5935, 0
      %v5979 = vsel %vm337, %v5936, 0
      %v5982 = vsel %vm337, %v5937, 0
      %v5985 = vsel %vm337, %v5938, 0
      %v5988 = vsel %vm337, %v5939, 0
      %v5991 = vsel %vm337, %v5940, 0
      %v5994 = vsel %vm337, %v5941, 0
      %v5997 = vsel %vm337, %v5942, 0
      %v6000 = vsel %vm337, %v5943, 0
      %v6003 = vsel %vm337, %v5944, 0
      %v6006 = vsel %vm337, %v5945, 0
      %v6009 = vsel %vm337, %v5946, 0
      %v6012 = vsel %vm337, %v5947, 0
      %v6015 = vsel %vm337, %v5948, 0
      %v6018 = vsel %vm337, %v5949, 0
      %v6021 = vsel %vm337, %v5950, 0
      %v6024 = vsel %vm337, %v5951, 0
      %v6027 = vsel %vm337, %v5952, 0
      %v6030 = vsel %vm337, %v5953, 0
      %v6033 = vsel %vm337, %v5954, 0
      %v6036 = vsel %vm337, %v5955, 0
      %v6039 = vsel %vm337, %v5956, 0
      %v6042 = vsel %vm337, %v5957, 0
      %v6045 = vsel %vm337, %v5958, 0
      %v6048 = vsel %vm337, %v5959, 0
      %v6051 = vsel %vm337, %v5960, 0
      %v6054 = vsel %vm337, %v5961, 0
      %v6057 = vsel %vm337, %v5962, 0
      %v6060 = vsel %vm337, %v5963, 0
      %6062 = vmatpush.msra.mxu0 0.0
      %6063 = vmatpush.msra.mxu0 0.0
      %6064 = vmatpush.msra.mxu0 0.0
      %6065 = vmatpush.msra.mxu0 0.0
      %6066 = vmatpush.msra.mxu0 0.0
      %6067 = vmatpush.msra.mxu0 0.0
      %6068 = vmatpush.msra.mxu0 0.0
      %6069 = vmatpush.msra.mxu0 0.0
      %6070 = vmatpush.msra.mxu0 0.0
      %6071 = vmatpush.msra.mxu0 0.0
      %6072 = vmatpush.msra.mxu0 0.0
      %6073 = vmatpush.msra.mxu0 0.0
      %6074 = vmatpush.msra.mxu0 0.0
      %6075 = vmatpush.msra.mxu0 0.0
      %6076 = vmatpush.msra.mxu0 0.0
      %6077 = vmatpush.msra.mxu0 %v5965
      %6078 = vmatmul.f32.gmra.mxu0 %v5967
      %v6079 = vpop.f32.mrf.mxu0
      %v6080 = vadd.f32 0.0, %v6079
      %6081 = vmatmul.f32.gmra.mxu0 %v5970
      %v6082 = vpop.f32.mrf.mxu0
      %v6083 = vadd.f32 0.0, %v6082
      %6084 = vmatmul.f32.gmra.mxu0 %v5973
      %v6085 = vpop.f32.mrf.mxu0
      %v6086 = vadd.f32 0.0, %v6085
      %6087 = vmatmul.f32.gmra.mxu0 %v5976
      %v6088 = vpop.f32.mrf.mxu0
      %v6089 = vadd.f32 0.0, %v6088
      %6090 = vmatmul.f32.gmra.mxu0 %v5979
      %v6091 = vpop.f32.mrf.mxu0
      %v6092 = vadd.f32 0.0, %v6091
      %6093 = vmatmul.f32.gmra.mxu0 %v5982
      %v6094 = vpop.f32.mrf.mxu0
      %v6095 = vadd.f32 0.0, %v6094
      %6096 = vmatmul.f32.gmra.mxu0 %v5985
      %v6097 = vpop.f32.mrf.mxu0
      %v6098 = vadd.f32 0.0, %v6097
      %6099 = vmatmul.f32.gmra.mxu0 %v5988
      %v6100 = vpop.f32.mrf.mxu0
      %v6101 = vadd.f32 0.0, %v6100
      %6102 = vmatmul.f32.gmra.mxu0 %v5991
      %v6103 = vpop.f32.mrf.mxu0
      %v6104 = vadd.f32 0.0, %v6103
      %6105 = vmatmul.f32.gmra.mxu0 %v5994
      %v6106 = vpop.f32.mrf.mxu0
      %v6107 = vadd.f32 0.0, %v6106
      %6108 = vmatmul.f32.gmra.mxu0 %v5997
      %v6109 = vpop.f32.mrf.mxu0
      %v6110 = vadd.f32 0.0, %v6109
      %6111 = vmatmul.f32.gmra.mxu0 %v6000
      %v6112 = vpop.f32.mrf.mxu0
      %v6113 = vadd.f32 0.0, %v6112
      %6114 = vmatmul.f32.gmra.mxu0 %v6003
      %v6115 = vpop.f32.mrf.mxu0
      %v6116 = vadd.f32 0.0, %v6115
      %6117 = vmatmul.f32.gmra.mxu0 %v6006
      %v6118 = vpop.f32.mrf.mxu0
      %v6119 = vadd.f32 0.0, %v6118
      %6120 = vmatmul.f32.gmra.mxu0 %v6009
      %v6121 = vpop.f32.mrf.mxu0
      %v6122 = vadd.f32 0.0, %v6121
      %6123 = vmatmul.f32.gmra.mxu0 %v6012
      %v6124 = vpop.f32.mrf.mxu0
      %v6125 = vadd.f32 0.0, %v6124
      %6126 = vmatmul.f32.gmra.mxu0 %v6015
      %v6127 = vpop.f32.mrf.mxu0
      %v6128 = vadd.f32 0.0, %v6127
      %6129 = vmatmul.f32.gmra.mxu0 %v6018
      %v6130 = vpop.f32.mrf.mxu0
      %v6131 = vadd.f32 0.0, %v6130
      %6132 = vmatmul.f32.gmra.mxu0 %v6021
      %v6133 = vpop.f32.mrf.mxu0
      %v6134 = vadd.f32 0.0, %v6133
      %6135 = vmatmul.f32.gmra.mxu0 %v6024
      %v6136 = vpop.f32.mrf.mxu0
      %v6137 = vadd.f32 0.0, %v6136
      %6138 = vmatmul.f32.gmra.mxu0 %v6027
      %v6139 = vpop.f32.mrf.mxu0
      %v6140 = vadd.f32 0.0, %v6139
      %6141 = vmatmul.f32.gmra.mxu0 %v6030
      %v6142 = vpop.f32.mrf.mxu0
      %v6143 = vadd.f32 0.0, %v6142
      %6144 = vmatmul.f32.gmra.mxu0 %v6033
      %v6145 = vpop.f32.mrf.mxu0
      %v6146 = vadd.f32 0.0, %v6145
      %6147 = vmatmul.f32.gmra.mxu0 %v6036
      %v6148 = vpop.f32.mrf.mxu0
      %v6149 = vadd.f32 0.0, %v6148
      %6150 = vmatmul.f32.gmra.mxu0 %v6039
      %v6151 = vpop.f32.mrf.mxu0
      %v6152 = vadd.f32 0.0, %v6151
      %6153 = vmatmul.f32.gmra.mxu0 %v6042
      %v6154 = vpop.f32.mrf.mxu0
      %v6155 = vadd.f32 0.0, %v6154
      %6156 = vmatmul.f32.gmra.mxu0 %v6045
      %v6157 = vpop.f32.mrf.mxu0
      %v6158 = vadd.f32 0.0, %v6157
      %6159 = vmatmul.f32.gmra.mxu0 %v6048
      %v6160 = vpop.f32.mrf.mxu0
      %v6161 = vadd.f32 0.0, %v6160
      %6162 = vmatmul.f32.gmra.mxu0 %v6051
      %v6163 = vpop.f32.mrf.mxu0
      %v6164 = vadd.f32 0.0, %v6163
      %6165 = vmatmul.f32.gmra.mxu0 %v6054
      %v6166 = vpop.f32.mrf.mxu0
      %v6167 = vadd.f32 0.0, %v6166
      %6168 = vmatmul.f32.gmra.mxu0 %v6057
      %v6169 = vpop.f32.mrf.mxu0
      %v6170 = vadd.f32 0.0, %v6169
      %6171 = vmatmul.f32.gmra.mxu0 %v6060
      %v6172 = vpop.f32.mrf.mxu0
      %v6173 = vadd.f32 0.0, %v6172
      %6174 = vdwg.mxu0
      %v6175 = vadd.f32 %v5837, %v6080
      %v6176 = vadd.f32 %v5840, %v6083
      %v6177 = vadd.f32 %v5843, %v6086
      %v6178 = vadd.f32 %v5846, %v6089
      %v6179 = vadd.f32 %v5849, %v6092
      %v6180 = vadd.f32 %v5852, %v6095
      %v6181 = vadd.f32 %v5855, %v6098
      %v6182 = vadd.f32 %v5858, %v6101
      %v6183 = vadd.f32 %v5861, %v6104
      %v6184 = vadd.f32 %v5864, %v6107
      %v6185 = vadd.f32 %v5867, %v6110
      %v6186 = vadd.f32 %v5870, %v6113
      %v6187 = vadd.f32 %v5873, %v6116
      %v6188 = vadd.f32 %v5876, %v6119
      %v6189 = vadd.f32 %v5879, %v6122
      %v6190 = vadd.f32 %v5882, %v6125
      %v6191 = vadd.f32 %v5885, %v6128
      %v6192 = vadd.f32 %v5888, %v6131
      %v6193 = vadd.f32 %v5891, %v6134
      %v6194 = vadd.f32 %v5894, %v6137
      %v6195 = vadd.f32 %v5897, %v6140
      %v6196 = vadd.f32 %v5900, %v6143
      %v6197 = vadd.f32 %v5903, %v6146
      %v6198 = vadd.f32 %v5906, %v6149
      %v6199 = vadd.f32 %v5909, %v6152
      %v6200 = vadd.f32 %v5912, %v6155
      %v6201 = vadd.f32 %v5915, %v6158
      %v6202 = vadd.f32 %v5918, %v6161
      %v6203 = vadd.f32 %v5921, %v6164
      %v6204 = vadd.f32 %v5924, %v6167
      %v6205 = vadd.f32 %v5927, %v6170
      %v6206 = vadd.f32 %v5930, %v6173
      %v6207 = vld [vmem:[%s5413] sm:$0xff]
      %v6208 = vld [vmem:[%s5413 + $0x8] sm:$0xff]
      %v6209 = vld [vmem:[%s5413 + $0x18] sm:$0xff]
      %v6210 = vld [vmem:[%s5413 + $0x20] sm:$0xff]
      %v6211 = vld [vmem:[%s5413 + $0x30] sm:$0xff]
      %v6212 = vld [vmem:[%s5413 + $0x38] sm:$0xff]
      %v6213 = vld [vmem:[%s5413 + $0x48] sm:$0xff]
      %v6214 = vld [vmem:[%s5413 + $0x50] sm:$0xff]
      %v6215 = vld [vmem:[%s5413 + $0x60] sm:$0xff]
      %v6216 = vld [vmem:[%s5413 + $0x68] sm:$0xff]
      %v6217 = vld [vmem:[%s5413 + $0x78] sm:$0xff]
      %v6218 = vld [vmem:[%s5413 + $0x80] sm:$0xff]
      %v6219 = vld [vmem:[%s5413 + $0x90] sm:$0xff]
      %v6220 = vld [vmem:[%s5413 + $0x98] sm:$0xff]
      %v6221 = vld [vmem:[%s5413 + $0xa8] sm:$0xff]
      %v6222 = vld [vmem:[%s5413 + $0xb0] sm:$0xff]
      %v6223 = vld [vmem:[%s5413 + $0xc0] sm:$0xff]
      %v6224 = vld [vmem:[%s5413 + $0xc8] sm:$0xff]
      %v6225 = vld [vmem:[%s5413 + $0xd8] sm:$0xff]
      %v6226 = vld [vmem:[%s5413 + $0xe0] sm:$0xff]
      %v6227 = vld [vmem:[%s5413 + $0xf0] sm:$0xff]
      %v6228 = vld [vmem:[%s5413 + $0xf8] sm:$0xff]
      %v6229 = vld [vmem:[%s5413 + $0x108] sm:$0xff]
      %v6230 = vld [vmem:[%s5413 + $0x110] sm:$0xff]
      %v6231 = vld [vmem:[%s5413 + $0x120] sm:$0xff]
      %v6232 = vld [vmem:[%s5413 + $0x128] sm:$0xff]
      %v6233 = vld [vmem:[%s5413 + $0x138] sm:$0xff]
      %v6234 = vld [vmem:[%s5413 + $0x140] sm:$0xff]
      %v6235 = vld [vmem:[%s5413 + $0x150] sm:$0xff]
      %v6236 = vld [vmem:[%s5413 + $0x158] sm:$0xff]
      %v6237 = vld [vmem:[%s5413 + $0x168] sm:$0xff]
      %v6238 = vld [vmem:[%s5413 + $0x170] sm:$0xff]
      %s6239 = scalar_lea.vmem %s3, 96
      %v6240 = vld [vmem:[%s6239] sm:$0xff]
      %v6242 = vsel %vm337, %v6207, 0
      %v6245 = vsel %vm337, %v6208, 0
      %v6248 = vsel %vm337, %v6209, 0
      %v6251 = vsel %vm337, %v6210, 0
      %v6254 = vsel %vm337, %v6211, 0
      %v6257 = vsel %vm337, %v6212, 0
      %v6260 = vsel %vm337, %v6213, 0
      %v6263 = vsel %vm337, %v6214, 0
      %v6266 = vsel %vm337, %v6215, 0
      %v6269 = vsel %vm337, %v6216, 0
      %v6272 = vsel %vm337, %v6217, 0
      %v6275 = vsel %vm337, %v6218, 0
      %v6278 = vsel %vm337, %v6219, 0
      %v6281 = vsel %vm337, %v6220, 0
      %v6284 = vsel %vm337, %v6221, 0
      %v6287 = vsel %vm337, %v6222, 0
      %v6290 = vsel %vm337, %v6223, 0
      %v6293 = vsel %vm337, %v6224, 0
      %v6296 = vsel %vm337, %v6225, 0
      %v6299 = vsel %vm337, %v6226, 0
      %v6302 = vsel %vm337, %v6227, 0
      %v6305 = vsel %vm337, %v6228, 0
      %v6308 = vsel %vm337, %v6229, 0
      %v6311 = vsel %vm337, %v6230, 0
      %v6314 = vsel %vm337, %v6231, 0
      %v6317 = vsel %vm337, %v6232, 0
      %v6320 = vsel %vm337, %v6233, 0
      %v6323 = vsel %vm337, %v6234, 0
      %v6326 = vsel %vm337, %v6235, 0
      %v6329 = vsel %vm337, %v6236, 0
      %v6332 = vsel %vm337, %v6237, 0
      %v6335 = vsel %vm337, %v6238, 0
      %6337 = vmatpush.msra.mxu0 0.0
      %6338 = vmatpush.msra.mxu0 0.0
      %6339 = vmatpush.msra.mxu0 0.0
      %6340 = vmatpush.msra.mxu0 0.0
      %6341 = vmatpush.msra.mxu0 0.0
      %6342 = vmatpush.msra.mxu0 0.0
      %6343 = vmatpush.msra.mxu0 0.0
      %6344 = vmatpush.msra.mxu0 0.0
      %6345 = vmatpush.msra.mxu0 0.0
      %6346 = vmatpush.msra.mxu0 0.0
      %6347 = vmatpush.msra.mxu0 0.0
      %6348 = vmatpush.msra.mxu0 0.0
      %6349 = vmatpush.msra.mxu0 0.0
      %6350 = vmatpush.msra.mxu0 0.0
      %6351 = vmatpush.msra.mxu0 0.0
      %6352 = vmatpush.msra.mxu0 %v6240
      %6353 = vmatmul.f32.gmra.mxu0 %v6242
      %v6354 = vpop.f32.mrf.mxu0
      %v6355 = vadd.f32 0.0, %v6354
      %6356 = vmatmul.f32.gmra.mxu0 %v6245
      %v6357 = vpop.f32.mrf.mxu0
      %v6358 = vadd.f32 0.0, %v6357
      %6359 = vmatmul.f32.gmra.mxu0 %v6248
      %v6360 = vpop.f32.mrf.mxu0
      %v6361 = vadd.f32 0.0, %v6360
      %6362 = vmatmul.f32.gmra.mxu0 %v6251
      %v6363 = vpop.f32.mrf.mxu0
      %v6364 = vadd.f32 0.0, %v6363
      %6365 = vmatmul.f32.gmra.mxu0 %v6254
      %v6366 = vpop.f32.mrf.mxu0
      %v6367 = vadd.f32 0.0, %v6366
      %6368 = vmatmul.f32.gmra.mxu0 %v6257
      %v6369 = vpop.f32.mrf.mxu0
      %v6370 = vadd.f32 0.0, %v6369
      %6371 = vmatmul.f32.gmra.mxu0 %v6260
      %v6372 = vpop.f32.mrf.mxu0
      %v6373 = vadd.f32 0.0, %v6372
      %6374 = vmatmul.f32.gmra.mxu0 %v6263
      %v6375 = vpop.f32.mrf.mxu0
      %v6376 = vadd.f32 0.0, %v6375
      %6377 = vmatmul.f32.gmra.mxu0 %v6266
      %v6378 = vpop.f32.mrf.mxu0
      %v6379 = vadd.f32 0.0, %v6378
      %6380 = vmatmul.f32.gmra.mxu0 %v6269
      %v6381 = vpop.f32.mrf.mxu0
      %v6382 = vadd.f32 0.0, %v6381
      %6383 = vmatmul.f32.gmra.mxu0 %v6272
      %v6384 = vpop.f32.mrf.mxu0
      %v6385 = vadd.f32 0.0, %v6384
      %6386 = vmatmul.f32.gmra.mxu0 %v6275
      %v6387 = vpop.f32.mrf.mxu0
      %v6388 = vadd.f32 0.0, %v6387
      %6389 = vmatmul.f32.gmra.mxu0 %v6278
      %v6390 = vpop.f32.mrf.mxu0
      %v6391 = vadd.f32 0.0, %v6390
      %6392 = vmatmul.f32.gmra.mxu0 %v6281
      %v6393 = vpop.f32.mrf.mxu0
      %v6394 = vadd.f32 0.0, %v6393
      %6395 = vmatmul.f32.gmra.mxu0 %v6284
      %v6396 = vpop.f32.mrf.mxu0
      %v6397 = vadd.f32 0.0, %v6396
      %6398 = vmatmul.f32.gmra.mxu0 %v6287
      %v6399 = vpop.f32.mrf.mxu0
      %v6400 = vadd.f32 0.0, %v6399
      %6401 = vmatmul.f32.gmra.mxu0 %v6290
      %v6402 = vpop.f32.mrf.mxu0
      %v6403 = vadd.f32 0.0, %v6402
      %6404 = vmatmul.f32.gmra.mxu0 %v6293
      %v6405 = vpop.f32.mrf.mxu0
      %v6406 = vadd.f32 0.0, %v6405
      %6407 = vmatmul.f32.gmra.mxu0 %v6296
      %v6408 = vpop.f32.mrf.mxu0
      %v6409 = vadd.f32 0.0, %v6408
      %6410 = vmatmul.f32.gmra.mxu0 %v6299
      %v6411 = vpop.f32.mrf.mxu0
      %v6412 = vadd.f32 0.0, %v6411
      %6413 = vmatmul.f32.gmra.mxu0 %v6302
      %v6414 = vpop.f32.mrf.mxu0
      %v6415 = vadd.f32 0.0, %v6414
      %6416 = vmatmul.f32.gmra.mxu0 %v6305
      %v6417 = vpop.f32.mrf.mxu0
      %v6418 = vadd.f32 0.0, %v6417
      %6419 = vmatmul.f32.gmra.mxu0 %v6308
      %v6420 = vpop.f32.mrf.mxu0
      %v6421 = vadd.f32 0.0, %v6420
      %6422 = vmatmul.f32.gmra.mxu0 %v6311
      %v6423 = vpop.f32.mrf.mxu0
      %v6424 = vadd.f32 0.0, %v6423
      %6425 = vmatmul.f32.gmra.mxu0 %v6314
      %v6426 = vpop.f32.mrf.mxu0
      %v6427 = vadd.f32 0.0, %v6426
      %6428 = vmatmul.f32.gmra.mxu0 %v6317
      %v6429 = vpop.f32.mrf.mxu0
      %v6430 = vadd.f32 0.0, %v6429
      %6431 = vmatmul.f32.gmra.mxu0 %v6320
      %v6432 = vpop.f32.mrf.mxu0
      %v6433 = vadd.f32 0.0, %v6432
      %6434 = vmatmul.f32.gmra.mxu0 %v6323
      %v6435 = vpop.f32.mrf.mxu0
      %v6436 = vadd.f32 0.0, %v6435
      %6437 = vmatmul.f32.gmra.mxu0 %v6326
      %v6438 = vpop.f32.mrf.mxu0
      %v6439 = vadd.f32 0.0, %v6438
      %6440 = vmatmul.f32.gmra.mxu0 %v6329
      %v6441 = vpop.f32.mrf.mxu0
      %v6442 = vadd.f32 0.0, %v6441
      %6443 = vmatmul.f32.gmra.mxu0 %v6332
      %v6444 = vpop.f32.mrf.mxu0
      %v6445 = vadd.f32 0.0, %v6444
      %6446 = vmatmul.f32.gmra.mxu0 %v6335
      %v6447 = vpop.f32.mrf.mxu0
      %v6448 = vadd.f32 0.0, %v6447
      %6449 = vdwg.mxu0
      %v6450 = vadd.f32 %v6175, %v6355
      %v6451 = vadd.f32 %v6176, %v6358
      %v6452 = vadd.f32 %v6177, %v6361
      %v6453 = vadd.f32 %v6178, %v6364
      %v6454 = vadd.f32 %v6179, %v6367
      %v6455 = vadd.f32 %v6180, %v6370
      %v6456 = vadd.f32 %v6181, %v6373
      %v6457 = vadd.f32 %v6182, %v6376
      %v6458 = vadd.f32 %v6183, %v6379
      %v6459 = vadd.f32 %v6184, %v6382
      %v6460 = vadd.f32 %v6185, %v6385
      %v6461 = vadd.f32 %v6186, %v6388
      %v6462 = vadd.f32 %v6187, %v6391
      %v6463 = vadd.f32 %v6188, %v6394
      %v6464 = vadd.f32 %v6189, %v6397
      %v6465 = vadd.f32 %v6190, %v6400
      %v6466 = vadd.f32 %v6191, %v6403
      %v6467 = vadd.f32 %v6192, %v6406
      %v6468 = vadd.f32 %v6193, %v6409
      %v6469 = vadd.f32 %v6194, %v6412
      %v6470 = vadd.f32 %v6195, %v6415
      %v6471 = vadd.f32 %v6196, %v6418
      %v6472 = vadd.f32 %v6197, %v6421
      %v6473 = vadd.f32 %v6198, %v6424
      %v6474 = vadd.f32 %v6199, %v6427
      %v6475 = vadd.f32 %v6200, %v6430
      %v6476 = vadd.f32 %v6201, %v6433
      %v6477 = vadd.f32 %v6202, %v6436
      %v6478 = vadd.f32 %v6203, %v6439
      %v6479 = vadd.f32 %v6204, %v6442
      %v6480 = vadd.f32 %v6205, %v6445
      %v6481 = vadd.f32 %v6206, %v6448
      %v6482 = vld [vmem:[%s5413 + $0x1] sm:$0xff]
      %v6483 = vld [vmem:[%s5413 + $0x9] sm:$0xff]
      %v6484 = vld [vmem:[%s5413 + $0x19] sm:$0xff]
      %v6485 = vld [vmem:[%s5413 + $0x21] sm:$0xff]
      %v6486 = vld [vmem:[%s5413 + $0x31] sm:$0xff]
      %v6487 = vld [vmem:[%s5413 + $0x39] sm:$0xff]
      %v6488 = vld [vmem:[%s5413 + $0x49] sm:$0xff]
      %v6489 = vld [vmem:[%s5413 + $0x51] sm:$0xff]
      %v6490 = vld [vmem:[%s5413 + $0x61] sm:$0xff]
      %v6491 = vld [vmem:[%s5413 + $0x69] sm:$0xff]
      %v6492 = vld [vmem:[%s5413 + $0x79] sm:$0xff]
      %v6493 = vld [vmem:[%s5413 + $0x81] sm:$0xff]
      %v6494 = vld [vmem:[%s5413 + $0x91] sm:$0xff]
      %v6495 = vld [vmem:[%s5413 + $0x99] sm:$0xff]
      %v6496 = vld [vmem:[%s5413 + $0xa9] sm:$0xff]
      %v6497 = vld [vmem:[%s5413 + $0xb1] sm:$0xff]
      %v6498 = vld [vmem:[%s5413 + $0xc1] sm:$0xff]
      %v6499 = vld [vmem:[%s5413 + $0xc9] sm:$0xff]
      %v6500 = vld [vmem:[%s5413 + $0xd9] sm:$0xff]
      %v6501 = vld [vmem:[%s5413 + $0xe1] sm:$0xff]
      %v6502 = vld [vmem:[%s5413 + $0xf1] sm:$0xff]
      %v6503 = vld [vmem:[%s5413 + $0xf9] sm:$0xff]
      %v6504 = vld [vmem:[%s5413 + $0x109] sm:$0xff]
      %v6505 = vld [vmem:[%s5413 + $0x111] sm:$0xff]
      %v6506 = vld [vmem:[%s5413 + $0x121] sm:$0xff]
      %v6507 = vld [vmem:[%s5413 + $0x129] sm:$0xff]
      %v6508 = vld [vmem:[%s5413 + $0x139] sm:$0xff]
      %v6509 = vld [vmem:[%s5413 + $0x141] sm:$0xff]
      %v6510 = vld [vmem:[%s5413 + $0x151] sm:$0xff]
      %v6511 = vld [vmem:[%s5413 + $0x159] sm:$0xff]
      %v6512 = vld [vmem:[%s5413 + $0x169] sm:$0xff]
      %v6513 = vld [vmem:[%s5413 + $0x171] sm:$0xff]
      %s6514 = scalar_lea.vmem %s3, 104
      %v6515 = vld [vmem:[%s6514] sm:$0xff]
      %v6517 = vsel %vm337, %v6482, 0
      %v6520 = vsel %vm337, %v6483, 0
      %v6523 = vsel %vm337, %v6484, 0
      %v6526 = vsel %vm337, %v6485, 0
      %v6529 = vsel %vm337, %v6486, 0
      %v6532 = vsel %vm337, %v6487, 0
      %v6535 = vsel %vm337, %v6488, 0
      %v6538 = vsel %vm337, %v6489, 0
      %v6541 = vsel %vm337, %v6490, 0
      %v6544 = vsel %vm337, %v6491, 0
      %v6547 = vsel %vm337, %v6492, 0
      %v6550 = vsel %vm337, %v6493, 0
      %v6553 = vsel %vm337, %v6494, 0
      %v6556 = vsel %vm337, %v6495, 0
      %v6559 = vsel %vm337, %v6496, 0
      %v6562 = vsel %vm337, %v6497, 0
      %v6565 = vsel %vm337, %v6498, 0
      %v6568 = vsel %vm337, %v6499, 0
      %v6571 = vsel %vm337, %v6500, 0
      %v6574 = vsel %vm337, %v6501, 0
      %v6577 = vsel %vm337, %v6502, 0
      %v6580 = vsel %vm337, %v6503, 0
      %v6583 = vsel %vm337, %v6504, 0
      %v6586 = vsel %vm337, %v6505, 0
      %v6589 = vsel %vm337, %v6506, 0
      %v6592 = vsel %vm337, %v6507, 0
      %v6595 = vsel %vm337, %v6508, 0
      %v6598 = vsel %vm337, %v6509, 0
      %v6601 = vsel %vm337, %v6510, 0
      %v6604 = vsel %vm337, %v6511, 0
      %v6607 = vsel %vm337, %v6512, 0
      %v6610 = vsel %vm337, %v6513, 0
      %6612 = vmatpush.msra.mxu0 0.0
      %6613 = vmatpush.msra.mxu0 0.0
      %6614 = vmatpush.msra.mxu0 0.0
      %6615 = vmatpush.msra.mxu0 0.0
      %6616 = vmatpush.msra.mxu0 0.0
      %6617 = vmatpush.msra.mxu0 0.0
      %6618 = vmatpush.msra.mxu0 0.0
      %6619 = vmatpush.msra.mxu0 0.0
      %6620 = vmatpush.msra.mxu0 0.0
      %6621 = vmatpush.msra.mxu0 0.0
      %6622 = vmatpush.msra.mxu0 0.0
      %6623 = vmatpush.msra.mxu0 0.0
      %6624 = vmatpush.msra.mxu0 0.0
      %6625 = vmatpush.msra.mxu0 0.0
      %6626 = vmatpush.msra.mxu0 0.0
      %6627 = vmatpush.msra.mxu0 %v6515
      %6628 = vmatmul.f32.gmra.mxu0 %v6517
      %v6629 = vpop.f32.mrf.mxu0
      %v6630 = vadd.f32 0.0, %v6629
      %6631 = vmatmul.f32.gmra.mxu0 %v6520
      %v6632 = vpop.f32.mrf.mxu0
      %v6633 = vadd.f32 0.0, %v6632
      %6634 = vmatmul.f32.gmra.mxu0 %v6523
      %v6635 = vpop.f32.mrf.mxu0
      %v6636 = vadd.f32 0.0, %v6635
      %6637 = vmatmul.f32.gmra.mxu0 %v6526
      %v6638 = vpop.f32.mrf.mxu0
      %v6639 = vadd.f32 0.0, %v6638
      %6640 = vmatmul.f32.gmra.mxu0 %v6529
      %v6641 = vpop.f32.mrf.mxu0
      %v6642 = vadd.f32 0.0, %v6641
      %6643 = vmatmul.f32.gmra.mxu0 %v6532
      %v6644 = vpop.f32.mrf.mxu0
      %v6645 = vadd.f32 0.0, %v6644
      %6646 = vmatmul.f32.gmra.mxu0 %v6535
      %v6647 = vpop.f32.mrf.mxu0
      %v6648 = vadd.f32 0.0, %v6647
      %6649 = vmatmul.f32.gmra.mxu0 %v6538
      %v6650 = vpop.f32.mrf.mxu0
      %v6651 = vadd.f32 0.0, %v6650
      %6652 = vmatmul.f32.gmra.mxu0 %v6541
      %v6653 = vpop.f32.mrf.mxu0
      %v6654 = vadd.f32 0.0, %v6653
      %6655 = vmatmul.f32.gmra.mxu0 %v6544
      %v6656 = vpop.f32.mrf.mxu0
      %v6657 = vadd.f32 0.0, %v6656
      %6658 = vmatmul.f32.gmra.mxu0 %v6547
      %v6659 = vpop.f32.mrf.mxu0
      %v6660 = vadd.f32 0.0, %v6659
      %6661 = vmatmul.f32.gmra.mxu0 %v6550
      %v6662 = vpop.f32.mrf.mxu0
      %v6663 = vadd.f32 0.0, %v6662
      %6664 = vmatmul.f32.gmra.mxu0 %v6553
      %v6665 = vpop.f32.mrf.mxu0
      %v6666 = vadd.f32 0.0, %v6665
      %6667 = vmatmul.f32.gmra.mxu0 %v6556
      %v6668 = vpop.f32.mrf.mxu0
      %v6669 = vadd.f32 0.0, %v6668
      %6670 = vmatmul.f32.gmra.mxu0 %v6559
      %v6671 = vpop.f32.mrf.mxu0
      %v6672 = vadd.f32 0.0, %v6671
      %6673 = vmatmul.f32.gmra.mxu0 %v6562
      %v6674 = vpop.f32.mrf.mxu0
      %v6675 = vadd.f32 0.0, %v6674
      %6676 = vmatmul.f32.gmra.mxu0 %v6565
      %v6677 = vpop.f32.mrf.mxu0
      %v6678 = vadd.f32 0.0, %v6677
      %6679 = vmatmul.f32.gmra.mxu0 %v6568
      %v6680 = vpop.f32.mrf.mxu0
      %v6681 = vadd.f32 0.0, %v6680
      %6682 = vmatmul.f32.gmra.mxu0 %v6571
      %v6683 = vpop.f32.mrf.mxu0
      %v6684 = vadd.f32 0.0, %v6683
      %6685 = vmatmul.f32.gmra.mxu0 %v6574
      %v6686 = vpop.f32.mrf.mxu0
      %v6687 = vadd.f32 0.0, %v6686
      %6688 = vmatmul.f32.gmra.mxu0 %v6577
      %v6689 = vpop.f32.mrf.mxu0
      %v6690 = vadd.f32 0.0, %v6689
      %6691 = vmatmul.f32.gmra.mxu0 %v6580
      %v6692 = vpop.f32.mrf.mxu0
      %v6693 = vadd.f32 0.0, %v6692
      %6694 = vmatmul.f32.gmra.mxu0 %v6583
      %v6695 = vpop.f32.mrf.mxu0
      %v6696 = vadd.f32 0.0, %v6695
      %6697 = vmatmul.f32.gmra.mxu0 %v6586
      %v6698 = vpop.f32.mrf.mxu0
      %v6699 = vadd.f32 0.0, %v6698
      %6700 = vmatmul.f32.gmra.mxu0 %v6589
      %v6701 = vpop.f32.mrf.mxu0
      %v6702 = vadd.f32 0.0, %v6701
      %6703 = vmatmul.f32.gmra.mxu0 %v6592
      %v6704 = vpop.f32.mrf.mxu0
      %v6705 = vadd.f32 0.0, %v6704
      %6706 = vmatmul.f32.gmra.mxu0 %v6595
      %v6707 = vpop.f32.mrf.mxu0
      %v6708 = vadd.f32 0.0, %v6707
      %6709 = vmatmul.f32.gmra.mxu0 %v6598
      %v6710 = vpop.f32.mrf.mxu0
      %v6711 = vadd.f32 0.0, %v6710
      %6712 = vmatmul.f32.gmra.mxu0 %v6601
      %v6713 = vpop.f32.mrf.mxu0
      %v6714 = vadd.f32 0.0, %v6713
      %6715 = vmatmul.f32.gmra.mxu0 %v6604
      %v6716 = vpop.f32.mrf.mxu0
      %v6717 = vadd.f32 0.0, %v6716
      %6718 = vmatmul.f32.gmra.mxu0 %v6607
      %v6719 = vpop.f32.mrf.mxu0
      %v6720 = vadd.f32 0.0, %v6719
      %6721 = vmatmul.f32.gmra.mxu0 %v6610
      %v6722 = vpop.f32.mrf.mxu0
      %v6723 = vadd.f32 0.0, %v6722
      %6724 = vdwg.mxu0
      %v6725 = vadd.f32 %v6450, %v6630
      %v6726 = vadd.f32 %v6451, %v6633
      %v6727 = vadd.f32 %v6452, %v6636
      %v6728 = vadd.f32 %v6453, %v6639
      %v6729 = vadd.f32 %v6454, %v6642
      %v6730 = vadd.f32 %v6455, %v6645
      %v6731 = vadd.f32 %v6456, %v6648
      %v6732 = vadd.f32 %v6457, %v6651
      %v6733 = vadd.f32 %v6458, %v6654
      %v6734 = vadd.f32 %v6459, %v6657
      %v6735 = vadd.f32 %v6460, %v6660
      %v6736 = vadd.f32 %v6461, %v6663
      %v6737 = vadd.f32 %v6462, %v6666
      %v6738 = vadd.f32 %v6463, %v6669
      %v6739 = vadd.f32 %v6464, %v6672
      %v6740 = vadd.f32 %v6465, %v6675
      %v6741 = vadd.f32 %v6466, %v6678
      %v6742 = vadd.f32 %v6467, %v6681
      %v6743 = vadd.f32 %v6468, %v6684
      %v6744 = vadd.f32 %v6469, %v6687
      %v6745 = vadd.f32 %v6470, %v6690
      %v6746 = vadd.f32 %v6471, %v6693
      %v6747 = vadd.f32 %v6472, %v6696
      %v6748 = vadd.f32 %v6473, %v6699
      %v6749 = vadd.f32 %v6474, %v6702
      %v6750 = vadd.f32 %v6475, %v6705
      %v6751 = vadd.f32 %v6476, %v6708
      %v6752 = vadd.f32 %v6477, %v6711
      %v6753 = vadd.f32 %v6478, %v6714
      %v6754 = vadd.f32 %v6479, %v6717
      %v6755 = vadd.f32 %v6480, %v6720
      %v6756 = vadd.f32 %v6481, %v6723
      %v6757 = vld [vmem:[%s5413 + $0x2] sm:$0xff]
      %v6758 = vld [vmem:[%s5413 + $0xa] sm:$0xff]
      %v6759 = vld [vmem:[%s5413 + $0x1a] sm:$0xff]
      %v6760 = vld [vmem:[%s5413 + $0x22] sm:$0xff]
      %v6761 = vld [vmem:[%s5413 + $0x32] sm:$0xff]
      %v6762 = vld [vmem:[%s5413 + $0x3a] sm:$0xff]
      %v6763 = vld [vmem:[%s5413 + $0x4a] sm:$0xff]
      %v6764 = vld [vmem:[%s5413 + $0x52] sm:$0xff]
      %v6765 = vld [vmem:[%s5413 + $0x62] sm:$0xff]
      %v6766 = vld [vmem:[%s5413 + $0x6a] sm:$0xff]
      %v6767 = vld [vmem:[%s5413 + $0x7a] sm:$0xff]
      %v6768 = vld [vmem:[%s5413 + $0x82] sm:$0xff]
      %v6769 = vld [vmem:[%s5413 + $0x92] sm:$0xff]
      %v6770 = vld [vmem:[%s5413 + $0x9a] sm:$0xff]
      %v6771 = vld [vmem:[%s5413 + $0xaa] sm:$0xff]
      %v6772 = vld [vmem:[%s5413 + $0xb2] sm:$0xff]
      %v6773 = vld [vmem:[%s5413 + $0xc2] sm:$0xff]
      %v6774 = vld [vmem:[%s5413 + $0xca] sm:$0xff]
      %v6775 = vld [vmem:[%s5413 + $0xda] sm:$0xff]
      %v6776 = vld [vmem:[%s5413 + $0xe2] sm:$0xff]
      %v6777 = vld [vmem:[%s5413 + $0xf2] sm:$0xff]
      %v6778 = vld [vmem:[%s5413 + $0xfa] sm:$0xff]
      %v6779 = vld [vmem:[%s5413 + $0x10a] sm:$0xff]
      %v6780 = vld [vmem:[%s5413 + $0x112] sm:$0xff]
      %v6781 = vld [vmem:[%s5413 + $0x122] sm:$0xff]
      %v6782 = vld [vmem:[%s5413 + $0x12a] sm:$0xff]
      %v6783 = vld [vmem:[%s5413 + $0x13a] sm:$0xff]
      %v6784 = vld [vmem:[%s5413 + $0x142] sm:$0xff]
      %v6785 = vld [vmem:[%s5413 + $0x152] sm:$0xff]
      %v6786 = vld [vmem:[%s5413 + $0x15a] sm:$0xff]
      %v6787 = vld [vmem:[%s5413 + $0x16a] sm:$0xff]
      %v6788 = vld [vmem:[%s5413 + $0x172] sm:$0xff]
      %s6789 = scalar_lea.vmem %s3, 112
      %v6790 = vld [vmem:[%s6789] sm:$0xff]
      %v6792 = vsel %vm337, %v6757, 0
      %v6795 = vsel %vm337, %v6758, 0
      %v6798 = vsel %vm337, %v6759, 0
      %v6801 = vsel %vm337, %v6760, 0
      %v6804 = vsel %vm337, %v6761, 0
      %v6807 = vsel %vm337, %v6762, 0
      %v6810 = vsel %vm337, %v6763, 0
      %v6813 = vsel %vm337, %v6764, 0
      %v6816 = vsel %vm337, %v6765, 0
      %v6819 = vsel %vm337, %v6766, 0
      %v6822 = vsel %vm337, %v6767, 0
      %v6825 = vsel %vm337, %v6768, 0
      %v6828 = vsel %vm337, %v6769, 0
      %v6831 = vsel %vm337, %v6770, 0
      %v6834 = vsel %vm337, %v6771, 0
      %v6837 = vsel %vm337, %v6772, 0
      %v6840 = vsel %vm337, %v6773, 0
      %v6843 = vsel %vm337, %v6774, 0
      %v6846 = vsel %vm337, %v6775, 0
      %v6849 = vsel %vm337, %v6776, 0
      %v6852 = vsel %vm337, %v6777, 0
      %v6855 = vsel %vm337, %v6778, 0
      %v6858 = vsel %vm337, %v6779, 0
      %v6861 = vsel %vm337, %v6780, 0
      %v6864 = vsel %vm337, %v6781, 0
      %v6867 = vsel %vm337, %v6782, 0
      %v6870 = vsel %vm337, %v6783, 0
      %v6873 = vsel %vm337, %v6784, 0
      %v6876 = vsel %vm337, %v6785, 0
      %v6879 = vsel %vm337, %v6786, 0
      %v6882 = vsel %vm337, %v6787, 0
      %v6885 = vsel %vm337, %v6788, 0
      %6887 = vmatpush.msra.mxu0 0.0
      %6888 = vmatpush.msra.mxu0 0.0
      %6889 = vmatpush.msra.mxu0 0.0
      %6890 = vmatpush.msra.mxu0 0.0
      %6891 = vmatpush.msra.mxu0 0.0
      %6892 = vmatpush.msra.mxu0 0.0
      %6893 = vmatpush.msra.mxu0 0.0
      %6894 = vmatpush.msra.mxu0 0.0
      %6895 = vmatpush.msra.mxu0 0.0
      %6896 = vmatpush.msra.mxu0 0.0
      %6897 = vmatpush.msra.mxu0 0.0
      %6898 = vmatpush.msra.mxu0 0.0
      %6899 = vmatpush.msra.mxu0 0.0
      %6900 = vmatpush.msra.mxu0 0.0
      %6901 = vmatpush.msra.mxu0 0.0
      %6902 = vmatpush.msra.mxu0 %v6790
      %6903 = vmatmul.f32.gmra.mxu0 %v6792
      %v6904 = vpop.f32.mrf.mxu0
      %v6905 = vadd.f32 0.0, %v6904
      %6906 = vmatmul.f32.gmra.mxu0 %v6795
      %v6907 = vpop.f32.mrf.mxu0
      %v6908 = vadd.f32 0.0, %v6907
      %6909 = vmatmul.f32.gmra.mxu0 %v6798
      %v6910 = vpop.f32.mrf.mxu0
      %v6911 = vadd.f32 0.0, %v6910
      %6912 = vmatmul.f32.gmra.mxu0 %v6801
      %v6913 = vpop.f32.mrf.mxu0
      %v6914 = vadd.f32 0.0, %v6913
      %6915 = vmatmul.f32.gmra.mxu0 %v6804
      %v6916 = vpop.f32.mrf.mxu0
      %v6917 = vadd.f32 0.0, %v6916
      %6918 = vmatmul.f32.gmra.mxu0 %v6807
      %v6919 = vpop.f32.mrf.mxu0
      %v6920 = vadd.f32 0.0, %v6919
      %6921 = vmatmul.f32.gmra.mxu0 %v6810
      %v6922 = vpop.f32.mrf.mxu0
      %v6923 = vadd.f32 0.0, %v6922
      %6924 = vmatmul.f32.gmra.mxu0 %v6813
      %v6925 = vpop.f32.mrf.mxu0
      %v6926 = vadd.f32 0.0, %v6925
      %6927 = vmatmul.f32.gmra.mxu0 %v6816
      %v6928 = vpop.f32.mrf.mxu0
      %v6929 = vadd.f32 0.0, %v6928
      %6930 = vmatmul.f32.gmra.mxu0 %v6819
      %v6931 = vpop.f32.mrf.mxu0
      %v6932 = vadd.f32 0.0, %v6931
      %6933 = vmatmul.f32.gmra.mxu0 %v6822
      %v6934 = vpop.f32.mrf.mxu0
      %v6935 = vadd.f32 0.0, %v6934
      %6936 = vmatmul.f32.gmra.mxu0 %v6825
      %v6937 = vpop.f32.mrf.mxu0
      %v6938 = vadd.f32 0.0, %v6937
      %6939 = vmatmul.f32.gmra.mxu0 %v6828
      %v6940 = vpop.f32.mrf.mxu0
      %v6941 = vadd.f32 0.0, %v6940
      %6942 = vmatmul.f32.gmra.mxu0 %v6831
      %v6943 = vpop.f32.mrf.mxu0
      %v6944 = vadd.f32 0.0, %v6943
      %6945 = vmatmul.f32.gmra.mxu0 %v6834
      %v6946 = vpop.f32.mrf.mxu0
      %v6947 = vadd.f32 0.0, %v6946
      %6948 = vmatmul.f32.gmra.mxu0 %v6837
      %v6949 = vpop.f32.mrf.mxu0
      %v6950 = vadd.f32 0.0, %v6949
      %6951 = vmatmul.f32.gmra.mxu0 %v6840
      %v6952 = vpop.f32.mrf.mxu0
      %v6953 = vadd.f32 0.0, %v6952
      %6954 = vmatmul.f32.gmra.mxu0 %v6843
      %v6955 = vpop.f32.mrf.mxu0
      %v6956 = vadd.f32 0.0, %v6955
      %6957 = vmatmul.f32.gmra.mxu0 %v6846
      %v6958 = vpop.f32.mrf.mxu0
      %v6959 = vadd.f32 0.0, %v6958
      %6960 = vmatmul.f32.gmra.mxu0 %v6849
      %v6961 = vpop.f32.mrf.mxu0
      %v6962 = vadd.f32 0.0, %v6961
      %6963 = vmatmul.f32.gmra.mxu0 %v6852
      %v6964 = vpop.f32.mrf.mxu0
      %v6965 = vadd.f32 0.0, %v6964
      %6966 = vmatmul.f32.gmra.mxu0 %v6855
      %v6967 = vpop.f32.mrf.mxu0
      %v6968 = vadd.f32 0.0, %v6967
      %6969 = vmatmul.f32.gmra.mxu0 %v6858
      %v6970 = vpop.f32.mrf.mxu0
      %v6971 = vadd.f32 0.0, %v6970
      %6972 = vmatmul.f32.gmra.mxu0 %v6861
      %v6973 = vpop.f32.mrf.mxu0
      %v6974 = vadd.f32 0.0, %v6973
      %6975 = vmatmul.f32.gmra.mxu0 %v6864
      %v6976 = vpop.f32.mrf.mxu0
      %v6977 = vadd.f32 0.0, %v6976
      %6978 = vmatmul.f32.gmra.mxu0 %v6867
      %v6979 = vpop.f32.mrf.mxu0
      %v6980 = vadd.f32 0.0, %v6979
      %6981 = vmatmul.f32.gmra.mxu0 %v6870
      %v6982 = vpop.f32.mrf.mxu0
      %v6983 = vadd.f32 0.0, %v6982
      %6984 = vmatmul.f32.gmra.mxu0 %v6873
      %v6985 = vpop.f32.mrf.mxu0
      %v6986 = vadd.f32 0.0, %v6985
      %6987 = vmatmul.f32.gmra.mxu0 %v6876
      %v6988 = vpop.f32.mrf.mxu0
      %v6989 = vadd.f32 0.0, %v6988
      %6990 = vmatmul.f32.gmra.mxu0 %v6879
      %v6991 = vpop.f32.mrf.mxu0
      %v6992 = vadd.f32 0.0, %v6991
      %6993 = vmatmul.f32.gmra.mxu0 %v6882
      %v6994 = vpop.f32.mrf.mxu0
      %v6995 = vadd.f32 0.0, %v6994
      %6996 = vmatmul.f32.gmra.mxu0 %v6885
      %v6997 = vpop.f32.mrf.mxu0
      %v6998 = vadd.f32 0.0, %v6997
      %6999 = vdwg.mxu0
      %v7000 = vadd.f32 %v6725, %v6905
      %v7001 = vadd.f32 %v6726, %v6908
      %v7002 = vadd.f32 %v6727, %v6911
      %v7003 = vadd.f32 %v6728, %v6914
      %v7004 = vadd.f32 %v6729, %v6917
      %v7005 = vadd.f32 %v6730, %v6920
      %v7006 = vadd.f32 %v6731, %v6923
      %v7007 = vadd.f32 %v6732, %v6926
      %v7008 = vadd.f32 %v6733, %v6929
      %v7009 = vadd.f32 %v6734, %v6932
      %v7010 = vadd.f32 %v6735, %v6935
      %v7011 = vadd.f32 %v6736, %v6938
      %v7012 = vadd.f32 %v6737, %v6941
      %v7013 = vadd.f32 %v6738, %v6944
      %v7014 = vadd.f32 %v6739, %v6947
      %v7015 = vadd.f32 %v6740, %v6950
      %v7016 = vadd.f32 %v6741, %v6953
      %v7017 = vadd.f32 %v6742, %v6956
      %v7018 = vadd.f32 %v6743, %v6959
      %v7019 = vadd.f32 %v6744, %v6962
      %v7020 = vadd.f32 %v6745, %v6965
      %v7021 = vadd.f32 %v6746, %v6968
      %v7022 = vadd.f32 %v6747, %v6971
      %v7023 = vadd.f32 %v6748, %v6974
      %v7024 = vadd.f32 %v6749, %v6977
      %v7025 = vadd.f32 %v6750, %v6980
      %v7026 = vadd.f32 %v6751, %v6983
      %v7027 = vadd.f32 %v6752, %v6986
      %v7028 = vadd.f32 %v6753, %v6989
      %v7029 = vadd.f32 %v6754, %v6992
      %v7030 = vadd.f32 %v6755, %v6995
      %v7031 = vadd.f32 %v6756, %v6998
      %s7032 = scalar_lea.vmem [#allocation4], 48
      %v7033 = vld [vmem:[%s7032] sm:$0xff]
      %v7034 = vld [vmem:[%s7032 + $0x8] sm:$0xff]
      %v7035 = vld [vmem:[%s7032 + $0x18] sm:$0xff]
      %v7036 = vld [vmem:[%s7032 + $0x20] sm:$0xff]
      %v7037 = vld [vmem:[%s7032 + $0x30] sm:$0xff]
      %v7038 = vld [vmem:[%s7032 + $0x38] sm:$0xff]
      %v7039 = vld [vmem:[%s7032 + $0x48] sm:$0xff]
      %v7040 = vld [vmem:[%s7032 + $0x50] sm:$0xff]
      %v7041 = vld [vmem:[%s7032 + $0x60] sm:$0xff]
      %v7042 = vld [vmem:[%s7032 + $0x68] sm:$0xff]
      %v7043 = vld [vmem:[%s7032 + $0x78] sm:$0xff]
      %v7044 = vld [vmem:[%s7032 + $0x80] sm:$0xff]
      %v7045 = vld [vmem:[%s7032 + $0x90] sm:$0xff]
      %v7046 = vld [vmem:[%s7032 + $0x98] sm:$0xff]
      %v7047 = vld [vmem:[%s7032 + $0xa8] sm:$0xff]
      %v7048 = vld [vmem:[%s7032 + $0xb0] sm:$0xff]
      %v7049 = vld [vmem:[%s7032 + $0xc0] sm:$0xff]
      %v7050 = vld [vmem:[%s7032 + $0xc8] sm:$0xff]
      %v7051 = vld [vmem:[%s7032 + $0xd8] sm:$0xff]
      %v7052 = vld [vmem:[%s7032 + $0xe0] sm:$0xff]
      %v7053 = vld [vmem:[%s7032 + $0xf0] sm:$0xff]
      %v7054 = vld [vmem:[%s7032 + $0xf8] sm:$0xff]
      %v7055 = vld [vmem:[%s7032 + $0x108] sm:$0xff]
      %v7056 = vld [vmem:[%s7032 + $0x110] sm:$0xff]
      %v7057 = vld [vmem:[%s7032 + $0x120] sm:$0xff]
      %v7058 = vld [vmem:[%s7032 + $0x128] sm:$0xff]
      %v7059 = vld [vmem:[%s7032 + $0x138] sm:$0xff]
      %v7060 = vld [vmem:[%s7032 + $0x140] sm:$0xff]
      %v7061 = vld [vmem:[%s7032 + $0x150] sm:$0xff]
      %v7062 = vld [vmem:[%s7032 + $0x158] sm:$0xff]
      %v7063 = vld [vmem:[%s7032 + $0x168] sm:$0xff]
      %v7064 = vld [vmem:[%s7032 + $0x170] sm:$0xff]
      %s7065 = scalar_lea.vmem %s3, 120
      %v7066 = vld [vmem:[%s7065] sm:$0xff]
      %v7068 = vsel %vm337, %v7033, 0
      %v7071 = vsel %vm337, %v7034, 0
      %v7074 = vsel %vm337, %v7035, 0
      %v7077 = vsel %vm337, %v7036, 0
      %v7080 = vsel %vm337, %v7037, 0
      %v7083 = vsel %vm337, %v7038, 0
      %v7086 = vsel %vm337, %v7039, 0
      %v7089 = vsel %vm337, %v7040, 0
      %v7092 = vsel %vm337, %v7041, 0
      %v7095 = vsel %vm337, %v7042, 0
      %v7098 = vsel %vm337, %v7043, 0
      %v7101 = vsel %vm337, %v7044, 0
      %v7104 = vsel %vm337, %v7045, 0
      %v7107 = vsel %vm337, %v7046, 0
      %v7110 = vsel %vm337, %v7047, 0
      %v7113 = vsel %vm337, %v7048, 0
      %v7116 = vsel %vm337, %v7049, 0
      %v7119 = vsel %vm337, %v7050, 0
      %v7122 = vsel %vm337, %v7051, 0
      %v7125 = vsel %vm337, %v7052, 0
      %v7128 = vsel %vm337, %v7053, 0
      %v7131 = vsel %vm337, %v7054, 0
      %v7134 = vsel %vm337, %v7055, 0
      %v7137 = vsel %vm337, %v7056, 0
      %v7140 = vsel %vm337, %v7057, 0
      %v7143 = vsel %vm337, %v7058, 0
      %v7146 = vsel %vm337, %v7059, 0
      %v7149 = vsel %vm337, %v7060, 0
      %v7152 = vsel %vm337, %v7061, 0
      %v7155 = vsel %vm337, %v7062, 0
      %v7158 = vsel %vm337, %v7063, 0
      %v7161 = vsel %vm337, %v7064, 0
      %7163 = vmatpush.msra.mxu0 0.0
      %7164 = vmatpush.msra.mxu0 0.0
      %7165 = vmatpush.msra.mxu0 0.0
      %7166 = vmatpush.msra.mxu0 0.0
      %7167 = vmatpush.msra.mxu0 0.0
      %7168 = vmatpush.msra.mxu0 0.0
      %7169 = vmatpush.msra.mxu0 0.0
      %7170 = vmatpush.msra.mxu0 0.0
      %7171 = vmatpush.msra.mxu0 0.0
      %7172 = vmatpush.msra.mxu0 0.0
      %7173 = vmatpush.msra.mxu0 0.0
      %7174 = vmatpush.msra.mxu0 0.0
      %7175 = vmatpush.msra.mxu0 0.0
      %7176 = vmatpush.msra.mxu0 0.0
      %7177 = vmatpush.msra.mxu0 0.0
      %7178 = vmatpush.msra.mxu0 %v7066
      %7179 = vmatmul.f32.gmra.mxu0 %v7068
      %v7180 = vpop.f32.mrf.mxu0
      %v7181 = vadd.f32 0.0, %v7180
      %7182 = vmatmul.f32.gmra.mxu0 %v7071
      %v7183 = vpop.f32.mrf.mxu0
      %v7184 = vadd.f32 0.0, %v7183
      %7185 = vmatmul.f32.gmra.mxu0 %v7074
      %v7186 = vpop.f32.mrf.mxu0
      %v7187 = vadd.f32 0.0, %v7186
      %7188 = vmatmul.f32.gmra.mxu0 %v7077
      %v7189 = vpop.f32.mrf.mxu0
      %v7190 = vadd.f32 0.0, %v7189
      %7191 = vmatmul.f32.gmra.mxu0 %v7080
      %v7192 = vpop.f32.mrf.mxu0
      %v7193 = vadd.f32 0.0, %v7192
      %7194 = vmatmul.f32.gmra.mxu0 %v7083
      %v7195 = vpop.f32.mrf.mxu0
      %v7196 = vadd.f32 0.0, %v7195
      %7197 = vmatmul.f32.gmra.mxu0 %v7086
      %v7198 = vpop.f32.mrf.mxu0
      %v7199 = vadd.f32 0.0, %v7198
      %7200 = vmatmul.f32.gmra.mxu0 %v7089
      %v7201 = vpop.f32.mrf.mxu0
      %v7202 = vadd.f32 0.0, %v7201
      %7203 = vmatmul.f32.gmra.mxu0 %v7092
      %v7204 = vpop.f32.mrf.mxu0
      %v7205 = vadd.f32 0.0, %v7204
      %7206 = vmatmul.f32.gmra.mxu0 %v7095
      %v7207 = vpop.f32.mrf.mxu0
      %v7208 = vadd.f32 0.0, %v7207
      %7209 = vmatmul.f32.gmra.mxu0 %v7098
      %v7210 = vpop.f32.mrf.mxu0
      %v7211 = vadd.f32 0.0, %v7210
      %7212 = vmatmul.f32.gmra.mxu0 %v7101
      %v7213 = vpop.f32.mrf.mxu0
      %v7214 = vadd.f32 0.0, %v7213
      %7215 = vmatmul.f32.gmra.mxu0 %v7104
      %v7216 = vpop.f32.mrf.mxu0
      %v7217 = vadd.f32 0.0, %v7216
      %7218 = vmatmul.f32.gmra.mxu0 %v7107
      %v7219 = vpop.f32.mrf.mxu0
      %v7220 = vadd.f32 0.0, %v7219
      %7221 = vmatmul.f32.gmra.mxu0 %v7110
      %v7222 = vpop.f32.mrf.mxu0
      %v7223 = vadd.f32 0.0, %v7222
      %7224 = vmatmul.f32.gmra.mxu0 %v7113
      %v7225 = vpop.f32.mrf.mxu0
      %v7226 = vadd.f32 0.0, %v7225
      %7227 = vmatmul.f32.gmra.mxu0 %v7116
      %v7228 = vpop.f32.mrf.mxu0
      %v7229 = vadd.f32 0.0, %v7228
      %7230 = vmatmul.f32.gmra.mxu0 %v7119
      %v7231 = vpop.f32.mrf.mxu0
      %v7232 = vadd.f32 0.0, %v7231
      %7233 = vmatmul.f32.gmra.mxu0 %v7122
      %v7234 = vpop.f32.mrf.mxu0
      %v7235 = vadd.f32 0.0, %v7234
      %7236 = vmatmul.f32.gmra.mxu0 %v7125
      %v7237 = vpop.f32.mrf.mxu0
      %v7238 = vadd.f32 0.0, %v7237
      %7239 = vmatmul.f32.gmra.mxu0 %v7128
      %v7240 = vpop.f32.mrf.mxu0
      %v7241 = vadd.f32 0.0, %v7240
      %7242 = vmatmul.f32.gmra.mxu0 %v7131
      %v7243 = vpop.f32.mrf.mxu0
      %v7244 = vadd.f32 0.0, %v7243
      %7245 = vmatmul.f32.gmra.mxu0 %v7134
      %v7246 = vpop.f32.mrf.mxu0
      %v7247 = vadd.f32 0.0, %v7246
      %7248 = vmatmul.f32.gmra.mxu0 %v7137
      %v7249 = vpop.f32.mrf.mxu0
      %v7250 = vadd.f32 0.0, %v7249
      %7251 = vmatmul.f32.gmra.mxu0 %v7140
      %v7252 = vpop.f32.mrf.mxu0
      %v7253 = vadd.f32 0.0, %v7252
      %7254 = vmatmul.f32.gmra.mxu0 %v7143
      %v7255 = vpop.f32.mrf.mxu0
      %v7256 = vadd.f32 0.0, %v7255
      %7257 = vmatmul.f32.gmra.mxu0 %v7146
      %v7258 = vpop.f32.mrf.mxu0
      %v7259 = vadd.f32 0.0, %v7258
      %7260 = vmatmul.f32.gmra.mxu0 %v7149
      %v7261 = vpop.f32.mrf.mxu0
      %v7262 = vadd.f32 0.0, %v7261
      %7263 = vmatmul.f32.gmra.mxu0 %v7152
      %v7264 = vpop.f32.mrf.mxu0
      %v7265 = vadd.f32 0.0, %v7264
      %7266 = vmatmul.f32.gmra.mxu0 %v7155
      %v7267 = vpop.f32.mrf.mxu0
      %v7268 = vadd.f32 0.0, %v7267
      %7269 = vmatmul.f32.gmra.mxu0 %v7158
      %v7270 = vpop.f32.mrf.mxu0
      %v7271 = vadd.f32 0.0, %v7270
      %7272 = vmatmul.f32.gmra.mxu0 %v7161
      %v7273 = vpop.f32.mrf.mxu0
      %v7274 = vadd.f32 0.0, %v7273
      %7275 = vdwg.mxu0
      %v7276 = vadd.f32 %v7000, %v7181
      %v7277 = vadd.f32 %v7001, %v7184
      %v7278 = vadd.f32 %v7002, %v7187
      %v7279 = vadd.f32 %v7003, %v7190
      %v7280 = vadd.f32 %v7004, %v7193
      %v7281 = vadd.f32 %v7005, %v7196
      %v7282 = vadd.f32 %v7006, %v7199
      %v7283 = vadd.f32 %v7007, %v7202
      %v7284 = vadd.f32 %v7008, %v7205
      %v7285 = vadd.f32 %v7009, %v7208
      %v7286 = vadd.f32 %v7010, %v7211
      %v7287 = vadd.f32 %v7011, %v7214
      %v7288 = vadd.f32 %v7012, %v7217
      %v7289 = vadd.f32 %v7013, %v7220
      %v7290 = vadd.f32 %v7014, %v7223
      %v7291 = vadd.f32 %v7015, %v7226
      %v7292 = vadd.f32 %v7016, %v7229
      %v7293 = vadd.f32 %v7017, %v7232
      %v7294 = vadd.f32 %v7018, %v7235
      %v7295 = vadd.f32 %v7019, %v7238
      %v7296 = vadd.f32 %v7020, %v7241
      %v7297 = vadd.f32 %v7021, %v7244
      %v7298 = vadd.f32 %v7022, %v7247
      %v7299 = vadd.f32 %v7023, %v7250
      %v7300 = vadd.f32 %v7024, %v7253
      %v7301 = vadd.f32 %v7025, %v7256
      %v7302 = vadd.f32 %v7026, %v7259
      %v7303 = vadd.f32 %v7027, %v7262
      %v7304 = vadd.f32 %v7028, %v7265
      %v7305 = vadd.f32 %v7029, %v7268
      %v7306 = vadd.f32 %v7030, %v7271
      %v7307 = vadd.f32 %v7031, %v7274
      %v7308 = vld [vmem:[%s7032 + $0x1] sm:$0xff]
      %v7309 = vld [vmem:[%s7032 + $0x9] sm:$0xff]
      %v7310 = vld [vmem:[%s7032 + $0x19] sm:$0xff]
      %v7311 = vld [vmem:[%s7032 + $0x21] sm:$0xff]
      %v7312 = vld [vmem:[%s7032 + $0x31] sm:$0xff]
      %v7313 = vld [vmem:[%s7032 + $0x39] sm:$0xff]
      %v7314 = vld [vmem:[%s7032 + $0x49] sm:$0xff]
      %v7315 = vld [vmem:[%s7032 + $0x51] sm:$0xff]
      %v7316 = vld [vmem:[%s7032 + $0x61] sm:$0xff]
      %v7317 = vld [vmem:[%s7032 + $0x69] sm:$0xff]
      %v7318 = vld [vmem:[%s7032 + $0x79] sm:$0xff]
      %v7319 = vld [vmem:[%s7032 + $0x81] sm:$0xff]
      %v7320 = vld [vmem:[%s7032 + $0x91] sm:$0xff]
      %v7321 = vld [vmem:[%s7032 + $0x99] sm:$0xff]
      %v7322 = vld [vmem:[%s7032 + $0xa9] sm:$0xff]
      %v7323 = vld [vmem:[%s7032 + $0xb1] sm:$0xff]
      %v7324 = vld [vmem:[%s7032 + $0xc1] sm:$0xff]
      %v7325 = vld [vmem:[%s7032 + $0xc9] sm:$0xff]
      %v7326 = vld [vmem:[%s7032 + $0xd9] sm:$0xff]
      %v7327 = vld [vmem:[%s7032 + $0xe1] sm:$0xff]
      %v7328 = vld [vmem:[%s7032 + $0xf1] sm:$0xff]
      %v7329 = vld [vmem:[%s7032 + $0xf9] sm:$0xff]
      %v7330 = vld [vmem:[%s7032 + $0x109] sm:$0xff]
      %v7331 = vld [vmem:[%s7032 + $0x111] sm:$0xff]
      %v7332 = vld [vmem:[%s7032 + $0x121] sm:$0xff]
      %v7333 = vld [vmem:[%s7032 + $0x129] sm:$0xff]
      %v7334 = vld [vmem:[%s7032 + $0x139] sm:$0xff]
      %v7335 = vld [vmem:[%s7032 + $0x141] sm:$0xff]
      %v7336 = vld [vmem:[%s7032 + $0x151] sm:$0xff]
      %v7337 = vld [vmem:[%s7032 + $0x159] sm:$0xff]
      %v7338 = vld [vmem:[%s7032 + $0x169] sm:$0xff]
      %v7339 = vld [vmem:[%s7032 + $0x171] sm:$0xff]
      %s7340 = scalar_lea.vmem %s3, 128
      %v7341 = vld [vmem:[%s7340] sm:$0xff]
      %v7343 = vsel %vm337, %v7308, 0
      %v7346 = vsel %vm337, %v7309, 0
      %v7349 = vsel %vm337, %v7310, 0
      %v7352 = vsel %vm337, %v7311, 0
      %v7355 = vsel %vm337, %v7312, 0
      %v7358 = vsel %vm337, %v7313, 0
      %v7361 = vsel %vm337, %v7314, 0
      %v7364 = vsel %vm337, %v7315, 0
      %v7367 = vsel %vm337, %v7316, 0
      %v7370 = vsel %vm337, %v7317, 0
      %v7373 = vsel %vm337, %v7318, 0
      %v7376 = vsel %vm337, %v7319, 0
      %v7379 = vsel %vm337, %v7320, 0
      %v7382 = vsel %vm337, %v7321, 0
      %v7385 = vsel %vm337, %v7322, 0
      %v7388 = vsel %vm337, %v7323, 0
      %v7391 = vsel %vm337, %v7324, 0
      %v7394 = vsel %vm337, %v7325, 0
      %v7397 = vsel %vm337, %v7326, 0
      %v7400 = vsel %vm337, %v7327, 0
      %v7403 = vsel %vm337, %v7328, 0
      %v7406 = vsel %vm337, %v7329, 0
      %v7409 = vsel %vm337, %v7330, 0
      %v7412 = vsel %vm337, %v7331, 0
      %v7415 = vsel %vm337, %v7332, 0
      %v7418 = vsel %vm337, %v7333, 0
      %v7421 = vsel %vm337, %v7334, 0
      %v7424 = vsel %vm337, %v7335, 0
      %v7427 = vsel %vm337, %v7336, 0
      %v7430 = vsel %vm337, %v7337, 0
      %v7433 = vsel %vm337, %v7338, 0
      %v7436 = vsel %vm337, %v7339, 0
      %7438 = vmatpush.msra.mxu0 0.0
      %7439 = vmatpush.msra.mxu0 0.0
      %7440 = vmatpush.msra.mxu0 0.0
      %7441 = vmatpush.msra.mxu0 0.0
      %7442 = vmatpush.msra.mxu0 0.0
      %7443 = vmatpush.msra.mxu0 0.0
      %7444 = vmatpush.msra.mxu0 0.0
      %7445 = vmatpush.msra.mxu0 0.0
      %7446 = vmatpush.msra.mxu0 0.0
      %7447 = vmatpush.msra.mxu0 0.0
      %7448 = vmatpush.msra.mxu0 0.0
      %7449 = vmatpush.msra.mxu0 0.0
      %7450 = vmatpush.msra.mxu0 0.0
      %7451 = vmatpush.msra.mxu0 0.0
      %7452 = vmatpush.msra.mxu0 0.0
      %7453 = vmatpush.msra.mxu0 %v7341
      %7454 = vmatmul.f32.gmra.mxu0 %v7343
      %v7455 = vpop.f32.mrf.mxu0
      %v7456 = vadd.f32 0.0, %v7455
      %7457 = vmatmul.f32.gmra.mxu0 %v7346
      %v7458 = vpop.f32.mrf.mxu0
      %v7459 = vadd.f32 0.0, %v7458
      %7460 = vmatmul.f32.gmra.mxu0 %v7349
      %v7461 = vpop.f32.mrf.mxu0
      %v7462 = vadd.f32 0.0, %v7461
      %7463 = vmatmul.f32.gmra.mxu0 %v7352
      %v7464 = vpop.f32.mrf.mxu0
      %v7465 = vadd.f32 0.0, %v7464
      %7466 = vmatmul.f32.gmra.mxu0 %v7355
      %v7467 = vpop.f32.mrf.mxu0
      %v7468 = vadd.f32 0.0, %v7467
      %7469 = vmatmul.f32.gmra.mxu0 %v7358
      %v7470 = vpop.f32.mrf.mxu0
      %v7471 = vadd.f32 0.0, %v7470
      %7472 = vmatmul.f32.gmra.mxu0 %v7361
      %v7473 = vpop.f32.mrf.mxu0
      %v7474 = vadd.f32 0.0, %v7473
      %7475 = vmatmul.f32.gmra.mxu0 %v7364
      %v7476 = vpop.f32.mrf.mxu0
      %v7477 = vadd.f32 0.0, %v7476
      %7478 = vmatmul.f32.gmra.mxu0 %v7367
      %v7479 = vpop.f32.mrf.mxu0
      %v7480 = vadd.f32 0.0, %v7479
      %7481 = vmatmul.f32.gmra.mxu0 %v7370
      %v7482 = vpop.f32.mrf.mxu0
      %v7483 = vadd.f32 0.0, %v7482
      %7484 = vmatmul.f32.gmra.mxu0 %v7373
      %v7485 = vpop.f32.mrf.mxu0
      %v7486 = vadd.f32 0.0, %v7485
      %7487 = vmatmul.f32.gmra.mxu0 %v7376
      %v7488 = vpop.f32.mrf.mxu0
      %v7489 = vadd.f32 0.0, %v7488
      %7490 = vmatmul.f32.gmra.mxu0 %v7379
      %v7491 = vpop.f32.mrf.mxu0
      %v7492 = vadd.f32 0.0, %v7491
      %7493 = vmatmul.f32.gmra.mxu0 %v7382
      %v7494 = vpop.f32.mrf.mxu0
      %v7495 = vadd.f32 0.0, %v7494
      %7496 = vmatmul.f32.gmra.mxu0 %v7385
      %v7497 = vpop.f32.mrf.mxu0
      %v7498 = vadd.f32 0.0, %v7497
      %7499 = vmatmul.f32.gmra.mxu0 %v7388
      %v7500 = vpop.f32.mrf.mxu0
      %v7501 = vadd.f32 0.0, %v7500
      %7502 = vmatmul.f32.gmra.mxu0 %v7391
      %v7503 = vpop.f32.mrf.mxu0
      %v7504 = vadd.f32 0.0, %v7503
      %7505 = vmatmul.f32.gmra.mxu0 %v7394
      %v7506 = vpop.f32.mrf.mxu0
      %v7507 = vadd.f32 0.0, %v7506
      %7508 = vmatmul.f32.gmra.mxu0 %v7397
      %v7509 = vpop.f32.mrf.mxu0
      %v7510 = vadd.f32 0.0, %v7509
      %7511 = vmatmul.f32.gmra.mxu0 %v7400
      %v7512 = vpop.f32.mrf.mxu0
      %v7513 = vadd.f32 0.0, %v7512
      %7514 = vmatmul.f32.gmra.mxu0 %v7403
      %v7515 = vpop.f32.mrf.mxu0
      %v7516 = vadd.f32 0.0, %v7515
      %7517 = vmatmul.f32.gmra.mxu0 %v7406
      %v7518 = vpop.f32.mrf.mxu0
      %v7519 = vadd.f32 0.0, %v7518
      %7520 = vmatmul.f32.gmra.mxu0 %v7409
      %v7521 = vpop.f32.mrf.mxu0
      %v7522 = vadd.f32 0.0, %v7521
      %7523 = vmatmul.f32.gmra.mxu0 %v7412
      %v7524 = vpop.f32.mrf.mxu0
      %v7525 = vadd.f32 0.0, %v7524
      %7526 = vmatmul.f32.gmra.mxu0 %v7415
      %v7527 = vpop.f32.mrf.mxu0
      %v7528 = vadd.f32 0.0, %v7527
      %7529 = vmatmul.f32.gmra.mxu0 %v7418
      %v7530 = vpop.f32.mrf.mxu0
      %v7531 = vadd.f32 0.0, %v7530
      %7532 = vmatmul.f32.gmra.mxu0 %v7421
      %v7533 = vpop.f32.mrf.mxu0
      %v7534 = vadd.f32 0.0, %v7533
      %7535 = vmatmul.f32.gmra.mxu0 %v7424
      %v7536 = vpop.f32.mrf.mxu0
      %v7537 = vadd.f32 0.0, %v7536
      %7538 = vmatmul.f32.gmra.mxu0 %v7427
      %v7539 = vpop.f32.mrf.mxu0
      %v7540 = vadd.f32 0.0, %v7539
      %7541 = vmatmul.f32.gmra.mxu0 %v7430
      %v7542 = vpop.f32.mrf.mxu0
      %v7543 = vadd.f32 0.0, %v7542
      %7544 = vmatmul.f32.gmra.mxu0 %v7433
      %v7545 = vpop.f32.mrf.mxu0
      %v7546 = vadd.f32 0.0, %v7545
      %7547 = vmatmul.f32.gmra.mxu0 %v7436
      %v7548 = vpop.f32.mrf.mxu0
      %v7549 = vadd.f32 0.0, %v7548
      %7550 = vdwg.mxu0
      %v7551 = vadd.f32 %v7276, %v7456
      %v7552 = vadd.f32 %v7277, %v7459
      %v7553 = vadd.f32 %v7278, %v7462
      %v7554 = vadd.f32 %v7279, %v7465
      %v7555 = vadd.f32 %v7280, %v7468
      %v7556 = vadd.f32 %v7281, %v7471
      %v7557 = vadd.f32 %v7282, %v7474
      %v7558 = vadd.f32 %v7283, %v7477
      %v7559 = vadd.f32 %v7284, %v7480
      %v7560 = vadd.f32 %v7285, %v7483
      %v7561 = vadd.f32 %v7286, %v7486
      %v7562 = vadd.f32 %v7287, %v7489
      %v7563 = vadd.f32 %v7288, %v7492
      %v7564 = vadd.f32 %v7289, %v7495
      %v7565 = vadd.f32 %v7290, %v7498
      %v7566 = vadd.f32 %v7291, %v7501
      %v7567 = vadd.f32 %v7292, %v7504
      %v7568 = vadd.f32 %v7293, %v7507
      %v7569 = vadd.f32 %v7294, %v7510
      %v7570 = vadd.f32 %v7295, %v7513
      %v7571 = vadd.f32 %v7296, %v7516
      %v7572 = vadd.f32 %v7297, %v7519
      %v7573 = vadd.f32 %v7298, %v7522
      %v7574 = vadd.f32 %v7299, %v7525
      %v7575 = vadd.f32 %v7300, %v7528
      %v7576 = vadd.f32 %v7301, %v7531
      %v7577 = vadd.f32 %v7302, %v7534
      %v7578 = vadd.f32 %v7303, %v7537
      %v7579 = vadd.f32 %v7304, %v7540
      %v7580 = vadd.f32 %v7305, %v7543
      %v7581 = vadd.f32 %v7306, %v7546
      %v7582 = vadd.f32 %v7307, %v7549
      %v7583 = vld [vmem:[%s7032 + $0x2] sm:$0xff]
      %v7584 = vld [vmem:[%s7032 + $0xa] sm:$0xff]
      %v7585 = vld [vmem:[%s7032 + $0x1a] sm:$0xff]
      %v7586 = vld [vmem:[%s7032 + $0x22] sm:$0xff]
      %v7587 = vld [vmem:[%s7032 + $0x32] sm:$0xff]
      %v7588 = vld [vmem:[%s7032 + $0x3a] sm:$0xff]
      %v7589 = vld [vmem:[%s7032 + $0x4a] sm:$0xff]
      %v7590 = vld [vmem:[%s7032 + $0x52] sm:$0xff]
      %v7591 = vld [vmem:[%s7032 + $0x62] sm:$0xff]
      %v7592 = vld [vmem:[%s7032 + $0x6a] sm:$0xff]
      %v7593 = vld [vmem:[%s7032 + $0x7a] sm:$0xff]
      %v7594 = vld [vmem:[%s7032 + $0x82] sm:$0xff]
      %v7595 = vld [vmem:[%s7032 + $0x92] sm:$0xff]
      %v7596 = vld [vmem:[%s7032 + $0x9a] sm:$0xff]
      %v7597 = vld [vmem:[%s7032 + $0xaa] sm:$0xff]
      %v7598 = vld [vmem:[%s7032 + $0xb2] sm:$0xff]
      %v7599 = vld [vmem:[%s7032 + $0xc2] sm:$0xff]
      %v7600 = vld [vmem:[%s7032 + $0xca] sm:$0xff]
      %v7601 = vld [vmem:[%s7032 + $0xda] sm:$0xff]
      %v7602 = vld [vmem:[%s7032 + $0xe2] sm:$0xff]
      %v7603 = vld [vmem:[%s7032 + $0xf2] sm:$0xff]
      %v7604 = vld [vmem:[%s7032 + $0xfa] sm:$0xff]
      %v7605 = vld [vmem:[%s7032 + $0x10a] sm:$0xff]
      %v7606 = vld [vmem:[%s7032 + $0x112] sm:$0xff]
      %v7607 = vld [vmem:[%s7032 + $0x122] sm:$0xff]
      %v7608 = vld [vmem:[%s7032 + $0x12a] sm:$0xff]
      %v7609 = vld [vmem:[%s7032 + $0x13a] sm:$0xff]
      %v7610 = vld [vmem:[%s7032 + $0x142] sm:$0xff]
      %v7611 = vld [vmem:[%s7032 + $0x152] sm:$0xff]
      %v7612 = vld [vmem:[%s7032 + $0x15a] sm:$0xff]
      %v7613 = vld [vmem:[%s7032 + $0x16a] sm:$0xff]
      %v7614 = vld [vmem:[%s7032 + $0x172] sm:$0xff]
      %s7615 = scalar_lea.vmem %s3, 136
      %v7616 = vld [vmem:[%s7615] sm:$0xff]
      %v7618 = vsel %vm337, %v7583, 0
      %v7621 = vsel %vm337, %v7584, 0
      %v7624 = vsel %vm337, %v7585, 0
      %v7627 = vsel %vm337, %v7586, 0
      %v7630 = vsel %vm337, %v7587, 0
      %v7633 = vsel %vm337, %v7588, 0
      %v7636 = vsel %vm337, %v7589, 0
      %v7639 = vsel %vm337, %v7590, 0
      %v7642 = vsel %vm337, %v7591, 0
      %v7645 = vsel %vm337, %v7592, 0
      %v7648 = vsel %vm337, %v7593, 0
      %v7651 = vsel %vm337, %v7594, 0
      %v7654 = vsel %vm337, %v7595, 0
      %v7657 = vsel %vm337, %v7596, 0
      %v7660 = vsel %vm337, %v7597, 0
      %v7663 = vsel %vm337, %v7598, 0
      %v7666 = vsel %vm337, %v7599, 0
      %v7669 = vsel %vm337, %v7600, 0
      %v7672 = vsel %vm337, %v7601, 0
      %v7675 = vsel %vm337, %v7602, 0
      %v7678 = vsel %vm337, %v7603, 0
      %v7681 = vsel %vm337, %v7604, 0
      %v7684 = vsel %vm337, %v7605, 0
      %v7687 = vsel %vm337, %v7606, 0
      %v7690 = vsel %vm337, %v7607, 0
      %v7693 = vsel %vm337, %v7608, 0
      %v7696 = vsel %vm337, %v7609, 0
      %v7699 = vsel %vm337, %v7610, 0
      %v7702 = vsel %vm337, %v7611, 0
      %v7705 = vsel %vm337, %v7612, 0
      %v7708 = vsel %vm337, %v7613, 0
      %v7711 = vsel %vm337, %v7614, 0
      %7713 = vmatpush.msra.mxu0 0.0
      %7714 = vmatpush.msra.mxu0 0.0
      %7715 = vmatpush.msra.mxu0 0.0
      %7716 = vmatpush.msra.mxu0 0.0
      %7717 = vmatpush.msra.mxu0 0.0
      %7718 = vmatpush.msra.mxu0 0.0
      %7719 = vmatpush.msra.mxu0 0.0
      %7720 = vmatpush.msra.mxu0 0.0
      %7721 = vmatpush.msra.mxu0 0.0
      %7722 = vmatpush.msra.mxu0 0.0
      %7723 = vmatpush.msra.mxu0 0.0
      %7724 = vmatpush.msra.mxu0 0.0
      %7725 = vmatpush.msra.mxu0 0.0
      %7726 = vmatpush.msra.mxu0 0.0
      %7727 = vmatpush.msra.mxu0 0.0
      %7728 = vmatpush.msra.mxu0 %v7616
      %7729 = vmatmul.f32.gmra.mxu0 %v7618
      %v7730 = vpop.f32.mrf.mxu0
      %v7731 = vadd.f32 0.0, %v7730
      %7732 = vmatmul.f32.gmra.mxu0 %v7621
      %v7733 = vpop.f32.mrf.mxu0
      %v7734 = vadd.f32 0.0, %v7733
      %7735 = vmatmul.f32.gmra.mxu0 %v7624
      %v7736 = vpop.f32.mrf.mxu0
      %v7737 = vadd.f32 0.0, %v7736
      %7738 = vmatmul.f32.gmra.mxu0 %v7627
      %v7739 = vpop.f32.mrf.mxu0
      %v7740 = vadd.f32 0.0, %v7739
      %7741 = vmatmul.f32.gmra.mxu0 %v7630
      %v7742 = vpop.f32.mrf.mxu0
      %v7743 = vadd.f32 0.0, %v7742
      %7744 = vmatmul.f32.gmra.mxu0 %v7633
      %v7745 = vpop.f32.mrf.mxu0
      %v7746 = vadd.f32 0.0, %v7745
      %7747 = vmatmul.f32.gmra.mxu0 %v7636
      %v7748 = vpop.f32.mrf.mxu0
      %v7749 = vadd.f32 0.0, %v7748
      %7750 = vmatmul.f32.gmra.mxu0 %v7639
      %v7751 = vpop.f32.mrf.mxu0
      %v7752 = vadd.f32 0.0, %v7751
      %7753 = vmatmul.f32.gmra.mxu0 %v7642
      %v7754 = vpop.f32.mrf.mxu0
      %v7755 = vadd.f32 0.0, %v7754
      %7756 = vmatmul.f32.gmra.mxu0 %v7645
      %v7757 = vpop.f32.mrf.mxu0
      %v7758 = vadd.f32 0.0, %v7757
      %7759 = vmatmul.f32.gmra.mxu0 %v7648
      %v7760 = vpop.f32.mrf.mxu0
      %v7761 = vadd.f32 0.0, %v7760
      %7762 = vmatmul.f32.gmra.mxu0 %v7651
      %v7763 = vpop.f32.mrf.mxu0
      %v7764 = vadd.f32 0.0, %v7763
      %7765 = vmatmul.f32.gmra.mxu0 %v7654
      %v7766 = vpop.f32.mrf.mxu0
      %v7767 = vadd.f32 0.0, %v7766
      %7768 = vmatmul.f32.gmra.mxu0 %v7657
      %v7769 = vpop.f32.mrf.mxu0
      %v7770 = vadd.f32 0.0, %v7769
      %7771 = vmatmul.f32.gmra.mxu0 %v7660
      %v7772 = vpop.f32.mrf.mxu0
      %v7773 = vadd.f32 0.0, %v7772
      %7774 = vmatmul.f32.gmra.mxu0 %v7663
      %v7775 = vpop.f32.mrf.mxu0
      %v7776 = vadd.f32 0.0, %v7775
      %7777 = vmatmul.f32.gmra.mxu0 %v7666
      %v7778 = vpop.f32.mrf.mxu0
      %v7779 = vadd.f32 0.0, %v7778
      %7780 = vmatmul.f32.gmra.mxu0 %v7669
      %v7781 = vpop.f32.mrf.mxu0
      %v7782 = vadd.f32 0.0, %v7781
      %7783 = vmatmul.f32.gmra.mxu0 %v7672
      %v7784 = vpop.f32.mrf.mxu0
      %v7785 = vadd.f32 0.0, %v7784
      %7786 = vmatmul.f32.gmra.mxu0 %v7675
      %v7787 = vpop.f32.mrf.mxu0
      %v7788 = vadd.f32 0.0, %v7787
      %7789 = vmatmul.f32.gmra.mxu0 %v7678
      %v7790 = vpop.f32.mrf.mxu0
      %v7791 = vadd.f32 0.0, %v7790
      %7792 = vmatmul.f32.gmra.mxu0 %v7681
      %v7793 = vpop.f32.mrf.mxu0
      %v7794 = vadd.f32 0.0, %v7793
      %7795 = vmatmul.f32.gmra.mxu0 %v7684
      %v7796 = vpop.f32.mrf.mxu0
      %v7797 = vadd.f32 0.0, %v7796
      %7798 = vmatmul.f32.gmra.mxu0 %v7687
      %v7799 = vpop.f32.mrf.mxu0
      %v7800 = vadd.f32 0.0, %v7799
      %7801 = vmatmul.f32.gmra.mxu0 %v7690
      %v7802 = vpop.f32.mrf.mxu0
      %v7803 = vadd.f32 0.0, %v7802
      %7804 = vmatmul.f32.gmra.mxu0 %v7693
      %v7805 = vpop.f32.mrf.mxu0
      %v7806 = vadd.f32 0.0, %v7805
      %7807 = vmatmul.f32.gmra.mxu0 %v7696
      %v7808 = vpop.f32.mrf.mxu0
      %v7809 = vadd.f32 0.0, %v7808
      %7810 = vmatmul.f32.gmra.mxu0 %v7699
      %v7811 = vpop.f32.mrf.mxu0
      %v7812 = vadd.f32 0.0, %v7811
      %7813 = vmatmul.f32.gmra.mxu0 %v7702
      %v7814 = vpop.f32.mrf.mxu0
      %v7815 = vadd.f32 0.0, %v7814
      %7816 = vmatmul.f32.gmra.mxu0 %v7705
      %v7817 = vpop.f32.mrf.mxu0
      %v7818 = vadd.f32 0.0, %v7817
      %7819 = vmatmul.f32.gmra.mxu0 %v7708
      %v7820 = vpop.f32.mrf.mxu0
      %v7821 = vadd.f32 0.0, %v7820
      %7822 = vmatmul.f32.gmra.mxu0 %v7711
      %v7823 = vpop.f32.mrf.mxu0
      %v7824 = vadd.f32 0.0, %v7823
      %7825 = vdwg.mxu0
      %v7826 = vadd.f32 %v7551, %v7731
      %v7827 = vadd.f32 %v7552, %v7734
      %v7828 = vadd.f32 %v7553, %v7737
      %v7829 = vadd.f32 %v7554, %v7740
      %v7830 = vadd.f32 %v7555, %v7743
      %v7831 = vadd.f32 %v7556, %v7746
      %v7832 = vadd.f32 %v7557, %v7749
      %v7833 = vadd.f32 %v7558, %v7752
      %v7834 = vadd.f32 %v7559, %v7755
      %v7835 = vadd.f32 %v7560, %v7758
      %v7836 = vadd.f32 %v7561, %v7761
      %v7837 = vadd.f32 %v7562, %v7764
      %v7838 = vadd.f32 %v7563, %v7767
      %v7839 = vadd.f32 %v7564, %v7770
      %v7840 = vadd.f32 %v7565, %v7773
      %v7841 = vadd.f32 %v7566, %v7776
      %v7842 = vadd.f32 %v7567, %v7779
      %v7843 = vadd.f32 %v7568, %v7782
      %v7844 = vadd.f32 %v7569, %v7785
      %v7845 = vadd.f32 %v7570, %v7788
      %v7846 = vadd.f32 %v7571, %v7791
      %v7847 = vadd.f32 %v7572, %v7794
      %v7848 = vadd.f32 %v7573, %v7797
      %v7849 = vadd.f32 %v7574, %v7800
      %v7850 = vadd.f32 %v7575, %v7803
      %v7851 = vadd.f32 %v7576, %v7806
      %v7852 = vadd.f32 %v7577, %v7809
      %v7853 = vadd.f32 %v7578, %v7812
      %v7854 = vadd.f32 %v7579, %v7815
      %v7855 = vadd.f32 %v7580, %v7818
      %v7856 = vadd.f32 %v7581, %v7821
      %v7857 = vadd.f32 %v7582, %v7824
      %v7858 = vld [vmem:[%s4 + $0x1] sm:$0x1]
      %v7859 = vperm.slane %v7858, 0
      %v7860 = vadd.f32 %v7826, %v7859
      %v7861 = vadd.f32 %v7827, %v7859
      %v7862 = vadd.f32 %v7828, %v7859
      %v7863 = vadd.f32 %v7829, %v7859
      %v7864 = vadd.f32 %v7830, %v7859
      %v7865 = vadd.f32 %v7831, %v7859
      %v7866 = vadd.f32 %v7832, %v7859
      %v7867 = vadd.f32 %v7833, %v7859
      %v7868 = vadd.f32 %v7834, %v7859
      %v7869 = vadd.f32 %v7835, %v7859
      %v7870 = vadd.f32 %v7836, %v7859
      %v7871 = vadd.f32 %v7837, %v7859
      %v7872 = vadd.f32 %v7838, %v7859
      %v7873 = vadd.f32 %v7839, %v7859
      %v7874 = vadd.f32 %v7840, %v7859
      %v7875 = vadd.f32 %v7841, %v7859
      %v7876 = vadd.f32 %v7842, %v7859
      %v7877 = vadd.f32 %v7843, %v7859
      %v7878 = vadd.f32 %v7844, %v7859
      %v7879 = vadd.f32 %v7845, %v7859
      %v7880 = vadd.f32 %v7846, %v7859
      %v7881 = vadd.f32 %v7847, %v7859
      %v7882 = vadd.f32 %v7848, %v7859
      %v7883 = vadd.f32 %v7849, %v7859
      %v7884 = vadd.f32 %v7850, %v7859
      %v7885 = vadd.f32 %v7851, %v7859
      %v7886 = vadd.f32 %v7852, %v7859
      %v7887 = vadd.f32 %v7853, %v7859
      %v7888 = vadd.f32 %v7854, %v7859
      %v7889 = vadd.f32 %v7855, %v7859
      %v7890 = vadd.f32 %v7856, %v7859
      %v7891 = vadd.f32 %v7857, %v7859
      %v7892 = vmax.f32 %v7860, 0.0
      %v7893 = vmax.f32 %v7861, 0.0
      %v7894 = vmax.f32 %v7862, 0.0
      %v7895 = vmax.f32 %v7863, 0.0
      %v7896 = vmax.f32 %v7864, 0.0
      %v7897 = vmax.f32 %v7865, 0.0
      %v7898 = vmax.f32 %v7866, 0.0
      %v7899 = vmax.f32 %v7867, 0.0
      %v7900 = vmax.f32 %v7868, 0.0
      %v7901 = vmax.f32 %v7869, 0.0
      %v7902 = vmax.f32 %v7870, 0.0
      %v7903 = vmax.f32 %v7871, 0.0
      %v7904 = vmax.f32 %v7872, 0.0
      %v7905 = vmax.f32 %v7873, 0.0
      %v7906 = vmax.f32 %v7874, 0.0
      %v7907 = vmax.f32 %v7875, 0.0
      %v7908 = vmax.f32 %v7876, 0.0
      %v7909 = vmax.f32 %v7877, 0.0
      %v7910 = vmax.f32 %v7878, 0.0
      %v7911 = vmax.f32 %v7879, 0.0
      %v7912 = vmax.f32 %v7880, 0.0
      %v7913 = vmax.f32 %v7881, 0.0
      %v7914 = vmax.f32 %v7882, 0.0
      %v7915 = vmax.f32 %v7883, 0.0
      %v7916 = vmax.f32 %v7884, 0.0
      %v7917 = vmax.f32 %v7885, 0.0
      %v7918 = vmax.f32 %v7886, 0.0
      %v7919 = vmax.f32 %v7887, 0.0
      %v7920 = vmax.f32 %v7888, 0.0
      %v7921 = vmax.f32 %v7889, 0.0
      %v7922 = vmax.f32 %v7890, 0.0
      %v7923 = vmax.f32 %v7891, 0.0
      %7924 = vst.msk [vmem:[%s2903 + $0x1] sm:$0xff] %vm337, %v7892
      %7925 = vst.msk [vmem:[%s2903 + $0x9] sm:$0xff] %vm337, %v7893
      %7926 = vst.msk [vmem:[%s2903 + $0x19] sm:$0xff] %vm337, %v7894
      %7927 = vst.msk [vmem:[%s2903 + $0x21] sm:$0xff] %vm337, %v7895
      %7928 = vst.msk [vmem:[%s2903 + $0x31] sm:$0xff] %vm337, %v7896
      %7929 = vst.msk [vmem:[%s2903 + $0x39] sm:$0xff] %vm337, %v7897
      %7930 = vst.msk [vmem:[%s2903 + $0x49] sm:$0xff] %vm337, %v7898
      %7931 = vst.msk [vmem:[%s2903 + $0x51] sm:$0xff] %vm337, %v7899
      %7932 = vst.msk [vmem:[%s2903 + $0x61] sm:$0xff] %vm337, %v7900
      %7933 = vst.msk [vmem:[%s2903 + $0x69] sm:$0xff] %vm337, %v7901
      %7934 = vst.msk [vmem:[%s2903 + $0x79] sm:$0xff] %vm337, %v7902
      %7935 = vst.msk [vmem:[%s2903 + $0x81] sm:$0xff] %vm337, %v7903
      %7936 = vst.msk [vmem:[%s2903 + $0x91] sm:$0xff] %vm337, %v7904
      %7937 = vst.msk [vmem:[%s2903 + $0x99] sm:$0xff] %vm337, %v7905
      %7938 = vst.msk [vmem:[%s2903 + $0xa9] sm:$0xff] %vm337, %v7906
      %7939 = vst.msk [vmem:[%s2903 + $0xb1] sm:$0xff] %vm337, %v7907
      %7940 = vst.msk [vmem:[%s2903 + $0xc1] sm:$0xff] %vm337, %v7908
      %7941 = vst.msk [vmem:[%s2903 + $0xc9] sm:$0xff] %vm337, %v7909
      %7942 = vst.msk [vmem:[%s2903 + $0xd9] sm:$0xff] %vm337, %v7910
      %7943 = vst.msk [vmem:[%s2903 + $0xe1] sm:$0xff] %vm337, %v7911
      %7944 = vst.msk [vmem:[%s2903 + $0xf1] sm:$0xff] %vm337, %v7912
      %7945 = vst.msk [vmem:[%s2903 + $0xf9] sm:$0xff] %vm337, %v7913
      %7946 = vst.msk [vmem:[%s2903 + $0x109] sm:$0xff] %vm337, %v7914
      %7947 = vst.msk [vmem:[%s2903 + $0x111] sm:$0xff] %vm337, %v7915
      %7948 = vst.msk [vmem:[%s2903 + $0x121] sm:$0xff] %vm337, %v7916
      %7949 = vst.msk [vmem:[%s2903 + $0x129] sm:$0xff] %vm337, %v7917
      %7950 = vst.msk [vmem:[%s2903 + $0x139] sm:$0xff] %vm337, %v7918
      %7951 = vst.msk [vmem:[%s2903 + $0x141] sm:$0xff] %vm337, %v7919
      %7952 = vst.msk [vmem:[%s2903 + $0x151] sm:$0xff] %vm337, %v7920
      %7953 = vst.msk [vmem:[%s2903 + $0x159] sm:$0xff] %vm337, %v7921
      %7954 = vst.msk [vmem:[%s2903 + $0x169] sm:$0xff] %vm337, %v7922
      %7955 = vst.msk [vmem:[%s2903 + $0x171] sm:$0xff] %vm337, %v7923
      %v7956 = vld [vmem:[#allocation3] sm:$0xff]
      %v7957 = vld [vmem:[#allocation3 + $0x8] sm:$0xff]
      %v7958 = vld [vmem:[#allocation3 + $0x18] sm:$0xff]
      %v7959 = vld [vmem:[#allocation3 + $0x20] sm:$0xff]
      %v7960 = vld [vmem:[#allocation3 + $0x30] sm:$0xff]
      %v7961 = vld [vmem:[#allocation3 + $0x38] sm:$0xff]
      %v7962 = vld [vmem:[#allocation3 + $0x48] sm:$0xff]
      %v7963 = vld [vmem:[#allocation3 + $0x50] sm:$0xff]
      %v7964 = vld [vmem:[#allocation3 + $0x60] sm:$0xff]
      %v7965 = vld [vmem:[#allocation3 + $0x68] sm:$0xff]
      %v7966 = vld [vmem:[#allocation3 + $0x78] sm:$0xff]
      %v7967 = vld [vmem:[#allocation3 + $0x80] sm:$0xff]
      %v7968 = vld [vmem:[#allocation3 + $0x90] sm:$0xff]
      %v7969 = vld [vmem:[#allocation3 + $0x98] sm:$0xff]
      %v7970 = vld [vmem:[#allocation3 + $0xa8] sm:$0xff]
      %v7971 = vld [vmem:[#allocation3 + $0xb0] sm:$0xff]
      %v7972 = vld [vmem:[#allocation3 + $0xc0] sm:$0xff]
      %v7973 = vld [vmem:[#allocation3 + $0xc8] sm:$0xff]
      %v7974 = vld [vmem:[#allocation3 + $0xd8] sm:$0xff]
      %v7975 = vld [vmem:[#allocation3 + $0xe0] sm:$0xff]
      %v7976 = vld [vmem:[#allocation3 + $0xf0] sm:$0xff]
      %v7977 = vld [vmem:[#allocation3 + $0xf8] sm:$0xff]
      %v7978 = vld [vmem:[#allocation3 + $0x108] sm:$0xff]
      %v7979 = vld [vmem:[#allocation3 + $0x110] sm:$0xff]
      %v7980 = vld [vmem:[#allocation3 + $0x120] sm:$0xff]
      %v7981 = vld [vmem:[#allocation3 + $0x128] sm:$0xff]
      %v7982 = vld [vmem:[#allocation3 + $0x138] sm:$0xff]
      %v7983 = vld [vmem:[#allocation3 + $0x140] sm:$0xff]
      %v7984 = vld [vmem:[#allocation3 + $0x150] sm:$0xff]
      %v7985 = vld [vmem:[#allocation3 + $0x158] sm:$0xff]
      %v7986 = vld [vmem:[#allocation3 + $0x168] sm:$0xff]
      %v7987 = vld [vmem:[#allocation3 + $0x170] sm:$0xff]
      %s7988 = scalar_lea.vmem %s3, 144
      %v7989 = vld [vmem:[%s7988] sm:$0xff]
      %v7990 = vld [vmem:[#allocation3 + $0x1] sm:$0xff]
      %v7991 = vld [vmem:[#allocation3 + $0x9] sm:$0xff]
      %v7992 = vld [vmem:[#allocation3 + $0x19] sm:$0xff]
      %v7993 = vld [vmem:[#allocation3 + $0x21] sm:$0xff]
      %v7994 = vld [vmem:[#allocation3 + $0x31] sm:$0xff]
      %v7995 = vld [vmem:[#allocation3 + $0x39] sm:$0xff]
      %v7996 = vld [vmem:[#allocation3 + $0x49] sm:$0xff]
      %v7997 = vld [vmem:[#allocation3 + $0x51] sm:$0xff]
      %v7998 = vld [vmem:[#allocation3 + $0x61] sm:$0xff]
      %v7999 = vld [vmem:[#allocation3 + $0x69] sm:$0xff]
      %v8000 = vld [vmem:[#allocation3 + $0x79] sm:$0xff]
      %v8001 = vld [vmem:[#allocation3 + $0x81] sm:$0xff]
      %v8002 = vld [vmem:[#allocation3 + $0x91] sm:$0xff]
      %v8003 = vld [vmem:[#allocation3 + $0x99] sm:$0xff]
      %v8004 = vld [vmem:[#allocation3 + $0xa9] sm:$0xff]
      %v8005 = vld [vmem:[#allocation3 + $0xb1] sm:$0xff]
      %v8006 = vld [vmem:[#allocation3 + $0xc1] sm:$0xff]
      %v8007 = vld [vmem:[#allocation3 + $0xc9] sm:$0xff]
      %v8008 = vld [vmem:[#allocation3 + $0xd9] sm:$0xff]
      %v8009 = vld [vmem:[#allocation3 + $0xe1] sm:$0xff]
      %v8010 = vld [vmem:[#allocation3 + $0xf1] sm:$0xff]
      %v8011 = vld [vmem:[#allocation3 + $0xf9] sm:$0xff]
      %v8012 = vld [vmem:[#allocation3 + $0x109] sm:$0xff]
      %v8013 = vld [vmem:[#allocation3 + $0x111] sm:$0xff]
      %v8014 = vld [vmem:[#allocation3 + $0x121] sm:$0xff]
      %v8015 = vld [vmem:[#allocation3 + $0x129] sm:$0xff]
      %v8016 = vld [vmem:[#allocation3 + $0x139] sm:$0xff]
      %v8017 = vld [vmem:[#allocation3 + $0x141] sm:$0xff]
      %v8018 = vld [vmem:[#allocation3 + $0x151] sm:$0xff]
      %v8019 = vld [vmem:[#allocation3 + $0x159] sm:$0xff]
      %v8020 = vld [vmem:[#allocation3 + $0x169] sm:$0xff]
      %v8021 = vld [vmem:[#allocation3 + $0x171] sm:$0xff]
      %s8022 = scalar_lea.vmem %s3, 152
      %v8023 = vld [vmem:[%s8022] sm:$0xff]
      %v8025 = vsel %vm337, %v7990, 0
      %v8028 = vsel %vm337, %v7991, 0
      %v8031 = vsel %vm337, %v7992, 0
      %v8034 = vsel %vm337, %v7993, 0
      %v8037 = vsel %vm337, %v7994, 0
      %v8040 = vsel %vm337, %v7995, 0
      %v8043 = vsel %vm337, %v7996, 0
      %v8046 = vsel %vm337, %v7997, 0
      %v8049 = vsel %vm337, %v7998, 0
      %v8052 = vsel %vm337, %v7999, 0
      %v8055 = vsel %vm337, %v8000, 0
      %v8058 = vsel %vm337, %v8001, 0
      %v8061 = vsel %vm337, %v8002, 0
      %v8064 = vsel %vm337, %v8003, 0
      %v8067 = vsel %vm337, %v8004, 0
      %v8070 = vsel %vm337, %v8005, 0
      %v8073 = vsel %vm337, %v8006, 0
      %v8076 = vsel %vm337, %v8007, 0
      %v8079 = vsel %vm337, %v8008, 0
      %v8082 = vsel %vm337, %v8009, 0
      %v8085 = vsel %vm337, %v8010, 0
      %v8088 = vsel %vm337, %v8011, 0
      %v8091 = vsel %vm337, %v8012, 0
      %v8094 = vsel %vm337, %v8013, 0
      %v8097 = vsel %vm337, %v8014, 0
      %v8100 = vsel %vm337, %v8015, 0
      %v8103 = vsel %vm337, %v8016, 0
      %v8106 = vsel %vm337, %v8017, 0
      %v8109 = vsel %vm337, %v8018, 0
      %v8112 = vsel %vm337, %v8019, 0
      %v8115 = vsel %vm337, %v8020, 0
      %v8118 = vsel %vm337, %v8021, 0
      %8120 = vmatpush.msra.mxu0 0.0
      %8121 = vmatpush.msra.mxu0 0.0
      %8122 = vmatpush.msra.mxu0 0.0
      %8123 = vmatpush.msra.mxu0 0.0
      %8124 = vmatpush.msra.mxu0 0.0
      %8125 = vmatpush.msra.mxu0 0.0
      %8126 = vmatpush.msra.mxu0 0.0
      %8127 = vmatpush.msra.mxu0 0.0
      %8128 = vmatpush.msra.mxu0 0.0
      %8129 = vmatpush.msra.mxu0 0.0
      %8130 = vmatpush.msra.mxu0 0.0
      %8131 = vmatpush.msra.mxu0 0.0
      %8132 = vmatpush.msra.mxu0 0.0
      %8133 = vmatpush.msra.mxu0 0.0
      %8134 = vmatpush.msra.mxu0 0.0
      %8135 = vmatpush.msra.mxu0 %v8023
      %8136 = vmatmul.f32.gmra.mxu0 %v8025
      %v8137 = vpop.f32.mrf.mxu0
      %v8138 = vadd.f32 0.0, %v8137
      %8139 = vmatmul.f32.gmra.mxu0 %v8028
      %v8140 = vpop.f32.mrf.mxu0
      %v8141 = vadd.f32 0.0, %v8140
      %8142 = vmatmul.f32.gmra.mxu0 %v8031
      %v8143 = vpop.f32.mrf.mxu0
      %v8144 = vadd.f32 0.0, %v8143
      %8145 = vmatmul.f32.gmra.mxu0 %v8034
      %v8146 = vpop.f32.mrf.mxu0
      %v8147 = vadd.f32 0.0, %v8146
      %8148 = vmatmul.f32.gmra.mxu0 %v8037
      %v8149 = vpop.f32.mrf.mxu0
      %v8150 = vadd.f32 0.0, %v8149
      %8151 = vmatmul.f32.gmra.mxu0 %v8040
      %v8152 = vpop.f32.mrf.mxu0
      %v8153 = vadd.f32 0.0, %v8152
      %8154 = vmatmul.f32.gmra.mxu0 %v8043
      %v8155 = vpop.f32.mrf.mxu0
      %v8156 = vadd.f32 0.0, %v8155
      %8157 = vmatmul.f32.gmra.mxu0 %v8046
      %v8158 = vpop.f32.mrf.mxu0
      %v8159 = vadd.f32 0.0, %v8158
      %8160 = vmatmul.f32.gmra.mxu0 %v8049
      %v8161 = vpop.f32.mrf.mxu0
      %v8162 = vadd.f32 0.0, %v8161
      %8163 = vmatmul.f32.gmra.mxu0 %v8052
      %v8164 = vpop.f32.mrf.mxu0
      %v8165 = vadd.f32 0.0, %v8164
      %8166 = vmatmul.f32.gmra.mxu0 %v8055
      %v8167 = vpop.f32.mrf.mxu0
      %v8168 = vadd.f32 0.0, %v8167
      %8169 = vmatmul.f32.gmra.mxu0 %v8058
      %v8170 = vpop.f32.mrf.mxu0
      %v8171 = vadd.f32 0.0, %v8170
      %8172 = vmatmul.f32.gmra.mxu0 %v8061
      %v8173 = vpop.f32.mrf.mxu0
      %v8174 = vadd.f32 0.0, %v8173
      %8175 = vmatmul.f32.gmra.mxu0 %v8064
      %v8176 = vpop.f32.mrf.mxu0
      %v8177 = vadd.f32 0.0, %v8176
      %8178 = vmatmul.f32.gmra.mxu0 %v8067
      %v8179 = vpop.f32.mrf.mxu0
      %v8180 = vadd.f32 0.0, %v8179
      %8181 = vmatmul.f32.gmra.mxu0 %v8070
      %v8182 = vpop.f32.mrf.mxu0
      %v8183 = vadd.f32 0.0, %v8182
      %8184 = vmatmul.f32.gmra.mxu0 %v8073
      %v8185 = vpop.f32.mrf.mxu0
      %v8186 = vadd.f32 0.0, %v8185
      %8187 = vmatmul.f32.gmra.mxu0 %v8076
      %v8188 = vpop.f32.mrf.mxu0
      %v8189 = vadd.f32 0.0, %v8188
      %8190 = vmatmul.f32.gmra.mxu0 %v8079
      %v8191 = vpop.f32.mrf.mxu0
      %v8192 = vadd.f32 0.0, %v8191
      %8193 = vmatmul.f32.gmra.mxu0 %v8082
      %v8194 = vpop.f32.mrf.mxu0
      %v8195 = vadd.f32 0.0, %v8194
      %8196 = vmatmul.f32.gmra.mxu0 %v8085
      %v8197 = vpop.f32.mrf.mxu0
      %v8198 = vadd.f32 0.0, %v8197
      %8199 = vmatmul.f32.gmra.mxu0 %v8088
      %v8200 = vpop.f32.mrf.mxu0
      %v8201 = vadd.f32 0.0, %v8200
      %8202 = vmatmul.f32.gmra.mxu0 %v8091
      %v8203 = vpop.f32.mrf.mxu0
      %v8204 = vadd.f32 0.0, %v8203
      %8205 = vmatmul.f32.gmra.mxu0 %v8094
      %v8206 = vpop.f32.mrf.mxu0
      %v8207 = vadd.f32 0.0, %v8206
      %8208 = vmatmul.f32.gmra.mxu0 %v8097
      %v8209 = vpop.f32.mrf.mxu0
      %v8210 = vadd.f32 0.0, %v8209
      %8211 = vmatmul.f32.gmra.mxu0 %v8100
      %v8212 = vpop.f32.mrf.mxu0
      %v8213 = vadd.f32 0.0, %v8212
      %8214 = vmatmul.f32.gmra.mxu0 %v8103
      %v8215 = vpop.f32.mrf.mxu0
      %v8216 = vadd.f32 0.0, %v8215
      %8217 = vmatmul.f32.gmra.mxu0 %v8106
      %v8218 = vpop.f32.mrf.mxu0
      %v8219 = vadd.f32 0.0, %v8218
      %8220 = vmatmul.f32.gmra.mxu0 %v8109
      %v8221 = vpop.f32.mrf.mxu0
      %v8222 = vadd.f32 0.0, %v8221
      %8223 = vmatmul.f32.gmra.mxu0 %v8112
      %v8224 = vpop.f32.mrf.mxu0
      %v8225 = vadd.f32 0.0, %v8224
      %8226 = vmatmul.f32.gmra.mxu0 %v8115
      %v8227 = vpop.f32.mrf.mxu0
      %v8228 = vadd.f32 0.0, %v8227
      %8229 = vmatmul.f32.gmra.mxu0 %v8118
      %v8230 = vpop.f32.mrf.mxu0
      %v8231 = vadd.f32 0.0, %v8230
      %8232 = vdwg.mxu0
      %v8234 = vsel %vm337, %v7956, 0
      %v8237 = vsel %vm337, %v7957, 0
      %v8240 = vsel %vm337, %v7958, 0
      %v8243 = vsel %vm337, %v7959, 0
      %v8246 = vsel %vm337, %v7960, 0
      %v8249 = vsel %vm337, %v7961, 0
      %v8252 = vsel %vm337, %v7962, 0
      %v8255 = vsel %vm337, %v7963, 0
      %v8258 = vsel %vm337, %v7964, 0
      %v8261 = vsel %vm337, %v7965, 0
      %v8264 = vsel %vm337, %v7966, 0
      %v8267 = vsel %vm337, %v7967, 0
      %v8270 = vsel %vm337, %v7968, 0
      %v8273 = vsel %vm337, %v7969, 0
      %v8276 = vsel %vm337, %v7970, 0
      %v8279 = vsel %vm337, %v7971, 0
      %v8282 = vsel %vm337, %v7972, 0
      %v8285 = vsel %vm337, %v7973, 0
      %v8288 = vsel %vm337, %v7974, 0
      %v8291 = vsel %vm337, %v7975, 0
      %v8294 = vsel %vm337, %v7976, 0
      %v8297 = vsel %vm337, %v7977, 0
      %v8300 = vsel %vm337, %v7978, 0
      %v8303 = vsel %vm337, %v7979, 0
      %v8306 = vsel %vm337, %v7980, 0
      %v8309 = vsel %vm337, %v7981, 0
      %v8312 = vsel %vm337, %v7982, 0
      %v8315 = vsel %vm337, %v7983, 0
      %v8318 = vsel %vm337, %v7984, 0
      %v8321 = vsel %vm337, %v7985, 0
      %v8324 = vsel %vm337, %v7986, 0
      %v8327 = vsel %vm337, %v7987, 0
      %8329 = vmatpush.msra.mxu0 0.0
      %8330 = vmatpush.msra.mxu0 0.0
      %8331 = vmatpush.msra.mxu0 0.0
      %8332 = vmatpush.msra.mxu0 0.0
      %8333 = vmatpush.msra.mxu0 0.0
      %8334 = vmatpush.msra.mxu0 0.0
      %8335 = vmatpush.msra.mxu0 0.0
      %8336 = vmatpush.msra.mxu0 0.0
      %8337 = vmatpush.msra.mxu0 0.0
      %8338 = vmatpush.msra.mxu0 0.0
      %8339 = vmatpush.msra.mxu0 0.0
      %8340 = vmatpush.msra.mxu0 0.0
      %8341 = vmatpush.msra.mxu0 0.0
      %8342 = vmatpush.msra.mxu0 0.0
      %8343 = vmatpush.msra.mxu0 0.0
      %8344 = vmatpush.msra.mxu0 %v7989
      %8345 = vmatmul.f32.gmra.mxu0 %v8234
      %v8346 = vpop.f32.mrf.mxu0
      %v8347 = vadd.f32 %v8138, %v8346
      %8348 = vmatmul.f32.gmra.mxu0 %v8237
      %v8349 = vpop.f32.mrf.mxu0
      %v8350 = vadd.f32 %v8141, %v8349
      %8351 = vmatmul.f32.gmra.mxu0 %v8240
      %v8352 = vpop.f32.mrf.mxu0
      %v8353 = vadd.f32 %v8144, %v8352
      %8354 = vmatmul.f32.gmra.mxu0 %v8243
      %v8355 = vpop.f32.mrf.mxu0
      %v8356 = vadd.f32 %v8147, %v8355
      %8357 = vmatmul.f32.gmra.mxu0 %v8246
      %v8358 = vpop.f32.mrf.mxu0
      %v8359 = vadd.f32 %v8150, %v8358
      %8360 = vmatmul.f32.gmra.mxu0 %v8249
      %v8361 = vpop.f32.mrf.mxu0
      %v8362 = vadd.f32 %v8153, %v8361
      %8363 = vmatmul.f32.gmra.mxu0 %v8252
      %v8364 = vpop.f32.mrf.mxu0
      %v8365 = vadd.f32 %v8156, %v8364
      %8366 = vmatmul.f32.gmra.mxu0 %v8255
      %v8367 = vpop.f32.mrf.mxu0
      %v8368 = vadd.f32 %v8159, %v8367
      %8369 = vmatmul.f32.gmra.mxu0 %v8258
      %v8370 = vpop.f32.mrf.mxu0
      %v8371 = vadd.f32 %v8162, %v8370
      %8372 = vmatmul.f32.gmra.mxu0 %v8261
      %v8373 = vpop.f32.mrf.mxu0
      %v8374 = vadd.f32 %v8165, %v8373
      %8375 = vmatmul.f32.gmra.mxu0 %v8264
      %v8376 = vpop.f32.mrf.mxu0
      %v8377 = vadd.f32 %v8168, %v8376
      %8378 = vmatmul.f32.gmra.mxu0 %v8267
      %v8379 = vpop.f32.mrf.mxu0
      %v8380 = vadd.f32 %v8171, %v8379
      %8381 = vmatmul.f32.gmra.mxu0 %v8270
      %v8382 = vpop.f32.mrf.mxu0
      %v8383 = vadd.f32 %v8174, %v8382
      %8384 = vmatmul.f32.gmra.mxu0 %v8273
      %v8385 = vpop.f32.mrf.mxu0
      %v8386 = vadd.f32 %v8177, %v8385
      %8387 = vmatmul.f32.gmra.mxu0 %v8276
      %v8388 = vpop.f32.mrf.mxu0
      %v8389 = vadd.f32 %v8180, %v8388
      %8390 = vmatmul.f32.gmra.mxu0 %v8279
      %v8391 = vpop.f32.mrf.mxu0
      %v8392 = vadd.f32 %v8183, %v8391
      %8393 = vmatmul.f32.gmra.mxu0 %v8282
      %v8394 = vpop.f32.mrf.mxu0
      %v8395 = vadd.f32 %v8186, %v8394
      %8396 = vmatmul.f32.gmra.mxu0 %v8285
      %v8397 = vpop.f32.mrf.mxu0
      %v8398 = vadd.f32 %v8189, %v8397
      %8399 = vmatmul.f32.gmra.mxu0 %v8288
      %v8400 = vpop.f32.mrf.mxu0
      %v8401 = vadd.f32 %v8192, %v8400
      %8402 = vmatmul.f32.gmra.mxu0 %v8291
      %v8403 = vpop.f32.mrf.mxu0
      %v8404 = vadd.f32 %v8195, %v8403
      %8405 = vmatmul.f32.gmra.mxu0 %v8294
      %v8406 = vpop.f32.mrf.mxu0
      %v8407 = vadd.f32 %v8198, %v8406
      %8408 = vmatmul.f32.gmra.mxu0 %v8297
      %v8409 = vpop.f32.mrf.mxu0
      %v8410 = vadd.f32 %v8201, %v8409
      %8411 = vmatmul.f32.gmra.mxu0 %v8300
      %v8412 = vpop.f32.mrf.mxu0
      %v8413 = vadd.f32 %v8204, %v8412
      %8414 = vmatmul.f32.gmra.mxu0 %v8303
      %v8415 = vpop.f32.mrf.mxu0
      %v8416 = vadd.f32 %v8207, %v8415
      %8417 = vmatmul.f32.gmra.mxu0 %v8306
      %v8418 = vpop.f32.mrf.mxu0
      %v8419 = vadd.f32 %v8210, %v8418
      %8420 = vmatmul.f32.gmra.mxu0 %v8309
      %v8421 = vpop.f32.mrf.mxu0
      %v8422 = vadd.f32 %v8213, %v8421
      %8423 = vmatmul.f32.gmra.mxu0 %v8312
      %v8424 = vpop.f32.mrf.mxu0
      %v8425 = vadd.f32 %v8216, %v8424
      %8426 = vmatmul.f32.gmra.mxu0 %v8315
      %v8427 = vpop.f32.mrf.mxu0
      %v8428 = vadd.f32 %v8219, %v8427
      %8429 = vmatmul.f32.gmra.mxu0 %v8318
      %v8430 = vpop.f32.mrf.mxu0
      %v8431 = vadd.f32 %v8222, %v8430
      %8432 = vmatmul.f32.gmra.mxu0 %v8321
      %v8433 = vpop.f32.mrf.mxu0
      %v8434 = vadd.f32 %v8225, %v8433
      %8435 = vmatmul.f32.gmra.mxu0 %v8324
      %v8436 = vpop.f32.mrf.mxu0
      %v8437 = vadd.f32 %v8228, %v8436
      %8438 = vmatmul.f32.gmra.mxu0 %v8327
      %v8439 = vpop.f32.mrf.mxu0
      %v8440 = vadd.f32 %v8231, %v8439
      %8441 = vdwg.mxu0
      %v8442 = vld [vmem:[#allocation3 + $0x2] sm:$0xff]
      %v8443 = vld [vmem:[#allocation3 + $0xa] sm:$0xff]
      %v8444 = vld [vmem:[#allocation3 + $0x1a] sm:$0xff]
      %v8445 = vld [vmem:[#allocation3 + $0x22] sm:$0xff]
      %v8446 = vld [vmem:[#allocation3 + $0x32] sm:$0xff]
      %v8447 = vld [vmem:[#allocation3 + $0x3a] sm:$0xff]
      %v8448 = vld [vmem:[#allocation3 + $0x4a] sm:$0xff]
      %v8449 = vld [vmem:[#allocation3 + $0x52] sm:$0xff]
      %v8450 = vld [vmem:[#allocation3 + $0x62] sm:$0xff]
      %v8451 = vld [vmem:[#allocation3 + $0x6a] sm:$0xff]
      %v8452 = vld [vmem:[#allocation3 + $0x7a] sm:$0xff]
      %v8453 = vld [vmem:[#allocation3 + $0x82] sm:$0xff]
      %v8454 = vld [vmem:[#allocation3 + $0x92] sm:$0xff]
      %v8455 = vld [vmem:[#allocation3 + $0x9a] sm:$0xff]
      %v8456 = vld [vmem:[#allocation3 + $0xaa] sm:$0xff]
      %v8457 = vld [vmem:[#allocation3 + $0xb2] sm:$0xff]
      %v8458 = vld [vmem:[#allocation3 + $0xc2] sm:$0xff]
      %v8459 = vld [vmem:[#allocation3 + $0xca] sm:$0xff]
      %v8460 = vld [vmem:[#allocation3 + $0xda] sm:$0xff]
      %v8461 = vld [vmem:[#allocation3 + $0xe2] sm:$0xff]
      %v8462 = vld [vmem:[#allocation3 + $0xf2] sm:$0xff]
      %v8463 = vld [vmem:[#allocation3 + $0xfa] sm:$0xff]
      %v8464 = vld [vmem:[#allocation3 + $0x10a] sm:$0xff]
      %v8465 = vld [vmem:[#allocation3 + $0x112] sm:$0xff]
      %v8466 = vld [vmem:[#allocation3 + $0x122] sm:$0xff]
      %v8467 = vld [vmem:[#allocation3 + $0x12a] sm:$0xff]
      %v8468 = vld [vmem:[#allocation3 + $0x13a] sm:$0xff]
      %v8469 = vld [vmem:[#allocation3 + $0x142] sm:$0xff]
      %v8470 = vld [vmem:[#allocation3 + $0x152] sm:$0xff]
      %v8471 = vld [vmem:[#allocation3 + $0x15a] sm:$0xff]
      %v8472 = vld [vmem:[#allocation3 + $0x16a] sm:$0xff]
      %v8473 = vld [vmem:[#allocation3 + $0x172] sm:$0xff]
      %s8474 = scalar_lea.vmem %s3, 160
      %v8475 = vld [vmem:[%s8474] sm:$0xff]
      %v8477 = vsel %vm337, %v8442, 0
      %v8480 = vsel %vm337, %v8443, 0
      %v8483 = vsel %vm337, %v8444, 0
      %v8486 = vsel %vm337, %v8445, 0
      %v8489 = vsel %vm337, %v8446, 0
      %v8492 = vsel %vm337, %v8447, 0
      %v8495 = vsel %vm337, %v8448, 0
      %v8498 = vsel %vm337, %v8449, 0
      %v8501 = vsel %vm337, %v8450, 0
      %v8504 = vsel %vm337, %v8451, 0
      %v8507 = vsel %vm337, %v8452, 0
      %v8510 = vsel %vm337, %v8453, 0
      %v8513 = vsel %vm337, %v8454, 0
      %v8516 = vsel %vm337, %v8455, 0
      %v8519 = vsel %vm337, %v8456, 0
      %v8522 = vsel %vm337, %v8457, 0
      %v8525 = vsel %vm337, %v8458, 0
      %v8528 = vsel %vm337, %v8459, 0
      %v8531 = vsel %vm337, %v8460, 0
      %v8534 = vsel %vm337, %v8461, 0
      %v8537 = vsel %vm337, %v8462, 0
      %v8540 = vsel %vm337, %v8463, 0
      %v8543 = vsel %vm337, %v8464, 0
      %v8546 = vsel %vm337, %v8465, 0
      %v8549 = vsel %vm337, %v8466, 0
      %v8552 = vsel %vm337, %v8467, 0
      %v8555 = vsel %vm337, %v8468, 0
      %v8558 = vsel %vm337, %v8469, 0
      %v8561 = vsel %vm337, %v8470, 0
      %v8564 = vsel %vm337, %v8471, 0
      %v8567 = vsel %vm337, %v8472, 0
      %v8570 = vsel %vm337, %v8473, 0
      %8572 = vmatpush.msra.mxu0 0.0
      %8573 = vmatpush.msra.mxu0 0.0
      %8574 = vmatpush.msra.mxu0 0.0
      %8575 = vmatpush.msra.mxu0 0.0
      %8576 = vmatpush.msra.mxu0 0.0
      %8577 = vmatpush.msra.mxu0 0.0
      %8578 = vmatpush.msra.mxu0 0.0
      %8579 = vmatpush.msra.mxu0 0.0
      %8580 = vmatpush.msra.mxu0 0.0
      %8581 = vmatpush.msra.mxu0 0.0
      %8582 = vmatpush.msra.mxu0 0.0
      %8583 = vmatpush.msra.mxu0 0.0
      %8584 = vmatpush.msra.mxu0 0.0
      %8585 = vmatpush.msra.mxu0 0.0
      %8586 = vmatpush.msra.mxu0 0.0
      %8587 = vmatpush.msra.mxu0 %v8475
      %8588 = vmatmul.f32.gmra.mxu0 %v8477
      %v8589 = vpop.f32.mrf.mxu0
      %v8590 = vadd.f32 0.0, %v8589
      %8591 = vmatmul.f32.gmra.mxu0 %v8480
      %v8592 = vpop.f32.mrf.mxu0
      %v8593 = vadd.f32 0.0, %v8592
      %8594 = vmatmul.f32.gmra.mxu0 %v8483
      %v8595 = vpop.f32.mrf.mxu0
      %v8596 = vadd.f32 0.0, %v8595
      %8597 = vmatmul.f32.gmra.mxu0 %v8486
      %v8598 = vpop.f32.mrf.mxu0
      %v8599 = vadd.f32 0.0, %v8598
      %8600 = vmatmul.f32.gmra.mxu0 %v8489
      %v8601 = vpop.f32.mrf.mxu0
      %v8602 = vadd.f32 0.0, %v8601
      %8603 = vmatmul.f32.gmra.mxu0 %v8492
      %v8604 = vpop.f32.mrf.mxu0
      %v8605 = vadd.f32 0.0, %v8604
      %8606 = vmatmul.f32.gmra.mxu0 %v8495
      %v8607 = vpop.f32.mrf.mxu0
      %v8608 = vadd.f32 0.0, %v8607
      %8609 = vmatmul.f32.gmra.mxu0 %v8498
      %v8610 = vpop.f32.mrf.mxu0
      %v8611 = vadd.f32 0.0, %v8610
      %8612 = vmatmul.f32.gmra.mxu0 %v8501
      %v8613 = vpop.f32.mrf.mxu0
      %v8614 = vadd.f32 0.0, %v8613
      %8615 = vmatmul.f32.gmra.mxu0 %v8504
      %v8616 = vpop.f32.mrf.mxu0
      %v8617 = vadd.f32 0.0, %v8616
      %8618 = vmatmul.f32.gmra.mxu0 %v8507
      %v8619 = vpop.f32.mrf.mxu0
      %v8620 = vadd.f32 0.0, %v8619
      %8621 = vmatmul.f32.gmra.mxu0 %v8510
      %v8622 = vpop.f32.mrf.mxu0
      %v8623 = vadd.f32 0.0, %v8622
      %8624 = vmatmul.f32.gmra.mxu0 %v8513
      %v8625 = vpop.f32.mrf.mxu0
      %v8626 = vadd.f32 0.0, %v8625
      %8627 = vmatmul.f32.gmra.mxu0 %v8516
      %v8628 = vpop.f32.mrf.mxu0
      %v8629 = vadd.f32 0.0, %v8628
      %8630 = vmatmul.f32.gmra.mxu0 %v8519
      %v8631 = vpop.f32.mrf.mxu0
      %v8632 = vadd.f32 0.0, %v8631
      %8633 = vmatmul.f32.gmra.mxu0 %v8522
      %v8634 = vpop.f32.mrf.mxu0
      %v8635 = vadd.f32 0.0, %v8634
      %8636 = vmatmul.f32.gmra.mxu0 %v8525
      %v8637 = vpop.f32.mrf.mxu0
      %v8638 = vadd.f32 0.0, %v8637
      %8639 = vmatmul.f32.gmra.mxu0 %v8528
      %v8640 = vpop.f32.mrf.mxu0
      %v8641 = vadd.f32 0.0, %v8640
      %8642 = vmatmul.f32.gmra.mxu0 %v8531
      %v8643 = vpop.f32.mrf.mxu0
      %v8644 = vadd.f32 0.0, %v8643
      %8645 = vmatmul.f32.gmra.mxu0 %v8534
      %v8646 = vpop.f32.mrf.mxu0
      %v8647 = vadd.f32 0.0, %v8646
      %8648 = vmatmul.f32.gmra.mxu0 %v8537
      %v8649 = vpop.f32.mrf.mxu0
      %v8650 = vadd.f32 0.0, %v8649
      %8651 = vmatmul.f32.gmra.mxu0 %v8540
      %v8652 = vpop.f32.mrf.mxu0
      %v8653 = vadd.f32 0.0, %v8652
      %8654 = vmatmul.f32.gmra.mxu0 %v8543
      %v8655 = vpop.f32.mrf.mxu0
      %v8656 = vadd.f32 0.0, %v8655
      %8657 = vmatmul.f32.gmra.mxu0 %v8546
      %v8658 = vpop.f32.mrf.mxu0
      %v8659 = vadd.f32 0.0, %v8658
      %8660 = vmatmul.f32.gmra.mxu0 %v8549
      %v8661 = vpop.f32.mrf.mxu0
      %v8662 = vadd.f32 0.0, %v8661
      %8663 = vmatmul.f32.gmra.mxu0 %v8552
      %v8664 = vpop.f32.mrf.mxu0
      %v8665 = vadd.f32 0.0, %v8664
      %8666 = vmatmul.f32.gmra.mxu0 %v8555
      %v8667 = vpop.f32.mrf.mxu0
      %v8668 = vadd.f32 0.0, %v8667
      %8669 = vmatmul.f32.gmra.mxu0 %v8558
      %v8670 = vpop.f32.mrf.mxu0
      %v8671 = vadd.f32 0.0, %v8670
      %8672 = vmatmul.f32.gmra.mxu0 %v8561
      %v8673 = vpop.f32.mrf.mxu0
      %v8674 = vadd.f32 0.0, %v8673
      %8675 = vmatmul.f32.gmra.mxu0 %v8564
      %v8676 = vpop.f32.mrf.mxu0
      %v8677 = vadd.f32 0.0, %v8676
      %8678 = vmatmul.f32.gmra.mxu0 %v8567
      %v8679 = vpop.f32.mrf.mxu0
      %v8680 = vadd.f32 0.0, %v8679
      %8681 = vmatmul.f32.gmra.mxu0 %v8570
      %v8682 = vpop.f32.mrf.mxu0
      %v8683 = vadd.f32 0.0, %v8682
      %8684 = vdwg.mxu0
      %v8685 = vadd.f32 %v8347, %v8590
      %v8686 = vadd.f32 %v8350, %v8593
      %v8687 = vadd.f32 %v8353, %v8596
      %v8688 = vadd.f32 %v8356, %v8599
      %v8689 = vadd.f32 %v8359, %v8602
      %v8690 = vadd.f32 %v8362, %v8605
      %v8691 = vadd.f32 %v8365, %v8608
      %v8692 = vadd.f32 %v8368, %v8611
      %v8693 = vadd.f32 %v8371, %v8614
      %v8694 = vadd.f32 %v8374, %v8617
      %v8695 = vadd.f32 %v8377, %v8620
      %v8696 = vadd.f32 %v8380, %v8623
      %v8697 = vadd.f32 %v8383, %v8626
      %v8698 = vadd.f32 %v8386, %v8629
      %v8699 = vadd.f32 %v8389, %v8632
      %v8700 = vadd.f32 %v8392, %v8635
      %v8701 = vadd.f32 %v8395, %v8638
      %v8702 = vadd.f32 %v8398, %v8641
      %v8703 = vadd.f32 %v8401, %v8644
      %v8704 = vadd.f32 %v8404, %v8647
      %v8705 = vadd.f32 %v8407, %v8650
      %v8706 = vadd.f32 %v8410, %v8653
      %v8707 = vadd.f32 %v8413, %v8656
      %v8708 = vadd.f32 %v8416, %v8659
      %v8709 = vadd.f32 %v8419, %v8662
      %v8710 = vadd.f32 %v8422, %v8665
      %v8711 = vadd.f32 %v8425, %v8668
      %v8712 = vadd.f32 %v8428, %v8671
      %v8713 = vadd.f32 %v8431, %v8674
      %v8714 = vadd.f32 %v8434, %v8677
      %v8715 = vadd.f32 %v8437, %v8680
      %v8716 = vadd.f32 %v8440, %v8683
      %v8717 = vld [vmem:[%s2903] sm:$0xff]
      %v8718 = vld [vmem:[%s2903 + $0x8] sm:$0xff]
      %v8719 = vld [vmem:[%s2903 + $0x18] sm:$0xff]
      %v8720 = vld [vmem:[%s2903 + $0x20] sm:$0xff]
      %v8721 = vld [vmem:[%s2903 + $0x30] sm:$0xff]
      %v8722 = vld [vmem:[%s2903 + $0x38] sm:$0xff]
      %v8723 = vld [vmem:[%s2903 + $0x48] sm:$0xff]
      %v8724 = vld [vmem:[%s2903 + $0x50] sm:$0xff]
      %v8725 = vld [vmem:[%s2903 + $0x60] sm:$0xff]
      %v8726 = vld [vmem:[%s2903 + $0x68] sm:$0xff]
      %v8727 = vld [vmem:[%s2903 + $0x78] sm:$0xff]
      %v8728 = vld [vmem:[%s2903 + $0x80] sm:$0xff]
      %v8729 = vld [vmem:[%s2903 + $0x90] sm:$0xff]
      %v8730 = vld [vmem:[%s2903 + $0x98] sm:$0xff]
      %v8731 = vld [vmem:[%s2903 + $0xa8] sm:$0xff]
      %v8732 = vld [vmem:[%s2903 + $0xb0] sm:$0xff]
      %v8733 = vld [vmem:[%s2903 + $0xc0] sm:$0xff]
      %v8734 = vld [vmem:[%s2903 + $0xc8] sm:$0xff]
      %v8735 = vld [vmem:[%s2903 + $0xd8] sm:$0xff]
      %v8736 = vld [vmem:[%s2903 + $0xe0] sm:$0xff]
      %v8737 = vld [vmem:[%s2903 + $0xf0] sm:$0xff]
      %v8738 = vld [vmem:[%s2903 + $0xf8] sm:$0xff]
      %v8739 = vld [vmem:[%s2903 + $0x108] sm:$0xff]
      %v8740 = vld [vmem:[%s2903 + $0x110] sm:$0xff]
      %v8741 = vld [vmem:[%s2903 + $0x120] sm:$0xff]
      %v8742 = vld [vmem:[%s2903 + $0x128] sm:$0xff]
      %v8743 = vld [vmem:[%s2903 + $0x138] sm:$0xff]
      %v8744 = vld [vmem:[%s2903 + $0x140] sm:$0xff]
      %v8745 = vld [vmem:[%s2903 + $0x150] sm:$0xff]
      %v8746 = vld [vmem:[%s2903 + $0x158] sm:$0xff]
      %v8747 = vld [vmem:[%s2903 + $0x168] sm:$0xff]
      %v8748 = vld [vmem:[%s2903 + $0x170] sm:$0xff]
      %s8749 = scalar_lea.vmem %s3, 168
      %v8750 = vld [vmem:[%s8749] sm:$0xff]
      %v8752 = vsel %vm337, %v8717, 0
      %v8755 = vsel %vm337, %v8718, 0
      %v8758 = vsel %vm337, %v8719, 0
      %v8761 = vsel %vm337, %v8720, 0
      %v8764 = vsel %vm337, %v8721, 0
      %v8767 = vsel %vm337, %v8722, 0
      %v8770 = vsel %vm337, %v8723, 0
      %v8773 = vsel %vm337, %v8724, 0
      %v8776 = vsel %vm337, %v8725, 0
      %v8779 = vsel %vm337, %v8726, 0
      %v8782 = vsel %vm337, %v8727, 0
      %v8785 = vsel %vm337, %v8728, 0
      %v8788 = vsel %vm337, %v8729, 0
      %v8791 = vsel %vm337, %v8730, 0
      %v8794 = vsel %vm337, %v8731, 0
      %v8797 = vsel %vm337, %v8732, 0
      %v8800 = vsel %vm337, %v8733, 0
      %v8803 = vsel %vm337, %v8734, 0
      %v8806 = vsel %vm337, %v8735, 0
      %v8809 = vsel %vm337, %v8736, 0
      %v8812 = vsel %vm337, %v8737, 0
      %v8815 = vsel %vm337, %v8738, 0
      %v8818 = vsel %vm337, %v8739, 0
      %v8821 = vsel %vm337, %v8740, 0
      %v8824 = vsel %vm337, %v8741, 0
      %v8827 = vsel %vm337, %v8742, 0
      %v8830 = vsel %vm337, %v8743, 0
      %v8833 = vsel %vm337, %v8744, 0
      %v8836 = vsel %vm337, %v8745, 0
      %v8839 = vsel %vm337, %v8746, 0
      %v8842 = vsel %vm337, %v8747, 0
      %v8845 = vsel %vm337, %v8748, 0
      %8847 = vmatpush.msra.mxu0 0.0
      %8848 = vmatpush.msra.mxu0 0.0
      %8849 = vmatpush.msra.mxu0 0.0
      %8850 = vmatpush.msra.mxu0 0.0
      %8851 = vmatpush.msra.mxu0 0.0
      %8852 = vmatpush.msra.mxu0 0.0
      %8853 = vmatpush.msra.mxu0 0.0
      %8854 = vmatpush.msra.mxu0 0.0
      %8855 = vmatpush.msra.mxu0 0.0
      %8856 = vmatpush.msra.mxu0 0.0
      %8857 = vmatpush.msra.mxu0 0.0
      %8858 = vmatpush.msra.mxu0 0.0
      %8859 = vmatpush.msra.mxu0 0.0
      %8860 = vmatpush.msra.mxu0 0.0
      %8861 = vmatpush.msra.mxu0 0.0
      %8862 = vmatpush.msra.mxu0 %v8750
      %8863 = vmatmul.f32.gmra.mxu0 %v8752
      %v8864 = vpop.f32.mrf.mxu0
      %v8865 = vadd.f32 0.0, %v8864
      %8866 = vmatmul.f32.gmra.mxu0 %v8755
      %v8867 = vpop.f32.mrf.mxu0
      %v8868 = vadd.f32 0.0, %v8867
      %8869 = vmatmul.f32.gmra.mxu0 %v8758
      %v8870 = vpop.f32.mrf.mxu0
      %v8871 = vadd.f32 0.0, %v8870
      %8872 = vmatmul.f32.gmra.mxu0 %v8761
      %v8873 = vpop.f32.mrf.mxu0
      %v8874 = vadd.f32 0.0, %v8873
      %8875 = vmatmul.f32.gmra.mxu0 %v8764
      %v8876 = vpop.f32.mrf.mxu0
      %v8877 = vadd.f32 0.0, %v8876
      %8878 = vmatmul.f32.gmra.mxu0 %v8767
      %v8879 = vpop.f32.mrf.mxu0
      %v8880 = vadd.f32 0.0, %v8879
      %8881 = vmatmul.f32.gmra.mxu0 %v8770
      %v8882 = vpop.f32.mrf.mxu0
      %v8883 = vadd.f32 0.0, %v8882
      %8884 = vmatmul.f32.gmra.mxu0 %v8773
      %v8885 = vpop.f32.mrf.mxu0
      %v8886 = vadd.f32 0.0, %v8885
      %8887 = vmatmul.f32.gmra.mxu0 %v8776
      %v8888 = vpop.f32.mrf.mxu0
      %v8889 = vadd.f32 0.0, %v8888
      %8890 = vmatmul.f32.gmra.mxu0 %v8779
      %v8891 = vpop.f32.mrf.mxu0
      %v8892 = vadd.f32 0.0, %v8891
      %8893 = vmatmul.f32.gmra.mxu0 %v8782
      %v8894 = vpop.f32.mrf.mxu0
      %v8895 = vadd.f32 0.0, %v8894
      %8896 = vmatmul.f32.gmra.mxu0 %v8785
      %v8897 = vpop.f32.mrf.mxu0
      %v8898 = vadd.f32 0.0, %v8897
      %8899 = vmatmul.f32.gmra.mxu0 %v8788
      %v8900 = vpop.f32.mrf.mxu0
      %v8901 = vadd.f32 0.0, %v8900
      %8902 = vmatmul.f32.gmra.mxu0 %v8791
      %v8903 = vpop.f32.mrf.mxu0
      %v8904 = vadd.f32 0.0, %v8903
      %8905 = vmatmul.f32.gmra.mxu0 %v8794
      %v8906 = vpop.f32.mrf.mxu0
      %v8907 = vadd.f32 0.0, %v8906
      %8908 = vmatmul.f32.gmra.mxu0 %v8797
      %v8909 = vpop.f32.mrf.mxu0
      %v8910 = vadd.f32 0.0, %v8909
      %8911 = vmatmul.f32.gmra.mxu0 %v8800
      %v8912 = vpop.f32.mrf.mxu0
      %v8913 = vadd.f32 0.0, %v8912
      %8914 = vmatmul.f32.gmra.mxu0 %v8803
      %v8915 = vpop.f32.mrf.mxu0
      %v8916 = vadd.f32 0.0, %v8915
      %8917 = vmatmul.f32.gmra.mxu0 %v8806
      %v8918 = vpop.f32.mrf.mxu0
      %v8919 = vadd.f32 0.0, %v8918
      %8920 = vmatmul.f32.gmra.mxu0 %v8809
      %v8921 = vpop.f32.mrf.mxu0
      %v8922 = vadd.f32 0.0, %v8921
      %8923 = vmatmul.f32.gmra.mxu0 %v8812
      %v8924 = vpop.f32.mrf.mxu0
      %v8925 = vadd.f32 0.0, %v8924
      %8926 = vmatmul.f32.gmra.mxu0 %v8815
      %v8927 = vpop.f32.mrf.mxu0
      %v8928 = vadd.f32 0.0, %v8927
      %8929 = vmatmul.f32.gmra.mxu0 %v8818
      %v8930 = vpop.f32.mrf.mxu0
      %v8931 = vadd.f32 0.0, %v8930
      %8932 = vmatmul.f32.gmra.mxu0 %v8821
      %v8933 = vpop.f32.mrf.mxu0
      %v8934 = vadd.f32 0.0, %v8933
      %8935 = vmatmul.f32.gmra.mxu0 %v8824
      %v8936 = vpop.f32.mrf.mxu0
      %v8937 = vadd.f32 0.0, %v8936
      %8938 = vmatmul.f32.gmra.mxu0 %v8827
      %v8939 = vpop.f32.mrf.mxu0
      %v8940 = vadd.f32 0.0, %v8939
      %8941 = vmatmul.f32.gmra.mxu0 %v8830
      %v8942 = vpop.f32.mrf.mxu0
      %v8943 = vadd.f32 0.0, %v8942
      %8944 = vmatmul.f32.gmra.mxu0 %v8833
      %v8945 = vpop.f32.mrf.mxu0
      %v8946 = vadd.f32 0.0, %v8945
      %8947 = vmatmul.f32.gmra.mxu0 %v8836
      %v8948 = vpop.f32.mrf.mxu0
      %v8949 = vadd.f32 0.0, %v8948
      %8950 = vmatmul.f32.gmra.mxu0 %v8839
      %v8951 = vpop.f32.mrf.mxu0
      %v8952 = vadd.f32 0.0, %v8951
      %8953 = vmatmul.f32.gmra.mxu0 %v8842
      %v8954 = vpop.f32.mrf.mxu0
      %v8955 = vadd.f32 0.0, %v8954
      %8956 = vmatmul.f32.gmra.mxu0 %v8845
      %v8957 = vpop.f32.mrf.mxu0
      %v8958 = vadd.f32 0.0, %v8957
      %8959 = vdwg.mxu0
      %v8960 = vadd.f32 %v8685, %v8865
      %v8961 = vadd.f32 %v8686, %v8868
      %v8962 = vadd.f32 %v8687, %v8871
      %v8963 = vadd.f32 %v8688, %v8874
      %v8964 = vadd.f32 %v8689, %v8877
      %v8965 = vadd.f32 %v8690, %v8880
      %v8966 = vadd.f32 %v8691, %v8883
      %v8967 = vadd.f32 %v8692, %v8886
      %v8968 = vadd.f32 %v8693, %v8889
      %v8969 = vadd.f32 %v8694, %v8892
      %v8970 = vadd.f32 %v8695, %v8895
      %v8971 = vadd.f32 %v8696, %v8898
      %v8972 = vadd.f32 %v8697, %v8901
      %v8973 = vadd.f32 %v8698, %v8904
      %v8974 = vadd.f32 %v8699, %v8907
      %v8975 = vadd.f32 %v8700, %v8910
      %v8976 = vadd.f32 %v8701, %v8913
      %v8977 = vadd.f32 %v8702, %v8916
      %v8978 = vadd.f32 %v8703, %v8919
      %v8979 = vadd.f32 %v8704, %v8922
      %v8980 = vadd.f32 %v8705, %v8925
      %v8981 = vadd.f32 %v8706, %v8928
      %v8982 = vadd.f32 %v8707, %v8931
      %v8983 = vadd.f32 %v8708, %v8934
      %v8984 = vadd.f32 %v8709, %v8937
      %v8985 = vadd.f32 %v8710, %v8940
      %v8986 = vadd.f32 %v8711, %v8943
      %v8987 = vadd.f32 %v8712, %v8946
      %v8988 = vadd.f32 %v8713, %v8949
      %v8989 = vadd.f32 %v8714, %v8952
      %v8990 = vadd.f32 %v8715, %v8955
      %v8991 = vadd.f32 %v8716, %v8958
      %v8992 = vld [vmem:[%s2903 + $0x1] sm:$0xff]
      %v8993 = vld [vmem:[%s2903 + $0x9] sm:$0xff]
      %v8994 = vld [vmem:[%s2903 + $0x19] sm:$0xff]
      %v8995 = vld [vmem:[%s2903 + $0x21] sm:$0xff]
      %v8996 = vld [vmem:[%s2903 + $0x31] sm:$0xff]
      %v8997 = vld [vmem:[%s2903 + $0x39] sm:$0xff]
      %v8998 = vld [vmem:[%s2903 + $0x49] sm:$0xff]
      %v8999 = vld [vmem:[%s2903 + $0x51] sm:$0xff]
      %v9000 = vld [vmem:[%s2903 + $0x61] sm:$0xff]
      %v9001 = vld [vmem:[%s2903 + $0x69] sm:$0xff]
      %v9002 = vld [vmem:[%s2903 + $0x79] sm:$0xff]
      %v9003 = vld [vmem:[%s2903 + $0x81] sm:$0xff]
      %v9004 = vld [vmem:[%s2903 + $0x91] sm:$0xff]
      %v9005 = vld [vmem:[%s2903 + $0x99] sm:$0xff]
      %v9006 = vld [vmem:[%s2903 + $0xa9] sm:$0xff]
      %v9007 = vld [vmem:[%s2903 + $0xb1] sm:$0xff]
      %v9008 = vld [vmem:[%s2903 + $0xc1] sm:$0xff]
      %v9009 = vld [vmem:[%s2903 + $0xc9] sm:$0xff]
      %v9010 = vld [vmem:[%s2903 + $0xd9] sm:$0xff]
      %v9011 = vld [vmem:[%s2903 + $0xe1] sm:$0xff]
      %v9012 = vld [vmem:[%s2903 + $0xf1] sm:$0xff]
      %v9013 = vld [vmem:[%s2903 + $0xf9] sm:$0xff]
      %v9014 = vld [vmem:[%s2903 + $0x109] sm:$0xff]
      %v9015 = vld [vmem:[%s2903 + $0x111] sm:$0xff]
      %v9016 = vld [vmem:[%s2903 + $0x121] sm:$0xff]
      %v9017 = vld [vmem:[%s2903 + $0x129] sm:$0xff]
      %v9018 = vld [vmem:[%s2903 + $0x139] sm:$0xff]
      %v9019 = vld [vmem:[%s2903 + $0x141] sm:$0xff]
      %v9020 = vld [vmem:[%s2903 + $0x151] sm:$0xff]
      %v9021 = vld [vmem:[%s2903 + $0x159] sm:$0xff]
      %v9022 = vld [vmem:[%s2903 + $0x169] sm:$0xff]
      %v9023 = vld [vmem:[%s2903 + $0x171] sm:$0xff]
      %s9024 = scalar_lea.vmem %s3, 176
      %v9025 = vld [vmem:[%s9024] sm:$0xff]
      %v9027 = vsel %vm337, %v8992, 0
      %v9030 = vsel %vm337, %v8993, 0
      %v9033 = vsel %vm337, %v8994, 0
      %v9036 = vsel %vm337, %v8995, 0
      %v9039 = vsel %vm337, %v8996, 0
      %v9042 = vsel %vm337, %v8997, 0
      %v9045 = vsel %vm337, %v8998, 0
      %v9048 = vsel %vm337, %v8999, 0
      %v9051 = vsel %vm337, %v9000, 0
      %v9054 = vsel %vm337, %v9001, 0
      %v9057 = vsel %vm337, %v9002, 0
      %v9060 = vsel %vm337, %v9003, 0
      %v9063 = vsel %vm337, %v9004, 0
      %v9066 = vsel %vm337, %v9005, 0
      %v9069 = vsel %vm337, %v9006, 0
      %v9072 = vsel %vm337, %v9007, 0
      %v9075 = vsel %vm337, %v9008, 0
      %v9078 = vsel %vm337, %v9009, 0
      %v9081 = vsel %vm337, %v9010, 0
      %v9084 = vsel %vm337, %v9011, 0
      %v9087 = vsel %vm337, %v9012, 0
      %v9090 = vsel %vm337, %v9013, 0
      %v9093 = vsel %vm337, %v9014, 0
      %v9096 = vsel %vm337, %v9015, 0
      %v9099 = vsel %vm337, %v9016, 0
      %v9102 = vsel %vm337, %v9017, 0
      %v9105 = vsel %vm337, %v9018, 0
      %v9108 = vsel %vm337, %v9019, 0
      %v9111 = vsel %vm337, %v9020, 0
      %v9114 = vsel %vm337, %v9021, 0
      %v9117 = vsel %vm337, %v9022, 0
      %v9120 = vsel %vm337, %v9023, 0
      %9122 = vmatpush.msra.mxu0 0.0
      %9123 = vmatpush.msra.mxu0 0.0
      %9124 = vmatpush.msra.mxu0 0.0
      %9125 = vmatpush.msra.mxu0 0.0
      %9126 = vmatpush.msra.mxu0 0.0
      %9127 = vmatpush.msra.mxu0 0.0
      %9128 = vmatpush.msra.mxu0 0.0
      %9129 = vmatpush.msra.mxu0 0.0
      %9130 = vmatpush.msra.mxu0 0.0
      %9131 = vmatpush.msra.mxu0 0.0
      %9132 = vmatpush.msra.mxu0 0.0
      %9133 = vmatpush.msra.mxu0 0.0
      %9134 = vmatpush.msra.mxu0 0.0
      %9135 = vmatpush.msra.mxu0 0.0
      %9136 = vmatpush.msra.mxu0 0.0
      %9137 = vmatpush.msra.mxu0 %v9025
      %9138 = vmatmul.f32.gmra.mxu0 %v9027
      %v9139 = vpop.f32.mrf.mxu0
      %v9140 = vadd.f32 0.0, %v9139
      %9141 = vmatmul.f32.gmra.mxu0 %v9030
      %v9142 = vpop.f32.mrf.mxu0
      %v9143 = vadd.f32 0.0, %v9142
      %9144 = vmatmul.f32.gmra.mxu0 %v9033
      %v9145 = vpop.f32.mrf.mxu0
      %v9146 = vadd.f32 0.0, %v9145
      %9147 = vmatmul.f32.gmra.mxu0 %v9036
      %v9148 = vpop.f32.mrf.mxu0
      %v9149 = vadd.f32 0.0, %v9148
      %9150 = vmatmul.f32.gmra.mxu0 %v9039
      %v9151 = vpop.f32.mrf.mxu0
      %v9152 = vadd.f32 0.0, %v9151
      %9153 = vmatmul.f32.gmra.mxu0 %v9042
      %v9154 = vpop.f32.mrf.mxu0
      %v9155 = vadd.f32 0.0, %v9154
      %9156 = vmatmul.f32.gmra.mxu0 %v9045
      %v9157 = vpop.f32.mrf.mxu0
      %v9158 = vadd.f32 0.0, %v9157
      %9159 = vmatmul.f32.gmra.mxu0 %v9048
      %v9160 = vpop.f32.mrf.mxu0
      %v9161 = vadd.f32 0.0, %v9160
      %9162 = vmatmul.f32.gmra.mxu0 %v9051
      %v9163 = vpop.f32.mrf.mxu0
      %v9164 = vadd.f32 0.0, %v9163
      %9165 = vmatmul.f32.gmra.mxu0 %v9054
      %v9166 = vpop.f32.mrf.mxu0
      %v9167 = vadd.f32 0.0, %v9166
      %9168 = vmatmul.f32.gmra.mxu0 %v9057
      %v9169 = vpop.f32.mrf.mxu0
      %v9170 = vadd.f32 0.0, %v9169
      %9171 = vmatmul.f32.gmra.mxu0 %v9060
      %v9172 = vpop.f32.mrf.mxu0
      %v9173 = vadd.f32 0.0, %v9172
      %9174 = vmatmul.f32.gmra.mxu0 %v9063
      %v9175 = vpop.f32.mrf.mxu0
      %v9176 = vadd.f32 0.0, %v9175
      %9177 = vmatmul.f32.gmra.mxu0 %v9066
      %v9178 = vpop.f32.mrf.mxu0
      %v9179 = vadd.f32 0.0, %v9178
      %9180 = vmatmul.f32.gmra.mxu0 %v9069
      %v9181 = vpop.f32.mrf.mxu0
      %v9182 = vadd.f32 0.0, %v9181
      %9183 = vmatmul.f32.gmra.mxu0 %v9072
      %v9184 = vpop.f32.mrf.mxu0
      %v9185 = vadd.f32 0.0, %v9184
      %9186 = vmatmul.f32.gmra.mxu0 %v9075
      %v9187 = vpop.f32.mrf.mxu0
      %v9188 = vadd.f32 0.0, %v9187
      %9189 = vmatmul.f32.gmra.mxu0 %v9078
      %v9190 = vpop.f32.mrf.mxu0
      %v9191 = vadd.f32 0.0, %v9190
      %9192 = vmatmul.f32.gmra.mxu0 %v9081
      %v9193 = vpop.f32.mrf.mxu0
      %v9194 = vadd.f32 0.0, %v9193
      %9195 = vmatmul.f32.gmra.mxu0 %v9084
      %v9196 = vpop.f32.mrf.mxu0
      %v9197 = vadd.f32 0.0, %v9196
      %9198 = vmatmul.f32.gmra.mxu0 %v9087
      %v9199 = vpop.f32.mrf.mxu0
      %v9200 = vadd.f32 0.0, %v9199
      %9201 = vmatmul.f32.gmra.mxu0 %v9090
      %v9202 = vpop.f32.mrf.mxu0
      %v9203 = vadd.f32 0.0, %v9202
      %9204 = vmatmul.f32.gmra.mxu0 %v9093
      %v9205 = vpop.f32.mrf.mxu0
      %v9206 = vadd.f32 0.0, %v9205
      %9207 = vmatmul.f32.gmra.mxu0 %v9096
      %v9208 = vpop.f32.mrf.mxu0
      %v9209 = vadd.f32 0.0, %v9208
      %9210 = vmatmul.f32.gmra.mxu0 %v9099
      %v9211 = vpop.f32.mrf.mxu0
      %v9212 = vadd.f32 0.0, %v9211
      %9213 = vmatmul.f32.gmra.mxu0 %v9102
      %v9214 = vpop.f32.mrf.mxu0
      %v9215 = vadd.f32 0.0, %v9214
      %9216 = vmatmul.f32.gmra.mxu0 %v9105
      %v9217 = vpop.f32.mrf.mxu0
      %v9218 = vadd.f32 0.0, %v9217
      %9219 = vmatmul.f32.gmra.mxu0 %v9108
      %v9220 = vpop.f32.mrf.mxu0
      %v9221 = vadd.f32 0.0, %v9220
      %9222 = vmatmul.f32.gmra.mxu0 %v9111
      %v9223 = vpop.f32.mrf.mxu0
      %v9224 = vadd.f32 0.0, %v9223
      %9225 = vmatmul.f32.gmra.mxu0 %v9114
      %v9226 = vpop.f32.mrf.mxu0
      %v9227 = vadd.f32 0.0, %v9226
      %9228 = vmatmul.f32.gmra.mxu0 %v9117
      %v9229 = vpop.f32.mrf.mxu0
      %v9230 = vadd.f32 0.0, %v9229
      %9231 = vmatmul.f32.gmra.mxu0 %v9120
      %v9232 = vpop.f32.mrf.mxu0
      %v9233 = vadd.f32 0.0, %v9232
      %9234 = vdwg.mxu0
      %v9235 = vadd.f32 %v8960, %v9140
      %v9236 = vadd.f32 %v8961, %v9143
      %v9237 = vadd.f32 %v8962, %v9146
      %v9238 = vadd.f32 %v8963, %v9149
      %v9239 = vadd.f32 %v8964, %v9152
      %v9240 = vadd.f32 %v8965, %v9155
      %v9241 = vadd.f32 %v8966, %v9158
      %v9242 = vadd.f32 %v8967, %v9161
      %v9243 = vadd.f32 %v8968, %v9164
      %v9244 = vadd.f32 %v8969, %v9167
      %v9245 = vadd.f32 %v8970, %v9170
      %v9246 = vadd.f32 %v8971, %v9173
      %v9247 = vadd.f32 %v8972, %v9176
      %v9248 = vadd.f32 %v8973, %v9179
      %v9249 = vadd.f32 %v8974, %v9182
      %v9250 = vadd.f32 %v8975, %v9185
      %v9251 = vadd.f32 %v8976, %v9188
      %v9252 = vadd.f32 %v8977, %v9191
      %v9253 = vadd.f32 %v8978, %v9194
      %v9254 = vadd.f32 %v8979, %v9197
      %v9255 = vadd.f32 %v8980, %v9200
      %v9256 = vadd.f32 %v8981, %v9203
      %v9257 = vadd.f32 %v8982, %v9206
      %v9258 = vadd.f32 %v8983, %v9209
      %v9259 = vadd.f32 %v8984, %v9212
      %v9260 = vadd.f32 %v8985, %v9215
      %v9261 = vadd.f32 %v8986, %v9218
      %v9262 = vadd.f32 %v8987, %v9221
      %v9263 = vadd.f32 %v8988, %v9224
      %v9264 = vadd.f32 %v8989, %v9227
      %v9265 = vadd.f32 %v8990, %v9230
      %v9266 = vadd.f32 %v8991, %v9233
      %v9267 = vld [vmem:[%s2903 + $0x2] sm:$0xff]
      %v9268 = vld [vmem:[%s2903 + $0xa] sm:$0xff]
      %v9269 = vld [vmem:[%s2903 + $0x1a] sm:$0xff]
      %v9270 = vld [vmem:[%s2903 + $0x22] sm:$0xff]
      %v9271 = vld [vmem:[%s2903 + $0x32] sm:$0xff]
      %v9272 = vld [vmem:[%s2903 + $0x3a] sm:$0xff]
      %v9273 = vld [vmem:[%s2903 + $0x4a] sm:$0xff]
      %v9274 = vld [vmem:[%s2903 + $0x52] sm:$0xff]
      %v9275 = vld [vmem:[%s2903 + $0x62] sm:$0xff]
      %v9276 = vld [vmem:[%s2903 + $0x6a] sm:$0xff]
      %v9277 = vld [vmem:[%s2903 + $0x7a] sm:$0xff]
      %v9278 = vld [vmem:[%s2903 + $0x82] sm:$0xff]
      %v9279 = vld [vmem:[%s2903 + $0x92] sm:$0xff]
      %v9280 = vld [vmem:[%s2903 + $0x9a] sm:$0xff]
      %v9281 = vld [vmem:[%s2903 + $0xaa] sm:$0xff]
      %v9282 = vld [vmem:[%s2903 + $0xb2] sm:$0xff]
      %v9283 = vld [vmem:[%s2903 + $0xc2] sm:$0xff]
      %v9284 = vld [vmem:[%s2903 + $0xca] sm:$0xff]
      %v9285 = vld [vmem:[%s2903 + $0xda] sm:$0xff]
      %v9286 = vld [vmem:[%s2903 + $0xe2] sm:$0xff]
      %v9287 = vld [vmem:[%s2903 + $0xf2] sm:$0xff]
      %v9288 = vld [vmem:[%s2903 + $0xfa] sm:$0xff]
      %v9289 = vld [vmem:[%s2903 + $0x10a] sm:$0xff]
      %v9290 = vld [vmem:[%s2903 + $0x112] sm:$0xff]
      %v9291 = vld [vmem:[%s2903 + $0x122] sm:$0xff]
      %v9292 = vld [vmem:[%s2903 + $0x12a] sm:$0xff]
      %v9293 = vld [vmem:[%s2903 + $0x13a] sm:$0xff]
      %v9294 = vld [vmem:[%s2903 + $0x142] sm:$0xff]
      %v9295 = vld [vmem:[%s2903 + $0x152] sm:$0xff]
      %v9296 = vld [vmem:[%s2903 + $0x15a] sm:$0xff]
      %v9297 = vld [vmem:[%s2903 + $0x16a] sm:$0xff]
      %v9298 = vld [vmem:[%s2903 + $0x172] sm:$0xff]
      %s9299 = scalar_lea.vmem %s3, 184
      %v9300 = vld [vmem:[%s9299] sm:$0xff]
      %v9302 = vsel %vm337, %v9267, 0
      %v9305 = vsel %vm337, %v9268, 0
      %v9308 = vsel %vm337, %v9269, 0
      %v9311 = vsel %vm337, %v9270, 0
      %v9314 = vsel %vm337, %v9271, 0
      %v9317 = vsel %vm337, %v9272, 0
      %v9320 = vsel %vm337, %v9273, 0
      %v9323 = vsel %vm337, %v9274, 0
      %v9326 = vsel %vm337, %v9275, 0
      %v9329 = vsel %vm337, %v9276, 0
      %v9332 = vsel %vm337, %v9277, 0
      %v9335 = vsel %vm337, %v9278, 0
      %v9338 = vsel %vm337, %v9279, 0
      %v9341 = vsel %vm337, %v9280, 0
      %v9344 = vsel %vm337, %v9281, 0
      %v9347 = vsel %vm337, %v9282, 0
      %v9350 = vsel %vm337, %v9283, 0
      %v9353 = vsel %vm337, %v9284, 0
      %v9356 = vsel %vm337, %v9285, 0
      %v9359 = vsel %vm337, %v9286, 0
      %v9362 = vsel %vm337, %v9287, 0
      %v9365 = vsel %vm337, %v9288, 0
      %v9368 = vsel %vm337, %v9289, 0
      %v9371 = vsel %vm337, %v9290, 0
      %v9374 = vsel %vm337, %v9291, 0
      %v9377 = vsel %vm337, %v9292, 0
      %v9380 = vsel %vm337, %v9293, 0
      %v9383 = vsel %vm337, %v9294, 0
      %v9386 = vsel %vm337, %v9295, 0
      %v9389 = vsel %vm337, %v9296, 0
      %v9392 = vsel %vm337, %v9297, 0
      %v9395 = vsel %vm337, %v9298, 0
      %9397 = vmatpush.msra.mxu0 0.0
      %9398 = vmatpush.msra.mxu0 0.0
      %9399 = vmatpush.msra.mxu0 0.0
      %9400 = vmatpush.msra.mxu0 0.0
      %9401 = vmatpush.msra.mxu0 0.0
      %9402 = vmatpush.msra.mxu0 0.0
      %9403 = vmatpush.msra.mxu0 0.0
      %9404 = vmatpush.msra.mxu0 0.0
      %9405 = vmatpush.msra.mxu0 0.0
      %9406 = vmatpush.msra.mxu0 0.0
      %9407 = vmatpush.msra.mxu0 0.0
      %9408 = vmatpush.msra.mxu0 0.0
      %9409 = vmatpush.msra.mxu0 0.0
      %9410 = vmatpush.msra.mxu0 0.0
      %9411 = vmatpush.msra.mxu0 0.0
      %9412 = vmatpush.msra.mxu0 %v9300
      %9413 = vmatmul.f32.gmra.mxu0 %v9302
      %v9414 = vpop.f32.mrf.mxu0
      %v9415 = vadd.f32 0.0, %v9414
      %9416 = vmatmul.f32.gmra.mxu0 %v9305
      %v9417 = vpop.f32.mrf.mxu0
      %v9418 = vadd.f32 0.0, %v9417
      %9419 = vmatmul.f32.gmra.mxu0 %v9308
      %v9420 = vpop.f32.mrf.mxu0
      %v9421 = vadd.f32 0.0, %v9420
      %9422 = vmatmul.f32.gmra.mxu0 %v9311
      %v9423 = vpop.f32.mrf.mxu0
      %v9424 = vadd.f32 0.0, %v9423
      %9425 = vmatmul.f32.gmra.mxu0 %v9314
      %v9426 = vpop.f32.mrf.mxu0
      %v9427 = vadd.f32 0.0, %v9426
      %9428 = vmatmul.f32.gmra.mxu0 %v9317
      %v9429 = vpop.f32.mrf.mxu0
      %v9430 = vadd.f32 0.0, %v9429
      %9431 = vmatmul.f32.gmra.mxu0 %v9320
      %v9432 = vpop.f32.mrf.mxu0
      %v9433 = vadd.f32 0.0, %v9432
      %9434 = vmatmul.f32.gmra.mxu0 %v9323
      %v9435 = vpop.f32.mrf.mxu0
      %v9436 = vadd.f32 0.0, %v9435
      %9437 = vmatmul.f32.gmra.mxu0 %v9326
      %v9438 = vpop.f32.mrf.mxu0
      %v9439 = vadd.f32 0.0, %v9438
      %9440 = vmatmul.f32.gmra.mxu0 %v9329
      %v9441 = vpop.f32.mrf.mxu0
      %v9442 = vadd.f32 0.0, %v9441
      %9443 = vmatmul.f32.gmra.mxu0 %v9332
      %v9444 = vpop.f32.mrf.mxu0
      %v9445 = vadd.f32 0.0, %v9444
      %9446 = vmatmul.f32.gmra.mxu0 %v9335
      %v9447 = vpop.f32.mrf.mxu0
      %v9448 = vadd.f32 0.0, %v9447
      %9449 = vmatmul.f32.gmra.mxu0 %v9338
      %v9450 = vpop.f32.mrf.mxu0
      %v9451 = vadd.f32 0.0, %v9450
      %9452 = vmatmul.f32.gmra.mxu0 %v9341
      %v9453 = vpop.f32.mrf.mxu0
      %v9454 = vadd.f32 0.0, %v9453
      %9455 = vmatmul.f32.gmra.mxu0 %v9344
      %v9456 = vpop.f32.mrf.mxu0
      %v9457 = vadd.f32 0.0, %v9456
      %9458 = vmatmul.f32.gmra.mxu0 %v9347
      %v9459 = vpop.f32.mrf.mxu0
      %v9460 = vadd.f32 0.0, %v9459
      %9461 = vmatmul.f32.gmra.mxu0 %v9350
      %v9462 = vpop.f32.mrf.mxu0
      %v9463 = vadd.f32 0.0, %v9462
      %9464 = vmatmul.f32.gmra.mxu0 %v9353
      %v9465 = vpop.f32.mrf.mxu0
      %v9466 = vadd.f32 0.0, %v9465
      %9467 = vmatmul.f32.gmra.mxu0 %v9356
      %v9468 = vpop.f32.mrf.mxu0
      %v9469 = vadd.f32 0.0, %v9468
      %9470 = vmatmul.f32.gmra.mxu0 %v9359
      %v9471 = vpop.f32.mrf.mxu0
      %v9472 = vadd.f32 0.0, %v9471
      %9473 = vmatmul.f32.gmra.mxu0 %v9362
      %v9474 = vpop.f32.mrf.mxu0
      %v9475 = vadd.f32 0.0, %v9474
      %9476 = vmatmul.f32.gmra.mxu0 %v9365
      %v9477 = vpop.f32.mrf.mxu0
      %v9478 = vadd.f32 0.0, %v9477
      %9479 = vmatmul.f32.gmra.mxu0 %v9368
      %v9480 = vpop.f32.mrf.mxu0
      %v9481 = vadd.f32 0.0, %v9480
      %9482 = vmatmul.f32.gmra.mxu0 %v9371
      %v9483 = vpop.f32.mrf.mxu0
      %v9484 = vadd.f32 0.0, %v9483
      %9485 = vmatmul.f32.gmra.mxu0 %v9374
      %v9486 = vpop.f32.mrf.mxu0
      %v9487 = vadd.f32 0.0, %v9486
      %9488 = vmatmul.f32.gmra.mxu0 %v9377
      %v9489 = vpop.f32.mrf.mxu0
      %v9490 = vadd.f32 0.0, %v9489
      %9491 = vmatmul.f32.gmra.mxu0 %v9380
      %v9492 = vpop.f32.mrf.mxu0
      %v9493 = vadd.f32 0.0, %v9492
      %9494 = vmatmul.f32.gmra.mxu0 %v9383
      %v9495 = vpop.f32.mrf.mxu0
      %v9496 = vadd.f32 0.0, %v9495
      %9497 = vmatmul.f32.gmra.mxu0 %v9386
      %v9498 = vpop.f32.mrf.mxu0
      %v9499 = vadd.f32 0.0, %v9498
      %9500 = vmatmul.f32.gmra.mxu0 %v9389
      %v9501 = vpop.f32.mrf.mxu0
      %v9502 = vadd.f32 0.0, %v9501
      %9503 = vmatmul.f32.gmra.mxu0 %v9392
      %v9504 = vpop.f32.mrf.mxu0
      %v9505 = vadd.f32 0.0, %v9504
      %9506 = vmatmul.f32.gmra.mxu0 %v9395
      %v9507 = vpop.f32.mrf.mxu0
      %v9508 = vadd.f32 0.0, %v9507
      %9509 = vdwg.mxu0
      %v9510 = vadd.f32 %v9235, %v9415
      %v9511 = vadd.f32 %v9236, %v9418
      %v9512 = vadd.f32 %v9237, %v9421
      %v9513 = vadd.f32 %v9238, %v9424
      %v9514 = vadd.f32 %v9239, %v9427
      %v9515 = vadd.f32 %v9240, %v9430
      %v9516 = vadd.f32 %v9241, %v9433
      %v9517 = vadd.f32 %v9242, %v9436
      %v9518 = vadd.f32 %v9243, %v9439
      %v9519 = vadd.f32 %v9244, %v9442
      %v9520 = vadd.f32 %v9245, %v9445
      %v9521 = vadd.f32 %v9246, %v9448
      %v9522 = vadd.f32 %v9247, %v9451
      %v9523 = vadd.f32 %v9248, %v9454
      %v9524 = vadd.f32 %v9249, %v9457
      %v9525 = vadd.f32 %v9250, %v9460
      %v9526 = vadd.f32 %v9251, %v9463
      %v9527 = vadd.f32 %v9252, %v9466
      %v9528 = vadd.f32 %v9253, %v9469
      %v9529 = vadd.f32 %v9254, %v9472
      %v9530 = vadd.f32 %v9255, %v9475
      %v9531 = vadd.f32 %v9256, %v9478
      %v9532 = vadd.f32 %v9257, %v9481
      %v9533 = vadd.f32 %v9258, %v9484
      %v9534 = vadd.f32 %v9259, %v9487
      %v9535 = vadd.f32 %v9260, %v9490
      %v9536 = vadd.f32 %v9261, %v9493
      %v9537 = vadd.f32 %v9262, %v9496
      %v9538 = vadd.f32 %v9263, %v9499
      %v9539 = vadd.f32 %v9264, %v9502
      %v9540 = vadd.f32 %v9265, %v9505
      %v9541 = vadd.f32 %v9266, %v9508
      %v9542 = vld [vmem:[%s4521] sm:$0xff]
      %v9543 = vld [vmem:[%s4521 + $0x8] sm:$0xff]
      %v9544 = vld [vmem:[%s4521 + $0x18] sm:$0xff]
      %v9545 = vld [vmem:[%s4521 + $0x20] sm:$0xff]
      %v9546 = vld [vmem:[%s4521 + $0x30] sm:$0xff]
      %v9547 = vld [vmem:[%s4521 + $0x38] sm:$0xff]
      %v9548 = vld [vmem:[%s4521 + $0x48] sm:$0xff]
      %v9549 = vld [vmem:[%s4521 + $0x50] sm:$0xff]
      %v9550 = vld [vmem:[%s4521 + $0x60] sm:$0xff]
      %v9551 = vld [vmem:[%s4521 + $0x68] sm:$0xff]
      %v9552 = vld [vmem:[%s4521 + $0x78] sm:$0xff]
      %v9553 = vld [vmem:[%s4521 + $0x80] sm:$0xff]
      %v9554 = vld [vmem:[%s4521 + $0x90] sm:$0xff]
      %v9555 = vld [vmem:[%s4521 + $0x98] sm:$0xff]
      %v9556 = vld [vmem:[%s4521 + $0xa8] sm:$0xff]
      %v9557 = vld [vmem:[%s4521 + $0xb0] sm:$0xff]
      %v9558 = vld [vmem:[%s4521 + $0xc0] sm:$0xff]
      %v9559 = vld [vmem:[%s4521 + $0xc8] sm:$0xff]
      %v9560 = vld [vmem:[%s4521 + $0xd8] sm:$0xff]
      %v9561 = vld [vmem:[%s4521 + $0xe0] sm:$0xff]
      %v9562 = vld [vmem:[%s4521 + $0xf0] sm:$0xff]
      %v9563 = vld [vmem:[%s4521 + $0xf8] sm:$0xff]
      %v9564 = vld [vmem:[%s4521 + $0x108] sm:$0xff]
      %v9565 = vld [vmem:[%s4521 + $0x110] sm:$0xff]
      %v9566 = vld [vmem:[%s4521 + $0x120] sm:$0xff]
      %v9567 = vld [vmem:[%s4521 + $0x128] sm:$0xff]
      %v9568 = vld [vmem:[%s4521 + $0x138] sm:$0xff]
      %v9569 = vld [vmem:[%s4521 + $0x140] sm:$0xff]
      %v9570 = vld [vmem:[%s4521 + $0x150] sm:$0xff]
      %v9571 = vld [vmem:[%s4521 + $0x158] sm:$0xff]
      %v9572 = vld [vmem:[%s4521 + $0x168] sm:$0xff]
      %v9573 = vld [vmem:[%s4521 + $0x170] sm:$0xff]
      %s9574 = scalar_lea.vmem %s3, 192
      %v9575 = vld [vmem:[%s9574] sm:$0xff]
      %v9577 = vsel %vm337, %v9542, 0
      %v9580 = vsel %vm337, %v9543, 0
      %v9583 = vsel %vm337, %v9544, 0
      %v9586 = vsel %vm337, %v9545, 0
      %v9589 = vsel %vm337, %v9546, 0
      %v9592 = vsel %vm337, %v9547, 0
      %v9595 = vsel %vm337, %v9548, 0
      %v9598 = vsel %vm337, %v9549, 0
      %v9601 = vsel %vm337, %v9550, 0
      %v9604 = vsel %vm337, %v9551, 0
      %v9607 = vsel %vm337, %v9552, 0
      %v9610 = vsel %vm337, %v9553, 0
      %v9613 = vsel %vm337, %v9554, 0
      %v9616 = vsel %vm337, %v9555, 0
      %v9619 = vsel %vm337, %v9556, 0
      %v9622 = vsel %vm337, %v9557, 0
      %v9625 = vsel %vm337, %v9558, 0
      %v9628 = vsel %vm337, %v9559, 0
      %v9631 = vsel %vm337, %v9560, 0
      %v9634 = vsel %vm337, %v9561, 0
      %v9637 = vsel %vm337, %v9562, 0
      %v9640 = vsel %vm337, %v9563, 0
      %v9643 = vsel %vm337, %v9564, 0
      %v9646 = vsel %vm337, %v9565, 0
      %v9649 = vsel %vm337, %v9566, 0
      %v9652 = vsel %vm337, %v9567, 0
      %v9655 = vsel %vm337, %v9568, 0
      %v9658 = vsel %vm337, %v9569, 0
      %v9661 = vsel %vm337, %v9570, 0
      %v9664 = vsel %vm337, %v9571, 0
      %v9667 = vsel %vm337, %v9572, 0
      %v9670 = vsel %vm337, %v9573, 0
      %9672 = vmatpush.msra.mxu0 0.0
      %9673 = vmatpush.msra.mxu0 0.0
      %9674 = vmatpush.msra.mxu0 0.0
      %9675 = vmatpush.msra.mxu0 0.0
      %9676 = vmatpush.msra.mxu0 0.0
      %9677 = vmatpush.msra.mxu0 0.0
      %9678 = vmatpush.msra.mxu0 0.0
      %9679 = vmatpush.msra.mxu0 0.0
      %9680 = vmatpush.msra.mxu0 0.0
      %9681 = vmatpush.msra.mxu0 0.0
      %9682 = vmatpush.msra.mxu0 0.0
      %9683 = vmatpush.msra.mxu0 0.0
      %9684 = vmatpush.msra.mxu0 0.0
      %9685 = vmatpush.msra.mxu0 0.0
      %9686 = vmatpush.msra.mxu0 0.0
      %9687 = vmatpush.msra.mxu0 %v9575
      %9688 = vmatmul.f32.gmra.mxu0 %v9577
      %v9689 = vpop.f32.mrf.mxu0
      %v9690 = vadd.f32 0.0, %v9689
      %9691 = vmatmul.f32.gmra.mxu0 %v9580
      %v9692 = vpop.f32.mrf.mxu0
      %v9693 = vadd.f32 0.0, %v9692
      %9694 = vmatmul.f32.gmra.mxu0 %v9583
      %v9695 = vpop.f32.mrf.mxu0
      %v9696 = vadd.f32 0.0, %v9695
      %9697 = vmatmul.f32.gmra.mxu0 %v9586
      %v9698 = vpop.f32.mrf.mxu0
      %v9699 = vadd.f32 0.0, %v9698
      %9700 = vmatmul.f32.gmra.mxu0 %v9589
      %v9701 = vpop.f32.mrf.mxu0
      %v9702 = vadd.f32 0.0, %v9701
      %9703 = vmatmul.f32.gmra.mxu0 %v9592
      %v9704 = vpop.f32.mrf.mxu0
      %v9705 = vadd.f32 0.0, %v9704
      %9706 = vmatmul.f32.gmra.mxu0 %v9595
      %v9707 = vpop.f32.mrf.mxu0
      %v9708 = vadd.f32 0.0, %v9707
      %9709 = vmatmul.f32.gmra.mxu0 %v9598
      %v9710 = vpop.f32.mrf.mxu0
      %v9711 = vadd.f32 0.0, %v9710
      %9712 = vmatmul.f32.gmra.mxu0 %v9601
      %v9713 = vpop.f32.mrf.mxu0
      %v9714 = vadd.f32 0.0, %v9713
      %9715 = vmatmul.f32.gmra.mxu0 %v9604
      %v9716 = vpop.f32.mrf.mxu0
      %v9717 = vadd.f32 0.0, %v9716
      %9718 = vmatmul.f32.gmra.mxu0 %v9607
      %v9719 = vpop.f32.mrf.mxu0
      %v9720 = vadd.f32 0.0, %v9719
      %9721 = vmatmul.f32.gmra.mxu0 %v9610
      %v9722 = vpop.f32.mrf.mxu0
      %v9723 = vadd.f32 0.0, %v9722
      %9724 = vmatmul.f32.gmra.mxu0 %v9613
      %v9725 = vpop.f32.mrf.mxu0
      %v9726 = vadd.f32 0.0, %v9725
      %9727 = vmatmul.f32.gmra.mxu0 %v9616
      %v9728 = vpop.f32.mrf.mxu0
      %v9729 = vadd.f32 0.0, %v9728
      %9730 = vmatmul.f32.gmra.mxu0 %v9619
      %v9731 = vpop.f32.mrf.mxu0
      %v9732 = vadd.f32 0.0, %v9731
      %9733 = vmatmul.f32.gmra.mxu0 %v9622
      %v9734 = vpop.f32.mrf.mxu0
      %v9735 = vadd.f32 0.0, %v9734
      %9736 = vmatmul.f32.gmra.mxu0 %v9625
      %v9737 = vpop.f32.mrf.mxu0
      %v9738 = vadd.f32 0.0, %v9737
      %9739 = vmatmul.f32.gmra.mxu0 %v9628
      %v9740 = vpop.f32.mrf.mxu0
      %v9741 = vadd.f32 0.0, %v9740
      %9742 = vmatmul.f32.gmra.mxu0 %v9631
      %v9743 = vpop.f32.mrf.mxu0
      %v9744 = vadd.f32 0.0, %v9743
      %9745 = vmatmul.f32.gmra.mxu0 %v9634
      %v9746 = vpop.f32.mrf.mxu0
      %v9747 = vadd.f32 0.0, %v9746
      %9748 = vmatmul.f32.gmra.mxu0 %v9637
      %v9749 = vpop.f32.mrf.mxu0
      %v9750 = vadd.f32 0.0, %v9749
      %9751 = vmatmul.f32.gmra.mxu0 %v9640
      %v9752 = vpop.f32.mrf.mxu0
      %v9753 = vadd.f32 0.0, %v9752
      %9754 = vmatmul.f32.gmra.mxu0 %v9643
      %v9755 = vpop.f32.mrf.mxu0
      %v9756 = vadd.f32 0.0, %v9755
      %9757 = vmatmul.f32.gmra.mxu0 %v9646
      %v9758 = vpop.f32.mrf.mxu0
      %v9759 = vadd.f32 0.0, %v9758
      %9760 = vmatmul.f32.gmra.mxu0 %v9649
      %v9761 = vpop.f32.mrf.mxu0
      %v9762 = vadd.f32 0.0, %v9761
      %9763 = vmatmul.f32.gmra.mxu0 %v9652
      %v9764 = vpop.f32.mrf.mxu0
      %v9765 = vadd.f32 0.0, %v9764
      %9766 = vmatmul.f32.gmra.mxu0 %v9655
      %v9767 = vpop.f32.mrf.mxu0
      %v9768 = vadd.f32 0.0, %v9767
      %9769 = vmatmul.f32.gmra.mxu0 %v9658
      %v9770 = vpop.f32.mrf.mxu0
      %v9771 = vadd.f32 0.0, %v9770
      %9772 = vmatmul.f32.gmra.mxu0 %v9661
      %v9773 = vpop.f32.mrf.mxu0
      %v9774 = vadd.f32 0.0, %v9773
      %9775 = vmatmul.f32.gmra.mxu0 %v9664
      %v9776 = vpop.f32.mrf.mxu0
      %v9777 = vadd.f32 0.0, %v9776
      %9778 = vmatmul.f32.gmra.mxu0 %v9667
      %v9779 = vpop.f32.mrf.mxu0
      %v9780 = vadd.f32 0.0, %v9779
      %9781 = vmatmul.f32.gmra.mxu0 %v9670
      %v9782 = vpop.f32.mrf.mxu0
      %v9783 = vadd.f32 0.0, %v9782
      %9784 = vdwg.mxu0
      %v9785 = vadd.f32 %v9510, %v9690
      %v9786 = vadd.f32 %v9511, %v9693
      %v9787 = vadd.f32 %v9512, %v9696
      %v9788 = vadd.f32 %v9513, %v9699
      %v9789 = vadd.f32 %v9514, %v9702
      %v9790 = vadd.f32 %v9515, %v9705
      %v9791 = vadd.f32 %v9516, %v9708
      %v9792 = vadd.f32 %v9517, %v9711
      %v9793 = vadd.f32 %v9518, %v9714
      %v9794 = vadd.f32 %v9519, %v9717
      %v9795 = vadd.f32 %v9520, %v9720
      %v9796 = vadd.f32 %v9521, %v9723
      %v9797 = vadd.f32 %v9522, %v9726
      %v9798 = vadd.f32 %v9523, %v9729
      %v9799 = vadd.f32 %v9524, %v9732
      %v9800 = vadd.f32 %v9525, %v9735
      %v9801 = vadd.f32 %v9526, %v9738
      %v9802 = vadd.f32 %v9527, %v9741
      %v9803 = vadd.f32 %v9528, %v9744
      %v9804 = vadd.f32 %v9529, %v9747
      %v9805 = vadd.f32 %v9530, %v9750
      %v9806 = vadd.f32 %v9531, %v9753
      %v9807 = vadd.f32 %v9532, %v9756
      %v9808 = vadd.f32 %v9533, %v9759
      %v9809 = vadd.f32 %v9534, %v9762
      %v9810 = vadd.f32 %v9535, %v9765
      %v9811 = vadd.f32 %v9536, %v9768
      %v9812 = vadd.f32 %v9537, %v9771
      %v9813 = vadd.f32 %v9538, %v9774
      %v9814 = vadd.f32 %v9539, %v9777
      %v9815 = vadd.f32 %v9540, %v9780
      %v9816 = vadd.f32 %v9541, %v9783
      %v9817 = vld [vmem:[%s4521 + $0x1] sm:$0xff]
      %v9818 = vld [vmem:[%s4521 + $0x9] sm:$0xff]
      %v9819 = vld [vmem:[%s4521 + $0x19] sm:$0xff]
      %v9820 = vld [vmem:[%s4521 + $0x21] sm:$0xff]
      %v9821 = vld [vmem:[%s4521 + $0x31] sm:$0xff]
      %v9822 = vld [vmem:[%s4521 + $0x39] sm:$0xff]
      %v9823 = vld [vmem:[%s4521 + $0x49] sm:$0xff]
      %v9824 = vld [vmem:[%s4521 + $0x51] sm:$0xff]
      %v9825 = vld [vmem:[%s4521 + $0x61] sm:$0xff]
      %v9826 = vld [vmem:[%s4521 + $0x69] sm:$0xff]
      %v9827 = vld [vmem:[%s4521 + $0x79] sm:$0xff]
      %v9828 = vld [vmem:[%s4521 + $0x81] sm:$0xff]
      %v9829 = vld [vmem:[%s4521 + $0x91] sm:$0xff]
      %v9830 = vld [vmem:[%s4521 + $0x99] sm:$0xff]
      %v9831 = vld [vmem:[%s4521 + $0xa9] sm:$0xff]
      %v9832 = vld [vmem:[%s4521 + $0xb1] sm:$0xff]
      %v9833 = vld [vmem:[%s4521 + $0xc1] sm:$0xff]
      %v9834 = vld [vmem:[%s4521 + $0xc9] sm:$0xff]
      %v9835 = vld [vmem:[%s4521 + $0xd9] sm:$0xff]
      %v9836 = vld [vmem:[%s4521 + $0xe1] sm:$0xff]
      %v9837 = vld [vmem:[%s4521 + $0xf1] sm:$0xff]
      %v9838 = vld [vmem:[%s4521 + $0xf9] sm:$0xff]
      %v9839 = vld [vmem:[%s4521 + $0x109] sm:$0xff]
      %v9840 = vld [vmem:[%s4521 + $0x111] sm:$0xff]
      %v9841 = vld [vmem:[%s4521 + $0x121] sm:$0xff]
      %v9842 = vld [vmem:[%s4521 + $0x129] sm:$0xff]
      %v9843 = vld [vmem:[%s4521 + $0x139] sm:$0xff]
      %v9844 = vld [vmem:[%s4521 + $0x141] sm:$0xff]
      %v9845 = vld [vmem:[%s4521 + $0x151] sm:$0xff]
      %v9846 = vld [vmem:[%s4521 + $0x159] sm:$0xff]
      %v9847 = vld [vmem:[%s4521 + $0x169] sm:$0xff]
      %v9848 = vld [vmem:[%s4521 + $0x171] sm:$0xff]
      %s9849 = scalar_lea.vmem %s3, 200
      %v9850 = vld [vmem:[%s9849] sm:$0xff]
      %v9852 = vsel %vm337, %v9817, 0
      %v9855 = vsel %vm337, %v9818, 0
      %v9858 = vsel %vm337, %v9819, 0
      %v9861 = vsel %vm337, %v9820, 0
      %v9864 = vsel %vm337, %v9821, 0
      %v9867 = vsel %vm337, %v9822, 0
      %v9870 = vsel %vm337, %v9823, 0
      %v9873 = vsel %vm337, %v9824, 0
      %v9876 = vsel %vm337, %v9825, 0
      %v9879 = vsel %vm337, %v9826, 0
      %v9882 = vsel %vm337, %v9827, 0
      %v9885 = vsel %vm337, %v9828, 0
      %v9888 = vsel %vm337, %v9829, 0
      %v9891 = vsel %vm337, %v9830, 0
      %v9894 = vsel %vm337, %v9831, 0
      %v9897 = vsel %vm337, %v9832, 0
      %v9900 = vsel %vm337, %v9833, 0
      %v9903 = vsel %vm337, %v9834, 0
      %v9906 = vsel %vm337, %v9835, 0
      %v9909 = vsel %vm337, %v9836, 0
      %v9912 = vsel %vm337, %v9837, 0
      %v9915 = vsel %vm337, %v9838, 0
      %v9918 = vsel %vm337, %v9839, 0
      %v9921 = vsel %vm337, %v9840, 0
      %v9924 = vsel %vm337, %v9841, 0
      %v9927 = vsel %vm337, %v9842, 0
      %v9930 = vsel %vm337, %v9843, 0
      %v9933 = vsel %vm337, %v9844, 0
      %v9936 = vsel %vm337, %v9845, 0
      %v9939 = vsel %vm337, %v9846, 0
      %v9942 = vsel %vm337, %v9847, 0
      %v9945 = vsel %vm337, %v9848, 0
      %9947 = vmatpush.msra.mxu0 0.0
      %9948 = vmatpush.msra.mxu0 0.0
      %9949 = vmatpush.msra.mxu0 0.0
      %9950 = vmatpush.msra.mxu0 0.0
      %9951 = vmatpush.msra.mxu0 0.0
      %9952 = vmatpush.msra.mxu0 0.0
      %9953 = vmatpush.msra.mxu0 0.0
      %9954 = vmatpush.msra.mxu0 0.0
      %9955 = vmatpush.msra.mxu0 0.0
      %9956 = vmatpush.msra.mxu0 0.0
      %9957 = vmatpush.msra.mxu0 0.0
      %9958 = vmatpush.msra.mxu0 0.0
      %9959 = vmatpush.msra.mxu0 0.0
      %9960 = vmatpush.msra.mxu0 0.0
      %9961 = vmatpush.msra.mxu0 0.0
      %9962 = vmatpush.msra.mxu0 %v9850
      %9963 = vmatmul.f32.gmra.mxu0 %v9852
      %v9964 = vpop.f32.mrf.mxu0
      %v9965 = vadd.f32 0.0, %v9964
      %9966 = vmatmul.f32.gmra.mxu0 %v9855
      %v9967 = vpop.f32.mrf.mxu0
      %v9968 = vadd.f32 0.0, %v9967
      %9969 = vmatmul.f32.gmra.mxu0 %v9858
      %v9970 = vpop.f32.mrf.mxu0
      %v9971 = vadd.f32 0.0, %v9970
      %9972 = vmatmul.f32.gmra.mxu0 %v9861
      %v9973 = vpop.f32.mrf.mxu0
      %v9974 = vadd.f32 0.0, %v9973
      %9975 = vmatmul.f32.gmra.mxu0 %v9864
      %v9976 = vpop.f32.mrf.mxu0
      %v9977 = vadd.f32 0.0, %v9976
      %9978 = vmatmul.f32.gmra.mxu0 %v9867
      %v9979 = vpop.f32.mrf.mxu0
      %v9980 = vadd.f32 0.0, %v9979
      %9981 = vmatmul.f32.gmra.mxu0 %v9870
      %v9982 = vpop.f32.mrf.mxu0
      %v9983 = vadd.f32 0.0, %v9982
      %9984 = vmatmul.f32.gmra.mxu0 %v9873
      %v9985 = vpop.f32.mrf.mxu0
      %v9986 = vadd.f32 0.0, %v9985
      %9987 = vmatmul.f32.gmra.mxu0 %v9876
      %v9988 = vpop.f32.mrf.mxu0
      %v9989 = vadd.f32 0.0, %v9988
      %9990 = vmatmul.f32.gmra.mxu0 %v9879
      %v9991 = vpop.f32.mrf.mxu0
      %v9992 = vadd.f32 0.0, %v9991
      %9993 = vmatmul.f32.gmra.mxu0 %v9882
      %v9994 = vpop.f32.mrf.mxu0
      %v9995 = vadd.f32 0.0, %v9994
      %9996 = vmatmul.f32.gmra.mxu0 %v9885
      %v9997 = vpop.f32.mrf.mxu0
      %v9998 = vadd.f32 0.0, %v9997
      %9999 = vmatmul.f32.gmra.mxu0 %v9888
      %v10000 = vpop.f32.mrf.mxu0
      %v10001 = vadd.f32 0.0, %v10000
      %10002 = vmatmul.f32.gmra.mxu0 %v9891
      %v10003 = vpop.f32.mrf.mxu0
      %v10004 = vadd.f32 0.0, %v10003
      %10005 = vmatmul.f32.gmra.mxu0 %v9894
      %v10006 = vpop.f32.mrf.mxu0
      %v10007 = vadd.f32 0.0, %v10006
      %10008 = vmatmul.f32.gmra.mxu0 %v9897
      %v10009 = vpop.f32.mrf.mxu0
      %v10010 = vadd.f32 0.0, %v10009
      %10011 = vmatmul.f32.gmra.mxu0 %v9900
      %v10012 = vpop.f32.mrf.mxu0
      %v10013 = vadd.f32 0.0, %v10012
      %10014 = vmatmul.f32.gmra.mxu0 %v9903
      %v10015 = vpop.f32.mrf.mxu0
      %v10016 = vadd.f32 0.0, %v10015
      %10017 = vmatmul.f32.gmra.mxu0 %v9906
      %v10018 = vpop.f32.mrf.mxu0
      %v10019 = vadd.f32 0.0, %v10018
      %10020 = vmatmul.f32.gmra.mxu0 %v9909
      %v10021 = vpop.f32.mrf.mxu0
      %v10022 = vadd.f32 0.0, %v10021
      %10023 = vmatmul.f32.gmra.mxu0 %v9912
      %v10024 = vpop.f32.mrf.mxu0
      %v10025 = vadd.f32 0.0, %v10024
      %10026 = vmatmul.f32.gmra.mxu0 %v9915
      %v10027 = vpop.f32.mrf.mxu0
      %v10028 = vadd.f32 0.0, %v10027
      %10029 = vmatmul.f32.gmra.mxu0 %v9918
      %v10030 = vpop.f32.mrf.mxu0
      %v10031 = vadd.f32 0.0, %v10030
      %10032 = vmatmul.f32.gmra.mxu0 %v9921
      %v10033 = vpop.f32.mrf.mxu0
      %v10034 = vadd.f32 0.0, %v10033
      %10035 = vmatmul.f32.gmra.mxu0 %v9924
      %v10036 = vpop.f32.mrf.mxu0
      %v10037 = vadd.f32 0.0, %v10036
      %10038 = vmatmul.f32.gmra.mxu0 %v9927
      %v10039 = vpop.f32.mrf.mxu0
      %v10040 = vadd.f32 0.0, %v10039
      %10041 = vmatmul.f32.gmra.mxu0 %v9930
      %v10042 = vpop.f32.mrf.mxu0
      %v10043 = vadd.f32 0.0, %v10042
      %10044 = vmatmul.f32.gmra.mxu0 %v9933
      %v10045 = vpop.f32.mrf.mxu0
      %v10046 = vadd.f32 0.0, %v10045
      %10047 = vmatmul.f32.gmra.mxu0 %v9936
      %v10048 = vpop.f32.mrf.mxu0
      %v10049 = vadd.f32 0.0, %v10048
      %10050 = vmatmul.f32.gmra.mxu0 %v9939
      %v10051 = vpop.f32.mrf.mxu0
      %v10052 = vadd.f32 0.0, %v10051
      %10053 = vmatmul.f32.gmra.mxu0 %v9942
      %v10054 = vpop.f32.mrf.mxu0
      %v10055 = vadd.f32 0.0, %v10054
      %10056 = vmatmul.f32.gmra.mxu0 %v9945
      %v10057 = vpop.f32.mrf.mxu0
      %v10058 = vadd.f32 0.0, %v10057
      %10059 = vdwg.mxu0
      %v10060 = vadd.f32 %v9785, %v9965
      %v10061 = vadd.f32 %v9786, %v9968
      %v10062 = vadd.f32 %v9787, %v9971
      %v10063 = vadd.f32 %v9788, %v9974
      %v10064 = vadd.f32 %v9789, %v9977
      %v10065 = vadd.f32 %v9790, %v9980
      %v10066 = vadd.f32 %v9791, %v9983
      %v10067 = vadd.f32 %v9792, %v9986
      %v10068 = vadd.f32 %v9793, %v9989
      %v10069 = vadd.f32 %v9794, %v9992
      %v10070 = vadd.f32 %v9795, %v9995
      %v10071 = vadd.f32 %v9796, %v9998
      %v10072 = vadd.f32 %v9797, %v10001
      %v10073 = vadd.f32 %v9798, %v10004
      %v10074 = vadd.f32 %v9799, %v10007
      %v10075 = vadd.f32 %v9800, %v10010
      %v10076 = vadd.f32 %v9801, %v10013
      %v10077 = vadd.f32 %v9802, %v10016
      %v10078 = vadd.f32 %v9803, %v10019
      %v10079 = vadd.f32 %v9804, %v10022
      %v10080 = vadd.f32 %v9805, %v10025
      %v10081 = vadd.f32 %v9806, %v10028
      %v10082 = vadd.f32 %v9807, %v10031
      %v10083 = vadd.f32 %v9808, %v10034
      %v10084 = vadd.f32 %v9809, %v10037
      %v10085 = vadd.f32 %v9810, %v10040
      %v10086 = vadd.f32 %v9811, %v10043
      %v10087 = vadd.f32 %v9812, %v10046
      %v10088 = vadd.f32 %v9813, %v10049
      %v10089 = vadd.f32 %v9814, %v10052
      %v10090 = vadd.f32 %v9815, %v10055
      %v10091 = vadd.f32 %v9816, %v10058
      %v10092 = vld [vmem:[%s4521 + $0x2] sm:$0xff]
      %v10093 = vld [vmem:[%s4521 + $0xa] sm:$0xff]
      %v10094 = vld [vmem:[%s4521 + $0x1a] sm:$0xff]
      %v10095 = vld [vmem:[%s4521 + $0x22] sm:$0xff]
      %v10096 = vld [vmem:[%s4521 + $0x32] sm:$0xff]
      %v10097 = vld [vmem:[%s4521 + $0x3a] sm:$0xff]
      %v10098 = vld [vmem:[%s4521 + $0x4a] sm:$0xff]
      %v10099 = vld [vmem:[%s4521 + $0x52] sm:$0xff]
      %v10100 = vld [vmem:[%s4521 + $0x62] sm:$0xff]
      %v10101 = vld [vmem:[%s4521 + $0x6a] sm:$0xff]
      %v10102 = vld [vmem:[%s4521 + $0x7a] sm:$0xff]
      %v10103 = vld [vmem:[%s4521 + $0x82] sm:$0xff]
      %v10104 = vld [vmem:[%s4521 + $0x92] sm:$0xff]
      %v10105 = vld [vmem:[%s4521 + $0x9a] sm:$0xff]
      %v10106 = vld [vmem:[%s4521 + $0xaa] sm:$0xff]
      %v10107 = vld [vmem:[%s4521 + $0xb2] sm:$0xff]
      %v10108 = vld [vmem:[%s4521 + $0xc2] sm:$0xff]
      %v10109 = vld [vmem:[%s4521 + $0xca] sm:$0xff]
      %v10110 = vld [vmem:[%s4521 + $0xda] sm:$0xff]
      %v10111 = vld [vmem:[%s4521 + $0xe2] sm:$0xff]
      %v10112 = vld [vmem:[%s4521 + $0xf2] sm:$0xff]
      %v10113 = vld [vmem:[%s4521 + $0xfa] sm:$0xff]
      %v10114 = vld [vmem:[%s4521 + $0x10a] sm:$0xff]
      %v10115 = vld [vmem:[%s4521 + $0x112] sm:$0xff]
      %v10116 = vld [vmem:[%s4521 + $0x122] sm:$0xff]
      %v10117 = vld [vmem:[%s4521 + $0x12a] sm:$0xff]
      %v10118 = vld [vmem:[%s4521 + $0x13a] sm:$0xff]
      %v10119 = vld [vmem:[%s4521 + $0x142] sm:$0xff]
      %v10120 = vld [vmem:[%s4521 + $0x152] sm:$0xff]
      %v10121 = vld [vmem:[%s4521 + $0x15a] sm:$0xff]
      %v10122 = vld [vmem:[%s4521 + $0x16a] sm:$0xff]
      %v10123 = vld [vmem:[%s4521 + $0x172] sm:$0xff]
      %s10124 = scalar_lea.vmem %s3, 208
      %v10125 = vld [vmem:[%s10124] sm:$0xff]
      %v10127 = vsel %vm337, %v10092, 0
      %v10130 = vsel %vm337, %v10093, 0
      %v10133 = vsel %vm337, %v10094, 0
      %v10136 = vsel %vm337, %v10095, 0
      %v10139 = vsel %vm337, %v10096, 0
      %v10142 = vsel %vm337, %v10097, 0
      %v10145 = vsel %vm337, %v10098, 0
      %v10148 = vsel %vm337, %v10099, 0
      %v10151 = vsel %vm337, %v10100, 0
      %v10154 = vsel %vm337, %v10101, 0
      %v10157 = vsel %vm337, %v10102, 0
      %v10160 = vsel %vm337, %v10103, 0
      %v10163 = vsel %vm337, %v10104, 0
      %v10166 = vsel %vm337, %v10105, 0
      %v10169 = vsel %vm337, %v10106, 0
      %v10172 = vsel %vm337, %v10107, 0
      %v10175 = vsel %vm337, %v10108, 0
      %v10178 = vsel %vm337, %v10109, 0
      %v10181 = vsel %vm337, %v10110, 0
      %v10184 = vsel %vm337, %v10111, 0
      %v10187 = vsel %vm337, %v10112, 0
      %v10190 = vsel %vm337, %v10113, 0
      %v10193 = vsel %vm337, %v10114, 0
      %v10196 = vsel %vm337, %v10115, 0
      %v10199 = vsel %vm337, %v10116, 0
      %v10202 = vsel %vm337, %v10117, 0
      %v10205 = vsel %vm337, %v10118, 0
      %v10208 = vsel %vm337, %v10119, 0
      %v10211 = vsel %vm337, %v10120, 0
      %v10214 = vsel %vm337, %v10121, 0
      %v10217 = vsel %vm337, %v10122, 0
      %v10220 = vsel %vm337, %v10123, 0
      %10222 = vmatpush.msra.mxu0 0.0
      %10223 = vmatpush.msra.mxu0 0.0
      %10224 = vmatpush.msra.mxu0 0.0
      %10225 = vmatpush.msra.mxu0 0.0
      %10226 = vmatpush.msra.mxu0 0.0
      %10227 = vmatpush.msra.mxu0 0.0
      %10228 = vmatpush.msra.mxu0 0.0
      %10229 = vmatpush.msra.mxu0 0.0
      %10230 = vmatpush.msra.mxu0 0.0
      %10231 = vmatpush.msra.mxu0 0.0
      %10232 = vmatpush.msra.mxu0 0.0
      %10233 = vmatpush.msra.mxu0 0.0
      %10234 = vmatpush.msra.mxu0 0.0
      %10235 = vmatpush.msra.mxu0 0.0
      %10236 = vmatpush.msra.mxu0 0.0
      %10237 = vmatpush.msra.mxu0 %v10125
      %10238 = vmatmul.f32.gmra.mxu0 %v10127
      %v10239 = vpop.f32.mrf.mxu0
      %v10240 = vadd.f32 0.0, %v10239
      %10241 = vmatmul.f32.gmra.mxu0 %v10130
      %v10242 = vpop.f32.mrf.mxu0
      %v10243 = vadd.f32 0.0, %v10242
      %10244 = vmatmul.f32.gmra.mxu0 %v10133
      %v10245 = vpop.f32.mrf.mxu0
      %v10246 = vadd.f32 0.0, %v10245
      %10247 = vmatmul.f32.gmra.mxu0 %v10136
      %v10248 = vpop.f32.mrf.mxu0
      %v10249 = vadd.f32 0.0, %v10248
      %10250 = vmatmul.f32.gmra.mxu0 %v10139
      %v10251 = vpop.f32.mrf.mxu0
      %v10252 = vadd.f32 0.0, %v10251
      %10253 = vmatmul.f32.gmra.mxu0 %v10142
      %v10254 = vpop.f32.mrf.mxu0
      %v10255 = vadd.f32 0.0, %v10254
      %10256 = vmatmul.f32.gmra.mxu0 %v10145
      %v10257 = vpop.f32.mrf.mxu0
      %v10258 = vadd.f32 0.0, %v10257
      %10259 = vmatmul.f32.gmra.mxu0 %v10148
      %v10260 = vpop.f32.mrf.mxu0
      %v10261 = vadd.f32 0.0, %v10260
      %10262 = vmatmul.f32.gmra.mxu0 %v10151
      %v10263 = vpop.f32.mrf.mxu0
      %v10264 = vadd.f32 0.0, %v10263
      %10265 = vmatmul.f32.gmra.mxu0 %v10154
      %v10266 = vpop.f32.mrf.mxu0
      %v10267 = vadd.f32 0.0, %v10266
      %10268 = vmatmul.f32.gmra.mxu0 %v10157
      %v10269 = vpop.f32.mrf.mxu0
      %v10270 = vadd.f32 0.0, %v10269
      %10271 = vmatmul.f32.gmra.mxu0 %v10160
      %v10272 = vpop.f32.mrf.mxu0
      %v10273 = vadd.f32 0.0, %v10272
      %10274 = vmatmul.f32.gmra.mxu0 %v10163
      %v10275 = vpop.f32.mrf.mxu0
      %v10276 = vadd.f32 0.0, %v10275
      %10277 = vmatmul.f32.gmra.mxu0 %v10166
      %v10278 = vpop.f32.mrf.mxu0
      %v10279 = vadd.f32 0.0, %v10278
      %10280 = vmatmul.f32.gmra.mxu0 %v10169
      %v10281 = vpop.f32.mrf.mxu0
      %v10282 = vadd.f32 0.0, %v10281
      %10283 = vmatmul.f32.gmra.mxu0 %v10172
      %v10284 = vpop.f32.mrf.mxu0
      %v10285 = vadd.f32 0.0, %v10284
      %10286 = vmatmul.f32.gmra.mxu0 %v10175
      %v10287 = vpop.f32.mrf.mxu0
      %v10288 = vadd.f32 0.0, %v10287
      %10289 = vmatmul.f32.gmra.mxu0 %v10178
      %v10290 = vpop.f32.mrf.mxu0
      %v10291 = vadd.f32 0.0, %v10290
      %10292 = vmatmul.f32.gmra.mxu0 %v10181
      %v10293 = vpop.f32.mrf.mxu0
      %v10294 = vadd.f32 0.0, %v10293
      %10295 = vmatmul.f32.gmra.mxu0 %v10184
      %v10296 = vpop.f32.mrf.mxu0
      %v10297 = vadd.f32 0.0, %v10296
      %10298 = vmatmul.f32.gmra.mxu0 %v10187
      %v10299 = vpop.f32.mrf.mxu0
      %v10300 = vadd.f32 0.0, %v10299
      %10301 = vmatmul.f32.gmra.mxu0 %v10190
      %v10302 = vpop.f32.mrf.mxu0
      %v10303 = vadd.f32 0.0, %v10302
      %10304 = vmatmul.f32.gmra.mxu0 %v10193
      %v10305 = vpop.f32.mrf.mxu0
      %v10306 = vadd.f32 0.0, %v10305
      %10307 = vmatmul.f32.gmra.mxu0 %v10196
      %v10308 = vpop.f32.mrf.mxu0
      %v10309 = vadd.f32 0.0, %v10308
      %10310 = vmatmul.f32.gmra.mxu0 %v10199
      %v10311 = vpop.f32.mrf.mxu0
      %v10312 = vadd.f32 0.0, %v10311
      %10313 = vmatmul.f32.gmra.mxu0 %v10202
      %v10314 = vpop.f32.mrf.mxu0
      %v10315 = vadd.f32 0.0, %v10314
      %10316 = vmatmul.f32.gmra.mxu0 %v10205
      %v10317 = vpop.f32.mrf.mxu0
      %v10318 = vadd.f32 0.0, %v10317
      %10319 = vmatmul.f32.gmra.mxu0 %v10208
      %v10320 = vpop.f32.mrf.mxu0
      %v10321 = vadd.f32 0.0, %v10320
      %10322 = vmatmul.f32.gmra.mxu0 %v10211
      %v10323 = vpop.f32.mrf.mxu0
      %v10324 = vadd.f32 0.0, %v10323
      %10325 = vmatmul.f32.gmra.mxu0 %v10214
      %v10326 = vpop.f32.mrf.mxu0
      %v10327 = vadd.f32 0.0, %v10326
      %10328 = vmatmul.f32.gmra.mxu0 %v10217
      %v10329 = vpop.f32.mrf.mxu0
      %v10330 = vadd.f32 0.0, %v10329
      %10331 = vmatmul.f32.gmra.mxu0 %v10220
      %v10332 = vpop.f32.mrf.mxu0
      %v10333 = vadd.f32 0.0, %v10332
      %10334 = vdwg.mxu0
      %v10335 = vadd.f32 %v10060, %v10240
      %v10336 = vadd.f32 %v10061, %v10243
      %v10337 = vadd.f32 %v10062, %v10246
      %v10338 = vadd.f32 %v10063, %v10249
      %v10339 = vadd.f32 %v10064, %v10252
      %v10340 = vadd.f32 %v10065, %v10255
      %v10341 = vadd.f32 %v10066, %v10258
      %v10342 = vadd.f32 %v10067, %v10261
      %v10343 = vadd.f32 %v10068, %v10264
      %v10344 = vadd.f32 %v10069, %v10267
      %v10345 = vadd.f32 %v10070, %v10270
      %v10346 = vadd.f32 %v10071, %v10273
      %v10347 = vadd.f32 %v10072, %v10276
      %v10348 = vadd.f32 %v10073, %v10279
      %v10349 = vadd.f32 %v10074, %v10282
      %v10350 = vadd.f32 %v10075, %v10285
      %v10351 = vadd.f32 %v10076, %v10288
      %v10352 = vadd.f32 %v10077, %v10291
      %v10353 = vadd.f32 %v10078, %v10294
      %v10354 = vadd.f32 %v10079, %v10297
      %v10355 = vadd.f32 %v10080, %v10300
      %v10356 = vadd.f32 %v10081, %v10303
      %v10357 = vadd.f32 %v10082, %v10306
      %v10358 = vadd.f32 %v10083, %v10309
      %v10359 = vadd.f32 %v10084, %v10312
      %v10360 = vadd.f32 %v10085, %v10315
      %v10361 = vadd.f32 %v10086, %v10318
      %v10362 = vadd.f32 %v10087, %v10321
      %v10363 = vadd.f32 %v10088, %v10324
      %v10364 = vadd.f32 %v10089, %v10327
      %v10365 = vadd.f32 %v10090, %v10330
      %v10366 = vadd.f32 %v10091, %v10333
      %v10367 = vld [vmem:[%s4 + $0x2] sm:$0x1]
      %v10368 = vperm.slane %v10367, 0
      %v10369 = vadd.f32 %v10335, %v10368
      %v10370 = vadd.f32 %v10336, %v10368
      %v10371 = vadd.f32 %v10337, %v10368
      %v10372 = vadd.f32 %v10338, %v10368
      %v10373 = vadd.f32 %v10339, %v10368
      %v10374 = vadd.f32 %v10340, %v10368
      %v10375 = vadd.f32 %v10341, %v10368
      %v10376 = vadd.f32 %v10342, %v10368
      %v10377 = vadd.f32 %v10343, %v10368
      %v10378 = vadd.f32 %v10344, %v10368
      %v10379 = vadd.f32 %v10345, %v10368
      %v10380 = vadd.f32 %v10346, %v10368
      %v10381 = vadd.f32 %v10347, %v10368
      %v10382 = vadd.f32 %v10348, %v10368
      %v10383 = vadd.f32 %v10349, %v10368
      %v10384 = vadd.f32 %v10350, %v10368
      %v10385 = vadd.f32 %v10351, %v10368
      %v10386 = vadd.f32 %v10352, %v10368
      %v10387 = vadd.f32 %v10353, %v10368
      %v10388 = vadd.f32 %v10354, %v10368
      %v10389 = vadd.f32 %v10355, %v10368
      %v10390 = vadd.f32 %v10356, %v10368
      %v10391 = vadd.f32 %v10357, %v10368
      %v10392 = vadd.f32 %v10358, %v10368
      %v10393 = vadd.f32 %v10359, %v10368
      %v10394 = vadd.f32 %v10360, %v10368
      %v10395 = vadd.f32 %v10361, %v10368
      %v10396 = vadd.f32 %v10362, %v10368
      %v10397 = vadd.f32 %v10363, %v10368
      %v10398 = vadd.f32 %v10364, %v10368
      %v10399 = vadd.f32 %v10365, %v10368
      %v10400 = vadd.f32 %v10366, %v10368
      %v10401 = vmax.f32 %v10369, 0.0
      %v10402 = vmax.f32 %v10370, 0.0
      %v10403 = vmax.f32 %v10371, 0.0
      %v10404 = vmax.f32 %v10372, 0.0
      %v10405 = vmax.f32 %v10373, 0.0
      %v10406 = vmax.f32 %v10374, 0.0
      %v10407 = vmax.f32 %v10375, 0.0
      %v10408 = vmax.f32 %v10376, 0.0
      %v10409 = vmax.f32 %v10377, 0.0
      %v10410 = vmax.f32 %v10378, 0.0
      %v10411 = vmax.f32 %v10379, 0.0
      %v10412 = vmax.f32 %v10380, 0.0
      %v10413 = vmax.f32 %v10381, 0.0
      %v10414 = vmax.f32 %v10382, 0.0
      %v10415 = vmax.f32 %v10383, 0.0
      %v10416 = vmax.f32 %v10384, 0.0
      %v10417 = vmax.f32 %v10385, 0.0
      %v10418 = vmax.f32 %v10386, 0.0
      %v10419 = vmax.f32 %v10387, 0.0
      %v10420 = vmax.f32 %v10388, 0.0
      %v10421 = vmax.f32 %v10389, 0.0
      %v10422 = vmax.f32 %v10390, 0.0
      %v10423 = vmax.f32 %v10391, 0.0
      %v10424 = vmax.f32 %v10392, 0.0
      %v10425 = vmax.f32 %v10393, 0.0
      %v10426 = vmax.f32 %v10394, 0.0
      %v10427 = vmax.f32 %v10395, 0.0
      %v10428 = vmax.f32 %v10396, 0.0
      %v10429 = vmax.f32 %v10397, 0.0
      %v10430 = vmax.f32 %v10398, 0.0
      %v10431 = vmax.f32 %v10399, 0.0
      %v10432 = vmax.f32 %v10400, 0.0
      %10433 = vst.msk [vmem:[%s5413 + $0x1] sm:$0xff] %vm337, %v10401
      %10434 = vst.msk [vmem:[%s5413 + $0x9] sm:$0xff] %vm337, %v10402
      %10435 = vst.msk [vmem:[%s5413 + $0x19] sm:$0xff] %vm337, %v10403
      %10436 = vst.msk [vmem:[%s5413 + $0x21] sm:$0xff] %vm337, %v10404
      %10437 = vst.msk [vmem:[%s5413 + $0x31] sm:$0xff] %vm337, %v10405
      %10438 = vst.msk [vmem:[%s5413 + $0x39] sm:$0xff] %vm337, %v10406
      %10439 = vst.msk [vmem:[%s5413 + $0x49] sm:$0xff] %vm337, %v10407
      %10440 = vst.msk [vmem:[%s5413 + $0x51] sm:$0xff] %vm337, %v10408
      %10441 = vst.msk [vmem:[%s5413 + $0x61] sm:$0xff] %vm337, %v10409
      %10442 = vst.msk [vmem:[%s5413 + $0x69] sm:$0xff] %vm337, %v10410
      %10443 = vst.msk [vmem:[%s5413 + $0x79] sm:$0xff] %vm337, %v10411
      %10444 = vst.msk [vmem:[%s5413 + $0x81] sm:$0xff] %vm337, %v10412
      %10445 = vst.msk [vmem:[%s5413 + $0x91] sm:$0xff] %vm337, %v10413
      %10446 = vst.msk [vmem:[%s5413 + $0x99] sm:$0xff] %vm337, %v10414
      %10447 = vst.msk [vmem:[%s5413 + $0xa9] sm:$0xff] %vm337, %v10415
      %10448 = vst.msk [vmem:[%s5413 + $0xb1] sm:$0xff] %vm337, %v10416
      %10449 = vst.msk [vmem:[%s5413 + $0xc1] sm:$0xff] %vm337, %v10417
      %10450 = vst.msk [vmem:[%s5413 + $0xc9] sm:$0xff] %vm337, %v10418
      %10451 = vst.msk [vmem:[%s5413 + $0xd9] sm:$0xff] %vm337, %v10419
      %10452 = vst.msk [vmem:[%s5413 + $0xe1] sm:$0xff] %vm337, %v10420
      %10453 = vst.msk [vmem:[%s5413 + $0xf1] sm:$0xff] %vm337, %v10421
      %10454 = vst.msk [vmem:[%s5413 + $0xf9] sm:$0xff] %vm337, %v10422
      %10455 = vst.msk [vmem:[%s5413 + $0x109] sm:$0xff] %vm337, %v10423
      %10456 = vst.msk [vmem:[%s5413 + $0x111] sm:$0xff] %vm337, %v10424
      %10457 = vst.msk [vmem:[%s5413 + $0x121] sm:$0xff] %vm337, %v10425
      %10458 = vst.msk [vmem:[%s5413 + $0x129] sm:$0xff] %vm337, %v10426
      %10459 = vst.msk [vmem:[%s5413 + $0x139] sm:$0xff] %vm337, %v10427
      %10460 = vst.msk [vmem:[%s5413 + $0x141] sm:$0xff] %vm337, %v10428
      %10461 = vst.msk [vmem:[%s5413 + $0x151] sm:$0xff] %vm337, %v10429
      %10462 = vst.msk [vmem:[%s5413 + $0x159] sm:$0xff] %vm337, %v10430
      %10463 = vst.msk [vmem:[%s5413 + $0x169] sm:$0xff] %vm337, %v10431
      %10464 = vst.msk [vmem:[%s5413 + $0x171] sm:$0xff] %vm337, %v10432
      %v10465 = vld [vmem:[#allocation4] sm:$0xff]
      %v10466 = vld [vmem:[#allocation4 + $0x8] sm:$0xff]
      %v10467 = vld [vmem:[#allocation4 + $0x18] sm:$0xff]
      %v10468 = vld [vmem:[#allocation4 + $0x20] sm:$0xff]
      %v10469 = vld [vmem:[#allocation4 + $0x30] sm:$0xff]
      %v10470 = vld [vmem:[#allocation4 + $0x38] sm:$0xff]
      %v10471 = vld [vmem:[#allocation4 + $0x48] sm:$0xff]
      %v10472 = vld [vmem:[#allocation4 + $0x50] sm:$0xff]
      %v10473 = vld [vmem:[#allocation4 + $0x60] sm:$0xff]
      %v10474 = vld [vmem:[#allocation4 + $0x68] sm:$0xff]
      %v10475 = vld [vmem:[#allocation4 + $0x78] sm:$0xff]
      %v10476 = vld [vmem:[#allocation4 + $0x80] sm:$0xff]
      %v10477 = vld [vmem:[#allocation4 + $0x90] sm:$0xff]
      %v10478 = vld [vmem:[#allocation4 + $0x98] sm:$0xff]
      %v10479 = vld [vmem:[#allocation4 + $0xa8] sm:$0xff]
      %v10480 = vld [vmem:[#allocation4 + $0xb0] sm:$0xff]
      %v10481 = vld [vmem:[#allocation4 + $0xc0] sm:$0xff]
      %v10482 = vld [vmem:[#allocation4 + $0xc8] sm:$0xff]
      %v10483 = vld [vmem:[#allocation4 + $0xd8] sm:$0xff]
      %v10484 = vld [vmem:[#allocation4 + $0xe0] sm:$0xff]
      %v10485 = vld [vmem:[#allocation4 + $0xf0] sm:$0xff]
      %v10486 = vld [vmem:[#allocation4 + $0xf8] sm:$0xff]
      %v10487 = vld [vmem:[#allocation4 + $0x108] sm:$0xff]
      %v10488 = vld [vmem:[#allocation4 + $0x110] sm:$0xff]
      %v10489 = vld [vmem:[#allocation4 + $0x120] sm:$0xff]
      %v10490 = vld [vmem:[#allocation4 + $0x128] sm:$0xff]
      %v10491 = vld [vmem:[#allocation4 + $0x138] sm:$0xff]
      %v10492 = vld [vmem:[#allocation4 + $0x140] sm:$0xff]
      %v10493 = vld [vmem:[#allocation4 + $0x150] sm:$0xff]
      %v10494 = vld [vmem:[#allocation4 + $0x158] sm:$0xff]
      %v10495 = vld [vmem:[#allocation4 + $0x168] sm:$0xff]
      %v10496 = vld [vmem:[#allocation4 + $0x170] sm:$0xff]
      %v10497 = vld [vmem:[%s5] sm:$0xff]
      %v10498 = vld [vmem:[#allocation4 + $0x1] sm:$0xff]
      %v10499 = vld [vmem:[#allocation4 + $0x9] sm:$0xff]
      %v10500 = vld [vmem:[#allocation4 + $0x19] sm:$0xff]
      %v10501 = vld [vmem:[#allocation4 + $0x21] sm:$0xff]
      %v10502 = vld [vmem:[#allocation4 + $0x31] sm:$0xff]
      %v10503 = vld [vmem:[#allocation4 + $0x39] sm:$0xff]
      %v10504 = vld [vmem:[#allocation4 + $0x49] sm:$0xff]
      %v10505 = vld [vmem:[#allocation4 + $0x51] sm:$0xff]
      %v10506 = vld [vmem:[#allocation4 + $0x61] sm:$0xff]
      %v10507 = vld [vmem:[#allocation4 + $0x69] sm:$0xff]
      %v10508 = vld [vmem:[#allocation4 + $0x79] sm:$0xff]
      %v10509 = vld [vmem:[#allocation4 + $0x81] sm:$0xff]
      %v10510 = vld [vmem:[#allocation4 + $0x91] sm:$0xff]
      %v10511 = vld [vmem:[#allocation4 + $0x99] sm:$0xff]
      %v10512 = vld [vmem:[#allocation4 + $0xa9] sm:$0xff]
      %v10513 = vld [vmem:[#allocation4 + $0xb1] sm:$0xff]
      %v10514 = vld [vmem:[#allocation4 + $0xc1] sm:$0xff]
      %v10515 = vld [vmem:[#allocation4 + $0xc9] sm:$0xff]
      %v10516 = vld [vmem:[#allocation4 + $0xd9] sm:$0xff]
      %v10517 = vld [vmem:[#allocation4 + $0xe1] sm:$0xff]
      %v10518 = vld [vmem:[#allocation4 + $0xf1] sm:$0xff]
      %v10519 = vld [vmem:[#allocation4 + $0xf9] sm:$0xff]
      %v10520 = vld [vmem:[#allocation4 + $0x109] sm:$0xff]
      %v10521 = vld [vmem:[#allocation4 + $0x111] sm:$0xff]
      %v10522 = vld [vmem:[#allocation4 + $0x121] sm:$0xff]
      %v10523 = vld [vmem:[#allocation4 + $0x129] sm:$0xff]
      %v10524 = vld [vmem:[#allocation4 + $0x139] sm:$0xff]
      %v10525 = vld [vmem:[#allocation4 + $0x141] sm:$0xff]
      %v10526 = vld [vmem:[#allocation4 + $0x151] sm:$0xff]
      %v10527 = vld [vmem:[#allocation4 + $0x159] sm:$0xff]
      %v10528 = vld [vmem:[#allocation4 + $0x169] sm:$0xff]
      %v10529 = vld [vmem:[#allocation4 + $0x171] sm:$0xff]
      %s10530 = scalar_lea.vmem %s5, 8
      %v10531 = vld [vmem:[%s10530] sm:$0xff]
      %v10533 = vsel %vm337, %v10498, 0
      %v10536 = vsel %vm337, %v10499, 0
      %v10539 = vsel %vm337, %v10500, 0
      %v10542 = vsel %vm337, %v10501, 0
      %v10545 = vsel %vm337, %v10502, 0
      %v10548 = vsel %vm337, %v10503, 0
      %v10551 = vsel %vm337, %v10504, 0
      %v10554 = vsel %vm337, %v10505, 0
      %v10557 = vsel %vm337, %v10506, 0
      %v10560 = vsel %vm337, %v10507, 0
      %v10563 = vsel %vm337, %v10508, 0
      %v10566 = vsel %vm337, %v10509, 0
      %v10569 = vsel %vm337, %v10510, 0
      %v10572 = vsel %vm337, %v10511, 0
      %v10575 = vsel %vm337, %v10512, 0
      %v10578 = vsel %vm337, %v10513, 0
      %v10581 = vsel %vm337, %v10514, 0
      %v10584 = vsel %vm337, %v10515, 0
      %v10587 = vsel %vm337, %v10516, 0
      %v10590 = vsel %vm337, %v10517, 0
      %v10593 = vsel %vm337, %v10518, 0
      %v10596 = vsel %vm337, %v10519, 0
      %v10599 = vsel %vm337, %v10520, 0
      %v10602 = vsel %vm337, %v10521, 0
      %v10605 = vsel %vm337, %v10522, 0
      %v10608 = vsel %vm337, %v10523, 0
      %v10611 = vsel %vm337, %v10524, 0
      %v10614 = vsel %vm337, %v10525, 0
      %v10617 = vsel %vm337, %v10526, 0
      %v10620 = vsel %vm337, %v10527, 0
      %v10623 = vsel %vm337, %v10528, 0
      %v10626 = vsel %vm337, %v10529, 0
      %10628 = vmatpush.msra.mxu0 0.0
      %10629 = vmatpush.msra.mxu0 0.0
      %10630 = vmatpush.msra.mxu0 0.0
      %10631 = vmatpush.msra.mxu0 0.0
      %10632 = vmatpush.msra.mxu0 0.0
      %10633 = vmatpush.msra.mxu0 0.0
      %10634 = vmatpush.msra.mxu0 0.0
      %10635 = vmatpush.msra.mxu0 0.0
      %10636 = vmatpush.msra.mxu0 0.0
      %10637 = vmatpush.msra.mxu0 0.0
      %10638 = vmatpush.msra.mxu0 0.0
      %10639 = vmatpush.msra.mxu0 0.0
      %10640 = vmatpush.msra.mxu0 0.0
      %10641 = vmatpush.msra.mxu0 0.0
      %10642 = vmatpush.msra.mxu0 0.0
      %10643 = vmatpush.msra.mxu0 %v10531
      %10644 = vmatmul.f32.gmra.mxu0 %v10533
      %v10645 = vpop.f32.mrf.mxu0
      %v10646 = vadd.f32 0.0, %v10645
      %10647 = vmatmul.f32.gmra.mxu0 %v10536
      %v10648 = vpop.f32.mrf.mxu0
      %v10649 = vadd.f32 0.0, %v10648
      %10650 = vmatmul.f32.gmra.mxu0 %v10539
      %v10651 = vpop.f32.mrf.mxu0
      %v10652 = vadd.f32 0.0, %v10651
      %10653 = vmatmul.f32.gmra.mxu0 %v10542
      %v10654 = vpop.f32.mrf.mxu0
      %v10655 = vadd.f32 0.0, %v10654
      %10656 = vmatmul.f32.gmra.mxu0 %v10545
      %v10657 = vpop.f32.mrf.mxu0
      %v10658 = vadd.f32 0.0, %v10657
      %10659 = vmatmul.f32.gmra.mxu0 %v10548
      %v10660 = vpop.f32.mrf.mxu0
      %v10661 = vadd.f32 0.0, %v10660
      %10662 = vmatmul.f32.gmra.mxu0 %v10551
      %v10663 = vpop.f32.mrf.mxu0
      %v10664 = vadd.f32 0.0, %v10663
      %10665 = vmatmul.f32.gmra.mxu0 %v10554
      %v10666 = vpop.f32.mrf.mxu0
      %v10667 = vadd.f32 0.0, %v10666
      %10668 = vmatmul.f32.gmra.mxu0 %v10557
      %v10669 = vpop.f32.mrf.mxu0
      %v10670 = vadd.f32 0.0, %v10669
      %10671 = vmatmul.f32.gmra.mxu0 %v10560
      %v10672 = vpop.f32.mrf.mxu0
      %v10673 = vadd.f32 0.0, %v10672
      %10674 = vmatmul.f32.gmra.mxu0 %v10563
      %v10675 = vpop.f32.mrf.mxu0
      %v10676 = vadd.f32 0.0, %v10675
      %10677 = vmatmul.f32.gmra.mxu0 %v10566
      %v10678 = vpop.f32.mrf.mxu0
      %v10679 = vadd.f32 0.0, %v10678
      %10680 = vmatmul.f32.gmra.mxu0 %v10569
      %v10681 = vpop.f32.mrf.mxu0
      %v10682 = vadd.f32 0.0, %v10681
      %10683 = vmatmul.f32.gmra.mxu0 %v10572
      %v10684 = vpop.f32.mrf.mxu0
      %v10685 = vadd.f32 0.0, %v10684
      %10686 = vmatmul.f32.gmra.mxu0 %v10575
      %v10687 = vpop.f32.mrf.mxu0
      %v10688 = vadd.f32 0.0, %v10687
      %10689 = vmatmul.f32.gmra.mxu0 %v10578
      %v10690 = vpop.f32.mrf.mxu0
      %v10691 = vadd.f32 0.0, %v10690
      %10692 = vmatmul.f32.gmra.mxu0 %v10581
      %v10693 = vpop.f32.mrf.mxu0
      %v10694 = vadd.f32 0.0, %v10693
      %10695 = vmatmul.f32.gmra.mxu0 %v10584
      %v10696 = vpop.f32.mrf.mxu0
      %v10697 = vadd.f32 0.0, %v10696
      %10698 = vmatmul.f32.gmra.mxu0 %v10587
      %v10699 = vpop.f32.mrf.mxu0
      %v10700 = vadd.f32 0.0, %v10699
      %10701 = vmatmul.f32.gmra.mxu0 %v10590
      %v10702 = vpop.f32.mrf.mxu0
      %v10703 = vadd.f32 0.0, %v10702
      %10704 = vmatmul.f32.gmra.mxu0 %v10593
      %v10705 = vpop.f32.mrf.mxu0
      %v10706 = vadd.f32 0.0, %v10705
      %10707 = vmatmul.f32.gmra.mxu0 %v10596
      %v10708 = vpop.f32.mrf.mxu0
      %v10709 = vadd.f32 0.0, %v10708
      %10710 = vmatmul.f32.gmra.mxu0 %v10599
      %v10711 = vpop.f32.mrf.mxu0
      %v10712 = vadd.f32 0.0, %v10711
      %10713 = vmatmul.f32.gmra.mxu0 %v10602
      %v10714 = vpop.f32.mrf.mxu0
      %v10715 = vadd.f32 0.0, %v10714
      %10716 = vmatmul.f32.gmra.mxu0 %v10605
      %v10717 = vpop.f32.mrf.mxu0
      %v10718 = vadd.f32 0.0, %v10717
      %10719 = vmatmul.f32.gmra.mxu0 %v10608
      %v10720 = vpop.f32.mrf.mxu0
      %v10721 = vadd.f32 0.0, %v10720
      %10722 = vmatmul.f32.gmra.mxu0 %v10611
      %v10723 = vpop.f32.mrf.mxu0
      %v10724 = vadd.f32 0.0, %v10723
      %10725 = vmatmul.f32.gmra.mxu0 %v10614
      %v10726 = vpop.f32.mrf.mxu0
      %v10727 = vadd.f32 0.0, %v10726
      %10728 = vmatmul.f32.gmra.mxu0 %v10617
      %v10729 = vpop.f32.mrf.mxu0
      %v10730 = vadd.f32 0.0, %v10729
      %10731 = vmatmul.f32.gmra.mxu0 %v10620
      %v10732 = vpop.f32.mrf.mxu0
      %v10733 = vadd.f32 0.0, %v10732
      %10734 = vmatmul.f32.gmra.mxu0 %v10623
      %v10735 = vpop.f32.mrf.mxu0
      %v10736 = vadd.f32 0.0, %v10735
      %10737 = vmatmul.f32.gmra.mxu0 %v10626
      %v10738 = vpop.f32.mrf.mxu0
      %v10739 = vadd.f32 0.0, %v10738
      %10740 = vdwg.mxu0
      %v10742 = vsel %vm337, %v10465, 0
      %v10745 = vsel %vm337, %v10466, 0
      %v10748 = vsel %vm337, %v10467, 0
      %v10751 = vsel %vm337, %v10468, 0
      %v10754 = vsel %vm337, %v10469, 0
      %v10757 = vsel %vm337, %v10470, 0
      %v10760 = vsel %vm337, %v10471, 0
      %v10763 = vsel %vm337, %v10472, 0
      %v10766 = vsel %vm337, %v10473, 0
      %v10769 = vsel %vm337, %v10474, 0
      %v10772 = vsel %vm337, %v10475, 0
      %v10775 = vsel %vm337, %v10476, 0
      %v10778 = vsel %vm337, %v10477, 0
      %v10781 = vsel %vm337, %v10478, 0
      %v10784 = vsel %vm337, %v10479, 0
      %v10787 = vsel %vm337, %v10480, 0
      %v10790 = vsel %vm337, %v10481, 0
      %v10793 = vsel %vm337, %v10482, 0
      %v10796 = vsel %vm337, %v10483, 0
      %v10799 = vsel %vm337, %v10484, 0
      %v10802 = vsel %vm337, %v10485, 0
      %v10805 = vsel %vm337, %v10486, 0
      %v10808 = vsel %vm337, %v10487, 0
      %v10811 = vsel %vm337, %v10488, 0
      %v10814 = vsel %vm337, %v10489, 0
      %v10817 = vsel %vm337, %v10490, 0
      %v10820 = vsel %vm337, %v10491, 0
      %v10823 = vsel %vm337, %v10492, 0
      %v10826 = vsel %vm337, %v10493, 0
      %v10829 = vsel %vm337, %v10494, 0
      %v10832 = vsel %vm337, %v10495, 0
      %v10835 = vsel %vm337, %v10496, 0
      %10837 = vmatpush.msra.mxu0 0.0
      %10838 = vmatpush.msra.mxu0 0.0
      %10839 = vmatpush.msra.mxu0 0.0
      %10840 = vmatpush.msra.mxu0 0.0
      %10841 = vmatpush.msra.mxu0 0.0
      %10842 = vmatpush.msra.mxu0 0.0
      %10843 = vmatpush.msra.mxu0 0.0
      %10844 = vmatpush.msra.mxu0 0.0
      %10845 = vmatpush.msra.mxu0 0.0
      %10846 = vmatpush.msra.mxu0 0.0
      %10847 = vmatpush.msra.mxu0 0.0
      %10848 = vmatpush.msra.mxu0 0.0
      %10849 = vmatpush.msra.mxu0 0.0
      %10850 = vmatpush.msra.mxu0 0.0
      %10851 = vmatpush.msra.mxu0 0.0
      %10852 = vmatpush.msra.mxu0 %v10497
      %10853 = vmatmul.f32.gmra.mxu0 %v10742
      %v10854 = vpop.f32.mrf.mxu0
      %v10855 = vadd.f32 %v10646, %v10854
      %10856 = vmatmul.f32.gmra.mxu0 %v10745
      %v10857 = vpop.f32.mrf.mxu0
      %v10858 = vadd.f32 %v10649, %v10857
      %10859 = vmatmul.f32.gmra.mxu0 %v10748
      %v10860 = vpop.f32.mrf.mxu0
      %v10861 = vadd.f32 %v10652, %v10860
      %10862 = vmatmul.f32.gmra.mxu0 %v10751
      %v10863 = vpop.f32.mrf.mxu0
      %v10864 = vadd.f32 %v10655, %v10863
      %10865 = vmatmul.f32.gmra.mxu0 %v10754
      %v10866 = vpop.f32.mrf.mxu0
      %v10867 = vadd.f32 %v10658, %v10866
      %10868 = vmatmul.f32.gmra.mxu0 %v10757
      %v10869 = vpop.f32.mrf.mxu0
      %v10870 = vadd.f32 %v10661, %v10869
      %10871 = vmatmul.f32.gmra.mxu0 %v10760
      %v10872 = vpop.f32.mrf.mxu0
      %v10873 = vadd.f32 %v10664, %v10872
      %10874 = vmatmul.f32.gmra.mxu0 %v10763
      %v10875 = vpop.f32.mrf.mxu0
      %v10876 = vadd.f32 %v10667, %v10875
      %10877 = vmatmul.f32.gmra.mxu0 %v10766
      %v10878 = vpop.f32.mrf.mxu0
      %v10879 = vadd.f32 %v10670, %v10878
      %10880 = vmatmul.f32.gmra.mxu0 %v10769
      %v10881 = vpop.f32.mrf.mxu0
      %v10882 = vadd.f32 %v10673, %v10881
      %10883 = vmatmul.f32.gmra.mxu0 %v10772
      %v10884 = vpop.f32.mrf.mxu0
      %v10885 = vadd.f32 %v10676, %v10884
      %10886 = vmatmul.f32.gmra.mxu0 %v10775
      %v10887 = vpop.f32.mrf.mxu0
      %v10888 = vadd.f32 %v10679, %v10887
      %10889 = vmatmul.f32.gmra.mxu0 %v10778
      %v10890 = vpop.f32.mrf.mxu0
      %v10891 = vadd.f32 %v10682, %v10890
      %10892 = vmatmul.f32.gmra.mxu0 %v10781
      %v10893 = vpop.f32.mrf.mxu0
      %v10894 = vadd.f32 %v10685, %v10893
      %10895 = vmatmul.f32.gmra.mxu0 %v10784
      %v10896 = vpop.f32.mrf.mxu0
      %v10897 = vadd.f32 %v10688, %v10896
      %10898 = vmatmul.f32.gmra.mxu0 %v10787
      %v10899 = vpop.f32.mrf.mxu0
      %v10900 = vadd.f32 %v10691, %v10899
      %10901 = vmatmul.f32.gmra.mxu0 %v10790
      %v10902 = vpop.f32.mrf.mxu0
      %v10903 = vadd.f32 %v10694, %v10902
      %10904 = vmatmul.f32.gmra.mxu0 %v10793
      %v10905 = vpop.f32.mrf.mxu0
      %v10906 = vadd.f32 %v10697, %v10905
      %10907 = vmatmul.f32.gmra.mxu0 %v10796
      %v10908 = vpop.f32.mrf.mxu0
      %v10909 = vadd.f32 %v10700, %v10908
      %10910 = vmatmul.f32.gmra.mxu0 %v10799
      %v10911 = vpop.f32.mrf.mxu0
      %v10912 = vadd.f32 %v10703, %v10911
      %10913 = vmatmul.f32.gmra.mxu0 %v10802
      %v10914 = vpop.f32.mrf.mxu0
      %v10915 = vadd.f32 %v10706, %v10914
      %10916 = vmatmul.f32.gmra.mxu0 %v10805
      %v10917 = vpop.f32.mrf.mxu0
      %v10918 = vadd.f32 %v10709, %v10917
      %10919 = vmatmul.f32.gmra.mxu0 %v10808
      %v10920 = vpop.f32.mrf.mxu0
      %v10921 = vadd.f32 %v10712, %v10920
      %10922 = vmatmul.f32.gmra.mxu0 %v10811
      %v10923 = vpop.f32.mrf.mxu0
      %v10924 = vadd.f32 %v10715, %v10923
      %10925 = vmatmul.f32.gmra.mxu0 %v10814
      %v10926 = vpop.f32.mrf.mxu0
      %v10927 = vadd.f32 %v10718, %v10926
      %10928 = vmatmul.f32.gmra.mxu0 %v10817
      %v10929 = vpop.f32.mrf.mxu0
      %v10930 = vadd.f32 %v10721, %v10929
      %10931 = vmatmul.f32.gmra.mxu0 %v10820
      %v10932 = vpop.f32.mrf.mxu0
      %v10933 = vadd.f32 %v10724, %v10932
      %10934 = vmatmul.f32.gmra.mxu0 %v10823
      %v10935 = vpop.f32.mrf.mxu0
      %v10936 = vadd.f32 %v10727, %v10935
      %10937 = vmatmul.f32.gmra.mxu0 %v10826
      %v10938 = vpop.f32.mrf.mxu0
      %v10939 = vadd.f32 %v10730, %v10938
      %10940 = vmatmul.f32.gmra.mxu0 %v10829
      %v10941 = vpop.f32.mrf.mxu0
      %v10942 = vadd.f32 %v10733, %v10941
      %10943 = vmatmul.f32.gmra.mxu0 %v10832
      %v10944 = vpop.f32.mrf.mxu0
      %v10945 = vadd.f32 %v10736, %v10944
      %10946 = vmatmul.f32.gmra.mxu0 %v10835
      %v10947 = vpop.f32.mrf.mxu0
      %v10948 = vadd.f32 %v10739, %v10947
      %10949 = vdwg.mxu0
      %v10950 = vld [vmem:[#allocation4 + $0x2] sm:$0xff]
      %v10951 = vld [vmem:[#allocation4 + $0xa] sm:$0xff]
      %v10952 = vld [vmem:[#allocation4 + $0x1a] sm:$0xff]
      %v10953 = vld [vmem:[#allocation4 + $0x22] sm:$0xff]
      %v10954 = vld [vmem:[#allocation4 + $0x32] sm:$0xff]
      %v10955 = vld [vmem:[#allocation4 + $0x3a] sm:$0xff]
      %v10956 = vld [vmem:[#allocation4 + $0x4a] sm:$0xff]
      %v10957 = vld [vmem:[#allocation4 + $0x52] sm:$0xff]
      %v10958 = vld [vmem:[#allocation4 + $0x62] sm:$0xff]
      %v10959 = vld [vmem:[#allocation4 + $0x6a] sm:$0xff]
      %v10960 = vld [vmem:[#allocation4 + $0x7a] sm:$0xff]
      %v10961 = vld [vmem:[#allocation4 + $0x82] sm:$0xff]
      %v10962 = vld [vmem:[#allocation4 + $0x92] sm:$0xff]
      %v10963 = vld [vmem:[#allocation4 + $0x9a] sm:$0xff]
      %v10964 = vld [vmem:[#allocation4 + $0xaa] sm:$0xff]
      %v10965 = vld [vmem:[#allocation4 + $0xb2] sm:$0xff]
      %v10966 = vld [vmem:[#allocation4 + $0xc2] sm:$0xff]
      %v10967 = vld [vmem:[#allocation4 + $0xca] sm:$0xff]
      %v10968 = vld [vmem:[#allocation4 + $0xda] sm:$0xff]
      %v10969 = vld [vmem:[#allocation4 + $0xe2] sm:$0xff]
      %v10970 = vld [vmem:[#allocation4 + $0xf2] sm:$0xff]
      %v10971 = vld [vmem:[#allocation4 + $0xfa] sm:$0xff]
      %v10972 = vld [vmem:[#allocation4 + $0x10a] sm:$0xff]
      %v10973 = vld [vmem:[#allocation4 + $0x112] sm:$0xff]
      %v10974 = vld [vmem:[#allocation4 + $0x122] sm:$0xff]
      %v10975 = vld [vmem:[#allocation4 + $0x12a] sm:$0xff]
      %v10976 = vld [vmem:[#allocation4 + $0x13a] sm:$0xff]
      %v10977 = vld [vmem:[#allocation4 + $0x142] sm:$0xff]
      %v10978 = vld [vmem:[#allocation4 + $0x152] sm:$0xff]
      %v10979 = vld [vmem:[#allocation4 + $0x15a] sm:$0xff]
      %v10980 = vld [vmem:[#allocation4 + $0x16a] sm:$0xff]
      %v10981 = vld [vmem:[#allocation4 + $0x172] sm:$0xff]
      %s10982 = scalar_lea.vmem %s5, 16
      %v10983 = vld [vmem:[%s10982] sm:$0xff]
      %v10985 = vsel %vm337, %v10950, 0
      %v10988 = vsel %vm337, %v10951, 0
      %v10991 = vsel %vm337, %v10952, 0
      %v10994 = vsel %vm337, %v10953, 0
      %v10997 = vsel %vm337, %v10954, 0
      %v11000 = vsel %vm337, %v10955, 0
      %v11003 = vsel %vm337, %v10956, 0
      %v11006 = vsel %vm337, %v10957, 0
      %v11009 = vsel %vm337, %v10958, 0
      %v11012 = vsel %vm337, %v10959, 0
      %v11015 = vsel %vm337, %v10960, 0
      %v11018 = vsel %vm337, %v10961, 0
      %v11021 = vsel %vm337, %v10962, 0
      %v11024 = vsel %vm337, %v10963, 0
      %v11027 = vsel %vm337, %v10964, 0
      %v11030 = vsel %vm337, %v10965, 0
      %v11033 = vsel %vm337, %v10966, 0
      %v11036 = vsel %vm337, %v10967, 0
      %v11039 = vsel %vm337, %v10968, 0
      %v11042 = vsel %vm337, %v10969, 0
      %v11045 = vsel %vm337, %v10970, 0
      %v11048 = vsel %vm337, %v10971, 0
      %v11051 = vsel %vm337, %v10972, 0
      %v11054 = vsel %vm337, %v10973, 0
      %v11057 = vsel %vm337, %v10974, 0
      %v11060 = vsel %vm337, %v10975, 0
      %v11063 = vsel %vm337, %v10976, 0
      %v11066 = vsel %vm337, %v10977, 0
      %v11069 = vsel %vm337, %v10978, 0
      %v11072 = vsel %vm337, %v10979, 0
      %v11075 = vsel %vm337, %v10980, 0
      %v11078 = vsel %vm337, %v10981, 0
      %11080 = vmatpush.msra.mxu0 0.0
      %11081 = vmatpush.msra.mxu0 0.0
      %11082 = vmatpush.msra.mxu0 0.0
      %11083 = vmatpush.msra.mxu0 0.0
      %11084 = vmatpush.msra.mxu0 0.0
      %11085 = vmatpush.msra.mxu0 0.0
      %11086 = vmatpush.msra.mxu0 0.0
      %11087 = vmatpush.msra.mxu0 0.0
      %11088 = vmatpush.msra.mxu0 0.0
      %11089 = vmatpush.msra.mxu0 0.0
      %11090 = vmatpush.msra.mxu0 0.0
      %11091 = vmatpush.msra.mxu0 0.0
      %11092 = vmatpush.msra.mxu0 0.0
      %11093 = vmatpush.msra.mxu0 0.0
      %11094 = vmatpush.msra.mxu0 0.0
      %11095 = vmatpush.msra.mxu0 %v10983
      %11096 = vmatmul.f32.gmra.mxu0 %v10985
      %v11097 = vpop.f32.mrf.mxu0
      %v11098 = vadd.f32 0.0, %v11097
      %11099 = vmatmul.f32.gmra.mxu0 %v10988
      %v11100 = vpop.f32.mrf.mxu0
      %v11101 = vadd.f32 0.0, %v11100
      %11102 = vmatmul.f32.gmra.mxu0 %v10991
      %v11103 = vpop.f32.mrf.mxu0
      %v11104 = vadd.f32 0.0, %v11103
      %11105 = vmatmul.f32.gmra.mxu0 %v10994
      %v11106 = vpop.f32.mrf.mxu0
      %v11107 = vadd.f32 0.0, %v11106
      %11108 = vmatmul.f32.gmra.mxu0 %v10997
      %v11109 = vpop.f32.mrf.mxu0
      %v11110 = vadd.f32 0.0, %v11109
      %11111 = vmatmul.f32.gmra.mxu0 %v11000
      %v11112 = vpop.f32.mrf.mxu0
      %v11113 = vadd.f32 0.0, %v11112
      %11114 = vmatmul.f32.gmra.mxu0 %v11003
      %v11115 = vpop.f32.mrf.mxu0
      %v11116 = vadd.f32 0.0, %v11115
      %11117 = vmatmul.f32.gmra.mxu0 %v11006
      %v11118 = vpop.f32.mrf.mxu0
      %v11119 = vadd.f32 0.0, %v11118
      %11120 = vmatmul.f32.gmra.mxu0 %v11009
      %v11121 = vpop.f32.mrf.mxu0
      %v11122 = vadd.f32 0.0, %v11121
      %11123 = vmatmul.f32.gmra.mxu0 %v11012
      %v11124 = vpop.f32.mrf.mxu0
      %v11125 = vadd.f32 0.0, %v11124
      %11126 = vmatmul.f32.gmra.mxu0 %v11015
      %v11127 = vpop.f32.mrf.mxu0
      %v11128 = vadd.f32 0.0, %v11127
      %11129 = vmatmul.f32.gmra.mxu0 %v11018
      %v11130 = vpop.f32.mrf.mxu0
      %v11131 = vadd.f32 0.0, %v11130
      %11132 = vmatmul.f32.gmra.mxu0 %v11021
      %v11133 = vpop.f32.mrf.mxu0
      %v11134 = vadd.f32 0.0, %v11133
      %11135 = vmatmul.f32.gmra.mxu0 %v11024
      %v11136 = vpop.f32.mrf.mxu0
      %v11137 = vadd.f32 0.0, %v11136
      %11138 = vmatmul.f32.gmra.mxu0 %v11027
      %v11139 = vpop.f32.mrf.mxu0
      %v11140 = vadd.f32 0.0, %v11139
      %11141 = vmatmul.f32.gmra.mxu0 %v11030
      %v11142 = vpop.f32.mrf.mxu0
      %v11143 = vadd.f32 0.0, %v11142
      %11144 = vmatmul.f32.gmra.mxu0 %v11033
      %v11145 = vpop.f32.mrf.mxu0
      %v11146 = vadd.f32 0.0, %v11145
      %11147 = vmatmul.f32.gmra.mxu0 %v11036
      %v11148 = vpop.f32.mrf.mxu0
      %v11149 = vadd.f32 0.0, %v11148
      %11150 = vmatmul.f32.gmra.mxu0 %v11039
      %v11151 = vpop.f32.mrf.mxu0
      %v11152 = vadd.f32 0.0, %v11151
      %11153 = vmatmul.f32.gmra.mxu0 %v11042
      %v11154 = vpop.f32.mrf.mxu0
      %v11155 = vadd.f32 0.0, %v11154
      %11156 = vmatmul.f32.gmra.mxu0 %v11045
      %v11157 = vpop.f32.mrf.mxu0
      %v11158 = vadd.f32 0.0, %v11157
      %11159 = vmatmul.f32.gmra.mxu0 %v11048
      %v11160 = vpop.f32.mrf.mxu0
      %v11161 = vadd.f32 0.0, %v11160
      %11162 = vmatmul.f32.gmra.mxu0 %v11051
      %v11163 = vpop.f32.mrf.mxu0
      %v11164 = vadd.f32 0.0, %v11163
      %11165 = vmatmul.f32.gmra.mxu0 %v11054
      %v11166 = vpop.f32.mrf.mxu0
      %v11167 = vadd.f32 0.0, %v11166
      %11168 = vmatmul.f32.gmra.mxu0 %v11057
      %v11169 = vpop.f32.mrf.mxu0
      %v11170 = vadd.f32 0.0, %v11169
      %11171 = vmatmul.f32.gmra.mxu0 %v11060
      %v11172 = vpop.f32.mrf.mxu0
      %v11173 = vadd.f32 0.0, %v11172
      %11174 = vmatmul.f32.gmra.mxu0 %v11063
      %v11175 = vpop.f32.mrf.mxu0
      %v11176 = vadd.f32 0.0, %v11175
      %11177 = vmatmul.f32.gmra.mxu0 %v11066
      %v11178 = vpop.f32.mrf.mxu0
      %v11179 = vadd.f32 0.0, %v11178
      %11180 = vmatmul.f32.gmra.mxu0 %v11069
      %v11181 = vpop.f32.mrf.mxu0
      %v11182 = vadd.f32 0.0, %v11181
      %11183 = vmatmul.f32.gmra.mxu0 %v11072
      %v11184 = vpop.f32.mrf.mxu0
      %v11185 = vadd.f32 0.0, %v11184
      %11186 = vmatmul.f32.gmra.mxu0 %v11075
      %v11187 = vpop.f32.mrf.mxu0
      %v11188 = vadd.f32 0.0, %v11187
      %11189 = vmatmul.f32.gmra.mxu0 %v11078
      %v11190 = vpop.f32.mrf.mxu0
      %v11191 = vadd.f32 0.0, %v11190
      %11192 = vdwg.mxu0
      %v11193 = vadd.f32 %v10855, %v11098
      %v11194 = vadd.f32 %v10858, %v11101
      %v11195 = vadd.f32 %v10861, %v11104
      %v11196 = vadd.f32 %v10864, %v11107
      %v11197 = vadd.f32 %v10867, %v11110
      %v11198 = vadd.f32 %v10870, %v11113
      %v11199 = vadd.f32 %v10873, %v11116
      %v11200 = vadd.f32 %v10876, %v11119
      %v11201 = vadd.f32 %v10879, %v11122
      %v11202 = vadd.f32 %v10882, %v11125
      %v11203 = vadd.f32 %v10885, %v11128
      %v11204 = vadd.f32 %v10888, %v11131
      %v11205 = vadd.f32 %v10891, %v11134
      %v11206 = vadd.f32 %v10894, %v11137
      %v11207 = vadd.f32 %v10897, %v11140
      %v11208 = vadd.f32 %v10900, %v11143
      %v11209 = vadd.f32 %v10903, %v11146
      %v11210 = vadd.f32 %v10906, %v11149
      %v11211 = vadd.f32 %v10909, %v11152
      %v11212 = vadd.f32 %v10912, %v11155
      %v11213 = vadd.f32 %v10915, %v11158
      %v11214 = vadd.f32 %v10918, %v11161
      %v11215 = vadd.f32 %v10921, %v11164
      %v11216 = vadd.f32 %v10924, %v11167
      %v11217 = vadd.f32 %v10927, %v11170
      %v11218 = vadd.f32 %v10930, %v11173
      %v11219 = vadd.f32 %v10933, %v11176
      %v11220 = vadd.f32 %v10936, %v11179
      %v11221 = vadd.f32 %v10939, %v11182
      %v11222 = vadd.f32 %v10942, %v11185
      %v11223 = vadd.f32 %v10945, %v11188
      %v11224 = vadd.f32 %v10948, %v11191
      %v11225 = vld [vmem:[%s5413] sm:$0xff]
      %v11226 = vld [vmem:[%s5413 + $0x8] sm:$0xff]
      %v11227 = vld [vmem:[%s5413 + $0x18] sm:$0xff]
      %v11228 = vld [vmem:[%s5413 + $0x20] sm:$0xff]
      %v11229 = vld [vmem:[%s5413 + $0x30] sm:$0xff]
      %v11230 = vld [vmem:[%s5413 + $0x38] sm:$0xff]
      %v11231 = vld [vmem:[%s5413 + $0x48] sm:$0xff]
      %v11232 = vld [vmem:[%s5413 + $0x50] sm:$0xff]
      %v11233 = vld [vmem:[%s5413 + $0x60] sm:$0xff]
      %v11234 = vld [vmem:[%s5413 + $0x68] sm:$0xff]
      %v11235 = vld [vmem:[%s5413 + $0x78] sm:$0xff]
      %v11236 = vld [vmem:[%s5413 + $0x80] sm:$0xff]
      %v11237 = vld [vmem:[%s5413 + $0x90] sm:$0xff]
      %v11238 = vld [vmem:[%s5413 + $0x98] sm:$0xff]
      %v11239 = vld [vmem:[%s5413 + $0xa8] sm:$0xff]
      %v11240 = vld [vmem:[%s5413 + $0xb0] sm:$0xff]
      %v11241 = vld [vmem:[%s5413 + $0xc0] sm:$0xff]
      %v11242 = vld [vmem:[%s5413 + $0xc8] sm:$0xff]
      %v11243 = vld [vmem:[%s5413 + $0xd8] sm:$0xff]
      %v11244 = vld [vmem:[%s5413 + $0xe0] sm:$0xff]
      %v11245 = vld [vmem:[%s5413 + $0xf0] sm:$0xff]
      %v11246 = vld [vmem:[%s5413 + $0xf8] sm:$0xff]
      %v11247 = vld [vmem:[%s5413 + $0x108] sm:$0xff]
      %v11248 = vld [vmem:[%s5413 + $0x110] sm:$0xff]
      %v11249 = vld [vmem:[%s5413 + $0x120] sm:$0xff]
      %v11250 = vld [vmem:[%s5413 + $0x128] sm:$0xff]
      %v11251 = vld [vmem:[%s5413 + $0x138] sm:$0xff]
      %v11252 = vld [vmem:[%s5413 + $0x140] sm:$0xff]
      %v11253 = vld [vmem:[%s5413 + $0x150] sm:$0xff]
      %v11254 = vld [vmem:[%s5413 + $0x158] sm:$0xff]
      %v11255 = vld [vmem:[%s5413 + $0x168] sm:$0xff]
      %v11256 = vld [vmem:[%s5413 + $0x170] sm:$0xff]
      %s11257 = scalar_lea.vmem %s5, 24
      %v11258 = vld [vmem:[%s11257] sm:$0xff]
      %v11260 = vsel %vm337, %v11225, 0
      %v11263 = vsel %vm337, %v11226, 0
      %v11266 = vsel %vm337, %v11227, 0
      %v11269 = vsel %vm337, %v11228, 0
      %v11272 = vsel %vm337, %v11229, 0
      %v11275 = vsel %vm337, %v11230, 0
      %v11278 = vsel %vm337, %v11231, 0
      %v11281 = vsel %vm337, %v11232, 0
      %v11284 = vsel %vm337, %v11233, 0
      %v11287 = vsel %vm337, %v11234, 0
      %v11290 = vsel %vm337, %v11235, 0
      %v11293 = vsel %vm337, %v11236, 0
      %v11296 = vsel %vm337, %v11237, 0
      %v11299 = vsel %vm337, %v11238, 0
      %v11302 = vsel %vm337, %v11239, 0
      %v11305 = vsel %vm337, %v11240, 0
      %v11308 = vsel %vm337, %v11241, 0
      %v11311 = vsel %vm337, %v11242, 0
      %v11314 = vsel %vm337, %v11243, 0
      %v11317 = vsel %vm337, %v11244, 0
      %v11320 = vsel %vm337, %v11245, 0
      %v11323 = vsel %vm337, %v11246, 0
      %v11326 = vsel %vm337, %v11247, 0
      %v11329 = vsel %vm337, %v11248, 0
      %v11332 = vsel %vm337, %v11249, 0
      %v11335 = vsel %vm337, %v11250, 0
      %v11338 = vsel %vm337, %v11251, 0
      %v11341 = vsel %vm337, %v11252, 0
      %v11344 = vsel %vm337, %v11253, 0
      %v11347 = vsel %vm337, %v11254, 0
      %v11350 = vsel %vm337, %v11255, 0
      %v11353 = vsel %vm337, %v11256, 0
      %11355 = vmatpush.msra.mxu0 0.0
      %11356 = vmatpush.msra.mxu0 0.0
      %11357 = vmatpush.msra.mxu0 0.0
      %11358 = vmatpush.msra.mxu0 0.0
      %11359 = vmatpush.msra.mxu0 0.0
      %11360 = vmatpush.msra.mxu0 0.0
      %11361 = vmatpush.msra.mxu0 0.0
      %11362 = vmatpush.msra.mxu0 0.0
      %11363 = vmatpush.msra.mxu0 0.0
      %11364 = vmatpush.msra.mxu0 0.0
      %11365 = vmatpush.msra.mxu0 0.0
      %11366 = vmatpush.msra.mxu0 0.0
      %11367 = vmatpush.msra.mxu0 0.0
      %11368 = vmatpush.msra.mxu0 0.0
      %11369 = vmatpush.msra.mxu0 0.0
      %11370 = vmatpush.msra.mxu0 %v11258
      %11371 = vmatmul.f32.gmra.mxu0 %v11260
      %v11372 = vpop.f32.mrf.mxu0
      %v11373 = vadd.f32 0.0, %v11372
      %11374 = vmatmul.f32.gmra.mxu0 %v11263
      %v11375 = vpop.f32.mrf.mxu0
      %v11376 = vadd.f32 0.0, %v11375
      %11377 = vmatmul.f32.gmra.mxu0 %v11266
      %v11378 = vpop.f32.mrf.mxu0
      %v11379 = vadd.f32 0.0, %v11378
      %11380 = vmatmul.f32.gmra.mxu0 %v11269
      %v11381 = vpop.f32.mrf.mxu0
      %v11382 = vadd.f32 0.0, %v11381
      %11383 = vmatmul.f32.gmra.mxu0 %v11272
      %v11384 = vpop.f32.mrf.mxu0
      %v11385 = vadd.f32 0.0, %v11384
      %11386 = vmatmul.f32.gmra.mxu0 %v11275
      %v11387 = vpop.f32.mrf.mxu0
      %v11388 = vadd.f32 0.0, %v11387
      %11389 = vmatmul.f32.gmra.mxu0 %v11278
      %v11390 = vpop.f32.mrf.mxu0
      %v11391 = vadd.f32 0.0, %v11390
      %11392 = vmatmul.f32.gmra.mxu0 %v11281
      %v11393 = vpop.f32.mrf.mxu0
      %v11394 = vadd.f32 0.0, %v11393
      %11395 = vmatmul.f32.gmra.mxu0 %v11284
      %v11396 = vpop.f32.mrf.mxu0
      %v11397 = vadd.f32 0.0, %v11396
      %11398 = vmatmul.f32.gmra.mxu0 %v11287
      %v11399 = vpop.f32.mrf.mxu0
      %v11400 = vadd.f32 0.0, %v11399
      %11401 = vmatmul.f32.gmra.mxu0 %v11290
      %v11402 = vpop.f32.mrf.mxu0
      %v11403 = vadd.f32 0.0, %v11402
      %11404 = vmatmul.f32.gmra.mxu0 %v11293
      %v11405 = vpop.f32.mrf.mxu0
      %v11406 = vadd.f32 0.0, %v11405
      %11407 = vmatmul.f32.gmra.mxu0 %v11296
      %v11408 = vpop.f32.mrf.mxu0
      %v11409 = vadd.f32 0.0, %v11408
      %11410 = vmatmul.f32.gmra.mxu0 %v11299
      %v11411 = vpop.f32.mrf.mxu0
      %v11412 = vadd.f32 0.0, %v11411
      %11413 = vmatmul.f32.gmra.mxu0 %v11302
      %v11414 = vpop.f32.mrf.mxu0
      %v11415 = vadd.f32 0.0, %v11414
      %11416 = vmatmul.f32.gmra.mxu0 %v11305
      %v11417 = vpop.f32.mrf.mxu0
      %v11418 = vadd.f32 0.0, %v11417
      %11419 = vmatmul.f32.gmra.mxu0 %v11308
      %v11420 = vpop.f32.mrf.mxu0
      %v11421 = vadd.f32 0.0, %v11420
      %11422 = vmatmul.f32.gmra.mxu0 %v11311
      %v11423 = vpop.f32.mrf.mxu0
      %v11424 = vadd.f32 0.0, %v11423
      %11425 = vmatmul.f32.gmra.mxu0 %v11314
      %v11426 = vpop.f32.mrf.mxu0
      %v11427 = vadd.f32 0.0, %v11426
      %11428 = vmatmul.f32.gmra.mxu0 %v11317
      %v11429 = vpop.f32.mrf.mxu0
      %v11430 = vadd.f32 0.0, %v11429
      %11431 = vmatmul.f32.gmra.mxu0 %v11320
      %v11432 = vpop.f32.mrf.mxu0
      %v11433 = vadd.f32 0.0, %v11432
      %11434 = vmatmul.f32.gmra.mxu0 %v11323
      %v11435 = vpop.f32.mrf.mxu0
      %v11436 = vadd.f32 0.0, %v11435
      %11437 = vmatmul.f32.gmra.mxu0 %v11326
      %v11438 = vpop.f32.mrf.mxu0
      %v11439 = vadd.f32 0.0, %v11438
      %11440 = vmatmul.f32.gmra.mxu0 %v11329
      %v11441 = vpop.f32.mrf.mxu0
      %v11442 = vadd.f32 0.0, %v11441
      %11443 = vmatmul.f32.gmra.mxu0 %v11332
      %v11444 = vpop.f32.mrf.mxu0
      %v11445 = vadd.f32 0.0, %v11444
      %11446 = vmatmul.f32.gmra.mxu0 %v11335
      %v11447 = vpop.f32.mrf.mxu0
      %v11448 = vadd.f32 0.0, %v11447
      %11449 = vmatmul.f32.gmra.mxu0 %v11338
      %v11450 = vpop.f32.mrf.mxu0
      %v11451 = vadd.f32 0.0, %v11450
      %11452 = vmatmul.f32.gmra.mxu0 %v11341
      %v11453 = vpop.f32.mrf.mxu0
      %v11454 = vadd.f32 0.0, %v11453
      %11455 = vmatmul.f32.gmra.mxu0 %v11344
      %v11456 = vpop.f32.mrf.mxu0
      %v11457 = vadd.f32 0.0, %v11456
      %11458 = vmatmul.f32.gmra.mxu0 %v11347
      %v11459 = vpop.f32.mrf.mxu0
      %v11460 = vadd.f32 0.0, %v11459
      %11461 = vmatmul.f32.gmra.mxu0 %v11350
      %v11462 = vpop.f32.mrf.mxu0
      %v11463 = vadd.f32 0.0, %v11462
      %11464 = vmatmul.f32.gmra.mxu0 %v11353
      %v11465 = vpop.f32.mrf.mxu0
      %v11466 = vadd.f32 0.0, %v11465
      %11467 = vdwg.mxu0
      %v11468 = vadd.f32 %v11193, %v11373
      %v11469 = vadd.f32 %v11194, %v11376
      %v11470 = vadd.f32 %v11195, %v11379
      %v11471 = vadd.f32 %v11196, %v11382
      %v11472 = vadd.f32 %v11197, %v11385
      %v11473 = vadd.f32 %v11198, %v11388
      %v11474 = vadd.f32 %v11199, %v11391
      %v11475 = vadd.f32 %v11200, %v11394
      %v11476 = vadd.f32 %v11201, %v11397
      %v11477 = vadd.f32 %v11202, %v11400
      %v11478 = vadd.f32 %v11203, %v11403
      %v11479 = vadd.f32 %v11204, %v11406
      %v11480 = vadd.f32 %v11205, %v11409
      %v11481 = vadd.f32 %v11206, %v11412
      %v11482 = vadd.f32 %v11207, %v11415
      %v11483 = vadd.f32 %v11208, %v11418
      %v11484 = vadd.f32 %v11209, %v11421
      %v11485 = vadd.f32 %v11210, %v11424
      %v11486 = vadd.f32 %v11211, %v11427
      %v11487 = vadd.f32 %v11212, %v11430
      %v11488 = vadd.f32 %v11213, %v11433
      %v11489 = vadd.f32 %v11214, %v11436
      %v11490 = vadd.f32 %v11215, %v11439
      %v11491 = vadd.f32 %v11216, %v11442
      %v11492 = vadd.f32 %v11217, %v11445
      %v11493 = vadd.f32 %v11218, %v11448
      %v11494 = vadd.f32 %v11219, %v11451
      %v11495 = vadd.f32 %v11220, %v11454
      %v11496 = vadd.f32 %v11221, %v11457
      %v11497 = vadd.f32 %v11222, %v11460
      %v11498 = vadd.f32 %v11223, %v11463
      %v11499 = vadd.f32 %v11224, %v11466
      %v11500 = vld [vmem:[%s5413 + $0x1] sm:$0xff]
      %v11501 = vld [vmem:[%s5413 + $0x9] sm:$0xff]
      %v11502 = vld [vmem:[%s5413 + $0x19] sm:$0xff]
      %v11503 = vld [vmem:[%s5413 + $0x21] sm:$0xff]
      %v11504 = vld [vmem:[%s5413 + $0x31] sm:$0xff]
      %v11505 = vld [vmem:[%s5413 + $0x39] sm:$0xff]
      %v11506 = vld [vmem:[%s5413 + $0x49] sm:$0xff]
      %v11507 = vld [vmem:[%s5413 + $0x51] sm:$0xff]
      %v11508 = vld [vmem:[%s5413 + $0x61] sm:$0xff]
      %v11509 = vld [vmem:[%s5413 + $0x69] sm:$0xff]
      %v11510 = vld [vmem:[%s5413 + $0x79] sm:$0xff]
      %v11511 = vld [vmem:[%s5413 + $0x81] sm:$0xff]
      %v11512 = vld [vmem:[%s5413 + $0x91] sm:$0xff]
      %v11513 = vld [vmem:[%s5413 + $0x99] sm:$0xff]
      %v11514 = vld [vmem:[%s5413 + $0xa9] sm:$0xff]
      %v11515 = vld [vmem:[%s5413 + $0xb1] sm:$0xff]
      %v11516 = vld [vmem:[%s5413 + $0xc1] sm:$0xff]
      %v11517 = vld [vmem:[%s5413 + $0xc9] sm:$0xff]
      %v11518 = vld [vmem:[%s5413 + $0xd9] sm:$0xff]
      %v11519 = vld [vmem:[%s5413 + $0xe1] sm:$0xff]
      %v11520 = vld [vmem:[%s5413 + $0xf1] sm:$0xff]
      %v11521 = vld [vmem:[%s5413 + $0xf9] sm:$0xff]
      %v11522 = vld [vmem:[%s5413 + $0x109] sm:$0xff]
      %v11523 = vld [vmem:[%s5413 + $0x111] sm:$0xff]
      %v11524 = vld [vmem:[%s5413 + $0x121] sm:$0xff]
      %v11525 = vld [vmem:[%s5413 + $0x129] sm:$0xff]
      %v11526 = vld [vmem:[%s5413 + $0x139] sm:$0xff]
      %v11527 = vld [vmem:[%s5413 + $0x141] sm:$0xff]
      %v11528 = vld [vmem:[%s5413 + $0x151] sm:$0xff]
      %v11529 = vld [vmem:[%s5413 + $0x159] sm:$0xff]
      %v11530 = vld [vmem:[%s5413 + $0x169] sm:$0xff]
      %v11531 = vld [vmem:[%s5413 + $0x171] sm:$0xff]
      %s11532 = scalar_lea.vmem %s5, 32
      %v11533 = vld [vmem:[%s11532] sm:$0xff]
      %v11535 = vsel %vm337, %v11500, 0
      %v11538 = vsel %vm337, %v11501, 0
      %v11541 = vsel %vm337, %v11502, 0
      %v11544 = vsel %vm337, %v11503, 0
      %v11547 = vsel %vm337, %v11504, 0
      %v11550 = vsel %vm337, %v11505, 0
      %v11553 = vsel %vm337, %v11506, 0
      %v11556 = vsel %vm337, %v11507, 0
      %v11559 = vsel %vm337, %v11508, 0
      %v11562 = vsel %vm337, %v11509, 0
      %v11565 = vsel %vm337, %v11510, 0
      %v11568 = vsel %vm337, %v11511, 0
      %v11571 = vsel %vm337, %v11512, 0
      %v11574 = vsel %vm337, %v11513, 0
      %v11577 = vsel %vm337, %v11514, 0
      %v11580 = vsel %vm337, %v11515, 0
      %v11583 = vsel %vm337, %v11516, 0
      %v11586 = vsel %vm337, %v11517, 0
      %v11589 = vsel %vm337, %v11518, 0
      %v11592 = vsel %vm337, %v11519, 0
      %v11595 = vsel %vm337, %v11520, 0
      %v11598 = vsel %vm337, %v11521, 0
      %v11601 = vsel %vm337, %v11522, 0
      %v11604 = vsel %vm337, %v11523, 0
      %v11607 = vsel %vm337, %v11524, 0
      %v11610 = vsel %vm337, %v11525, 0
      %v11613 = vsel %vm337, %v11526, 0
      %v11616 = vsel %vm337, %v11527, 0
      %v11619 = vsel %vm337, %v11528, 0
      %v11622 = vsel %vm337, %v11529, 0
      %v11625 = vsel %vm337, %v11530, 0
      %v11628 = vsel %vm337, %v11531, 0
      %11630 = vmatpush.msra.mxu0 0.0
      %11631 = vmatpush.msra.mxu0 0.0
      %11632 = vmatpush.msra.mxu0 0.0
      %11633 = vmatpush.msra.mxu0 0.0
      %11634 = vmatpush.msra.mxu0 0.0
      %11635 = vmatpush.msra.mxu0 0.0
      %11636 = vmatpush.msra.mxu0 0.0
      %11637 = vmatpush.msra.mxu0 0.0
      %11638 = vmatpush.msra.mxu0 0.0
      %11639 = vmatpush.msra.mxu0 0.0
      %11640 = vmatpush.msra.mxu0 0.0
      %11641 = vmatpush.msra.mxu0 0.0
      %11642 = vmatpush.msra.mxu0 0.0
      %11643 = vmatpush.msra.mxu0 0.0
      %11644 = vmatpush.msra.mxu0 0.0
      %11645 = vmatpush.msra.mxu0 %v11533
      %11646 = vmatmul.f32.gmra.mxu0 %v11535
      %v11647 = vpop.f32.mrf.mxu0
      %v11648 = vadd.f32 0.0, %v11647
      %11649 = vmatmul.f32.gmra.mxu0 %v11538
      %v11650 = vpop.f32.mrf.mxu0
      %v11651 = vadd.f32 0.0, %v11650
      %11652 = vmatmul.f32.gmra.mxu0 %v11541
      %v11653 = vpop.f32.mrf.mxu0
      %v11654 = vadd.f32 0.0, %v11653
      %11655 = vmatmul.f32.gmra.mxu0 %v11544
      %v11656 = vpop.f32.mrf.mxu0
      %v11657 = vadd.f32 0.0, %v11656
      %11658 = vmatmul.f32.gmra.mxu0 %v11547
      %v11659 = vpop.f32.mrf.mxu0
      %v11660 = vadd.f32 0.0, %v11659
      %11661 = vmatmul.f32.gmra.mxu0 %v11550
      %v11662 = vpop.f32.mrf.mxu0
      %v11663 = vadd.f32 0.0, %v11662
      %11664 = vmatmul.f32.gmra.mxu0 %v11553
      %v11665 = vpop.f32.mrf.mxu0
      %v11666 = vadd.f32 0.0, %v11665
      %11667 = vmatmul.f32.gmra.mxu0 %v11556
      %v11668 = vpop.f32.mrf.mxu0
      %v11669 = vadd.f32 0.0, %v11668
      %11670 = vmatmul.f32.gmra.mxu0 %v11559
      %v11671 = vpop.f32.mrf.mxu0
      %v11672 = vadd.f32 0.0, %v11671
      %11673 = vmatmul.f32.gmra.mxu0 %v11562
      %v11674 = vpop.f32.mrf.mxu0
      %v11675 = vadd.f32 0.0, %v11674
      %11676 = vmatmul.f32.gmra.mxu0 %v11565
      %v11677 = vpop.f32.mrf.mxu0
      %v11678 = vadd.f32 0.0, %v11677
      %11679 = vmatmul.f32.gmra.mxu0 %v11568
      %v11680 = vpop.f32.mrf.mxu0
      %v11681 = vadd.f32 0.0, %v11680
      %11682 = vmatmul.f32.gmra.mxu0 %v11571
      %v11683 = vpop.f32.mrf.mxu0
      %v11684 = vadd.f32 0.0, %v11683
      %11685 = vmatmul.f32.gmra.mxu0 %v11574
      %v11686 = vpop.f32.mrf.mxu0
      %v11687 = vadd.f32 0.0, %v11686
      %11688 = vmatmul.f32.gmra.mxu0 %v11577
      %v11689 = vpop.f32.mrf.mxu0
      %v11690 = vadd.f32 0.0, %v11689
      %11691 = vmatmul.f32.gmra.mxu0 %v11580
      %v11692 = vpop.f32.mrf.mxu0
      %v11693 = vadd.f32 0.0, %v11692
      %11694 = vmatmul.f32.gmra.mxu0 %v11583
      %v11695 = vpop.f32.mrf.mxu0
      %v11696 = vadd.f32 0.0, %v11695
      %11697 = vmatmul.f32.gmra.mxu0 %v11586
      %v11698 = vpop.f32.mrf.mxu0
      %v11699 = vadd.f32 0.0, %v11698
      %11700 = vmatmul.f32.gmra.mxu0 %v11589
      %v11701 = vpop.f32.mrf.mxu0
      %v11702 = vadd.f32 0.0, %v11701
      %11703 = vmatmul.f32.gmra.mxu0 %v11592
      %v11704 = vpop.f32.mrf.mxu0
      %v11705 = vadd.f32 0.0, %v11704
      %11706 = vmatmul.f32.gmra.mxu0 %v11595
      %v11707 = vpop.f32.mrf.mxu0
      %v11708 = vadd.f32 0.0, %v11707
      %11709 = vmatmul.f32.gmra.mxu0 %v11598
      %v11710 = vpop.f32.mrf.mxu0
      %v11711 = vadd.f32 0.0, %v11710
      %11712 = vmatmul.f32.gmra.mxu0 %v11601
      %v11713 = vpop.f32.mrf.mxu0
      %v11714 = vadd.f32 0.0, %v11713
      %11715 = vmatmul.f32.gmra.mxu0 %v11604
      %v11716 = vpop.f32.mrf.mxu0
      %v11717 = vadd.f32 0.0, %v11716
      %11718 = vmatmul.f32.gmra.mxu0 %v11607
      %v11719 = vpop.f32.mrf.mxu0
      %v11720 = vadd.f32 0.0, %v11719
      %11721 = vmatmul.f32.gmra.mxu0 %v11610
      %v11722 = vpop.f32.mrf.mxu0
      %v11723 = vadd.f32 0.0, %v11722
      %11724 = vmatmul.f32.gmra.mxu0 %v11613
      %v11725 = vpop.f32.mrf.mxu0
      %v11726 = vadd.f32 0.0, %v11725
      %11727 = vmatmul.f32.gmra.mxu0 %v11616
      %v11728 = vpop.f32.mrf.mxu0
      %v11729 = vadd.f32 0.0, %v11728
      %11730 = vmatmul.f32.gmra.mxu0 %v11619
      %v11731 = vpop.f32.mrf.mxu0
      %v11732 = vadd.f32 0.0, %v11731
      %11733 = vmatmul.f32.gmra.mxu0 %v11622
      %v11734 = vpop.f32.mrf.mxu0
      %v11735 = vadd.f32 0.0, %v11734
      %11736 = vmatmul.f32.gmra.mxu0 %v11625
      %v11737 = vpop.f32.mrf.mxu0
      %v11738 = vadd.f32 0.0, %v11737
      %11739 = vmatmul.f32.gmra.mxu0 %v11628
      %v11740 = vpop.f32.mrf.mxu0
      %v11741 = vadd.f32 0.0, %v11740
      %11742 = vdwg.mxu0
      %v11743 = vadd.f32 %v11468, %v11648
      %v11744 = vadd.f32 %v11469, %v11651
      %v11745 = vadd.f32 %v11470, %v11654
      %v11746 = vadd.f32 %v11471, %v11657
      %v11747 = vadd.f32 %v11472, %v11660
      %v11748 = vadd.f32 %v11473, %v11663
      %v11749 = vadd.f32 %v11474, %v11666
      %v11750 = vadd.f32 %v11475, %v11669
      %v11751 = vadd.f32 %v11476, %v11672
      %v11752 = vadd.f32 %v11477, %v11675
      %v11753 = vadd.f32 %v11478, %v11678
      %v11754 = vadd.f32 %v11479, %v11681
      %v11755 = vadd.f32 %v11480, %v11684
      %v11756 = vadd.f32 %v11481, %v11687
      %v11757 = vadd.f32 %v11482, %v11690
      %v11758 = vadd.f32 %v11483, %v11693
      %v11759 = vadd.f32 %v11484, %v11696
      %v11760 = vadd.f32 %v11485, %v11699
      %v11761 = vadd.f32 %v11486, %v11702
      %v11762 = vadd.f32 %v11487, %v11705
      %v11763 = vadd.f32 %v11488, %v11708
      %v11764 = vadd.f32 %v11489, %v11711
      %v11765 = vadd.f32 %v11490, %v11714
      %v11766 = vadd.f32 %v11491, %v11717
      %v11767 = vadd.f32 %v11492, %v11720
      %v11768 = vadd.f32 %v11493, %v11723
      %v11769 = vadd.f32 %v11494, %v11726
      %v11770 = vadd.f32 %v11495, %v11729
      %v11771 = vadd.f32 %v11496, %v11732
      %v11772 = vadd.f32 %v11497, %v11735
      %v11773 = vadd.f32 %v11498, %v11738
      %v11774 = vadd.f32 %v11499, %v11741
      %v11775 = vld [vmem:[%s5413 + $0x2] sm:$0xff]
      %v11776 = vld [vmem:[%s5413 + $0xa] sm:$0xff]
      %v11777 = vld [vmem:[%s5413 + $0x1a] sm:$0xff]
      %v11778 = vld [vmem:[%s5413 + $0x22] sm:$0xff]
      %v11779 = vld [vmem:[%s5413 + $0x32] sm:$0xff]
      %v11780 = vld [vmem:[%s5413 + $0x3a] sm:$0xff]
      %v11781 = vld [vmem:[%s5413 + $0x4a] sm:$0xff]
      %v11782 = vld [vmem:[%s5413 + $0x52] sm:$0xff]
      %v11783 = vld [vmem:[%s5413 + $0x62] sm:$0xff]
      %v11784 = vld [vmem:[%s5413 + $0x6a] sm:$0xff]
      %v11785 = vld [vmem:[%s5413 + $0x7a] sm:$0xff]
      %v11786 = vld [vmem:[%s5413 + $0x82] sm:$0xff]
      %v11787 = vld [vmem:[%s5413 + $0x92] sm:$0xff]
      %v11788 = vld [vmem:[%s5413 + $0x9a] sm:$0xff]
      %v11789 = vld [vmem:[%s5413 + $0xaa] sm:$0xff]
      %v11790 = vld [vmem:[%s5413 + $0xb2] sm:$0xff]
      %v11791 = vld [vmem:[%s5413 + $0xc2] sm:$0xff]
      %v11792 = vld [vmem:[%s5413 + $0xca] sm:$0xff]
      %v11793 = vld [vmem:[%s5413 + $0xda] sm:$0xff]
      %v11794 = vld [vmem:[%s5413 + $0xe2] sm:$0xff]
      %v11795 = vld [vmem:[%s5413 + $0xf2] sm:$0xff]
      %v11796 = vld [vmem:[%s5413 + $0xfa] sm:$0xff]
      %v11797 = vld [vmem:[%s5413 + $0x10a] sm:$0xff]
      %v11798 = vld [vmem:[%s5413 + $0x112] sm:$0xff]
      %v11799 = vld [vmem:[%s5413 + $0x122] sm:$0xff]
      %v11800 = vld [vmem:[%s5413 + $0x12a] sm:$0xff]
      %v11801 = vld [vmem:[%s5413 + $0x13a] sm:$0xff]
      %v11802 = vld [vmem:[%s5413 + $0x142] sm:$0xff]
      %v11803 = vld [vmem:[%s5413 + $0x152] sm:$0xff]
      %v11804 = vld [vmem:[%s5413 + $0x15a] sm:$0xff]
      %v11805 = vld [vmem:[%s5413 + $0x16a] sm:$0xff]
      %v11806 = vld [vmem:[%s5413 + $0x172] sm:$0xff]
      %s11807 = scalar_lea.vmem %s5, 40
      %v11808 = vld [vmem:[%s11807] sm:$0xff]
      %v11810 = vsel %vm337, %v11775, 0
      %v11813 = vsel %vm337, %v11776, 0
      %v11816 = vsel %vm337, %v11777, 0
      %v11819 = vsel %vm337, %v11778, 0
      %v11822 = vsel %vm337, %v11779, 0
      %v11825 = vsel %vm337, %v11780, 0
      %v11828 = vsel %vm337, %v11781, 0
      %v11831 = vsel %vm337, %v11782, 0
      %v11834 = vsel %vm337, %v11783, 0
      %v11837 = vsel %vm337, %v11784, 0
      %v11840 = vsel %vm337, %v11785, 0
      %v11843 = vsel %vm337, %v11786, 0
      %v11846 = vsel %vm337, %v11787, 0
      %v11849 = vsel %vm337, %v11788, 0
      %v11852 = vsel %vm337, %v11789, 0
      %v11855 = vsel %vm337, %v11790, 0
      %v11858 = vsel %vm337, %v11791, 0
      %v11861 = vsel %vm337, %v11792, 0
      %v11864 = vsel %vm337, %v11793, 0
      %v11867 = vsel %vm337, %v11794, 0
      %v11870 = vsel %vm337, %v11795, 0
      %v11873 = vsel %vm337, %v11796, 0
      %v11876 = vsel %vm337, %v11797, 0
      %v11879 = vsel %vm337, %v11798, 0
      %v11882 = vsel %vm337, %v11799, 0
      %v11885 = vsel %vm337, %v11800, 0
      %v11888 = vsel %vm337, %v11801, 0
      %v11891 = vsel %vm337, %v11802, 0
      %v11894 = vsel %vm337, %v11803, 0
      %v11897 = vsel %vm337, %v11804, 0
      %v11900 = vsel %vm337, %v11805, 0
      %v11903 = vsel %vm337, %v11806, 0
      %11905 = vmatpush.msra.mxu0 0.0
      %11906 = vmatpush.msra.mxu0 0.0
      %11907 = vmatpush.msra.mxu0 0.0
      %11908 = vmatpush.msra.mxu0 0.0
      %11909 = vmatpush.msra.mxu0 0.0
      %11910 = vmatpush.msra.mxu0 0.0
      %11911 = vmatpush.msra.mxu0 0.0
      %11912 = vmatpush.msra.mxu0 0.0
      %11913 = vmatpush.msra.mxu0 0.0
      %11914 = vmatpush.msra.mxu0 0.0
      %11915 = vmatpush.msra.mxu0 0.0
      %11916 = vmatpush.msra.mxu0 0.0
      %11917 = vmatpush.msra.mxu0 0.0
      %11918 = vmatpush.msra.mxu0 0.0
      %11919 = vmatpush.msra.mxu0 0.0
      %11920 = vmatpush.msra.mxu0 %v11808
      %11921 = vmatmul.f32.gmra.mxu0 %v11810
      %v11922 = vpop.f32.mrf.mxu0
      %v11923 = vadd.f32 0.0, %v11922
      %11924 = vmatmul.f32.gmra.mxu0 %v11813
      %v11925 = vpop.f32.mrf.mxu0
      %v11926 = vadd.f32 0.0, %v11925
      %11927 = vmatmul.f32.gmra.mxu0 %v11816
      %v11928 = vpop.f32.mrf.mxu0
      %v11929 = vadd.f32 0.0, %v11928
      %11930 = vmatmul.f32.gmra.mxu0 %v11819
      %v11931 = vpop.f32.mrf.mxu0
      %v11932 = vadd.f32 0.0, %v11931
      %11933 = vmatmul.f32.gmra.mxu0 %v11822
      %v11934 = vpop.f32.mrf.mxu0
      %v11935 = vadd.f32 0.0, %v11934
      %11936 = vmatmul.f32.gmra.mxu0 %v11825
      %v11937 = vpop.f32.mrf.mxu0
      %v11938 = vadd.f32 0.0, %v11937
      %11939 = vmatmul.f32.gmra.mxu0 %v11828
      %v11940 = vpop.f32.mrf.mxu0
      %v11941 = vadd.f32 0.0, %v11940
      %11942 = vmatmul.f32.gmra.mxu0 %v11831
      %v11943 = vpop.f32.mrf.mxu0
      %v11944 = vadd.f32 0.0, %v11943
      %11945 = vmatmul.f32.gmra.mxu0 %v11834
      %v11946 = vpop.f32.mrf.mxu0
      %v11947 = vadd.f32 0.0, %v11946
      %11948 = vmatmul.f32.gmra.mxu0 %v11837
      %v11949 = vpop.f32.mrf.mxu0
      %v11950 = vadd.f32 0.0, %v11949
      %11951 = vmatmul.f32.gmra.mxu0 %v11840
      %v11952 = vpop.f32.mrf.mxu0
      %v11953 = vadd.f32 0.0, %v11952
      %11954 = vmatmul.f32.gmra.mxu0 %v11843
      %v11955 = vpop.f32.mrf.mxu0
      %v11956 = vadd.f32 0.0, %v11955
      %11957 = vmatmul.f32.gmra.mxu0 %v11846
      %v11958 = vpop.f32.mrf.mxu0
      %v11959 = vadd.f32 0.0, %v11958
      %11960 = vmatmul.f32.gmra.mxu0 %v11849
      %v11961 = vpop.f32.mrf.mxu0
      %v11962 = vadd.f32 0.0, %v11961
      %11963 = vmatmul.f32.gmra.mxu0 %v11852
      %v11964 = vpop.f32.mrf.mxu0
      %v11965 = vadd.f32 0.0, %v11964
      %11966 = vmatmul.f32.gmra.mxu0 %v11855
      %v11967 = vpop.f32.mrf.mxu0
      %v11968 = vadd.f32 0.0, %v11967
      %11969 = vmatmul.f32.gmra.mxu0 %v11858
      %v11970 = vpop.f32.mrf.mxu0
      %v11971 = vadd.f32 0.0, %v11970
      %11972 = vmatmul.f32.gmra.mxu0 %v11861
      %v11973 = vpop.f32.mrf.mxu0
      %v11974 = vadd.f32 0.0, %v11973
      %11975 = vmatmul.f32.gmra.mxu0 %v11864
      %v11976 = vpop.f32.mrf.mxu0
      %v11977 = vadd.f32 0.0, %v11976
      %11978 = vmatmul.f32.gmra.mxu0 %v11867
      %v11979 = vpop.f32.mrf.mxu0
      %v11980 = vadd.f32 0.0, %v11979
      %11981 = vmatmul.f32.gmra.mxu0 %v11870
      %v11982 = vpop.f32.mrf.mxu0
      %v11983 = vadd.f32 0.0, %v11982
      %11984 = vmatmul.f32.gmra.mxu0 %v11873
      %v11985 = vpop.f32.mrf.mxu0
      %v11986 = vadd.f32 0.0, %v11985
      %11987 = vmatmul.f32.gmra.mxu0 %v11876
      %v11988 = vpop.f32.mrf.mxu0
      %v11989 = vadd.f32 0.0, %v11988
      %11990 = vmatmul.f32.gmra.mxu0 %v11879
      %v11991 = vpop.f32.mrf.mxu0
      %v11992 = vadd.f32 0.0, %v11991
      %11993 = vmatmul.f32.gmra.mxu0 %v11882
      %v11994 = vpop.f32.mrf.mxu0
      %v11995 = vadd.f32 0.0, %v11994
      %11996 = vmatmul.f32.gmra.mxu0 %v11885
      %v11997 = vpop.f32.mrf.mxu0
      %v11998 = vadd.f32 0.0, %v11997
      %11999 = vmatmul.f32.gmra.mxu0 %v11888
      %v12000 = vpop.f32.mrf.mxu0
      %v12001 = vadd.f32 0.0, %v12000
      %12002 = vmatmul.f32.gmra.mxu0 %v11891
      %v12003 = vpop.f32.mrf.mxu0
      %v12004 = vadd.f32 0.0, %v12003
      %12005 = vmatmul.f32.gmra.mxu0 %v11894
      %v12006 = vpop.f32.mrf.mxu0
      %v12007 = vadd.f32 0.0, %v12006
      %12008 = vmatmul.f32.gmra.mxu0 %v11897
      %v12009 = vpop.f32.mrf.mxu0
      %v12010 = vadd.f32 0.0, %v12009
      %12011 = vmatmul.f32.gmra.mxu0 %v11900
      %v12012 = vpop.f32.mrf.mxu0
      %v12013 = vadd.f32 0.0, %v12012
      %12014 = vmatmul.f32.gmra.mxu0 %v11903
      %v12015 = vpop.f32.mrf.mxu0
      %v12016 = vadd.f32 0.0, %v12015
      %12017 = vdwg.mxu0
      %v12018 = vadd.f32 %v11743, %v11923
      %v12019 = vadd.f32 %v11744, %v11926
      %v12020 = vadd.f32 %v11745, %v11929
      %v12021 = vadd.f32 %v11746, %v11932
      %v12022 = vadd.f32 %v11747, %v11935
      %v12023 = vadd.f32 %v11748, %v11938
      %v12024 = vadd.f32 %v11749, %v11941
      %v12025 = vadd.f32 %v11750, %v11944
      %v12026 = vadd.f32 %v11751, %v11947
      %v12027 = vadd.f32 %v11752, %v11950
      %v12028 = vadd.f32 %v11753, %v11953
      %v12029 = vadd.f32 %v11754, %v11956
      %v12030 = vadd.f32 %v11755, %v11959
      %v12031 = vadd.f32 %v11756, %v11962
      %v12032 = vadd.f32 %v11757, %v11965
      %v12033 = vadd.f32 %v11758, %v11968
      %v12034 = vadd.f32 %v11759, %v11971
      %v12035 = vadd.f32 %v11760, %v11974
      %v12036 = vadd.f32 %v11761, %v11977
      %v12037 = vadd.f32 %v11762, %v11980
      %v12038 = vadd.f32 %v11763, %v11983
      %v12039 = vadd.f32 %v11764, %v11986
      %v12040 = vadd.f32 %v11765, %v11989
      %v12041 = vadd.f32 %v11766, %v11992
      %v12042 = vadd.f32 %v11767, %v11995
      %v12043 = vadd.f32 %v11768, %v11998
      %v12044 = vadd.f32 %v11769, %v12001
      %v12045 = vadd.f32 %v11770, %v12004
      %v12046 = vadd.f32 %v11771, %v12007
      %v12047 = vadd.f32 %v11772, %v12010
      %v12048 = vadd.f32 %v11773, %v12013
      %v12049 = vadd.f32 %v11774, %v12016
      %v12050 = vld [vmem:[%s7032] sm:$0xff]
      %v12051 = vld [vmem:[%s7032 + $0x8] sm:$0xff]
      %v12052 = vld [vmem:[%s7032 + $0x18] sm:$0xff]
      %v12053 = vld [vmem:[%s7032 + $0x20] sm:$0xff]
      %v12054 = vld [vmem:[%s7032 + $0x30] sm:$0xff]
      %v12055 = vld [vmem:[%s7032 + $0x38] sm:$0xff]
      %v12056 = vld [vmem:[%s7032 + $0x48] sm:$0xff]
      %v12057 = vld [vmem:[%s7032 + $0x50] sm:$0xff]
      %v12058 = vld [vmem:[%s7032 + $0x60] sm:$0xff]
      %v12059 = vld [vmem:[%s7032 + $0x68] sm:$0xff]
      %v12060 = vld [vmem:[%s7032 + $0x78] sm:$0xff]
      %v12061 = vld [vmem:[%s7032 + $0x80] sm:$0xff]
      %v12062 = vld [vmem:[%s7032 + $0x90] sm:$0xff]
      %v12063 = vld [vmem:[%s7032 + $0x98] sm:$0xff]
      %v12064 = vld [vmem:[%s7032 + $0xa8] sm:$0xff]
      %v12065 = vld [vmem:[%s7032 + $0xb0] sm:$0xff]
      %v12066 = vld [vmem:[%s7032 + $0xc0] sm:$0xff]
      %v12067 = vld [vmem:[%s7032 + $0xc8] sm:$0xff]
      %v12068 = vld [vmem:[%s7032 + $0xd8] sm:$0xff]
      %v12069 = vld [vmem:[%s7032 + $0xe0] sm:$0xff]
      %v12070 = vld [vmem:[%s7032 + $0xf0] sm:$0xff]
      %v12071 = vld [vmem:[%s7032 + $0xf8] sm:$0xff]
      %v12072 = vld [vmem:[%s7032 + $0x108] sm:$0xff]
      %v12073 = vld [vmem:[%s7032 + $0x110] sm:$0xff]
      %v12074 = vld [vmem:[%s7032 + $0x120] sm:$0xff]
      %v12075 = vld [vmem:[%s7032 + $0x128] sm:$0xff]
      %v12076 = vld [vmem:[%s7032 + $0x138] sm:$0xff]
      %v12077 = vld [vmem:[%s7032 + $0x140] sm:$0xff]
      %v12078 = vld [vmem:[%s7032 + $0x150] sm:$0xff]
      %v12079 = vld [vmem:[%s7032 + $0x158] sm:$0xff]
      %v12080 = vld [vmem:[%s7032 + $0x168] sm:$0xff]
      %v12081 = vld [vmem:[%s7032 + $0x170] sm:$0xff]
      %s12082 = scalar_lea.vmem %s5, 48
      %v12083 = vld [vmem:[%s12082] sm:$0xff]
      %v12085 = vsel %vm337, %v12050, 0
      %v12088 = vsel %vm337, %v12051, 0
      %v12091 = vsel %vm337, %v12052, 0
      %v12094 = vsel %vm337, %v12053, 0
      %v12097 = vsel %vm337, %v12054, 0
      %v12100 = vsel %vm337, %v12055, 0
      %v12103 = vsel %vm337, %v12056, 0
      %v12106 = vsel %vm337, %v12057, 0
      %v12109 = vsel %vm337, %v12058, 0
      %v12112 = vsel %vm337, %v12059, 0
      %v12115 = vsel %vm337, %v12060, 0
      %v12118 = vsel %vm337, %v12061, 0
      %v12121 = vsel %vm337, %v12062, 0
      %v12124 = vsel %vm337, %v12063, 0
      %v12127 = vsel %vm337, %v12064, 0
      %v12130 = vsel %vm337, %v12065, 0
      %v12133 = vsel %vm337, %v12066, 0
      %v12136 = vsel %vm337, %v12067, 0
      %v12139 = vsel %vm337, %v12068, 0
      %v12142 = vsel %vm337, %v12069, 0
      %v12145 = vsel %vm337, %v12070, 0
      %v12148 = vsel %vm337, %v12071, 0
      %v12151 = vsel %vm337, %v12072, 0
      %v12154 = vsel %vm337, %v12073, 0
      %v12157 = vsel %vm337, %v12074, 0
      %v12160 = vsel %vm337, %v12075, 0
      %v12163 = vsel %vm337, %v12076, 0
      %v12166 = vsel %vm337, %v12077, 0
      %v12169 = vsel %vm337, %v12078, 0
      %v12172 = vsel %vm337, %v12079, 0
      %v12175 = vsel %vm337, %v12080, 0
      %v12178 = vsel %vm337, %v12081, 0
      %12180 = vmatpush.msra.mxu0 0.0
      %12181 = vmatpush.msra.mxu0 0.0
      %12182 = vmatpush.msra.mxu0 0.0
      %12183 = vmatpush.msra.mxu0 0.0
      %12184 = vmatpush.msra.mxu0 0.0
      %12185 = vmatpush.msra.mxu0 0.0
      %12186 = vmatpush.msra.mxu0 0.0
      %12187 = vmatpush.msra.mxu0 0.0
      %12188 = vmatpush.msra.mxu0 0.0
      %12189 = vmatpush.msra.mxu0 0.0
      %12190 = vmatpush.msra.mxu0 0.0
      %12191 = vmatpush.msra.mxu0 0.0
      %12192 = vmatpush.msra.mxu0 0.0
      %12193 = vmatpush.msra.mxu0 0.0
      %12194 = vmatpush.msra.mxu0 0.0
      %12195 = vmatpush.msra.mxu0 %v12083
      %12196 = vmatmul.f32.gmra.mxu0 %v12085
      %v12197 = vpop.f32.mrf.mxu0
      %v12198 = vadd.f32 0.0, %v12197
      %12199 = vmatmul.f32.gmra.mxu0 %v12088
      %v12200 = vpop.f32.mrf.mxu0
      %v12201 = vadd.f32 0.0, %v12200
      %12202 = vmatmul.f32.gmra.mxu0 %v12091
      %v12203 = vpop.f32.mrf.mxu0
      %v12204 = vadd.f32 0.0, %v12203
      %12205 = vmatmul.f32.gmra.mxu0 %v12094
      %v12206 = vpop.f32.mrf.mxu0
      %v12207 = vadd.f32 0.0, %v12206
      %12208 = vmatmul.f32.gmra.mxu0 %v12097
      %v12209 = vpop.f32.mrf.mxu0
      %v12210 = vadd.f32 0.0, %v12209
      %12211 = vmatmul.f32.gmra.mxu0 %v12100
      %v12212 = vpop.f32.mrf.mxu0
      %v12213 = vadd.f32 0.0, %v12212
      %12214 = vmatmul.f32.gmra.mxu0 %v12103
      %v12215 = vpop.f32.mrf.mxu0
      %v12216 = vadd.f32 0.0, %v12215
      %12217 = vmatmul.f32.gmra.mxu0 %v12106
      %v12218 = vpop.f32.mrf.mxu0
      %v12219 = vadd.f32 0.0, %v12218
      %12220 = vmatmul.f32.gmra.mxu0 %v12109
      %v12221 = vpop.f32.mrf.mxu0
      %v12222 = vadd.f32 0.0, %v12221
      %12223 = vmatmul.f32.gmra.mxu0 %v12112
      %v12224 = vpop.f32.mrf.mxu0
      %v12225 = vadd.f32 0.0, %v12224
      %12226 = vmatmul.f32.gmra.mxu0 %v12115
      %v12227 = vpop.f32.mrf.mxu0
      %v12228 = vadd.f32 0.0, %v12227
      %12229 = vmatmul.f32.gmra.mxu0 %v12118
      %v12230 = vpop.f32.mrf.mxu0
      %v12231 = vadd.f32 0.0, %v12230
      %12232 = vmatmul.f32.gmra.mxu0 %v12121
      %v12233 = vpop.f32.mrf.mxu0
      %v12234 = vadd.f32 0.0, %v12233
      %12235 = vmatmul.f32.gmra.mxu0 %v12124
      %v12236 = vpop.f32.mrf.mxu0
      %v12237 = vadd.f32 0.0, %v12236
      %12238 = vmatmul.f32.gmra.mxu0 %v12127
      %v12239 = vpop.f32.mrf.mxu0
      %v12240 = vadd.f32 0.0, %v12239
      %12241 = vmatmul.f32.gmra.mxu0 %v12130
      %v12242 = vpop.f32.mrf.mxu0
      %v12243 = vadd.f32 0.0, %v12242
      %12244 = vmatmul.f32.gmra.mxu0 %v12133
      %v12245 = vpop.f32.mrf.mxu0
      %v12246 = vadd.f32 0.0, %v12245
      %12247 = vmatmul.f32.gmra.mxu0 %v12136
      %v12248 = vpop.f32.mrf.mxu0
      %v12249 = vadd.f32 0.0, %v12248
      %12250 = vmatmul.f32.gmra.mxu0 %v12139
      %v12251 = vpop.f32.mrf.mxu0
      %v12252 = vadd.f32 0.0, %v12251
      %12253 = vmatmul.f32.gmra.mxu0 %v12142
      %v12254 = vpop.f32.mrf.mxu0
      %v12255 = vadd.f32 0.0, %v12254
      %12256 = vmatmul.f32.gmra.mxu0 %v12145
      %v12257 = vpop.f32.mrf.mxu0
      %v12258 = vadd.f32 0.0, %v12257
      %12259 = vmatmul.f32.gmra.mxu0 %v12148
      %v12260 = vpop.f32.mrf.mxu0
      %v12261 = vadd.f32 0.0, %v12260
      %12262 = vmatmul.f32.gmra.mxu0 %v12151
      %v12263 = vpop.f32.mrf.mxu0
      %v12264 = vadd.f32 0.0, %v12263
      %12265 = vmatmul.f32.gmra.mxu0 %v12154
      %v12266 = vpop.f32.mrf.mxu0
      %v12267 = vadd.f32 0.0, %v12266
      %12268 = vmatmul.f32.gmra.mxu0 %v12157
      %v12269 = vpop.f32.mrf.mxu0
      %v12270 = vadd.f32 0.0, %v12269
      %12271 = vmatmul.f32.gmra.mxu0 %v12160
      %v12272 = vpop.f32.mrf.mxu0
      %v12273 = vadd.f32 0.0, %v12272
      %12274 = vmatmul.f32.gmra.mxu0 %v12163
      %v12275 = vpop.f32.mrf.mxu0
      %v12276 = vadd.f32 0.0, %v12275
      %12277 = vmatmul.f32.gmra.mxu0 %v12166
      %v12278 = vpop.f32.mrf.mxu0
      %v12279 = vadd.f32 0.0, %v12278
      %12280 = vmatmul.f32.gmra.mxu0 %v12169
      %v12281 = vpop.f32.mrf.mxu0
      %v12282 = vadd.f32 0.0, %v12281
      %12283 = vmatmul.f32.gmra.mxu0 %v12172
      %v12284 = vpop.f32.mrf.mxu0
      %v12285 = vadd.f32 0.0, %v12284
      %12286 = vmatmul.f32.gmra.mxu0 %v12175
      %v12287 = vpop.f32.mrf.mxu0
      %v12288 = vadd.f32 0.0, %v12287
      %12289 = vmatmul.f32.gmra.mxu0 %v12178
      %v12290 = vpop.f32.mrf.mxu0
      %v12291 = vadd.f32 0.0, %v12290
      %12292 = vdwg.mxu0
      %v12293 = vadd.f32 %v12018, %v12198
      %v12294 = vadd.f32 %v12019, %v12201
      %v12295 = vadd.f32 %v12020, %v12204
      %v12296 = vadd.f32 %v12021, %v12207
      %v12297 = vadd.f32 %v12022, %v12210
      %v12298 = vadd.f32 %v12023, %v12213
      %v12299 = vadd.f32 %v12024, %v12216
      %v12300 = vadd.f32 %v12025, %v12219
      %v12301 = vadd.f32 %v12026, %v12222
      %v12302 = vadd.f32 %v12027, %v12225
      %v12303 = vadd.f32 %v12028, %v12228
      %v12304 = vadd.f32 %v12029, %v12231
      %v12305 = vadd.f32 %v12030, %v12234
      %v12306 = vadd.f32 %v12031, %v12237
      %v12307 = vadd.f32 %v12032, %v12240
      %v12308 = vadd.f32 %v12033, %v12243
      %v12309 = vadd.f32 %v12034, %v12246
      %v12310 = vadd.f32 %v12035, %v12249
      %v12311 = vadd.f32 %v12036, %v12252
      %v12312 = vadd.f32 %v12037, %v12255
      %v12313 = vadd.f32 %v12038, %v12258
      %v12314 = vadd.f32 %v12039, %v12261
      %v12315 = vadd.f32 %v12040, %v12264
      %v12316 = vadd.f32 %v12041, %v12267
      %v12317 = vadd.f32 %v12042, %v12270
      %v12318 = vadd.f32 %v12043, %v12273
      %v12319 = vadd.f32 %v12044, %v12276
      %v12320 = vadd.f32 %v12045, %v12279
      %v12321 = vadd.f32 %v12046, %v12282
      %v12322 = vadd.f32 %v12047, %v12285
      %v12323 = vadd.f32 %v12048, %v12288
      %v12324 = vadd.f32 %v12049, %v12291
      %v12325 = vld [vmem:[%s7032 + $0x1] sm:$0xff]
      %v12326 = vld [vmem:[%s7032 + $0x9] sm:$0xff]
      %v12327 = vld [vmem:[%s7032 + $0x19] sm:$0xff]
      %v12328 = vld [vmem:[%s7032 + $0x21] sm:$0xff]
      %v12329 = vld [vmem:[%s7032 + $0x31] sm:$0xff]
      %v12330 = vld [vmem:[%s7032 + $0x39] sm:$0xff]
      %v12331 = vld [vmem:[%s7032 + $0x49] sm:$0xff]
      %v12332 = vld [vmem:[%s7032 + $0x51] sm:$0xff]
      %v12333 = vld [vmem:[%s7032 + $0x61] sm:$0xff]
      %v12334 = vld [vmem:[%s7032 + $0x69] sm:$0xff]
      %v12335 = vld [vmem:[%s7032 + $0x79] sm:$0xff]
      %v12336 = vld [vmem:[%s7032 + $0x81] sm:$0xff]
      %v12337 = vld [vmem:[%s7032 + $0x91] sm:$0xff]
      %v12338 = vld [vmem:[%s7032 + $0x99] sm:$0xff]
      %v12339 = vld [vmem:[%s7032 + $0xa9] sm:$0xff]
      %v12340 = vld [vmem:[%s7032 + $0xb1] sm:$0xff]
      %v12341 = vld [vmem:[%s7032 + $0xc1] sm:$0xff]
      %v12342 = vld [vmem:[%s7032 + $0xc9] sm:$0xff]
      %v12343 = vld [vmem:[%s7032 + $0xd9] sm:$0xff]
      %v12344 = vld [vmem:[%s7032 + $0xe1] sm:$0xff]
      %v12345 = vld [vmem:[%s7032 + $0xf1] sm:$0xff]
      %v12346 = vld [vmem:[%s7032 + $0xf9] sm:$0xff]
      %v12347 = vld [vmem:[%s7032 + $0x109] sm:$0xff]
      %v12348 = vld [vmem:[%s7032 + $0x111] sm:$0xff]
      %v12349 = vld [vmem:[%s7032 + $0x121] sm:$0xff]
      %v12350 = vld [vmem:[%s7032 + $0x129] sm:$0xff]
      %v12351 = vld [vmem:[%s7032 + $0x139] sm:$0xff]
      %v12352 = vld [vmem:[%s7032 + $0x141] sm:$0xff]
      %v12353 = vld [vmem:[%s7032 + $0x151] sm:$0xff]
      %v12354 = vld [vmem:[%s7032 + $0x159] sm:$0xff]
      %v12355 = vld [vmem:[%s7032 + $0x169] sm:$0xff]
      %v12356 = vld [vmem:[%s7032 + $0x171] sm:$0xff]
      %s12357 = scalar_lea.vmem %s5, 56
      %v12358 = vld [vmem:[%s12357] sm:$0xff]
      %v12360 = vsel %vm337, %v12325, 0
      %v12363 = vsel %vm337, %v12326, 0
      %v12366 = vsel %vm337, %v12327, 0
      %v12369 = vsel %vm337, %v12328, 0
      %v12372 = vsel %vm337, %v12329, 0
      %v12375 = vsel %vm337, %v12330, 0
      %v12378 = vsel %vm337, %v12331, 0
      %v12381 = vsel %vm337, %v12332, 0
      %v12384 = vsel %vm337, %v12333, 0
      %v12387 = vsel %vm337, %v12334, 0
      %v12390 = vsel %vm337, %v12335, 0
      %v12393 = vsel %vm337, %v12336, 0
      %v12396 = vsel %vm337, %v12337, 0
      %v12399 = vsel %vm337, %v12338, 0
      %v12402 = vsel %vm337, %v12339, 0
      %v12405 = vsel %vm337, %v12340, 0
      %v12408 = vsel %vm337, %v12341, 0
      %v12411 = vsel %vm337, %v12342, 0
      %v12414 = vsel %vm337, %v12343, 0
      %v12417 = vsel %vm337, %v12344, 0
      %v12420 = vsel %vm337, %v12345, 0
      %v12423 = vsel %vm337, %v12346, 0
      %v12426 = vsel %vm337, %v12347, 0
      %v12429 = vsel %vm337, %v12348, 0
      %v12432 = vsel %vm337, %v12349, 0
      %v12435 = vsel %vm337, %v12350, 0
      %v12438 = vsel %vm337, %v12351, 0
      %v12441 = vsel %vm337, %v12352, 0
      %v12444 = vsel %vm337, %v12353, 0
      %v12447 = vsel %vm337, %v12354, 0
      %v12450 = vsel %vm337, %v12355, 0
      %v12453 = vsel %vm337, %v12356, 0
      %12455 = vmatpush.msra.mxu0 0.0
      %12456 = vmatpush.msra.mxu0 0.0
      %12457 = vmatpush.msra.mxu0 0.0
      %12458 = vmatpush.msra.mxu0 0.0
      %12459 = vmatpush.msra.mxu0 0.0
      %12460 = vmatpush.msra.mxu0 0.0
      %12461 = vmatpush.msra.mxu0 0.0
      %12462 = vmatpush.msra.mxu0 0.0
      %12463 = vmatpush.msra.mxu0 0.0
      %12464 = vmatpush.msra.mxu0 0.0
      %12465 = vmatpush.msra.mxu0 0.0
      %12466 = vmatpush.msra.mxu0 0.0
      %12467 = vmatpush.msra.mxu0 0.0
      %12468 = vmatpush.msra.mxu0 0.0
      %12469 = vmatpush.msra.mxu0 0.0
      %12470 = vmatpush.msra.mxu0 %v12358
      %12471 = vmatmul.f32.gmra.mxu0 %v12360
      %v12472 = vpop.f32.mrf.mxu0
      %v12473 = vadd.f32 0.0, %v12472
      %12474 = vmatmul.f32.gmra.mxu0 %v12363
      %v12475 = vpop.f32.mrf.mxu0
      %v12476 = vadd.f32 0.0, %v12475
      %12477 = vmatmul.f32.gmra.mxu0 %v12366
      %v12478 = vpop.f32.mrf.mxu0
      %v12479 = vadd.f32 0.0, %v12478
      %12480 = vmatmul.f32.gmra.mxu0 %v12369
      %v12481 = vpop.f32.mrf.mxu0
      %v12482 = vadd.f32 0.0, %v12481
      %12483 = vmatmul.f32.gmra.mxu0 %v12372
      %v12484 = vpop.f32.mrf.mxu0
      %v12485 = vadd.f32 0.0, %v12484
      %12486 = vmatmul.f32.gmra.mxu0 %v12375
      %v12487 = vpop.f32.mrf.mxu0
      %v12488 = vadd.f32 0.0, %v12487
      %12489 = vmatmul.f32.gmra.mxu0 %v12378
      %v12490 = vpop.f32.mrf.mxu0
      %v12491 = vadd.f32 0.0, %v12490
      %12492 = vmatmul.f32.gmra.mxu0 %v12381
      %v12493 = vpop.f32.mrf.mxu0
      %v12494 = vadd.f32 0.0, %v12493
      %12495 = vmatmul.f32.gmra.mxu0 %v12384
      %v12496 = vpop.f32.mrf.mxu0
      %v12497 = vadd.f32 0.0, %v12496
      %12498 = vmatmul.f32.gmra.mxu0 %v12387
      %v12499 = vpop.f32.mrf.mxu0
      %v12500 = vadd.f32 0.0, %v12499
      %12501 = vmatmul.f32.gmra.mxu0 %v12390
      %v12502 = vpop.f32.mrf.mxu0
      %v12503 = vadd.f32 0.0, %v12502
      %12504 = vmatmul.f32.gmra.mxu0 %v12393
      %v12505 = vpop.f32.mrf.mxu0
      %v12506 = vadd.f32 0.0, %v12505
      %12507 = vmatmul.f32.gmra.mxu0 %v12396
      %v12508 = vpop.f32.mrf.mxu0
      %v12509 = vadd.f32 0.0, %v12508
      %12510 = vmatmul.f32.gmra.mxu0 %v12399
      %v12511 = vpop.f32.mrf.mxu0
      %v12512 = vadd.f32 0.0, %v12511
      %12513 = vmatmul.f32.gmra.mxu0 %v12402
      %v12514 = vpop.f32.mrf.mxu0
      %v12515 = vadd.f32 0.0, %v12514
      %12516 = vmatmul.f32.gmra.mxu0 %v12405
      %v12517 = vpop.f32.mrf.mxu0
      %v12518 = vadd.f32 0.0, %v12517
      %12519 = vmatmul.f32.gmra.mxu0 %v12408
      %v12520 = vpop.f32.mrf.mxu0
      %v12521 = vadd.f32 0.0, %v12520
      %12522 = vmatmul.f32.gmra.mxu0 %v12411
      %v12523 = vpop.f32.mrf.mxu0
      %v12524 = vadd.f32 0.0, %v12523
      %12525 = vmatmul.f32.gmra.mxu0 %v12414
      %v12526 = vpop.f32.mrf.mxu0
      %v12527 = vadd.f32 0.0, %v12526
      %12528 = vmatmul.f32.gmra.mxu0 %v12417
      %v12529 = vpop.f32.mrf.mxu0
      %v12530 = vadd.f32 0.0, %v12529
      %12531 = vmatmul.f32.gmra.mxu0 %v12420
      %v12532 = vpop.f32.mrf.mxu0
      %v12533 = vadd.f32 0.0, %v12532
      %12534 = vmatmul.f32.gmra.mxu0 %v12423
      %v12535 = vpop.f32.mrf.mxu0
      %v12536 = vadd.f32 0.0, %v12535
      %12537 = vmatmul.f32.gmra.mxu0 %v12426
      %v12538 = vpop.f32.mrf.mxu0
      %v12539 = vadd.f32 0.0, %v12538
      %12540 = vmatmul.f32.gmra.mxu0 %v12429
      %v12541 = vpop.f32.mrf.mxu0
      %v12542 = vadd.f32 0.0, %v12541
      %12543 = vmatmul.f32.gmra.mxu0 %v12432
      %v12544 = vpop.f32.mrf.mxu0
      %v12545 = vadd.f32 0.0, %v12544
      %12546 = vmatmul.f32.gmra.mxu0 %v12435
      %v12547 = vpop.f32.mrf.mxu0
      %v12548 = vadd.f32 0.0, %v12547
      %12549 = vmatmul.f32.gmra.mxu0 %v12438
      %v12550 = vpop.f32.mrf.mxu0
      %v12551 = vadd.f32 0.0, %v12550
      %12552 = vmatmul.f32.gmra.mxu0 %v12441
      %v12553 = vpop.f32.mrf.mxu0
      %v12554 = vadd.f32 0.0, %v12553
      %12555 = vmatmul.f32.gmra.mxu0 %v12444
      %v12556 = vpop.f32.mrf.mxu0
      %v12557 = vadd.f32 0.0, %v12556
      %12558 = vmatmul.f32.gmra.mxu0 %v12447
      %v12559 = vpop.f32.mrf.mxu0
      %v12560 = vadd.f32 0.0, %v12559
      %12561 = vmatmul.f32.gmra.mxu0 %v12450
      %v12562 = vpop.f32.mrf.mxu0
      %v12563 = vadd.f32 0.0, %v12562
      %12564 = vmatmul.f32.gmra.mxu0 %v12453
      %v12565 = vpop.f32.mrf.mxu0
      %v12566 = vadd.f32 0.0, %v12565
      %12567 = vdwg.mxu0
      %v12568 = vadd.f32 %v12293, %v12473
      %v12569 = vadd.f32 %v12294, %v12476
      %v12570 = vadd.f32 %v12295, %v12479
      %v12571 = vadd.f32 %v12296, %v12482
      %v12572 = vadd.f32 %v12297, %v12485
      %v12573 = vadd.f32 %v12298, %v12488
      %v12574 = vadd.f32 %v12299, %v12491
      %v12575 = vadd.f32 %v12300, %v12494
      %v12576 = vadd.f32 %v12301, %v12497
      %v12577 = vadd.f32 %v12302, %v12500
      %v12578 = vadd.f32 %v12303, %v12503
      %v12579 = vadd.f32 %v12304, %v12506
      %v12580 = vadd.f32 %v12305, %v12509
      %v12581 = vadd.f32 %v12306, %v12512
      %v12582 = vadd.f32 %v12307, %v12515
      %v12583 = vadd.f32 %v12308, %v12518
      %v12584 = vadd.f32 %v12309, %v12521
      %v12585 = vadd.f32 %v12310, %v12524
      %v12586 = vadd.f32 %v12311, %v12527
      %v12587 = vadd.f32 %v12312, %v12530
      %v12588 = vadd.f32 %v12313, %v12533
      %v12589 = vadd.f32 %v12314, %v12536
      %v12590 = vadd.f32 %v12315, %v12539
      %v12591 = vadd.f32 %v12316, %v12542
      %v12592 = vadd.f32 %v12317, %v12545
      %v12593 = vadd.f32 %v12318, %v12548
      %v12594 = vadd.f32 %v12319, %v12551
      %v12595 = vadd.f32 %v12320, %v12554
      %v12596 = vadd.f32 %v12321, %v12557
      %v12597 = vadd.f32 %v12322, %v12560
      %v12598 = vadd.f32 %v12323, %v12563
      %v12599 = vadd.f32 %v12324, %v12566
      %v12600 = vld [vmem:[%s7032 + $0x2] sm:$0xff]
      %v12601 = vld [vmem:[%s7032 + $0xa] sm:$0xff]
      %v12602 = vld [vmem:[%s7032 + $0x1a] sm:$0xff]
      %v12603 = vld [vmem:[%s7032 + $0x22] sm:$0xff]
      %v12604 = vld [vmem:[%s7032 + $0x32] sm:$0xff]
      %v12605 = vld [vmem:[%s7032 + $0x3a] sm:$0xff]
      %v12606 = vld [vmem:[%s7032 + $0x4a] sm:$0xff]
      %v12607 = vld [vmem:[%s7032 + $0x52] sm:$0xff]
      %v12608 = vld [vmem:[%s7032 + $0x62] sm:$0xff]
      %v12609 = vld [vmem:[%s7032 + $0x6a] sm:$0xff]
      %v12610 = vld [vmem:[%s7032 + $0x7a] sm:$0xff]
      %v12611 = vld [vmem:[%s7032 + $0x82] sm:$0xff]
      %v12612 = vld [vmem:[%s7032 + $0x92] sm:$0xff]
      %v12613 = vld [vmem:[%s7032 + $0x9a] sm:$0xff]
      %v12614 = vld [vmem:[%s7032 + $0xaa] sm:$0xff]
      %v12615 = vld [vmem:[%s7032 + $0xb2] sm:$0xff]
      %v12616 = vld [vmem:[%s7032 + $0xc2] sm:$0xff]
      %v12617 = vld [vmem:[%s7032 + $0xca] sm:$0xff]
      %v12618 = vld [vmem:[%s7032 + $0xda] sm:$0xff]
      %v12619 = vld [vmem:[%s7032 + $0xe2] sm:$0xff]
      %v12620 = vld [vmem:[%s7032 + $0xf2] sm:$0xff]
      %v12621 = vld [vmem:[%s7032 + $0xfa] sm:$0xff]
      %v12622 = vld [vmem:[%s7032 + $0x10a] sm:$0xff]
      %v12623 = vld [vmem:[%s7032 + $0x112] sm:$0xff]
      %v12624 = vld [vmem:[%s7032 + $0x122] sm:$0xff]
      %v12625 = vld [vmem:[%s7032 + $0x12a] sm:$0xff]
      %v12626 = vld [vmem:[%s7032 + $0x13a] sm:$0xff]
      %v12627 = vld [vmem:[%s7032 + $0x142] sm:$0xff]
      %v12628 = vld [vmem:[%s7032 + $0x152] sm:$0xff]
      %v12629 = vld [vmem:[%s7032 + $0x15a] sm:$0xff]
      %v12630 = vld [vmem:[%s7032 + $0x16a] sm:$0xff]
      %v12631 = vld [vmem:[%s7032 + $0x172] sm:$0xff]
      %s12632 = scalar_lea.vmem %s5, 64
      %v12633 = vld [vmem:[%s12632] sm:$0xff]
      %v12635 = vsel %vm337, %v12600, 0
      %v12638 = vsel %vm337, %v12601, 0
      %v12641 = vsel %vm337, %v12602, 0
      %v12644 = vsel %vm337, %v12603, 0
      %v12647 = vsel %vm337, %v12604, 0
      %v12650 = vsel %vm337, %v12605, 0
      %v12653 = vsel %vm337, %v12606, 0
      %v12656 = vsel %vm337, %v12607, 0
      %v12659 = vsel %vm337, %v12608, 0
      %v12662 = vsel %vm337, %v12609, 0
      %v12665 = vsel %vm337, %v12610, 0
      %v12668 = vsel %vm337, %v12611, 0
      %v12671 = vsel %vm337, %v12612, 0
      %v12674 = vsel %vm337, %v12613, 0
      %v12677 = vsel %vm337, %v12614, 0
      %v12680 = vsel %vm337, %v12615, 0
      %v12683 = vsel %vm337, %v12616, 0
      %v12686 = vsel %vm337, %v12617, 0
      %v12689 = vsel %vm337, %v12618, 0
      %v12692 = vsel %vm337, %v12619, 0
      %v12695 = vsel %vm337, %v12620, 0
      %v12698 = vsel %vm337, %v12621, 0
      %v12701 = vsel %vm337, %v12622, 0
      %v12704 = vsel %vm337, %v12623, 0
      %v12707 = vsel %vm337, %v12624, 0
      %v12710 = vsel %vm337, %v12625, 0
      %v12713 = vsel %vm337, %v12626, 0
      %v12716 = vsel %vm337, %v12627, 0
      %v12719 = vsel %vm337, %v12628, 0
      %v12722 = vsel %vm337, %v12629, 0
      %v12725 = vsel %vm337, %v12630, 0
      %v12728 = vsel %vm337, %v12631, 0
      %12730 = vmatpush.msra.mxu0 0.0
      %12731 = vmatpush.msra.mxu0 0.0
      %12732 = vmatpush.msra.mxu0 0.0
      %12733 = vmatpush.msra.mxu0 0.0
      %12734 = vmatpush.msra.mxu0 0.0
      %12735 = vmatpush.msra.mxu0 0.0
      %12736 = vmatpush.msra.mxu0 0.0
      %12737 = vmatpush.msra.mxu0 0.0
      %12738 = vmatpush.msra.mxu0 0.0
      %12739 = vmatpush.msra.mxu0 0.0
      %12740 = vmatpush.msra.mxu0 0.0
      %12741 = vmatpush.msra.mxu0 0.0
      %12742 = vmatpush.msra.mxu0 0.0
      %12743 = vmatpush.msra.mxu0 0.0
      %12744 = vmatpush.msra.mxu0 0.0
      %12745 = vmatpush.msra.mxu0 %v12633
      %12746 = vmatmul.f32.gmra.mxu0 %v12635
      %v12747 = vpop.f32.mrf.mxu0
      %v12748 = vadd.f32 0.0, %v12747
      %12749 = vmatmul.f32.gmra.mxu0 %v12638
      %v12750 = vpop.f32.mrf.mxu0
      %v12751 = vadd.f32 0.0, %v12750
      %12752 = vmatmul.f32.gmra.mxu0 %v12641
      %v12753 = vpop.f32.mrf.mxu0
      %v12754 = vadd.f32 0.0, %v12753
      %12755 = vmatmul.f32.gmra.mxu0 %v12644
      %v12756 = vpop.f32.mrf.mxu0
      %v12757 = vadd.f32 0.0, %v12756
      %12758 = vmatmul.f32.gmra.mxu0 %v12647
      %v12759 = vpop.f32.mrf.mxu0
      %v12760 = vadd.f32 0.0, %v12759
      %12761 = vmatmul.f32.gmra.mxu0 %v12650
      %v12762 = vpop.f32.mrf.mxu0
      %v12763 = vadd.f32 0.0, %v12762
      %12764 = vmatmul.f32.gmra.mxu0 %v12653
      %v12765 = vpop.f32.mrf.mxu0
      %v12766 = vadd.f32 0.0, %v12765
      %12767 = vmatmul.f32.gmra.mxu0 %v12656
      %v12768 = vpop.f32.mrf.mxu0
      %v12769 = vadd.f32 0.0, %v12768
      %12770 = vmatmul.f32.gmra.mxu0 %v12659
      %v12771 = vpop.f32.mrf.mxu0
      %v12772 = vadd.f32 0.0, %v12771
      %12773 = vmatmul.f32.gmra.mxu0 %v12662
      %v12774 = vpop.f32.mrf.mxu0
      %v12775 = vadd.f32 0.0, %v12774
      %12776 = vmatmul.f32.gmra.mxu0 %v12665
      %v12777 = vpop.f32.mrf.mxu0
      %v12778 = vadd.f32 0.0, %v12777
      %12779 = vmatmul.f32.gmra.mxu0 %v12668
      %v12780 = vpop.f32.mrf.mxu0
      %v12781 = vadd.f32 0.0, %v12780
      %12782 = vmatmul.f32.gmra.mxu0 %v12671
      %v12783 = vpop.f32.mrf.mxu0
      %v12784 = vadd.f32 0.0, %v12783
      %12785 = vmatmul.f32.gmra.mxu0 %v12674
      %v12786 = vpop.f32.mrf.mxu0
      %v12787 = vadd.f32 0.0, %v12786
      %12788 = vmatmul.f32.gmra.mxu0 %v12677
      %v12789 = vpop.f32.mrf.mxu0
      %v12790 = vadd.f32 0.0, %v12789
      %12791 = vmatmul.f32.gmra.mxu0 %v12680
      %v12792 = vpop.f32.mrf.mxu0
      %v12793 = vadd.f32 0.0, %v12792
      %12794 = vmatmul.f32.gmra.mxu0 %v12683
      %v12795 = vpop.f32.mrf.mxu0
      %v12796 = vadd.f32 0.0, %v12795
      %12797 = vmatmul.f32.gmra.mxu0 %v12686
      %v12798 = vpop.f32.mrf.mxu0
      %v12799 = vadd.f32 0.0, %v12798
      %12800 = vmatmul.f32.gmra.mxu0 %v12689
      %v12801 = vpop.f32.mrf.mxu0
      %v12802 = vadd.f32 0.0, %v12801
      %12803 = vmatmul.f32.gmra.mxu0 %v12692
      %v12804 = vpop.f32.mrf.mxu0
      %v12805 = vadd.f32 0.0, %v12804
      %12806 = vmatmul.f32.gmra.mxu0 %v12695
      %v12807 = vpop.f32.mrf.mxu0
      %v12808 = vadd.f32 0.0, %v12807
      %12809 = vmatmul.f32.gmra.mxu0 %v12698
      %v12810 = vpop.f32.mrf.mxu0
      %v12811 = vadd.f32 0.0, %v12810
      %12812 = vmatmul.f32.gmra.mxu0 %v12701
      %v12813 = vpop.f32.mrf.mxu0
      %v12814 = vadd.f32 0.0, %v12813
      %12815 = vmatmul.f32.gmra.mxu0 %v12704
      %v12816 = vpop.f32.mrf.mxu0
      %v12817 = vadd.f32 0.0, %v12816
      %12818 = vmatmul.f32.gmra.mxu0 %v12707
      %v12819 = vpop.f32.mrf.mxu0
      %v12820 = vadd.f32 0.0, %v12819
      %12821 = vmatmul.f32.gmra.mxu0 %v12710
      %v12822 = vpop.f32.mrf.mxu0
      %v12823 = vadd.f32 0.0, %v12822
      %12824 = vmatmul.f32.gmra.mxu0 %v12713
      %v12825 = vpop.f32.mrf.mxu0
      %v12826 = vadd.f32 0.0, %v12825
      %12827 = vmatmul.f32.gmra.mxu0 %v12716
      %v12828 = vpop.f32.mrf.mxu0
      %v12829 = vadd.f32 0.0, %v12828
      %12830 = vmatmul.f32.gmra.mxu0 %v12719
      %v12831 = vpop.f32.mrf.mxu0
      %v12832 = vadd.f32 0.0, %v12831
      %12833 = vmatmul.f32.gmra.mxu0 %v12722
      %v12834 = vpop.f32.mrf.mxu0
      %v12835 = vadd.f32 0.0, %v12834
      %12836 = vmatmul.f32.gmra.mxu0 %v12725
      %v12837 = vpop.f32.mrf.mxu0
      %v12838 = vadd.f32 0.0, %v12837
      %12839 = vmatmul.f32.gmra.mxu0 %v12728
      %v12840 = vpop.f32.mrf.mxu0
      %v12841 = vadd.f32 0.0, %v12840
      %12842 = vdwg.mxu0
      %v12843 = vadd.f32 %v12568, %v12748
      %v12844 = vadd.f32 %v12569, %v12751
      %v12845 = vadd.f32 %v12570, %v12754
      %v12846 = vadd.f32 %v12571, %v12757
      %v12847 = vadd.f32 %v12572, %v12760
      %v12848 = vadd.f32 %v12573, %v12763
      %v12849 = vadd.f32 %v12574, %v12766
      %v12850 = vadd.f32 %v12575, %v12769
      %v12851 = vadd.f32 %v12576, %v12772
      %v12852 = vadd.f32 %v12577, %v12775
      %v12853 = vadd.f32 %v12578, %v12778
      %v12854 = vadd.f32 %v12579, %v12781
      %v12855 = vadd.f32 %v12580, %v12784
      %v12856 = vadd.f32 %v12581, %v12787
      %v12857 = vadd.f32 %v12582, %v12790
      %v12858 = vadd.f32 %v12583, %v12793
      %v12859 = vadd.f32 %v12584, %v12796
      %v12860 = vadd.f32 %v12585, %v12799
      %v12861 = vadd.f32 %v12586, %v12802
      %v12862 = vadd.f32 %v12587, %v12805
      %v12863 = vadd.f32 %v12588, %v12808
      %v12864 = vadd.f32 %v12589, %v12811
      %v12865 = vadd.f32 %v12590, %v12814
      %v12866 = vadd.f32 %v12591, %v12817
      %v12867 = vadd.f32 %v12592, %v12820
      %v12868 = vadd.f32 %v12593, %v12823
      %v12869 = vadd.f32 %v12594, %v12826
      %v12870 = vadd.f32 %v12595, %v12829
      %v12871 = vadd.f32 %v12596, %v12832
      %v12872 = vadd.f32 %v12597, %v12835
      %v12873 = vadd.f32 %v12598, %v12838
      %v12874 = vadd.f32 %v12599, %v12841
      %v12875 = vld [vmem:[#allocation5] sm:$0x1]
      %v12877 = vperm.slane %v12875, 0
      %v12879 = vadd.f32 %v12843, %v12877
      %v12880 = vadd.f32 %v12844, %v12877
      %v12881 = vadd.f32 %v12845, %v12877
      %v12882 = vadd.f32 %v12846, %v12877
      %v12883 = vadd.f32 %v12847, %v12877
      %v12884 = vadd.f32 %v12848, %v12877
      %v12885 = vadd.f32 %v12849, %v12877
      %v12886 = vadd.f32 %v12850, %v12877
      %v12887 = vadd.f32 %v12851, %v12877
      %v12888 = vadd.f32 %v12852, %v12877
      %v12889 = vadd.f32 %v12853, %v12877
      %v12890 = vadd.f32 %v12854, %v12877
      %v12891 = vadd.f32 %v12855, %v12877
      %v12892 = vadd.f32 %v12856, %v12877
      %v12893 = vadd.f32 %v12857, %v12877
      %v12894 = vadd.f32 %v12858, %v12877
      %v12895 = vadd.f32 %v12859, %v12877
      %v12896 = vadd.f32 %v12860, %v12877
      %v12897 = vadd.f32 %v12861, %v12877
      %v12898 = vadd.f32 %v12862, %v12877
      %v12899 = vadd.f32 %v12863, %v12877
      %v12900 = vadd.f32 %v12864, %v12877
      %v12901 = vadd.f32 %v12865, %v12877
      %v12902 = vadd.f32 %v12866, %v12877
      %v12903 = vadd.f32 %v12867, %v12877
      %v12904 = vadd.f32 %v12868, %v12877
      %v12905 = vadd.f32 %v12869, %v12877
      %v12906 = vadd.f32 %v12870, %v12877
      %v12907 = vadd.f32 %v12871, %v12877
      %v12908 = vadd.f32 %v12872, %v12877
      %v12909 = vadd.f32 %v12873, %v12877
      %v12910 = vadd.f32 %v12874, %v12877
      %v12911 = vsub.f32 %v447, %v12879
      %v12912 = vsub.f32 %v448, %v12880
      %v12913 = vsub.f32 %v449, %v12881
      %v12914 = vsub.f32 %v450, %v12882
      %v12915 = vsub.f32 %v451, %v12883
      %v12916 = vsub.f32 %v452, %v12884
      %v12917 = vsub.f32 %v453, %v12885
      %v12918 = vsub.f32 %v454, %v12886
      %v12919 = vsub.f32 %v455, %v12887
      %v12920 = vsub.f32 %v456, %v12888
      %v12921 = vsub.f32 %v457, %v12889
      %v12922 = vsub.f32 %v458, %v12890
      %v12923 = vsub.f32 %v459, %v12891
      %v12924 = vsub.f32 %v460, %v12892
      %v12925 = vsub.f32 %v461, %v12893
      %v12926 = vsub.f32 %v462, %v12894
      %v12927 = vsub.f32 %v463, %v12895
      %v12928 = vsub.f32 %v464, %v12896
      %v12929 = vsub.f32 %v465, %v12897
      %v12930 = vsub.f32 %v466, %v12898
      %v12931 = vsub.f32 %v467, %v12899
      %v12932 = vsub.f32 %v468, %v12900
      %v12933 = vsub.f32 %v469, %v12901
      %v12934 = vsub.f32 %v470, %v12902
      %v12935 = vsub.f32 %v471, %v12903
      %v12936 = vsub.f32 %v472, %v12904
      %v12937 = vsub.f32 %v473, %v12905
      %v12938 = vsub.f32 %v474, %v12906
      %v12939 = vsub.f32 %v475, %v12907
      %v12940 = vsub.f32 %v476, %v12908
      %v12941 = vsub.f32 %v477, %v12909
      %v12942 = vsub.f32 %v478, %v12910
      %12943 = vst.msk [vmem:[%s280] sm:$0xff] %vm281, %v12911
      %12944 = vst.msk [vmem:[%s280 + $0x8] sm:$0xff] %vm281, %v12912
      %12945 = vst.msk [vmem:[%s280 + $0x10] sm:$0xff] %vm281, %v12913
      %12946 = vst.msk [vmem:[%s280 + $0x18] sm:$0xff] %vm281, %v12914
      %12947 = vst.msk [vmem:[%s280 + $0x20] sm:$0xff] %vm281, %v12915
      %12948 = vst.msk [vmem:[%s280 + $0x28] sm:$0xff] %vm281, %v12916
      %12949 = vst.msk [vmem:[%s280 + $0x30] sm:$0xff] %vm281, %v12917
      %12950 = vst.msk [vmem:[%s280 + $0x38] sm:$0xff] %vm281, %v12918
      %12951 = vst.msk [vmem:[%s280 + $0x40] sm:$0xff] %vm281, %v12919
      %12952 = vst.msk [vmem:[%s280 + $0x48] sm:$0xff] %vm281, %v12920
      %12953 = vst.msk [vmem:[%s280 + $0x50] sm:$0xff] %vm281, %v12921
      %12954 = vst.msk [vmem:[%s280 + $0x58] sm:$0xff] %vm281, %v12922
      %12955 = vst.msk [vmem:[%s280 + $0x60] sm:$0xff] %vm281, %v12923
      %12956 = vst.msk [vmem:[%s280 + $0x68] sm:$0xff] %vm281, %v12924
      %12957 = vst.msk [vmem:[%s280 + $0x70] sm:$0xff] %vm281, %v12925
      %12958 = vst.msk [vmem:[%s280 + $0x78] sm:$0xff] %vm281, %v12926
      %12959 = vst.msk [vmem:[%s280 + $0x80] sm:$0xff] %vm281, %v12927
      %12960 = vst.msk [vmem:[%s280 + $0x88] sm:$0xff] %vm281, %v12928
      %12961 = vst.msk [vmem:[%s280 + $0x90] sm:$0xff] %vm281, %v12929
      %12962 = vst.msk [vmem:[%s280 + $0x98] sm:$0xff] %vm281, %v12930
      %12963 = vst.msk [vmem:[%s280 + $0xa0] sm:$0xff] %vm281, %v12931
      %12964 = vst.msk [vmem:[%s280 + $0xa8] sm:$0xff] %vm281, %v12932
      %12965 = vst.msk [vmem:[%s280 + $0xb0] sm:$0xff] %vm281, %v12933
      %12966 = vst.msk [vmem:[%s280 + $0xb8] sm:$0xff] %vm281, %v12934
      %12967 = vst.msk [vmem:[%s280 + $0xc0] sm:$0xff] %vm281, %v12935
      %12968 = vst.msk [vmem:[%s280 + $0xc8] sm:$0xff] %vm281, %v12936
      %12969 = vst.msk [vmem:[%s280 + $0xd0] sm:$0xff] %vm281, %v12937
      %12970 = vst.msk [vmem:[%s280 + $0xd8] sm:$0xff] %vm281, %v12938
      %12971 = vst.msk [vmem:[%s280 + $0xe0] sm:$0xff] %vm281, %v12939
      %12972 = vst.msk [vmem:[%s280 + $0xe8] sm:$0xff] %vm281, %v12940
      %12973 = vst.msk [vmem:[%s280 + $0xf0] sm:$0xff] %vm281, %v12941
      %12974 = vst.msk [vmem:[%s280 + $0xf8] sm:$0xff] %vm281, %v12942
      %p12975 = scmp.lt.s32.totalorder %s20, 1
      %s12976 = scalar_select %p12975, %s20, 1
      %s12977 = smul.addr %s12976, 32
      %s12978 = smul.addr %s12977, 8
      %s12979 = scalar_lea.vmem %s7, %s12978
      // Predicated region
      $region49: #{dncnn_forward.1} parent=47 // pred_check
        %p12980 = pneg %p190
      $region50: #{dncnn_forward.1} parent=47 // pred_check_branch
        %12982 = sbr.rel (%p12980) target = $region52
      $region51: #{dncnn_forward.1} parent=47 // pred_region
        _
      $region52: #{dncnn_forward.1} parent=47 // pred_fallthru
        _
    $region48: #{dncnn_forward.1} parent=5 // pred_fallthru
      _
    %p12983 = scmp.le.s32.totalorder 2, %s15
    // Predicated region
    $region53: #{dncnn_forward.1} parent=5 // pred_check
      %p12984 = pneg %p12983
    $region54: #{dncnn_forward.1} parent=5 // pred_check_branch
      %12986 = sbr.rel (%p12984) target = $region56
    $region55: #{dncnn_forward.1} parent=5 // pred_region
      %s12987 = ssub.s32 %s15, 2
      // Predicated region
      $region57: #{dncnn_forward.1} parent=55 // pred_check
        %p12988 = pneg %p196
      $region58: #{dncnn_forward.1} parent=55 // pred_check_branch
        %12990 = sbr.rel (%p12988) target = $region60
      $region59: #{dncnn_forward.1} parent=55 // pred_region
        %p12991 = scmp.lt.s32.totalorder %s21, 1
        %s12992 = scalar_select %p12991, %s21, 1
        %s12993 = smul.addr %s12992, 32
        %s12994 = smul.addr %s12993, 8
        %s12995 = scalar_lea.vmem %s7, %s12994
      $region60: #{dncnn_forward.1} parent=55 // pred_fallthru
        _
    $region56: #{dncnn_forward.1} parent=5 // pred_fallthru
      _
  $region6: #{dncnn_forward.1} parent=0 // loop_footer
    %s19 = sadd.s32 1, %s15
  $region7: #{dncnn_forward.1} parent=0 // loop_footer_branch
    %14 = sbr.rel target = $region3
  $region8: #{dncnn_forward.1} parent=0 // loop_exit
    _

</llo_original>
